<compile_context>
chip_gen: v5e
topology: v5e:2x2
jax: 0.10.0
libtpu: 0.0.40
codegen_flags: <defaults>
</compile_context>

<pallas_src>
import functools
import math

import jax
import jax.numpy as jnp
from jax import lax
from jax.experimental import pallas as pl
from jax.experimental.pallas import tpu as pltpu


def _round_up(x, m):
    return ((x + m - 1) // m) * m


# ---------------------------------------------------------------------------
# Pallas kernels
# ---------------------------------------------------------------------------
def _mm_bias_act_kernel(x_ref, w_ref, b_ref, o_ref, *, act):
    # Full K and N resident: single MXU matmul, bias + activation fused.
    y = jnp.dot(x_ref[...], w_ref[...], preferred_element_type=jnp.float32)
    y = y + b_ref[...]
    if act == "relu":
        y = jnp.maximum(y, 0.0)
    elif act == "sigmoid":
        y = jax.nn.sigmoid(y)
    o_ref[...] = y.astype(o_ref.dtype)


def _mm2_bias_act_kernel(x_ref, w1_ref, b1_ref, w2_ref, b2_ref, o_ref):
    # Two-stage fused kernel: relu(x @ w1 + b1) @ w2 + b2 -> sigmoid.
    # Used for deconv4 (phased) + deconv5 (1x1, block-diagonal) + sigmoid.
    h = jnp.dot(x_ref[...], w1_ref[...], preferred_element_type=jnp.float32)
    h = jnp.maximum(h + b1_ref[...], 0.0)
    y = jnp.dot(h.astype(w2_ref.dtype), w2_ref[...],
                preferred_element_type=jnp.float32)
    o_ref[...] = jax.nn.sigmoid(y + b2_ref[...]).astype(o_ref.dtype)


# ---------------------------------------------------------------------------
# Wrappers: padding / tiling / pallas_call
# ---------------------------------------------------------------------------
def _pad2(a, rows, cols):
    r, c = a.shape
    return jnp.pad(a, ((0, rows - r), (0, cols - c)))


def _choose_m_tiling(M):
    # Small M: single tile (no padding to 128).  Large M: 256-row tiles so the
    # M grid axis is >= 2 (megacore 'parallel' sharding on v7x) and
    # intermediates stay small.
    Mp = _round_up(M, 16)
    if Mp <= 512:
        return Mp, Mp
    tm = 256
    return _round_up(M, tm), tm


def matmul_bias_act(x, w, b, act="relu"):
    """y = act(x @ w + b).  x:(M,K), w:(K,N), b:(N,) -> (M,N) float32."""
    M, K = x.shape
    _, N = w.shape
    Mp, tm = _choose_m_tiling(M)
    Kp = _round_up(K, 128)
    Np = _round_up(N, 128)
    xp = _pad2(x.astype(jnp.bfloat16), Mp, Kp)
    wp = _pad2(w.astype(jnp.bfloat16), Kp, Np)
    bp = jnp.pad(b.astype(jnp.float32), (0, Np - N)).reshape(1, Np)

    out = pl.pallas_call(
        functools.partial(_mm_bias_act_kernel, act=act),
        out_shape=jax.ShapeDtypeStruct((Mp, Np), jnp.float32),
        grid_spec=pltpu.PrefetchScalarGridSpec(
            num_scalar_prefetch=0,
            grid=(Mp // tm,),
            in_specs=[
                pl.BlockSpec((tm, Kp), lambda i: (i, 0)),
                pl.BlockSpec((Kp, Np), lambda i: (0, 0)),   # weight DMA'd once
                pl.BlockSpec((1, Np), lambda i: (0, 0)),
            ],
            out_specs=pl.BlockSpec((tm, Np), lambda i: (i, 0)),
        ),
        compiler_params=pltpu.CompilerParams(
            dimension_semantics=("parallel",)),
    )(xp, wp, bp)
    return out[:M, :N]


def matmul2_bias_act(x, w1, b1, w2, b2):
    """sigmoid(relu(x @ w1 + b1) @ w2 + b2).  Fully fused, float32 out."""
    M, K = x.shape
    _, N1 = w1.shape
    _, N2 = w2.shape
    Mp, tm = _choose_m_tiling(M)
    Kp = _round_up(K, 128)
    N1p = _round_up(N1, 128)
    N2p = _round_up(N2, 128)
    xp = _pad2(x.astype(jnp.bfloat16), Mp, Kp)
    w1p = _pad2(w1.astype(jnp.bfloat16), Kp, N1p)
    b1p = jnp.pad(b1.astype(jnp.float32), (0, N1p - N1)).reshape(1, N1p)
    w2p = _pad2(w2.astype(jnp.bfloat16), N1p, N2p)
    b2p = jnp.pad(b2.astype(jnp.float32), (0, N2p - N2)).reshape(1, N2p)

    out = pl.pallas_call(
        _mm2_bias_act_kernel,
        out_shape=jax.ShapeDtypeStruct((Mp, N2p), jnp.float32),
        grid_spec=pltpu.PrefetchScalarGridSpec(
            num_scalar_prefetch=0,
            grid=(Mp // tm,),
            in_specs=[
                pl.BlockSpec((tm, Kp), lambda i: (i, 0)),
                pl.BlockSpec((Kp, N1p), lambda i: (0, 0)),
                pl.BlockSpec((1, N1p), lambda i: (0, 0)),
                pl.BlockSpec((N1p, N2p), lambda i: (0, 0)),
                pl.BlockSpec((1, N2p), lambda i: (0, 0)),
            ],
            out_specs=pl.BlockSpec((tm, N2p), lambda i: (i, 0)),
        ),
        compiler_params=pltpu.CompilerParams(
            dimension_semantics=("parallel",)),
    )(xp, w1p, b1p, w2p, b2p)
    return out[:M, :N2]


# ---------------------------------------------------------------------------
# Conv / ConvTranspose lowering (im2col + subpixel decomposition, JAX glue)
# ---------------------------------------------------------------------------
def _extract_patches(x, kh, kw, stride):
    # x: (N,H,W,C) -> (N,Ho,Wo,kh*kw*C); feature order is (kh, kw, C).
    N, H, W, C = x.shape
    Ho = (H - kh) // stride + 1
    Wo = (W - kw) // stride + 1
    cols = []
    for i in range(kh):
        for j in range(kw):
            cols.append(x[:, i:i + stride * Ho:stride, j:j + stride * Wo:stride, :])
    return jnp.concatenate(cols, axis=-1), Ho, Wo


def conv2d(x, w, b, stride, act):
    # x: NHWC.  w: (C_out, C_in, kh, kw) PyTorch Conv2d layout, padding=0.
    C_out, C_in, kh, kw = w.shape
    p, Ho, Wo = _extract_patches(x, kh, kw, stride)
    Nb = x.shape[0]
    wm = jnp.transpose(w, (2, 3, 1, 0)).reshape(kh * kw * C_in, C_out)
    y = matmul_bias_act(p.reshape(Nb * Ho * Wo, kh * kw * C_in), wm, b, act=act)
    return y.reshape(Nb, Ho, Wo, C_out)


def _deconv_weight_matrix(w_t, stride):
    # w_t: (C_in, C_out, kh, kw) with kh % stride == kw % stride == 0.
    # Returns W[(ih,iw,cin), (ph,pw,cout)] = w_t[cin,cout,(Th-1-ih)*s+ph,(Tw-1-iw)*s+pw]
    C_in, C_out, kh, kw = w_t.shape
    s = stride
    Th, Tw = kh // s, kw // s
    w_r = w_t.reshape(C_in, C_out, Th, s, Tw, s)
    w_r = jnp.flip(w_r, axis=(2, 4))                       # tap -> patch index flip
    w_m = jnp.transpose(w_r, (2, 4, 0, 3, 5, 1))           # (ih,iw,cin,ph,pw,cout)
    return w_m.reshape(Th * Tw * C_in, s * s * C_out)


def conv_transpose2d(x, w_t, b, stride, act, fuse_w2=None, fuse_b2=None):
    """ConvTranspose2d (padding=0) via subpixel decomposition.

    x: (N,H,W,Cin) NHWC.  w_t: (C_in,C_out,kh,kw) PyTorch layout.
    All s*s output phases share the same (k/s x k/s) im2col patches, so the
    whole layer is ONE matmul with N = s*s*C_out (no zero-dilated input).
    fuse_w2/fuse_b2: optional per-pixel 1x1 conv (C_out,C2)/(C2,) applied after
    the relu, followed by sigmoid (fuses deconv5 into deconv4).
    """
    C_in, C_out, kh, kw = w_t.shape
    s = stride
    assert kh % s == 0 and kw % s == 0
    Th, Tw = kh // s, kw // s
    Nb, H, W, _ = x.shape
    xp = jnp.pad(x, ((0, 0), (Th - 1, Th - 1), (Tw - 1, Tw - 1), (0, 0)))
    p, Qh, Qw = _extract_patches(xp, Th, Tw, 1)
    M = Nb * Qh * Qw
    w_m = _deconv_weight_matrix(w_t, s)                    # (Th*Tw*Cin, s*s*Cout)
    b_m = jnp.tile(b, s * s)

    if fuse_w2 is None:
        y = matmul_bias_act(p.reshape(M, Th * Tw * C_in), w_m, b_m, act=act)
        C_last = C_out
    else:
        C2 = fuse_w2.shape[1]
        w2_bd = jnp.kron(jnp.eye(s * s, dtype=jnp.float32),
                         fuse_w2.astype(jnp.float32))      # block-diag (s*s*Cout, s*s*C2)
        b2_m = jnp.tile(fuse_b2, s * s)
        y = matmul2_bias_act(p.reshape(M, Th * Tw * C_in), w_m, b_m, w2_bd, b2_m)
        C_last = C2

    # Interleave phases: (N,Qh,Qw,s,s,C) -> (N,Qh*s,Qw*s,C) = (N,H_out,W_out,C)
    y = y.reshape(Nb, Qh, Qw, s, s, C_last)
    y = jnp.transpose(y, (0, 1, 3, 2, 4, 5)).reshape(Nb, Qh * s, Qw * s, C_last)
    return y


# ---------------------------------------------------------------------------
# Parameters (deterministic synthetic init, PyTorch-style uniform bounds)
# ---------------------------------------------------------------------------
def init_params(key):
    keys = jax.random.split(key, 22)

    def u(k, shape, fan_in):
        bound = 1.0 / math.sqrt(fan_in)
        return jax.random.uniform(k, shape, jnp.float32, -bound, bound)

    p = {}
    p["conv1_w"] = u(keys[0], (32, 4, 8, 8), 4 * 64);   p["conv1_b"] = u(keys[1], (32,), 4 * 64)
    p["conv2_w"] = u(keys[2], (64, 32, 4, 4), 32 * 16); p["conv2_b"] = u(keys[3], (64,), 32 * 16)
    p["conv3_w"] = u(keys[4], (64, 64, 3, 3), 64 * 9);  p["conv3_b"] = u(keys[5], (64,), 64 * 9)
    p["conv4_w"] = u(keys[6], (16, 64, 3, 3), 64 * 9);  p["conv4_b"] = u(keys[7], (16,), 64 * 9)
    p["fc_e_w"] = u(keys[8], (50, 640), 640);           p["fc_e_b"] = u(keys[9], (50,), 640)
    p["fc_d_w"] = u(keys[10], (640, 50), 50);           p["fc_d_b"] = u(keys[11], (640,), 50)
    p["deconv1_w"] = u(keys[12], (16, 16, 3, 3), 16 * 9);  p["deconv1_b"] = u(keys[13], (16,), 16 * 9)
    p["deconv2_w"] = u(keys[14], (16, 64, 3, 3), 16 * 9);  p["deconv2_b"] = u(keys[15], (64,), 16 * 9)
    p["deconv3_w"] = u(keys[16], (64, 64, 4, 4), 64 * 16); p["deconv3_b"] = u(keys[17], (64,), 64 * 16)
    p["deconv4_w"] = u(keys[18], (64, 32, 8, 8), 64 * 64); p["deconv4_b"] = u(keys[19], (32,), 64 * 64)
    p["deconv5_w"] = u(keys[20], (32, 4, 1, 1), 32);       p["deconv5_b"] = u(keys[21], (4,), 32)
    return p


# ---------------------------------------------------------------------------
# Forward pass (matches CNNControlAE.forward)
# ---------------------------------------------------------------------------
def cnn_control_ae_forward(x_nchw, params, reg_loss_fn=None):
    # TODO(synk): calculate_reg_loss is a user-supplied callable in the PyTorch
    # module; default to an L1-mean penalty computed in plain JAX (not hot path).
    if reg_loss_fn is None:
        reg_loss_fn = lambda u: jnp.mean(jnp.abs(u))

    x = jnp.transpose(x_nchw, (0, 2, 3, 1)).astype(jnp.float32)      # NCHW -> NHWC

    h = conv2d(x, params["conv1_w"], params["conv1_b"], 4, "relu")   # (N,26,20,32)
    h = conv2d(h, params["conv2_w"], params["conv2_b"], 2, "relu")   # (N,12, 9,64)
    h = conv2d(h, params["conv3_w"], params["conv3_b"], 1, "relu")   # (N,10, 7,64)
    h = conv2d(h, params["conv4_w"], params["conv4_b"], 1, "relu")   # (N, 8, 5,16)

    N = h.shape[0]
    flat = jnp.transpose(h, (0, 3, 1, 2)).reshape(N, 16 * 8 * 5)     # PyTorch NCHW flatten
    u = matmul_bias_act(flat, params["fc_e_w"].T, params["fc_e_b"], act="relu")   # (N,50)
    reg_loss = reg_loss_fn(u)

    y = matmul_bias_act(u, params["fc_d_w"].T, params["fc_d_b"], act="relu")      # (N,640)
    y = jnp.transpose(y.reshape(N, 16, 8, 5), (0, 2, 3, 1))                       # (N,8,5,16)

    y = conv_transpose2d(y, params["deconv1_w"], params["deconv1_b"], 1, "relu")  # (N,10, 7,16)
    y = conv_transpose2d(y, params["deconv2_w"], params["deconv2_b"], 1, "relu")  # (N,12, 9,64)
    y = conv_transpose2d(y, params["deconv3_w"], params["deconv3_b"], 2, "relu")  # (N,26,20,64)
    # deconv4 (stride 4, subpixel) + deconv5 (1x1) + sigmoid in ONE fused kernel.
    w5 = params["deconv5_w"][:, :, 0, 0]                                          # (32,4)
    y = conv_transpose2d(y, params["deconv4_w"], params["deconv4_b"], 4, "relu",
                         fuse_w2=w5, fuse_b2=params["deconv5_b"])                 # (N,108,84,4)

    return jnp.transpose(y, (0, 3, 1, 2)), u, reg_loss                            # -> NCHW


# ---------------------------------------------------------------------------
# Pure-JAX reference (fp32, lax convs) for a correctness cross-check
# ---------------------------------------------------------------------------
def _ref_forward(x_nchw, params):
    def conv(x, w, b, s):
        y = lax.conv_general_dilated(x, w, (s, s), "VALID",
                                     dimension_numbers=("NCHW", "OIHW", "NCHW"))
        return y + b.reshape(1, -1, 1, 1)

    def deconv(x, w_t, b, s):
        kh, kw = w_t.shape[2], w_t.shape[3]
        w = jnp.transpose(jnp.flip(w_t, (2, 3)), (1, 0, 2, 3))
        y = lax.conv_general_dilated(x, w, (1, 1),
                                     padding=((kh - 1, kh - 1), (kw - 1, kw - 1)),
                                     lhs_dilation=(s, s),
                                     dimension_numbers=("NCHW", "OIHW", "NCHW"))
        return y + b.reshape(1, -1, 1, 1)

    r = jax.nn.relu
    h = r(conv(x_nchw, params["conv1_w"], params["conv1_b"], 4))
    h = r(conv(h, params["conv2_w"], params["conv2_b"], 2))
    h = r(conv(h, params["conv3_w"], params["conv3_b"], 1))
    h = r(conv(h, params["conv4_w"], params["conv4_b"], 1))
    N = h.shape[0]
    u = r(h.reshape(N, -1) @ params["fc_e_w"].T + params["fc_e_b"])
    y = r(u @ params["fc_d_w"].T + params["fc_d_b"]).reshape(N, 16, 8, 5)
    y = r(deconv(y, params["deconv1_w"], params["deconv1_b"], 1))
    y = r(deconv(y, params["deconv2_w"], params["deconv2_b"], 1))
    y = r(deconv(y, params["deconv3_w"], params["deconv3_b"], 2))
    y = r(deconv(y, params["deconv4_w"], params["deconv4_b"], 4))
    y = deconv(y, params["deconv5_w"], params["deconv5_b"], 1)
    return jax.nn.sigmoid(y), u


if __name__ == "__main__":
    key = jax.random.PRNGKey(0)
    pkey, xkey = jax.random.split(key)
    params = init_params(pkey)

    # Smallest shape consistent with the module: batch=2, 4 channels,
    # spatial fixed at (108, 84) by the 640-feature bottleneck.
    x = jax.random.uniform(xkey, (2, 4, 108, 84), jnp.float32)

    fwd = jax.jit(lambda xx, pp: cnn_control_ae_forward(xx, pp))
    out, u, reg_loss = fwd(x, params)
    jax.block_until_ready((out, u, reg_loss))

    assert out.shape == (2, 4, 108, 84) and out.dtype == jnp.float32
    assert u.shape == (2, 50)
    assert bool(jnp.all(out >= 0.0)) and bool(jnp.all(out <= 1.0))

    # Cross-check against a pure-JAX fp32 reference (loose tol: bf16 matmul inputs).
    out_ref, u_ref = jax.jit(_ref_forward)(x, params)
    jax.block_until_ready((out_ref, u_ref))
    assert float(jnp.max(jnp.abs(out - out_ref))) < 5e-2
    assert float(jnp.max(jnp.abs(u - u_ref))) < 5e-2

    print("KERNEL_OK")
</pallas_src>

<mosaic_0001>
module attributes {stable_mosaic.version = 11 : i64} {
  func.func @_mm_bias_act_kernel(%arg0: i32, %arg1: memref<256x256xbf16, #tpu.memory_space<vmem>>, %arg2: memref<256x128xbf16, #tpu.memory_space<vmem>>, %arg3: memref<1x128xf32, #tpu.memory_space<vmem>>, %arg4: memref<256x128xf32, #tpu.memory_space<vmem>>) attributes {dimension_semantics = [#tpu.dimension_semantics<parallel>], iteration_bounds = array<i64: 5>, scalar_prefetch = 0 : i64, scratch_operands = 0 : i64, tpu.core_type = #tpu.core_type<tc>, window_params = [{transform_indices = @transform_0, window_bounds = array<i64: 256, 256>}, {pipeline_mode = #tpu.pipeline_mode<synchronous>, transform_indices = @transform_1, window_bounds = array<i64: 256, 128>}, {pipeline_mode = #tpu.pipeline_mode<synchronous>, transform_indices = @transform_2, window_bounds = array<i64: 1, 128>}, {transform_indices = @transform_3, window_bounds = array<i64: 256, 128>}]} {
    %c0 = arith.constant 0 : index
    %c0_0 = arith.constant 0 : index
    %0 = vector.load %arg1[%c0, %c0_0] : memref<256x256xbf16, #tpu.memory_space<vmem>>, vector<256x256xbf16>
    %c0_1 = arith.constant 0 : index
    %c0_2 = arith.constant 0 : index
    %1 = vector.load %arg2[%c0_1, %c0_2] : memref<256x128xbf16, #tpu.memory_space<vmem>>, vector<256x128xbf16>
    %cst = arith.constant dense<0.000000e+00> : vector<256x128xf32>
    %2 = tpu.matmul %0, %1, %cst {dimension_numbers = #tpu.dot_dimension_numbers<[1], [0], [0], [1], [0, 0, 1, 1], [], []>} : vector<256x256xbf16>, vector<256x128xbf16>, vector<256x128xf32> -> vector<256x128xf32>
    %c0_3 = arith.constant 0 : index
    %c0_4 = arith.constant 0 : index
    %3 = vector.load %arg3[%c0_3, %c0_4] : memref<1x128xf32, #tpu.memory_space<vmem>>, vector<1x128xf32>
    %4 = vector.broadcast %3 : vector<1x128xf32> to vector<256x128xf32>
    %5 = arith.addf %2, %4 : vector<256x128xf32>
    %cst_5 = arith.constant 0.000000e+00 : f32
    %6 = vector.broadcast %cst_5 : f32 to vector<256x128xf32>
    %7 = arith.maximumf %5, %6 : vector<256x128xf32>
    %c0_6 = arith.constant 0 : index
    %c0_7 = arith.constant 0 : index
    %8 = vector.load %arg4[%c0_6, %c0_7] : memref<256x128xf32, #tpu.memory_space<vmem>>, vector<256x128xf32>
    tpu.vector_store %arg4[%c0_6, %c0_7], %7 {strides = array<i32>} : memref<256x128xf32, #tpu.memory_space<vmem>>, vector<256x128xf32>,
    return
  }
  func.func @transform_0(%arg0: i32) -> (i32, i32) {
    %c0_i32 = arith.constant 0 : i32
    %c0_i32_0 = arith.constant 0 : i32
    return %arg0, %c0_i32 : i32, i32
  }
  func.func @transform_1(%arg0: i32) -> (i32, i32) {
    %c0_i32 = arith.constant 0 : i32
    %c0_i32_0 = arith.constant 0 : i32
    %c0_i32_1 = arith.constant 0 : i32
    return %c0_i32, %c0_i32_0 : i32, i32
  }
  func.func @transform_2(%arg0: i32) -> (i32, i32) {
    %c0_i32 = arith.constant 0 : i32
    %c0_i32_0 = arith.constant 0 : i32
    %c0_i32_1 = arith.constant 0 : i32
    return %c0_i32, %c0_i32_0 : i32, i32
  }
  func.func @transform_3(%arg0: i32) -> (i32, i32) {
    %c0_i32 = arith.constant 0 : i32
    %c0_i32_0 = arith.constant 0 : i32
    return %arg0, %c0_i32 : i32, i32
  }
}

module attributes {stable_mosaic.version = 11 : i64} {
  func.func @_mm_bias_act_kernel(%arg0: i32, %arg1: memref<224x512xbf16, #tpu.memory_space<vmem>>, %arg2: memref<512x128xbf16, #tpu.memory_space<vmem>>, %arg3: memref<1x128xf32, #tpu.memory_space<vmem>>, %arg4: memref<224x128xf32, #tpu.memory_space<vmem>>) attributes {dimension_semantics = [#tpu.dimension_semantics<parallel>], iteration_bounds = array<i64: 1>, scalar_prefetch = 0 : i64, scratch_operands = 0 : i64, tpu.core_type = #tpu.core_type<tc>, window_params = [{transform_indices = @transform_0, window_bounds = array<i64: 224, 512>}, {pipeline_mode = #tpu.pipeline_mode<synchronous>, transform_indices = @transform_1, window_bounds = array<i64: 512, 128>}, {pipeline_mode = #tpu.pipeline_mode<synchronous>, transform_indices = @transform_2, window_bounds = array<i64: 1, 128>}, {transform_indices = @transform_3, window_bounds = array<i64: 224, 128>}]} {
    %c0 = arith.constant 0 : index
    %c0_0 = arith.constant 0 : index
    %0 = vector.load %arg1[%c0, %c0_0] : memref<224x512xbf16, #tpu.memory_space<vmem>>, vector<224x512xbf16>
    %c0_1 = arith.constant 0 : index
    %c0_2 = arith.constant 0 : index
    %1 = vector.load %arg2[%c0_1, %c0_2] : memref<512x128xbf16, #tpu.memory_space<vmem>>, vector<512x128xbf16>
    %cst = arith.constant dense<0.000000e+00> : vector<224x128xf32>
    %2 = tpu.matmul %0, %1, %cst {dimension_numbers = #tpu.dot_dimension_numbers<[1], [0], [0], [1], [0, 0, 1, 1], [], []>} : vector<224x512xbf16>, vector<512x128xbf16>, vector<224x128xf32> -> vector<224x128xf32>
    %c0_3 = arith.constant 0 : index
    %c0_4 = arith.constant 0 : index
    %3 = vector.load %arg3[%c0_3, %c0_4] : memref<1x128xf32, #tpu.memory_space<vmem>>, vector<1x128xf32>
    %4 = vector.broadcast %3 : vector<1x128xf32> to vector<224x128xf32>
    %5 = arith.addf %2, %4 : vector<224x128xf32>
    %cst_5 = arith.constant 0.000000e+00 : f32
    %6 = vector.broadcast %cst_5 : f32 to vector<224x128xf32>
    %7 = arith.maximumf %5, %6 : vector<224x128xf32>
    %c0_6 = arith.constant 0 : index
    %c0_7 = arith.constant 0 : index
    %8 = vector.load %arg4[%c0_6, %c0_7] : memref<224x128xf32, #tpu.memory_space<vmem>>, vector<224x128xf32>
    tpu.vector_store %arg4[%c0_6, %c0_7], %7 {strides = array<i32>} : memref<224x128xf32, #tpu.memory_space<vmem>>, vector<224x128xf32>,
    return
  }
  func.func @transform_0(%arg0: i32) -> (i32, i32) {
    %c0_i32 = arith.constant 0 : i32
    %c0_i32_0 = arith.constant 0 : i32
    return %arg0, %c0_i32 : i32, i32
  }
  func.func @transform_1(%arg0: i32) -> (i32, i32) {
    %c0_i32 = arith.constant 0 : i32
    %c0_i32_0 = arith.constant 0 : i32
    %c0_i32_1 = arith.constant 0 : i32
    return %c0_i32, %c0_i32_0 : i32, i32
  }
  func.func @transform_2(%arg0: i32) -> (i32, i32) {
    %c0_i32 = arith.constant 0 : i32
    %c0_i32_0 = arith.constant 0 : i32
    %c0_i32_1 = arith.constant 0 : i32
    return %c0_i32, %c0_i32_0 : i32, i32
  }
  func.func @transform_3(%arg0: i32) -> (i32, i32) {
    %c0_i32 = arith.constant 0 : i32
    %c0_i32_0 = arith.constant 0 : i32
    return %arg0, %c0_i32 : i32, i32
  }
}

module attributes {stable_mosaic.version = 11 : i64} {
  func.func @_mm_bias_act_kernel(%arg0: i32, %arg1: memref<144x640xbf16, #tpu.memory_space<vmem>>, %arg2: memref<640x128xbf16, #tpu.memory_space<vmem>>, %arg3: memref<1x128xf32, #tpu.memory_space<vmem>>, %arg4: memref<144x128xf32, #tpu.memory_space<vmem>>) attributes {dimension_semantics = [#tpu.dimension_semantics<parallel>], iteration_bounds = array<i64: 1>, scalar_prefetch = 0 : i64, scratch_operands = 0 : i64, tpu.core_type = #tpu.core_type<tc>, window_params = [{transform_indices = @transform_0, window_bounds = array<i64: 144, 640>}, {pipeline_mode = #tpu.pipeline_mode<synchronous>, transform_indices = @transform_1, window_bounds = array<i64: 640, 128>}, {pipeline_mode = #tpu.pipeline_mode<synchronous>, transform_indices = @transform_2, window_bounds = array<i64: 1, 128>}, {transform_indices = @transform_3, window_bounds = array<i64: 144, 128>}]} {
    %c0 = arith.constant 0 : index
    %c0_0 = arith.constant 0 : index
    %0 = vector.load %arg1[%c0, %c0_0] : memref<144x640xbf16, #tpu.memory_space<vmem>>, vector<144x640xbf16>
    %c0_1 = arith.constant 0 : index
    %c0_2 = arith.constant 0 : index
    %1 = vector.load %arg2[%c0_1, %c0_2] : memref<640x128xbf16, #tpu.memory_space<vmem>>, vector<640x128xbf16>
    %cst = arith.constant dense<0.000000e+00> : vector<144x128xf32>
    %2 = tpu.matmul %0, %1, %cst {dimension_numbers = #tpu.dot_dimension_numbers<[1], [0], [0], [1], [0, 0, 1, 1], [], []>} : vector<144x640xbf16>, vector<640x128xbf16>, vector<144x128xf32> -> vector<144x128xf32>
    %c0_3 = arith.constant 0 : index
    %c0_4 = arith.constant 0 : index
    %3 = vector.load %arg3[%c0_3, %c0_4] : memref<1x128xf32, #tpu.memory_space<vmem>>, vector<1x128xf32>
    %4 = vector.broadcast %3 : vector<1x128xf32> to vector<144x128xf32>
    %5 = arith.addf %2, %4 : vector<144x128xf32>
    %cst_5 = arith.constant 0.000000e+00 : f32
    %6 = vector.broadcast %cst_5 : f32 to vector<144x128xf32>
    %7 = arith.maximumf %5, %6 : vector<144x128xf32>
    %c0_6 = arith.constant 0 : index
    %c0_7 = arith.constant 0 : index
    %8 = vector.load %arg4[%c0_6, %c0_7] : memref<144x128xf32, #tpu.memory_space<vmem>>, vector<144x128xf32>
    tpu.vector_store %arg4[%c0_6, %c0_7], %7 {strides = array<i32>} : memref<144x128xf32, #tpu.memory_space<vmem>>, vector<144x128xf32>,
    return
  }
  func.func @transform_0(%arg0: i32) -> (i32, i32) {
    %c0_i32 = arith.constant 0 : i32
    %c0_i32_0 = arith.constant 0 : i32
    return %arg0, %c0_i32 : i32, i32
  }
  func.func @transform_1(%arg0: i32) -> (i32, i32) {
    %c0_i32 = arith.constant 0 : i32
    %c0_i32_0 = arith.constant 0 : i32
    %c0_i32_1 = arith.constant 0 : i32
    return %c0_i32, %c0_i32_0 : i32, i32
  }
  func.func @transform_2(%arg0: i32) -> (i32, i32) {
    %c0_i32 = arith.constant 0 : i32
    %c0_i32_0 = arith.constant 0 : i32
    %c0_i32_1 = arith.constant 0 : i32
    return %c0_i32, %c0_i32_0 : i32, i32
  }
  func.func @transform_3(%arg0: i32) -> (i32, i32) {
    %c0_i32 = arith.constant 0 : i32
    %c0_i32_0 = arith.constant 0 : i32
    return %arg0, %c0_i32 : i32, i32
  }
}

module attributes {stable_mosaic.version = 11 : i64} {
  func.func @_mm_bias_act_kernel(%arg0: i32, %arg1: memref<80x640xbf16, #tpu.memory_space<vmem>>, %arg2: memref<640x128xbf16, #tpu.memory_space<vmem>>, %arg3: memref<1x128xf32, #tpu.memory_space<vmem>>, %arg4: memref<80x128xf32, #tpu.memory_space<vmem>>) attributes {dimension_semantics = [#tpu.dimension_semantics<parallel>], iteration_bounds = array<i64: 1>, scalar_prefetch = 0 : i64, scratch_operands = 0 : i64, tpu.core_type = #tpu.core_type<tc>, window_params = [{transform_indices = @transform_0, window_bounds = array<i64: 80, 640>}, {pipeline_mode = #tpu.pipeline_mode<synchronous>, transform_indices = @transform_1, window_bounds = array<i64: 640, 128>}, {pipeline_mode = #tpu.pipeline_mode<synchronous>, transform_indices = @transform_2, window_bounds = array<i64: 1, 128>}, {transform_indices = @transform_3, window_bounds = array<i64: 80, 128>}]} {
    %c0 = arith.constant 0 : index
    %c0_0 = arith.constant 0 : index
    %0 = vector.load %arg1[%c0, %c0_0] : memref<80x640xbf16, #tpu.memory_space<vmem>>, vector<80x640xbf16>
    %c0_1 = arith.constant 0 : index
    %c0_2 = arith.constant 0 : index
    %1 = vector.load %arg2[%c0_1, %c0_2] : memref<640x128xbf16, #tpu.memory_space<vmem>>, vector<640x128xbf16>
    %cst = arith.constant dense<0.000000e+00> : vector<80x128xf32>
    %2 = tpu.matmul %0, %1, %cst {dimension_numbers = #tpu.dot_dimension_numbers<[1], [0], [0], [1], [0, 0, 1, 1], [], []>} : vector<80x640xbf16>, vector<640x128xbf16>, vector<80x128xf32> -> vector<80x128xf32>
    %c0_3 = arith.constant 0 : index
    %c0_4 = arith.constant 0 : index
    %3 = vector.load %arg3[%c0_3, %c0_4] : memref<1x128xf32, #tpu.memory_space<vmem>>, vector<1x128xf32>
    %4 = vector.broadcast %3 : vector<1x128xf32> to vector<80x128xf32>
    %5 = arith.addf %2, %4 : vector<80x128xf32>
    %cst_5 = arith.constant 0.000000e+00 : f32
    %6 = vector.broadcast %cst_5 : f32 to vector<80x128xf32>
    %7 = arith.maximumf %5, %6 : vector<80x128xf32>
    %c0_6 = arith.constant 0 : index
    %c0_7 = arith.constant 0 : index
    %8 = vector.load %arg4[%c0_6, %c0_7] : memref<80x128xf32, #tpu.memory_space<vmem>>, vector<80x128xf32>
    tpu.vector_store %arg4[%c0_6, %c0_7], %7 {strides = array<i32>} : memref<80x128xf32, #tpu.memory_space<vmem>>, vector<80x128xf32>,
    return
  }
  func.func @transform_0(%arg0: i32) -> (i32, i32) {
    %c0_i32 = arith.constant 0 : i32
    %c0_i32_0 = arith.constant 0 : i32
    return %arg0, %c0_i32 : i32, i32
  }
  func.func @transform_1(%arg0: i32) -> (i32, i32) {
    %c0_i32 = arith.constant 0 : i32
    %c0_i32_0 = arith.constant 0 : i32
    %c0_i32_1 = arith.constant 0 : i32
    return %c0_i32, %c0_i32_0 : i32, i32
  }
  func.func @transform_2(%arg0: i32) -> (i32, i32) {
    %c0_i32 = arith.constant 0 : i32
    %c0_i32_0 = arith.constant 0 : i32
    %c0_i32_1 = arith.constant 0 : i32
    return %c0_i32, %c0_i32_0 : i32, i32
  }
  func.func @transform_3(%arg0: i32) -> (i32, i32) {
    %c0_i32 = arith.constant 0 : i32
    %c0_i32_0 = arith.constant 0 : i32
    return %arg0, %c0_i32 : i32, i32
  }
}

module attributes {stable_mosaic.version = 11 : i64} {
  func.func @_mm_bias_act_kernel(%arg0: i32, %arg1: memref<16x640xbf16, #tpu.memory_space<vmem>>, %arg2: memref<640x128xbf16, #tpu.memory_space<vmem>>, %arg3: memref<1x128xf32, #tpu.memory_space<vmem>>, %arg4: memref<16x128xf32, #tpu.memory_space<vmem>>) attributes {dimension_semantics = [#tpu.dimension_semantics<parallel>], iteration_bounds = array<i64: 1>, scalar_prefetch = 0 : i64, scratch_operands = 0 : i64, tpu.core_type = #tpu.core_type<tc>, window_params = [{transform_indices = @transform_0, window_bounds = array<i64: 16, 640>}, {pipeline_mode = #tpu.pipeline_mode<synchronous>, transform_indices = @transform_1, window_bounds = array<i64: 640, 128>}, {pipeline_mode = #tpu.pipeline_mode<synchronous>, transform_indices = @transform_2, window_bounds = array<i64: 1, 128>}, {transform_indices = @transform_3, window_bounds = array<i64: 16, 128>}]} {
    %c0 = arith.constant 0 : index
    %c0_0 = arith.constant 0 : index
    %0 = vector.load %arg1[%c0, %c0_0] : memref<16x640xbf16, #tpu.memory_space<vmem>>, vector<16x640xbf16>
    %c0_1 = arith.constant 0 : index
    %c0_2 = arith.constant 0 : index
    %1 = vector.load %arg2[%c0_1, %c0_2] : memref<640x128xbf16, #tpu.memory_space<vmem>>, vector<640x128xbf16>
    %cst = arith.constant dense<0.000000e+00> : vector<16x128xf32>
    %2 = tpu.matmul %0, %1, %cst {dimension_numbers = #tpu.dot_dimension_numbers<[1], [0], [0], [1], [0, 0, 1, 1], [], []>} : vector<16x640xbf16>, vector<640x128xbf16>, vector<16x128xf32> -> vector<16x128xf32>
    %c0_3 = arith.constant 0 : index
    %c0_4 = arith.constant 0 : index
    %3 = vector.load %arg3[%c0_3, %c0_4] : memref<1x128xf32, #tpu.memory_space<vmem>>, vector<1x128xf32>
    %4 = vector.broadcast %3 : vector<1x128xf32> to vector<16x128xf32>
    %5 = arith.addf %2, %4 : vector<16x128xf32>
    %cst_5 = arith.constant 0.000000e+00 : f32
    %6 = vector.broadcast %cst_5 : f32 to vector<16x128xf32>
    %7 = arith.maximumf %5, %6 : vector<16x128xf32>
    %c0_6 = arith.constant 0 : index
    %c0_7 = arith.constant 0 : index
    %8 = vector.load %arg4[%c0_6, %c0_7] : memref<16x128xf32, #tpu.memory_space<vmem>>, vector<16x128xf32>
    tpu.vector_store %arg4[%c0_6, %c0_7], %7 {strides = array<i32>} : memref<16x128xf32, #tpu.memory_space<vmem>>, vector<16x128xf32>,
    return
  }
  func.func @transform_0(%arg0: i32) -> (i32, i32) {
    %c0_i32 = arith.constant 0 : i32
    %c0_i32_0 = arith.constant 0 : i32
    return %arg0, %c0_i32 : i32, i32
  }
  func.func @transform_1(%arg0: i32) -> (i32, i32) {
    %c0_i32 = arith.constant 0 : i32
    %c0_i32_0 = arith.constant 0 : i32
    %c0_i32_1 = arith.constant 0 : i32
    return %c0_i32, %c0_i32_0 : i32, i32
  }
  func.func @transform_2(%arg0: i32) -> (i32, i32) {
    %c0_i32 = arith.constant 0 : i32
    %c0_i32_0 = arith.constant 0 : i32
    %c0_i32_1 = arith.constant 0 : i32
    return %c0_i32, %c0_i32_0 : i32, i32
  }
  func.func @transform_3(%arg0: i32) -> (i32, i32) {
    %c0_i32 = arith.constant 0 : i32
    %c0_i32_0 = arith.constant 0 : i32
    return %arg0, %c0_i32 : i32, i32
  }
}

module attributes {stable_mosaic.version = 11 : i64} {
  func.func @_mm_bias_act_kernel(%arg0: i32, %arg1: memref<16x128xbf16, #tpu.memory_space<vmem>>, %arg2: memref<128x640xbf16, #tpu.memory_space<vmem>>, %arg3: memref<1x640xf32, #tpu.memory_space<vmem>>, %arg4: memref<16x640xf32, #tpu.memory_space<vmem>>) attributes {dimension_semantics = [#tpu.dimension_semantics<parallel>], iteration_bounds = array<i64: 1>, scalar_prefetch = 0 : i64, scratch_operands = 0 : i64, tpu.core_type = #tpu.core_type<tc>, window_params = [{transform_indices = @transform_0, window_bounds = array<i64: 16, 128>}, {pipeline_mode = #tpu.pipeline_mode<synchronous>, transform_indices = @transform_1, window_bounds = array<i64: 128, 640>}, {pipeline_mode = #tpu.pipeline_mode<synchronous>, transform_indices = @transform_2, window_bounds = array<i64: 1, 640>}, {transform_indices = @transform_3, window_bounds = array<i64: 16, 640>}]} {
    %c0 = arith.constant 0 : index
    %c0_0 = arith.constant 0 : index
    %0 = vector.load %arg1[%c0, %c0_0] : memref<16x128xbf16, #tpu.memory_space<vmem>>, vector<16x128xbf16>
    %c0_1 = arith.constant 0 : index
    %c0_2 = arith.constant 0 : index
    %1 = vector.load %arg2[%c0_1, %c0_2] : memref<128x640xbf16, #tpu.memory_space<vmem>>, vector<128x640xbf16>
    %cst = arith.constant dense<0.000000e+00> : vector<16x640xf32>
    %2 = tpu.matmul %0, %1, %cst {dimension_numbers = #tpu.dot_dimension_numbers<[1], [0], [0], [1], [0, 0, 1, 1], [], []>} : vector<16x128xbf16>, vector<128x640xbf16>, vector<16x640xf32> -> vector<16x640xf32>
    %c0_3 = arith.constant 0 : index
    %c0_4 = arith.constant 0 : index
    %3 = vector.load %arg3[%c0_3, %c0_4] : memref<1x640xf32, #tpu.memory_space<vmem>>, vector<1x640xf32>
    %4 = vector.broadcast %3 : vector<1x640xf32> to vector<16x640xf32>
    %5 = arith.addf %2, %4 : vector<16x640xf32>
    %cst_5 = arith.constant 0.000000e+00 : f32
    %6 = vector.broadcast %cst_5 : f32 to vector<16x640xf32>
    %7 = arith.maximumf %5, %6 : vector<16x640xf32>
    %c0_6 = arith.constant 0 : index
    %c0_7 = arith.constant 0 : index
    %8 = vector.load %arg4[%c0_6, %c0_7] : memref<16x640xf32, #tpu.memory_space<vmem>>, vector<16x640xf32>
    tpu.vector_store %arg4[%c0_6, %c0_7], %7 {strides = array<i32>} : memref<16x640xf32, #tpu.memory_space<vmem>>, vector<16x640xf32>,
    return
  }
  func.func @transform_0(%arg0: i32) -> (i32, i32) {
    %c0_i32 = arith.constant 0 : i32
    %c0_i32_0 = arith.constant 0 : i32
    return %arg0, %c0_i32 : i32, i32
  }
  func.func @transform_1(%arg0: i32) -> (i32, i32) {
    %c0_i32 = arith.constant 0 : i32
    %c0_i32_0 = arith.constant 0 : i32
    %c0_i32_1 = arith.constant 0 : i32
    return %c0_i32, %c0_i32_0 : i32, i32
  }
  func.func @transform_2(%arg0: i32) -> (i32, i32) {
    %c0_i32 = arith.constant 0 : i32
    %c0_i32_0 = arith.constant 0 : i32
    %c0_i32_1 = arith.constant 0 : i32
    return %c0_i32, %c0_i32_0 : i32, i32
  }
  func.func @transform_3(%arg0: i32) -> (i32, i32) {
    %c0_i32 = arith.constant 0 : i32
    %c0_i32_0 = arith.constant 0 : i32
    return %arg0, %c0_i32 : i32, i32
  }
}

module attributes {stable_mosaic.version = 11 : i64} {
  func.func @_mm_bias_act_kernel(%arg0: i32, %arg1: memref<144x256xbf16, #tpu.memory_space<vmem>>, %arg2: memref<256x128xbf16, #tpu.memory_space<vmem>>, %arg3: memref<1x128xf32, #tpu.memory_space<vmem>>, %arg4: memref<144x128xf32, #tpu.memory_space<vmem>>) attributes {dimension_semantics = [#tpu.dimension_semantics<parallel>], iteration_bounds = array<i64: 1>, scalar_prefetch = 0 : i64, scratch_operands = 0 : i64, tpu.core_type = #tpu.core_type<tc>, window_params = [{transform_indices = @transform_0, window_bounds = array<i64: 144, 256>}, {pipeline_mode = #tpu.pipeline_mode<synchronous>, transform_indices = @transform_1, window_bounds = array<i64: 256, 128>}, {pipeline_mode = #tpu.pipeline_mode<synchronous>, transform_indices = @transform_2, window_bounds = array<i64: 1, 128>}, {transform_indices = @transform_3, window_bounds = array<i64: 144, 128>}]} {
    %c0 = arith.constant 0 : index
    %c0_0 = arith.constant 0 : index
    %0 = vector.load %arg1[%c0, %c0_0] : memref<144x256xbf16, #tpu.memory_space<vmem>>, vector<144x256xbf16>
    %c0_1 = arith.constant 0 : index
    %c0_2 = arith.constant 0 : index
    %1 = vector.load %arg2[%c0_1, %c0_2] : memref<256x128xbf16, #tpu.memory_space<vmem>>, vector<256x128xbf16>
    %cst = arith.constant dense<0.000000e+00> : vector<144x128xf32>
    %2 = tpu.matmul %0, %1, %cst {dimension_numbers = #tpu.dot_dimension_numbers<[1], [0], [0], [1], [0, 0, 1, 1], [], []>} : vector<144x256xbf16>, vector<256x128xbf16>, vector<144x128xf32> -> vector<144x128xf32>
    %c0_3 = arith.constant 0 : index
    %c0_4 = arith.constant 0 : index
    %3 = vector.load %arg3[%c0_3, %c0_4] : memref<1x128xf32, #tpu.memory_space<vmem>>, vector<1x128xf32>
    %4 = vector.broadcast %3 : vector<1x128xf32> to vector<144x128xf32>
    %5 = arith.addf %2, %4 : vector<144x128xf32>
    %cst_5 = arith.constant 0.000000e+00 : f32
    %6 = vector.broadcast %cst_5 : f32 to vector<144x128xf32>
    %7 = arith.maximumf %5, %6 : vector<144x128xf32>
    %c0_6 = arith.constant 0 : index
    %c0_7 = arith.constant 0 : index
    %8 = vector.load %arg4[%c0_6, %c0_7] : memref<144x128xf32, #tpu.memory_space<vmem>>, vector<144x128xf32>
    tpu.vector_store %arg4[%c0_6, %c0_7], %7 {strides = array<i32>} : memref<144x128xf32, #tpu.memory_space<vmem>>, vector<144x128xf32>,
    return
  }
  func.func @transform_0(%arg0: i32) -> (i32, i32) {
    %c0_i32 = arith.constant 0 : i32
    %c0_i32_0 = arith.constant 0 : i32
    return %arg0, %c0_i32 : i32, i32
  }
  func.func @transform_1(%arg0: i32) -> (i32, i32) {
    %c0_i32 = arith.constant 0 : i32
    %c0_i32_0 = arith.constant 0 : i32
    %c0_i32_1 = arith.constant 0 : i32
    return %c0_i32, %c0_i32_0 : i32, i32
  }
  func.func @transform_2(%arg0: i32) -> (i32, i32) {
    %c0_i32 = arith.constant 0 : i32
    %c0_i32_0 = arith.constant 0 : i32
    %c0_i32_1 = arith.constant 0 : i32
    return %c0_i32, %c0_i32_0 : i32, i32
  }
  func.func @transform_3(%arg0: i32) -> (i32, i32) {
    %c0_i32 = arith.constant 0 : i32
    %c0_i32_0 = arith.constant 0 : i32
    return %arg0, %c0_i32 : i32, i32
  }
}

module attributes {stable_mosaic.version = 11 : i64} {
  func.func @_mm_bias_act_kernel(%arg0: i32, %arg1: memref<224x256xbf16, #tpu.memory_space<vmem>>, %arg2: memref<256x128xbf16, #tpu.memory_space<vmem>>, %arg3: memref<1x128xf32, #tpu.memory_space<vmem>>, %arg4: memref<224x128xf32, #tpu.memory_space<vmem>>) attributes {dimension_semantics = [#tpu.dimension_semantics<parallel>], iteration_bounds = array<i64: 1>, scalar_prefetch = 0 : i64, scratch_operands = 0 : i64, tpu.core_type = #tpu.core_type<tc>, window_params = [{transform_indices = @transform_0, window_bounds = array<i64: 224, 256>}, {pipeline_mode = #tpu.pipeline_mode<synchronous>, transform_indices = @transform_1, window_bounds = array<i64: 256, 128>}, {pipeline_mode = #tpu.pipeline_mode<synchronous>, transform_indices = @transform_2, window_bounds = array<i64: 1, 128>}, {transform_indices = @transform_3, window_bounds = array<i64: 224, 128>}]} {
    %c0 = arith.constant 0 : index
    %c0_0 = arith.constant 0 : index
    %0 = vector.load %arg1[%c0, %c0_0] : memref<224x256xbf16, #tpu.memory_space<vmem>>, vector<224x256xbf16>
    %c0_1 = arith.constant 0 : index
    %c0_2 = arith.constant 0 : index
    %1 = vector.load %arg2[%c0_1, %c0_2] : memref<256x128xbf16, #tpu.memory_space<vmem>>, vector<256x128xbf16>
    %cst = arith.constant dense<0.000000e+00> : vector<224x128xf32>
    %2 = tpu.matmul %0, %1, %cst {dimension_numbers = #tpu.dot_dimension_numbers<[1], [0], [0], [1], [0, 0, 1, 1], [], []>} : vector<224x256xbf16>, vector<256x128xbf16>, vector<224x128xf32> -> vector<224x128xf32>
    %c0_3 = arith.constant 0 : index
    %c0_4 = arith.constant 0 : index
    %3 = vector.load %arg3[%c0_3, %c0_4] : memref<1x128xf32, #tpu.memory_space<vmem>>, vector<1x128xf32>
    %4 = vector.broadcast %3 : vector<1x128xf32> to vector<224x128xf32>
    %5 = arith.addf %2, %4 : vector<224x128xf32>
    %cst_5 = arith.constant 0.000000e+00 : f32
    %6 = vector.broadcast %cst_5 : f32 to vector<224x128xf32>
    %7 = arith.maximumf %5, %6 : vector<224x128xf32>
    %c0_6 = arith.constant 0 : index
    %c0_7 = arith.constant 0 : index
    %8 = vector.load %arg4[%c0_6, %c0_7] : memref<224x128xf32, #tpu.memory_space<vmem>>, vector<224x128xf32>
    tpu.vector_store %arg4[%c0_6, %c0_7], %7 {strides = array<i32>} : memref<224x128xf32, #tpu.memory_space<vmem>>, vector<224x128xf32>,
    return
  }
  func.func @transform_0(%arg0: i32) -> (i32, i32) {
    %c0_i32 = arith.constant 0 : i32
    %c0_i32_0 = arith.constant 0 : i32
    return %arg0, %c0_i32 : i32, i32
  }
  func.func @transform_1(%arg0: i32) -> (i32, i32) {
    %c0_i32 = arith.constant 0 : i32
    %c0_i32_0 = arith.constant 0 : i32
    %c0_i32_1 = arith.constant 0 : i32
    return %c0_i32, %c0_i32_0 : i32, i32
  }
  func.func @transform_2(%arg0: i32) -> (i32, i32) {
    %c0_i32 = arith.constant 0 : i32
    %c0_i32_0 = arith.constant 0 : i32
    %c0_i32_1 = arith.constant 0 : i32
    return %c0_i32, %c0_i32_0 : i32, i32
  }
  func.func @transform_3(%arg0: i32) -> (i32, i32) {
    %c0_i32 = arith.constant 0 : i32
    %c0_i32_0 = arith.constant 0 : i32
    return %arg0, %c0_i32 : i32, i32
  }
}

module attributes {stable_mosaic.version = 11 : i64} {
  func.func @_mm_bias_act_kernel(%arg0: i32, %arg1: memref<272x256xbf16, #tpu.memory_space<vmem>>, %arg2: memref<256x256xbf16, #tpu.memory_space<vmem>>, %arg3: memref<1x256xf32, #tpu.memory_space<vmem>>, %arg4: memref<272x256xf32, #tpu.memory_space<vmem>>) attributes {dimension_semantics = [#tpu.dimension_semantics<parallel>], iteration_bounds = array<i64: 1>, scalar_prefetch = 0 : i64, scratch_operands = 0 : i64, tpu.core_type = #tpu.core_type<tc>, window_params = [{transform_indices = @transform_0, window_bounds = array<i64: 272, 256>}, {pipeline_mode = #tpu.pipeline_mode<synchronous>, transform_indices = @transform_1, window_bounds = array<i64: 256, 256>}, {pipeline_mode = #tpu.pipeline_mode<synchronous>, transform_indices = @transform_2, window_bounds = array<i64: 1, 256>}, {transform_indices = @transform_3, window_bounds = array<i64: 272, 256>}]} {
    %c0 = arith.constant 0 : index
    %c0_0 = arith.constant 0 : index
    %0 = vector.load %arg1[%c0, %c0_0] : memref<272x256xbf16, #tpu.memory_space<vmem>>, vector<272x256xbf16>
    %c0_1 = arith.constant 0 : index
    %c0_2 = arith.constant 0 : index
    %1 = vector.load %arg2[%c0_1, %c0_2] : memref<256x256xbf16, #tpu.memory_space<vmem>>, vector<256x256xbf16>
    %cst = arith.constant dense<0.000000e+00> : vector<272x256xf32>
    %2 = tpu.matmul %0, %1, %cst {dimension_numbers = #tpu.dot_dimension_numbers<[1], [0], [0], [1], [0, 0, 1, 1], [], []>} : vector<272x256xbf16>, vector<256x256xbf16>, vector<272x256xf32> -> vector<272x256xf32>
    %c0_3 = arith.constant 0 : index
    %c0_4 = arith.constant 0 : index
    %3 = vector.load %arg3[%c0_3, %c0_4] : memref<1x256xf32, #tpu.memory_space<vmem>>, vector<1x256xf32>
    %4 = vector.broadcast %3 : vector<1x256xf32> to vector<272x256xf32>
    %5 = arith.addf %2, %4 : vector<272x256xf32>
    %cst_5 = arith.constant 0.000000e+00 : f32
    %6 = vector.broadcast %cst_5 : f32 to vector<272x256xf32>
    %7 = arith.maximumf %5, %6 : vector<272x256xf32>
    %c0_6 = arith.constant 0 : index
    %c0_7 = arith.constant 0 : index
    %8 = vector.load %arg4[%c0_6, %c0_7] : memref<272x256xf32, #tpu.memory_space<vmem>>, vector<272x256xf32>
    tpu.vector_store %arg4[%c0_6, %c0_7], %7 {strides = array<i32>} : memref<272x256xf32, #tpu.memory_space<vmem>>, vector<272x256xf32>,
    return
  }
  func.func @transform_0(%arg0: i32) -> (i32, i32) {
    %c0_i32 = arith.constant 0 : i32
    %c0_i32_0 = arith.constant 0 : i32
    return %arg0, %c0_i32 : i32, i32
  }
  func.func @transform_1(%arg0: i32) -> (i32, i32) {
    %c0_i32 = arith.constant 0 : i32
    %c0_i32_0 = arith.constant 0 : i32
    %c0_i32_1 = arith.constant 0 : i32
    return %c0_i32, %c0_i32_0 : i32, i32
  }
  func.func @transform_2(%arg0: i32) -> (i32, i32) {
    %c0_i32 = arith.constant 0 : i32
    %c0_i32_0 = arith.constant 0 : i32
    %c0_i32_1 = arith.constant 0 : i32
    return %c0_i32, %c0_i32_0 : i32, i32
  }
  func.func @transform_3(%arg0: i32) -> (i32, i32) {
    %c0_i32 = arith.constant 0 : i32
    %c0_i32_0 = arith.constant 0 : i32
    return %arg0, %c0_i32 : i32, i32
  }
}

module attributes {stable_mosaic.version = 11 : i64} {
  func.func @_mm2_bias_act_kernel(%arg0: i32, %arg1: memref<256x256xbf16, #tpu.memory_space<vmem>>, %arg2: memref<256x512xbf16, #tpu.memory_space<vmem>>, %arg3: memref<1x512xf32, #tpu.memory_space<vmem>>, %arg4: memref<512x128xbf16, #tpu.memory_space<vmem>>, %arg5: memref<1x128xf32, #tpu.memory_space<vmem>>, %arg6: memref<256x128xf32, #tpu.memory_space<vmem>>) attributes {dimension_semantics = [#tpu.dimension_semantics<parallel>], iteration_bounds = array<i64: 5>, scalar_prefetch = 0 : i64, scratch_operands = 0 : i64, tpu.core_type = #tpu.core_type<tc>, window_params = [{transform_indices = @transform_0, window_bounds = array<i64: 256, 256>}, {pipeline_mode = #tpu.pipeline_mode<synchronous>, transform_indices = @transform_1, window_bounds = array<i64: 256, 512>}, {pipeline_mode = #tpu.pipeline_mode<synchronous>, transform_indices = @transform_2, window_bounds = array<i64: 1, 512>}, {pipeline_mode = #tpu.pipeline_mode<synchronous>, transform_indices = @transform_3, window_bounds = array<i64: 512, 128>}, {pipeline_mode = #tpu.pipeline_mode<synchronous>, transform_indices = @transform_4, window_bounds = array<i64: 1, 128>}, {transform_indices = @transform_5, window_bounds = array<i64: 256, 128>}]} {
    %c0 = arith.constant 0 : index
    %c0_0 = arith.constant 0 : index
    %0 = vector.load %arg1[%c0, %c0_0] : memref<256x256xbf16, #tpu.memory_space<vmem>>, vector<256x256xbf16>
    %c0_1 = arith.constant 0 : index
    %c0_2 = arith.constant 0 : index
    %1 = vector.load %arg2[%c0_1, %c0_2] : memref<256x512xbf16, #tpu.memory_space<vmem>>, vector<256x512xbf16>
    %cst = arith.constant dense<0.000000e+00> : vector<256x512xf32>
    %2 = tpu.matmul %0, %1, %cst {dimension_numbers = #tpu.dot_dimension_numbers<[1], [0], [0], [1], [0, 0, 1, 1], [], []>} : vector<256x256xbf16>, vector<256x512xbf16>, vector<256x512xf32> -> vector<256x512xf32>
    %c0_3 = arith.constant 0 : index
    %c0_4 = arith.constant 0 : index
    %3 = vector.load %arg3[%c0_3, %c0_4] : memref<1x512xf32, #tpu.memory_space<vmem>>, vector<1x512xf32>
    %4 = vector.broadcast %3 : vector<1x512xf32> to vector<256x512xf32>
    %5 = arith.addf %2, %4 : vector<256x512xf32>
    %cst_5 = arith.constant 0.000000e+00 : f32
    %6 = vector.broadcast %cst_5 : f32 to vector<256x512xf32>
    %7 = arith.maximumf %5, %6 : vector<256x512xf32>
    %8 = arith.truncf %7 : vector<256x512xf32> to vector<256x512xbf16>
    %c0_6 = arith.constant 0 : index
    %c0_7 = arith.constant 0 : index
    %9 = vector.load %arg4[%c0_6, %c0_7] : memref<512x128xbf16, #tpu.memory_space<vmem>>, vector<512x128xbf16>
    %cst_8 = arith.constant dense<0.000000e+00> : vector<256x128xf32>
    %10 = tpu.matmul %8, %9, %cst_8 {dimension_numbers = #tpu.dot_dimension_numbers<[1], [0], [0], [1], [0, 0, 1, 1], [], []>} : vector<256x512xbf16>, vector<512x128xbf16>, vector<256x128xf32> -> vector<256x128xf32>
    %c0_9 = arith.constant 0 : index
    %c0_10 = arith.constant 0 : index
    %11 = vector.load %arg5[%c0_9, %c0_10] : memref<1x128xf32, #tpu.memory_space<vmem>>, vector<1x128xf32>
    %12 = vector.broadcast %11 : vector<1x128xf32> to vector<256x128xf32>
    %13 = arith.addf %10, %12 : vector<256x128xf32>
    %14 = arith.negf %13 : vector<256x128xf32>
    %15 = math.exp %14 : vector<256x128xf32>
    %cst_11 = arith.constant 1.000000e+00 : f32
    %16 = vector.broadcast %cst_11 : f32 to vector<256x128xf32>
    %17 = arith.addf %16, %15 : vector<256x128xf32>
    %18 = arith.divf %16, %17 : vector<256x128xf32>
    %c0_12 = arith.constant 0 : index
    %c0_13 = arith.constant 0 : index
    %19 = vector.load %arg6[%c0_12, %c0_13] : memref<256x128xf32, #tpu.memory_space<vmem>>, vector<256x128xf32>
    tpu.vector_store %arg6[%c0_12, %c0_13], %18 {strides = array<i32>} : memref<256x128xf32, #tpu.memory_space<vmem>>, vector<256x128xf32>,
    return
  }
  func.func @transform_0(%arg0: i32) -> (i32, i32) {
    %c0_i32 = arith.constant 0 : i32
    %c0_i32_0 = arith.constant 0 : i32
    return %arg0, %c0_i32 : i32, i32
  }
  func.func @transform_1(%arg0: i32) -> (i32, i32) {
    %c0_i32 = arith.constant 0 : i32
    %c0_i32_0 = arith.constant 0 : i32
    %c0_i32_1 = arith.constant 0 : i32
    return %c0_i32, %c0_i32_0 : i32, i32
  }
  func.func @transform_2(%arg0: i32) -> (i32, i32) {
    %c0_i32 = arith.constant 0 : i32
    %c0_i32_0 = arith.constant 0 : i32
    %c0_i32_1 = arith.constant 0 : i32
    return %c0_i32, %c0_i32_0 : i32, i32
  }
  func.func @transform_3(%arg0: i32) -> (i32, i32) {
    %c0_i32 = arith.constant 0 : i32
    %c0_i32_0 = arith.constant 0 : i32
    %c0_i32_1 = arith.constant 0 : i32
    return %c0_i32, %c0_i32_0 : i32, i32
  }
  func.func @transform_4(%arg0: i32) -> (i32, i32) {
    %c0_i32 = arith.constant 0 : i32
    %c0_i32_0 = arith.constant 0 : i32
    %c0_i32_1 = arith.constant 0 : i32
    return %c0_i32, %c0_i32_0 : i32, i32
  }
  func.func @transform_5(%arg0: i32) -> (i32, i32) {
    %c0_i32 = arith.constant 0 : i32
    %c0_i32_0 = arith.constant 0 : i32
    return %arg0, %c0_i32 : i32, i32
  }
}

</mosaic_0001>

<llo_original>
// kernel: _lambda_.10
$region0: #{_lambda_.10}
  #allocation0 [shape = 'u32[]', space=smem, size = 0x4, offset = 0x4, fixed_abs, tag = 'smem constant byte address 0x4 - core index']
  #allocation1 [shape = 'u32[72,128]{1,0:T(1,128)}', space=vmem, size = 0x9000, scoped, tag = 'internal scratch']
  %s0 = inlined_call_operand.vmem [shape: bf16[1280,256], index: 0, kind: input, shape index: {}]
  %s1 = inlined_call_operand.vmem [shape: bf16[256,128], index: 1, kind: input, shape index: {}]
  %s2 = inlined_call_operand.vmem [shape: f32[1,128], index: 2, kind: input, shape index: {}]
  %s3 = inlined_call_operand.vmem [shape: f32[1280,128], index: 3, kind: output, shape index: {}]
  %s4 = sld [smem:[#allocation0]]
  $region45: #{_lambda_.10} parent=0
    _
  %s6 = ssub.s32 1, %s4
  %s7 = scalar_select 0, %s6, %s4
  loop: start=0, step=1, limit=7
  $region2: #{_lambda_.10} parent=0 // loop_pre_header
    _
  $region3: #{_lambda_.10} parent=0 // loop_header
    %s9 = sphi 0, %s13
    %p10 = scmp.ge.s32.totalorder %s9, 7
    %s19 = sphi 0, %s21
    %s22 = sphi 0, %s19
    %s23 = sphi 0, %s22
    %s39 = sphi 0, %s23
    %s43 = sphi 0, %s43
    %s45 = sphi 0, %s43
    %s46 = sphi 0, %s45
    %s60 = sphi 0, %s46
    %s64 = sphi 0, %s64
    %s66 = sphi 0, %s64
    %s67 = sphi 0, %s66
    %s81 = sphi 0, %s67
    %s87 = sphi 0, %s89
    %s90 = sphi 0, %s87
    %s91 = sphi 0, %s90
    %s107 = sphi 0, %s91
  $region4: #{_lambda_.10} parent=0 // loop_header_branch
    %12 = sbr.rel (%p10) target = $region8
  $region5: #{_lambda_.10} parent=0 // loop_body
    %s14 = ssub.s32 %s9, 1
    %s15 = ssub.s32 %s9, 2
    %s16 = sadd.s32 %s9, 1
    %s17 = ssub.s32 %s9, %s16
    %p18 = scmp.eq.s32.totalorder %s17, 0
    %s20 = sadd.s32 %s19, 1
    %s21 = scalar_select %p18, %s19, %s20
    %p24 = pneg %p18
    %p25 = scmp.eq.s32.totalorder %s9, 4
    %p26 = por %p24, %p25
    %p27 = scmp.ne.s32.totalorder %s19, %s22
    %p28 = scmp.eq.s32.totalorder %s9, 0
    %p29 = por %p27, %p28
    %p30 = scmp.ne.s32.totalorder %s19, %s22
    %p31 = scmp.eq.s32.totalorder %s14, 4
    %p32 = por %p30, %p31
    %p33 = scmp.ne.s32.totalorder %s22, %s23
    %p34 = scmp.eq.s32.totalorder %s14, 0
    %p35 = por %p33, %p34
    %p36 = scmp.ne.s32.totalorder %s22, %s23
    %p37 = scmp.eq.s32.totalorder %s15, 4
    %p38 = por %p36, %p37
    %p40 = scmp.ne.s32.totalorder %s23, %s39
    %p41 = scmp.eq.s32.totalorder %s15, 0
    %p42 = por %p40, %p41
    %s44 = sadd.s32 %s43, 1
    %p47 = scmp.eq.s32.totalorder %s9, 4
    %p48 = scmp.ne.s32.totalorder %s43, %s45
    %p49 = scmp.eq.s32.totalorder %s9, 0
    %p50 = por %p48, %p49
    %p51 = scmp.ne.s32.totalorder %s43, %s45
    %p52 = scmp.eq.s32.totalorder %s14, 4
    %p53 = por %p51, %p52
    %p54 = scmp.ne.s32.totalorder %s45, %s46
    %p55 = scmp.eq.s32.totalorder %s14, 0
    %p56 = por %p54, %p55
    %p57 = scmp.ne.s32.totalorder %s45, %s46
    %p58 = scmp.eq.s32.totalorder %s15, 4
    %p59 = por %p57, %p58
    %p61 = scmp.ne.s32.totalorder %s46, %s60
    %p62 = scmp.eq.s32.totalorder %s15, 0
    %p63 = por %p61, %p62
    %s65 = sadd.s32 %s64, 1
    %p68 = scmp.eq.s32.totalorder %s9, 4
    %p69 = scmp.ne.s32.totalorder %s64, %s66
    %p70 = scmp.eq.s32.totalorder %s9, 0
    %p71 = por %p69, %p70
    %p72 = scmp.ne.s32.totalorder %s64, %s66
    %p73 = scmp.eq.s32.totalorder %s14, 4
    %p74 = por %p72, %p73
    %p75 = scmp.ne.s32.totalorder %s66, %s67
    %p76 = scmp.eq.s32.totalorder %s14, 0
    %p77 = por %p75, %p76
    %p78 = scmp.ne.s32.totalorder %s66, %s67
    %p79 = scmp.eq.s32.totalorder %s15, 4
    %p80 = por %p78, %p79
    %p82 = scmp.ne.s32.totalorder %s67, %s81
    %p83 = scmp.eq.s32.totalorder %s15, 0
    %p84 = por %p82, %p83
    %s85 = ssub.s32 %s9, %s16
    %p86 = scmp.eq.s32.totalorder %s85, 0
    %s88 = sadd.s32 %s87, 1
    %s89 = scalar_select %p86, %s87, %s88
    %p92 = pneg %p86
    %p93 = scmp.eq.s32.totalorder %s9, 4
    %p94 = por %p92, %p93
    %p95 = scmp.ne.s32.totalorder %s87, %s90
    %p96 = scmp.eq.s32.totalorder %s9, 0
    %p97 = por %p95, %p96
    %p98 = scmp.ne.s32.totalorder %s87, %s90
    %p99 = scmp.eq.s32.totalorder %s14, 4
    %p100 = por %p98, %p99
    %p101 = scmp.ne.s32.totalorder %s90, %s91
    %p102 = scmp.eq.s32.totalorder %s14, 0
    %p103 = por %p101, %p102
    %p104 = scmp.ne.s32.totalorder %s90, %s91
    %p105 = scmp.eq.s32.totalorder %s15, 4
    %p106 = por %p104, %p105
    %p108 = scmp.ne.s32.totalorder %s91, %s107
    %p109 = scmp.eq.s32.totalorder %s15, 0
    %p110 = por %p108, %p109
    %p111 = scmp.le.s32.totalorder 1, %s9
    %p112 = scmp.lt.s32.totalorder %s9, 6
    %p113 = pnand %p111, %p112
    %p114 = pneg %p113
    // Predicated region
    $region9: #{_lambda_.10} parent=5 // pred_check
      _
    $region10: #{_lambda_.10} parent=5 // pred_check_branch
      %116 = sbr.rel (%p113) target = $region12
    $region11: #{_lambda_.10} parent=5 // pred_region
      %s117 = ssub.s32 %s9, 1
      // Predicated region
      $region13: #{_lambda_.10} parent=11 // pred_check
        %p118 = pneg %p56
      $region14: #{_lambda_.10} parent=11 // pred_check_branch
        %120 = sbr.rel (%p118) target = $region16
      $region15: #{_lambda_.10} parent=11 // pred_region
        _
      $region16: #{_lambda_.10} parent=11 // pred_fallthru
        _
      // Predicated region
      $region17: #{_lambda_.10} parent=11 // pred_check
        %p121 = pneg %p77
      $region18: #{_lambda_.10} parent=11 // pred_check_branch
        %123 = sbr.rel (%p121) target = $region20
      $region19: #{_lambda_.10} parent=11 // pred_region
        _
      $region20: #{_lambda_.10} parent=11 // pred_fallthru
        _
    $region12: #{_lambda_.10} parent=5 // pred_fallthru
      _
    %p124 = scmp.lt.s32.totalorder %s9, 5
    // Predicated region
    $region21: #{_lambda_.10} parent=5 // pred_check
      %p125 = pneg %p124
    $region22: #{_lambda_.10} parent=5 // pred_check_branch
      %127 = sbr.rel (%p125) target = $region24
    $region23: #{_lambda_.10} parent=5 // pred_region
      // Predicated region
      $region25: #{_lambda_.10} parent=23 // pred_check
        %p128 = pneg %p29
      $region26: #{_lambda_.10} parent=23 // pred_check_branch
        %130 = sbr.rel (%p128) target = $region28
      $region27: #{_lambda_.10} parent=23 // pred_region
        %s131 = smul.u32 32, %s9
        %p132 = scmp.lt.s32.totalorder %s131, 159
        %s133 = scalar_select %p132, %s131, 159
        %s134 = smul.addr %s133, 2
        %s135 = smul.addr %s134, 4
        %s136 = scalar_lea.vmem %s0, %s135
        %s137 = smul.u32 32, %s9
      $region28: #{_lambda_.10} parent=23 // pred_fallthru
        _
    $region24: #{_lambda_.10} parent=5 // pred_fallthru
      _
    %p138 = scmp.le.s32.totalorder 1, %s9
    %p139 = scmp.lt.s32.totalorder %s9, 6
    %p140 = pnand %p138, %p139
    %p141 = pneg %p140
    // Predicated region
    $region29: #{_lambda_.10} parent=5 // pred_check
      _
    $region30: #{_lambda_.10} parent=5 // pred_check_branch
      %143 = sbr.rel (%p140) target = $region32
    $region31: #{_lambda_.10} parent=5 // pred_region
      %s144 = ssub.s32 %s9, 1
      %s145 = smul.u32 32, %s14
      %p146 = scmp.lt.s32.totalorder %s145, 159
      %s147 = scalar_select %p146, %s145, 159
      %s148 = smul.addr %s147, 2
      %s149 = smul.addr %s148, 4
      %s150 = scalar_lea.vmem %s0, %s149
      %p151 = pneg %p35
      %p152 = pneg %p32
      %p153 = pneg %p56
      %p154 = pneg %p53
      %p155 = pneg %p77
      %p156 = pneg %p74
      %p157 = pneg %p103
      %p158 = pneg %p100
      %s159 = smul.u32 32, %s14
      %p160 = scmp.lt.s32.totalorder %s159, 159
      %s161 = scalar_select %p160, %s159, 159
      %s162 = smul.addr %s161, 8
      %s163 = scalar_lea.vmem %s3, %s162
      %s164 = smul.u32 32, %s14
      %p165 = scmp.lt.s32.totalorder %s164, 159
      %s166 = scalar_select %p165, %s164, 159
      %s167 = smul.addr %s166, 2
      %s168 = smul.addr %s167, 4
      %s169 = scalar_lea.vmem %s0, %s168
      %s170 = smul.u32 32, %s14
      %s171 = smul.u32 32, %s14
      %p172 = scmp.lt.s32.totalorder %s171, 159
      %s173 = scalar_select %p172, %s171, 159
      %s174 = smul.addr %s173, 8
      %s175 = scalar_lea.vmem %s3, %s174
      %s176 = smul.u32 32, %s14
      %v177 = vld [vmem:[%s169] sm:$0xff]
      %v178 = vld [vmem:[%s169 + $0x8] sm:$0xff]
      %v179 = vld [vmem:[%s169 + $0x10] sm:$0xff]
      %v180 = vld [vmem:[%s169 + $0x18] sm:$0xff]
      %v181 = vld [vmem:[%s169 + $0x20] sm:$0xff]
      %v182 = vld [vmem:[%s169 + $0x28] sm:$0xff]
      %v183 = vld [vmem:[%s169 + $0x30] sm:$0xff]
      %v184 = vld [vmem:[%s169 + $0x38] sm:$0xff]
      %v185 = vld [vmem:[%s169 + $0x40] sm:$0xff]
      %v186 = vld [vmem:[%s169 + $0x48] sm:$0xff]
      %v187 = vld [vmem:[%s169 + $0x50] sm:$0xff]
      %v188 = vld [vmem:[%s169 + $0x58] sm:$0xff]
      %v189 = vld [vmem:[%s169 + $0x60] sm:$0xff]
      %v190 = vld [vmem:[%s169 + $0x68] sm:$0xff]
      %v191 = vld [vmem:[%s169 + $0x70] sm:$0xff]
      %v192 = vld [vmem:[%s169 + $0x78] sm:$0xff]
      %v193 = vld [vmem:[%s169 + $0x80] sm:$0xff]
      %v194 = vld [vmem:[%s169 + $0x88] sm:$0xff]
      %v195 = vld [vmem:[%s169 + $0x90] sm:$0xff]
      %v196 = vld [vmem:[%s169 + $0x98] sm:$0xff]
      %v197 = vld [vmem:[%s169 + $0xa0] sm:$0xff]
      %v198 = vld [vmem:[%s169 + $0xa8] sm:$0xff]
      %v199 = vld [vmem:[%s169 + $0xb0] sm:$0xff]
      %v200 = vld [vmem:[%s169 + $0xb8] sm:$0xff]
      %v201 = vld [vmem:[%s169 + $0xc0] sm:$0xff]
      %v202 = vld [vmem:[%s169 + $0xc8] sm:$0xff]
      %v203 = vld [vmem:[%s169 + $0xd0] sm:$0xff]
      %v204 = vld [vmem:[%s169 + $0xd8] sm:$0xff]
      %v205 = vld [vmem:[%s169 + $0xe0] sm:$0xff]
      %v206 = vld [vmem:[%s169 + $0xe8] sm:$0xff]
      %v207 = vld [vmem:[%s169 + $0xf0] sm:$0xff]
      %v208 = vld [vmem:[%s169 + $0xf8] sm:$0xff]
      %v209 = vld [vmem:[%s1] sm:$0xf]
      %v210 = vld [vmem:[%s1 + $0x4] sm:$0xf]
      %v211 = vld [vmem:[%s1 + $0x8] sm:$0xf]
      %v212 = vld [vmem:[%s1 + $0xc] sm:$0xf]
      %v213 = vld [vmem:[%s1 + $0x10] sm:$0xf]
      %v214 = vld [vmem:[%s1 + $0x14] sm:$0xf]
      %v215 = vld [vmem:[%s1 + $0x18] sm:$0xf]
      %v216 = vld [vmem:[%s1 + $0x1c] sm:$0xf]
      %v217 = vld [vmem:[%s1 + $0x20] sm:$0xf]
      %v218 = vld [vmem:[%s1 + $0x24] sm:$0xf]
      %v219 = vld [vmem:[%s1 + $0x28] sm:$0xf]
      %v220 = vld [vmem:[%s1 + $0x2c] sm:$0xf]
      %v221 = vld [vmem:[%s1 + $0x30] sm:$0xf]
      %v222 = vld [vmem:[%s1 + $0x34] sm:$0xf]
      %v223 = vld [vmem:[%s1 + $0x38] sm:$0xf]
      %v224 = vld [vmem:[%s1 + $0x3c] sm:$0xf]
      %v225 = vld [vmem:[%s1 + $0x40] sm:$0xf]
      %v226 = vld [vmem:[%s1 + $0x44] sm:$0xf]
      %v227 = vld [vmem:[%s1 + $0x48] sm:$0xf]
      %v228 = vld [vmem:[%s1 + $0x4c] sm:$0xf]
      %v229 = vld [vmem:[%s1 + $0x50] sm:$0xf]
      %v230 = vld [vmem:[%s1 + $0x54] sm:$0xf]
      %v231 = vld [vmem:[%s1 + $0x58] sm:$0xf]
      %v232 = vld [vmem:[%s1 + $0x5c] sm:$0xf]
      %v233 = vld [vmem:[%s1 + $0x60] sm:$0xf]
      %v234 = vld [vmem:[%s1 + $0x64] sm:$0xf]
      %v235 = vld [vmem:[%s1 + $0x68] sm:$0xf]
      %v236 = vld [vmem:[%s1 + $0x6c] sm:$0xf]
      %v237 = vld [vmem:[%s1 + $0x70] sm:$0xf]
      %v238 = vld [vmem:[%s1 + $0x74] sm:$0xf]
      %v239 = vld [vmem:[%s1 + $0x78] sm:$0xf]
      %v240 = vld [vmem:[%s1 + $0x7c] sm:$0xf]
      %v241 = vld [vmem:[%s2] sm:$0x1]
      %v243 = vperm.slane %v241, 0
      %v277 = vunpack.c.l.b16 %v177
      %v278 = vunpack.c.h.b16 %v177
      %v279 = vunpack.c.l.b16 %v178
      %v280 = vunpack.c.h.b16 %v178
      %v281 = vunpack.c.l.b16 %v179
      %v282 = vunpack.c.h.b16 %v179
      %v283 = vunpack.c.l.b16 %v180
      %v284 = vunpack.c.h.b16 %v180
      %v285 = vunpack.c.l.b16 %v181
      %v286 = vunpack.c.h.b16 %v181
      %v287 = vunpack.c.l.b16 %v182
      %v288 = vunpack.c.h.b16 %v182
      %v289 = vunpack.c.l.b16 %v183
      %v290 = vunpack.c.h.b16 %v183
      %v291 = vunpack.c.l.b16 %v184
      %v292 = vunpack.c.h.b16 %v184
      %v293 = vunpack.c.l.b16 %v185
      %v294 = vunpack.c.h.b16 %v185
      %v295 = vunpack.c.l.b16 %v186
      %v296 = vunpack.c.h.b16 %v186
      %v297 = vunpack.c.l.b16 %v187
      %v298 = vunpack.c.h.b16 %v187
      %v299 = vunpack.c.l.b16 %v188
      %v300 = vunpack.c.h.b16 %v188
      %v301 = vunpack.c.l.b16 %v189
      %v302 = vunpack.c.h.b16 %v189
      %v303 = vunpack.c.l.b16 %v190
      %v304 = vunpack.c.h.b16 %v190
      %v305 = vunpack.c.l.b16 %v191
      %v306 = vunpack.c.h.b16 %v191
      %v307 = vunpack.c.l.b16 %v192
      %v308 = vunpack.c.h.b16 %v192
      %v309 = vunpack.c.l.b16 %v193
      %v310 = vunpack.c.h.b16 %v193
      %v311 = vunpack.c.l.b16 %v194
      %v312 = vunpack.c.h.b16 %v194
      %v313 = vunpack.c.l.b16 %v195
      %v314 = vunpack.c.h.b16 %v195
      %v315 = vunpack.c.l.b16 %v196
      %v316 = vunpack.c.h.b16 %v196
      %v317 = vunpack.c.l.b16 %v197
      %v318 = vunpack.c.h.b16 %v197
      %v319 = vunpack.c.l.b16 %v198
      %v320 = vunpack.c.h.b16 %v198
      %v321 = vunpack.c.l.b16 %v199
      %v322 = vunpack.c.h.b16 %v199
      %v323 = vunpack.c.l.b16 %v200
      %v324 = vunpack.c.h.b16 %v200
      %v325 = vunpack.c.l.b16 %v201
      %v326 = vunpack.c.h.b16 %v201
      %v327 = vunpack.c.l.b16 %v202
      %v328 = vunpack.c.h.b16 %v202
      %v329 = vunpack.c.l.b16 %v203
      %v330 = vunpack.c.h.b16 %v203
      %v331 = vunpack.c.l.b16 %v204
      %v332 = vunpack.c.h.b16 %v204
      %v333 = vunpack.c.l.b16 %v205
      %v334 = vunpack.c.h.b16 %v205
      %v335 = vunpack.c.l.b16 %v206
      %v336 = vunpack.c.h.b16 %v206
      %v337 = vunpack.c.l.b16 %v207
      %v338 = vunpack.c.h.b16 %v207
      %v339 = vunpack.c.l.b16 %v208
      %v340 = vunpack.c.h.b16 %v208
      %v341 = vpack.c.b16 %v279, %v277
      %v342 = vpack.c.b16 %v280, %v278
      %v343 = vpack.c.b16 %v283, %v281
      %v344 = vpack.c.b16 %v284, %v282
      %v345 = vpack.c.b16 %v287, %v285
      %v346 = vpack.c.b16 %v288, %v286
      %v347 = vpack.c.b16 %v291, %v289
      %v348 = vpack.c.b16 %v292, %v290
      %v349 = vpack.c.b16 %v295, %v293
      %v350 = vpack.c.b16 %v296, %v294
      %v351 = vpack.c.b16 %v299, %v297
      %v352 = vpack.c.b16 %v300, %v298
      %v353 = vpack.c.b16 %v303, %v301
      %v354 = vpack.c.b16 %v304, %v302
      %v355 = vpack.c.b16 %v307, %v305
      %v356 = vpack.c.b16 %v308, %v306
      %v357 = vpack.c.b16 %v311, %v309
      %v358 = vpack.c.b16 %v312, %v310
      %v359 = vpack.c.b16 %v315, %v313
      %v360 = vpack.c.b16 %v316, %v314
      %v361 = vpack.c.b16 %v319, %v317
      %v362 = vpack.c.b16 %v320, %v318
      %v363 = vpack.c.b16 %v323, %v321
      %v364 = vpack.c.b16 %v324, %v322
      %v365 = vpack.c.b16 %v327, %v325
      %v366 = vpack.c.b16 %v328, %v326
      %v367 = vpack.c.b16 %v331, %v329
      %v368 = vpack.c.b16 %v332, %v330
      %v369 = vpack.c.b16 %v335, %v333
      %v370 = vpack.c.b16 %v336, %v334
      %v371 = vpack.c.b16 %v339, %v337
      %v372 = vpack.c.b16 %v340, %v338
      %v437 = vunpack.c.l.b16 %v209
      %v438 = vunpack.c.l.b16 %v210
      %v439 = vunpack.c.l.b16 %v211
      %v440 = vunpack.c.l.b16 %v212
      %v441 = vunpack.c.l.b16 %v213
      %v442 = vunpack.c.l.b16 %v214
      %v443 = vunpack.c.l.b16 %v215
      %v444 = vunpack.c.l.b16 %v216
      %v445 = vunpack.c.l.b16 %v217
      %v446 = vunpack.c.l.b16 %v218
      %v447 = vunpack.c.l.b16 %v219
      %v448 = vunpack.c.l.b16 %v220
      %v449 = vunpack.c.l.b16 %v221
      %v450 = vunpack.c.l.b16 %v222
      %v451 = vunpack.c.l.b16 %v223
      %v452 = vunpack.c.l.b16 %v224
      %v453 = vunpack.c.l.b16 %v225
      %v454 = vunpack.c.l.b16 %v226
      %v455 = vunpack.c.l.b16 %v227
      %v456 = vunpack.c.l.b16 %v228
      %v457 = vunpack.c.l.b16 %v229
      %v458 = vunpack.c.l.b16 %v230
      %v459 = vunpack.c.l.b16 %v231
      %v460 = vunpack.c.l.b16 %v232
      %v461 = vunpack.c.l.b16 %v233
      %v462 = vunpack.c.l.b16 %v234
      %v463 = vunpack.c.l.b16 %v235
      %v464 = vunpack.c.l.b16 %v236
      %v465 = vunpack.c.l.b16 %v237
      %v466 = vunpack.c.l.b16 %v238
      %v467 = vunpack.c.l.b16 %v239
      %v468 = vunpack.c.l.b16 %v240
      %v469 = vpack.c.b16 %v438, %v437
      %v470 = vpack.c.b16 %v440, %v439
      %v471 = vpack.c.b16 %v442, %v441
      %v472 = vpack.c.b16 %v444, %v443
      %v473 = vpack.c.b16 %v446, %v445
      %v474 = vpack.c.b16 %v448, %v447
      %v475 = vpack.c.b16 %v450, %v449
      %v476 = vpack.c.b16 %v452, %v451
      %v477 = vpack.c.b16 %v454, %v453
      %v478 = vpack.c.b16 %v456, %v455
      %v479 = vpack.c.b16 %v458, %v457
      %v480 = vpack.c.b16 %v460, %v459
      %v481 = vpack.c.b16 %v462, %v461
      %v482 = vpack.c.b16 %v464, %v463
      %v483 = vpack.c.b16 %v466, %v465
      %v484 = vpack.c.b16 %v468, %v467
      %501 = vmatpush.bf16.msra.mxu0 %v476
      %502 = vmatpush.bf16.msra.mxu0 %v475
      %503 = vmatpush.bf16.msra.mxu0 %v474
      %504 = vmatpush.bf16.msra.mxu0 %v473
      %505 = vmatpush.bf16.msra.mxu0 %v472
      %506 = vmatpush.bf16.msra.mxu0 %v471
      %507 = vmatpush.bf16.msra.mxu0 %v470
      %508 = vmatpush.bf16.msra.mxu0 %v469
      %509 = vmatmul.bf16.gmra.mxu0 %v341
      %v510 = vpop.f32.mrf.mxu0
      %v511 = vadd.f32 %v243, %v510
      %v512 = vpop.f32.mrf.mxu0
      %v513 = vadd.f32 %v243, %v512
      %514 = vmatmul.bf16.gmra.mxu0 %v343
      %v515 = vpop.f32.mrf.mxu0
      %v516 = vadd.f32 %v243, %v515
      %v517 = vpop.f32.mrf.mxu0
      %v518 = vadd.f32 %v243, %v517
      %519 = vmatmul.bf16.gmra.mxu0 %v345
      %v520 = vpop.f32.mrf.mxu0
      %v521 = vadd.f32 %v243, %v520
      %v522 = vpop.f32.mrf.mxu0
      %v523 = vadd.f32 %v243, %v522
      %524 = vmatmul.bf16.gmra.mxu0 %v347
      %v525 = vpop.f32.mrf.mxu0
      %v526 = vadd.f32 %v243, %v525
      %v527 = vpop.f32.mrf.mxu0
      %v528 = vadd.f32 %v243, %v527
      %529 = vmatmul.bf16.gmra.mxu0 %v349
      %v530 = vpop.f32.mrf.mxu0
      %v531 = vadd.f32 %v243, %v530
      %v532 = vpop.f32.mrf.mxu0
      %v533 = vadd.f32 %v243, %v532
      %534 = vmatmul.bf16.gmra.mxu0 %v351
      %v535 = vpop.f32.mrf.mxu0
      %v536 = vadd.f32 %v243, %v535
      %v537 = vpop.f32.mrf.mxu0
      %v538 = vadd.f32 %v243, %v537
      %539 = vmatmul.bf16.gmra.mxu0 %v353
      %v540 = vpop.f32.mrf.mxu0
      %v541 = vadd.f32 %v243, %v540
      %v542 = vpop.f32.mrf.mxu0
      %v543 = vadd.f32 %v243, %v542
      %544 = vmatmul.bf16.gmra.mxu0 %v355
      %v545 = vpop.f32.mrf.mxu0
      %v546 = vadd.f32 %v243, %v545
      %v547 = vpop.f32.mrf.mxu0
      %v548 = vadd.f32 %v243, %v547
      %549 = vmatmul.bf16.gmra.mxu0 %v357
      %v550 = vpop.f32.mrf.mxu0
      %v551 = vadd.f32 %v243, %v550
      %v552 = vpop.f32.mrf.mxu0
      %v553 = vadd.f32 %v243, %v552
      %554 = vmatmul.bf16.gmra.mxu0 %v359
      %v555 = vpop.f32.mrf.mxu0
      %v556 = vadd.f32 %v243, %v555
      %v557 = vpop.f32.mrf.mxu0
      %v558 = vadd.f32 %v243, %v557
      %559 = vmatmul.bf16.gmra.mxu0 %v361
      %v560 = vpop.f32.mrf.mxu0
      %v561 = vadd.f32 %v243, %v560
      %v562 = vpop.f32.mrf.mxu0
      %v563 = vadd.f32 %v243, %v562
      %564 = vmatmul.bf16.gmra.mxu0 %v363
      %v565 = vpop.f32.mrf.mxu0
      %v566 = vadd.f32 %v243, %v565
      %v567 = vpop.f32.mrf.mxu0
      %v568 = vadd.f32 %v243, %v567
      %569 = vmatmul.bf16.gmra.mxu0 %v365
      %v570 = vpop.f32.mrf.mxu0
      %v571 = vadd.f32 %v243, %v570
      %v572 = vpop.f32.mrf.mxu0
      %v573 = vadd.f32 %v243, %v572
      %574 = vmatmul.bf16.gmra.mxu0 %v367
      %v575 = vpop.f32.mrf.mxu0
      %v576 = vadd.f32 %v243, %v575
      %v577 = vpop.f32.mrf.mxu0
      %v578 = vadd.f32 %v243, %v577
      %579 = vmatmul.bf16.gmra.mxu0 %v369
      %v580 = vpop.f32.mrf.mxu0
      %v581 = vadd.f32 %v243, %v580
      %v582 = vpop.f32.mrf.mxu0
      %v583 = vadd.f32 %v243, %v582
      %584 = vmatmul.bf16.gmra.mxu0 %v371
      %v585 = vpop.f32.mrf.mxu0
      %v586 = vadd.f32 %v243, %v585
      %v587 = vpop.f32.mrf.mxu0
      %v588 = vadd.f32 %v243, %v587
      %589 = vdwg.mxu0
      %590 = vmatpush.bf16.msra.mxu0 %v484
      %591 = vmatpush.bf16.msra.mxu0 %v483
      %592 = vmatpush.bf16.msra.mxu0 %v482
      %593 = vmatpush.bf16.msra.mxu0 %v481
      %594 = vmatpush.bf16.msra.mxu0 %v480
      %595 = vmatpush.bf16.msra.mxu0 %v479
      %596 = vmatpush.bf16.msra.mxu0 %v478
      %597 = vmatpush.bf16.msra.mxu0 %v477
      %598 = vmatmul.bf16.gmra.mxu0 %v342
      %v599 = vpop.f32.mrf.mxu0
      %v600 = vadd.f32 %v511, %v599
      %v601 = vpop.f32.mrf.mxu0
      %v602 = vadd.f32 %v513, %v601
      %603 = vmatmul.bf16.gmra.mxu0 %v344
      %v604 = vpop.f32.mrf.mxu0
      %v605 = vadd.f32 %v516, %v604
      %v606 = vpop.f32.mrf.mxu0
      %v607 = vadd.f32 %v518, %v606
      %608 = vmatmul.bf16.gmra.mxu0 %v346
      %v609 = vpop.f32.mrf.mxu0
      %v610 = vadd.f32 %v521, %v609
      %v611 = vpop.f32.mrf.mxu0
      %v612 = vadd.f32 %v523, %v611
      %613 = vmatmul.bf16.gmra.mxu0 %v348
      %v614 = vpop.f32.mrf.mxu0
      %v615 = vadd.f32 %v526, %v614
      %v616 = vpop.f32.mrf.mxu0
      %v617 = vadd.f32 %v528, %v616
      %618 = vmatmul.bf16.gmra.mxu0 %v350
      %v619 = vpop.f32.mrf.mxu0
      %v620 = vadd.f32 %v531, %v619
      %v621 = vpop.f32.mrf.mxu0
      %v622 = vadd.f32 %v533, %v621
      %623 = vmatmul.bf16.gmra.mxu0 %v352
      %v624 = vpop.f32.mrf.mxu0
      %v625 = vadd.f32 %v536, %v624
      %v626 = vpop.f32.mrf.mxu0
      %v627 = vadd.f32 %v538, %v626
      %628 = vmatmul.bf16.gmra.mxu0 %v354
      %v629 = vpop.f32.mrf.mxu0
      %v630 = vadd.f32 %v541, %v629
      %v631 = vpop.f32.mrf.mxu0
      %v632 = vadd.f32 %v543, %v631
      %633 = vmatmul.bf16.gmra.mxu0 %v356
      %v634 = vpop.f32.mrf.mxu0
      %v635 = vadd.f32 %v546, %v634
      %v636 = vpop.f32.mrf.mxu0
      %v637 = vadd.f32 %v548, %v636
      %638 = vmatmul.bf16.gmra.mxu0 %v358
      %v639 = vpop.f32.mrf.mxu0
      %v640 = vadd.f32 %v551, %v639
      %v641 = vpop.f32.mrf.mxu0
      %v642 = vadd.f32 %v553, %v641
      %643 = vmatmul.bf16.gmra.mxu0 %v360
      %v644 = vpop.f32.mrf.mxu0
      %v645 = vadd.f32 %v556, %v644
      %v646 = vpop.f32.mrf.mxu0
      %v647 = vadd.f32 %v558, %v646
      %648 = vmatmul.bf16.gmra.mxu0 %v362
      %v649 = vpop.f32.mrf.mxu0
      %v650 = vadd.f32 %v561, %v649
      %v651 = vpop.f32.mrf.mxu0
      %v652 = vadd.f32 %v563, %v651
      %653 = vmatmul.bf16.gmra.mxu0 %v364
      %v654 = vpop.f32.mrf.mxu0
      %v655 = vadd.f32 %v566, %v654
      %v656 = vpop.f32.mrf.mxu0
      %v657 = vadd.f32 %v568, %v656
      %658 = vmatmul.bf16.gmra.mxu0 %v366
      %v659 = vpop.f32.mrf.mxu0
      %v660 = vadd.f32 %v571, %v659
      %v661 = vpop.f32.mrf.mxu0
      %v662 = vadd.f32 %v573, %v661
      %663 = vmatmul.bf16.gmra.mxu0 %v368
      %v664 = vpop.f32.mrf.mxu0
      %v665 = vadd.f32 %v576, %v664
      %v666 = vpop.f32.mrf.mxu0
      %v667 = vadd.f32 %v578, %v666
      %668 = vmatmul.bf16.gmra.mxu0 %v370
      %v669 = vpop.f32.mrf.mxu0
      %v670 = vadd.f32 %v581, %v669
      %v671 = vpop.f32.mrf.mxu0
      %v672 = vadd.f32 %v583, %v671
      %673 = vmatmul.bf16.gmra.mxu0 %v372
      %v674 = vpop.f32.mrf.mxu0
      %v675 = vadd.f32 %v586, %v674
      %v676 = vpop.f32.mrf.mxu0
      %v677 = vadd.f32 %v588, %v676
      %678 = vdwg.mxu0
      %v679 = vmax.f32 %v600, 0.0
      %v680 = vmax.f32 %v602, 0.0
      %v681 = vmax.f32 %v605, 0.0
      %v682 = vmax.f32 %v607, 0.0
      %v683 = vmax.f32 %v610, 0.0
      %v684 = vmax.f32 %v612, 0.0
      %v685 = vmax.f32 %v615, 0.0
      %v686 = vmax.f32 %v617, 0.0
      %v687 = vmax.f32 %v620, 0.0
      %v688 = vmax.f32 %v622, 0.0
      %v689 = vmax.f32 %v625, 0.0
      %v690 = vmax.f32 %v627, 0.0
      %v691 = vmax.f32 %v630, 0.0
      %v692 = vmax.f32 %v632, 0.0
      %v693 = vmax.f32 %v635, 0.0
      %v694 = vmax.f32 %v637, 0.0
      %v695 = vmax.f32 %v640, 0.0
      %v696 = vmax.f32 %v642, 0.0
      %v697 = vmax.f32 %v645, 0.0
      %v698 = vmax.f32 %v647, 0.0
      %v699 = vmax.f32 %v650, 0.0
      %v700 = vmax.f32 %v652, 0.0
      %v701 = vmax.f32 %v655, 0.0
      %v702 = vmax.f32 %v657, 0.0
      %v703 = vmax.f32 %v660, 0.0
      %v704 = vmax.f32 %v662, 0.0
      %v705 = vmax.f32 %v665, 0.0
      %v706 = vmax.f32 %v667, 0.0
      %v707 = vmax.f32 %v670, 0.0
      %v708 = vmax.f32 %v672, 0.0
      %v709 = vmax.f32 %v675, 0.0
      %v710 = vmax.f32 %v677, 0.0
      %711 = vst [vmem:[%s175] sm:$0xff] %v679
      %712 = vst [vmem:[%s175 + $0x8] sm:$0xff] %v680
      %713 = vst [vmem:[%s175 + $0x10] sm:$0xff] %v681
      %714 = vst [vmem:[%s175 + $0x18] sm:$0xff] %v682
      %715 = vst [vmem:[%s175 + $0x20] sm:$0xff] %v683
      %716 = vst [vmem:[%s175 + $0x28] sm:$0xff] %v684
      %717 = vst [vmem:[%s175 + $0x30] sm:$0xff] %v685
      %718 = vst [vmem:[%s175 + $0x38] sm:$0xff] %v686
      %719 = vst [vmem:[%s175 + $0x40] sm:$0xff] %v687
      %720 = vst [vmem:[%s175 + $0x48] sm:$0xff] %v688
      %721 = vst [vmem:[%s175 + $0x50] sm:$0xff] %v689
      %722 = vst [vmem:[%s175 + $0x58] sm:$0xff] %v690
      %723 = vst [vmem:[%s175 + $0x60] sm:$0xff] %v691
      %724 = vst [vmem:[%s175 + $0x68] sm:$0xff] %v692
      %725 = vst [vmem:[%s175 + $0x70] sm:$0xff] %v693
      %726 = vst [vmem:[%s175 + $0x78] sm:$0xff] %v694
      %727 = vst [vmem:[%s175 + $0x80] sm:$0xff] %v695
      %728 = vst [vmem:[%s175 + $0x88] sm:$0xff] %v696
      %729 = vst [vmem:[%s175 + $0x90] sm:$0xff] %v697
      %730 = vst [vmem:[%s175 + $0x98] sm:$0xff] %v698
      %731 = vst [vmem:[%s175 + $0xa0] sm:$0xff] %v699
      %732 = vst [vmem:[%s175 + $0xa8] sm:$0xff] %v700
      %733 = vst [vmem:[%s175 + $0xb0] sm:$0xff] %v701
      %734 = vst [vmem:[%s175 + $0xb8] sm:$0xff] %v702
      %735 = vst [vmem:[%s175 + $0xc0] sm:$0xff] %v703
      %736 = vst [vmem:[%s175 + $0xc8] sm:$0xff] %v704
      %737 = vst [vmem:[%s175 + $0xd0] sm:$0xff] %v705
      %738 = vst [vmem:[%s175 + $0xd8] sm:$0xff] %v706
      %739 = vst [vmem:[%s175 + $0xe0] sm:$0xff] %v707
      %740 = vst [vmem:[%s175 + $0xe8] sm:$0xff] %v708
      %741 = vst [vmem:[%s175 + $0xf0] sm:$0xff] %v709
      %742 = vst [vmem:[%s175 + $0xf8] sm:$0xff] %v710
      %s743 = smul.u32 32, %s14
      %p744 = scmp.lt.s32.totalorder %s743, 159
      %s745 = scalar_select %p744, %s743, 159
      %s746 = smul.addr %s745, 8
      %s747 = scalar_lea.vmem %s3, %s746
      // Predicated region
      $region33: #{_lambda_.10} parent=31 // pred_check
        %p748 = pneg %p100
      $region34: #{_lambda_.10} parent=31 // pred_check_branch
        %750 = sbr.rel (%p748) target = $region36
      $region35: #{_lambda_.10} parent=31 // pred_region
        %s751 = smul.u32 32, %s14
      $region36: #{_lambda_.10} parent=31 // pred_fallthru
        _
    $region32: #{_lambda_.10} parent=5 // pred_fallthru
      _
    %p752 = scmp.le.s32.totalorder 2, %s9
    // Predicated region
    $region37: #{_lambda_.10} parent=5 // pred_check
      %p753 = pneg %p752
    $region38: #{_lambda_.10} parent=5 // pred_check_branch
      %755 = sbr.rel (%p753) target = $region40
    $region39: #{_lambda_.10} parent=5 // pred_region
      %s756 = ssub.s32 %s9, 2
      // Predicated region
      $region41: #{_lambda_.10} parent=39 // pred_check
        %p757 = pneg %p106
      $region42: #{_lambda_.10} parent=39 // pred_check_branch
        %759 = sbr.rel (%p757) target = $region44
      $region43: #{_lambda_.10} parent=39 // pred_region
        %s760 = smul.u32 32, %s15
        %p761 = scmp.lt.s32.totalorder %s760, 159
        %s762 = scalar_select %p761, %s760, 159
        %s763 = smul.addr %s762, 8
        %s764 = scalar_lea.vmem %s3, %s763
      $region44: #{_lambda_.10} parent=39 // pred_fallthru
        _
    $region40: #{_lambda_.10} parent=5 // pred_fallthru
      _
  $region6: #{_lambda_.10} parent=0 // loop_footer
    %s13 = sadd.s32 1, %s9
  $region7: #{_lambda_.10} parent=0 // loop_footer_branch
    %8 = sbr.rel target = $region3
  $region8: #{_lambda_.10} parent=0 // loop_exit
    _

// kernel: _lambda_.11
$region0: #{_lambda_.11}
  #allocation0 [shape = 'u32[]', space=smem, size = 0x4, offset = 0x4, fixed_abs, tag = 'smem constant byte address 0x4 - core index']
  #allocation1 [shape = 'u32[72,128]{1,0:T(1,128)}', space=vmem, size = 0x9000, scoped, tag = 'internal scratch']
  %s0 = inlined_call_operand.vmem [shape: bf16[224,512], index: 0, kind: input, shape index: {}]
  %s1 = inlined_call_operand.vmem [shape: bf16[512,128], index: 1, kind: input, shape index: {}]
  %s2 = inlined_call_operand.vmem [shape: f32[1,128], index: 2, kind: input, shape index: {}]
  %s3 = inlined_call_operand.vmem [shape: f32[224,128], index: 3, kind: output, shape index: {}]
  %s4 = sld [smem:[#allocation0]]
  $region22: #{_lambda_.11} parent=0
    _
  %s6 = ssub.s32 1, %s4
  %s7 = scalar_select 0, %s6, %s4
  // Predicated region
  $region2: #{_lambda_.11} parent=0 // pred_check
    _
  $region3: #{_lambda_.11} parent=0 // pred_check_branch
    %9 = sbr.rel (0) target = $region5
  $region4: #{_lambda_.11} parent=0 // pred_region
    _
  $region5: #{_lambda_.11} parent=0 // pred_fallthru
    _
  // Predicated region
  $region6: #{_lambda_.11} parent=0 // pred_check
    _
  $region7: #{_lambda_.11} parent=0 // pred_check_branch
    %11 = sbr.rel (0) target = $region9
  $region8: #{_lambda_.11} parent=0 // pred_region
    _
  $region9: #{_lambda_.11} parent=0 // pred_fallthru
    _
  // Predicated region
  $region10: #{_lambda_.11} parent=0 // pred_check
    _
  $region11: #{_lambda_.11} parent=0 // pred_check_branch
    %13 = sbr.rel (0) target = $region13
  $region12: #{_lambda_.11} parent=0 // pred_region
    _
  $region13: #{_lambda_.11} parent=0 // pred_fallthru
    _
  %v14 = vld [vmem:[%s0] sm:$0xff]
  %v15 = vld [vmem:[%s0 + $0x8] sm:$0xff]
  %v16 = vld [vmem:[%s0 + $0x10] sm:$0xff]
  %v17 = vld [vmem:[%s0 + $0x18] sm:$0xff]
  %v18 = vld [vmem:[%s0 + $0x20] sm:$0xff]
  %v19 = vld [vmem:[%s0 + $0x28] sm:$0xff]
  %v20 = vld [vmem:[%s0 + $0x30] sm:$0xff]
  %v21 = vld [vmem:[%s0 + $0x38] sm:$0xff]
  %v22 = vld [vmem:[%s0 + $0x40] sm:$0xff]
  %v23 = vld [vmem:[%s0 + $0x48] sm:$0xff]
  %v24 = vld [vmem:[%s0 + $0x50] sm:$0xff]
  %v25 = vld [vmem:[%s0 + $0x58] sm:$0xff]
  %v26 = vld [vmem:[%s0 + $0x60] sm:$0xff]
  %v27 = vld [vmem:[%s0 + $0x68] sm:$0xff]
  %v28 = vld [vmem:[%s0 + $0x70] sm:$0xff]
  %v29 = vld [vmem:[%s0 + $0x78] sm:$0xff]
  %v30 = vld [vmem:[%s0 + $0x80] sm:$0xff]
  %v31 = vld [vmem:[%s0 + $0x88] sm:$0xff]
  %v32 = vld [vmem:[%s0 + $0x90] sm:$0xff]
  %v33 = vld [vmem:[%s0 + $0x98] sm:$0xff]
  %v34 = vld [vmem:[%s0 + $0xa0] sm:$0xff]
  %v35 = vld [vmem:[%s0 + $0xa8] sm:$0xff]
  %v36 = vld [vmem:[%s0 + $0xb0] sm:$0xff]
  %v37 = vld [vmem:[%s0 + $0xb8] sm:$0xff]
  %v38 = vld [vmem:[%s0 + $0xc0] sm:$0xff]
  %v39 = vld [vmem:[%s0 + $0xc8] sm:$0xff]
  %v40 = vld [vmem:[%s0 + $0xd0] sm:$0xff]
  %v41 = vld [vmem:[%s0 + $0xd8] sm:$0xff]
  %v42 = vld [vmem:[%s0 + $0xe0] sm:$0xff]
  %v43 = vld [vmem:[%s0 + $0xe8] sm:$0xff]
  %v44 = vld [vmem:[%s0 + $0xf0] sm:$0xff]
  %v45 = vld [vmem:[%s0 + $0xf8] sm:$0xff]
  %v46 = vld [vmem:[%s0 + $0x100] sm:$0xff]
  %v47 = vld [vmem:[%s0 + $0x108] sm:$0xff]
  %v48 = vld [vmem:[%s0 + $0x110] sm:$0xff]
  %v49 = vld [vmem:[%s0 + $0x118] sm:$0xff]
  %v50 = vld [vmem:[%s0 + $0x120] sm:$0xff]
  %v51 = vld [vmem:[%s0 + $0x128] sm:$0xff]
  %v52 = vld [vmem:[%s0 + $0x130] sm:$0xff]
  %v53 = vld [vmem:[%s0 + $0x138] sm:$0xff]
  %v54 = vld [vmem:[%s0 + $0x140] sm:$0xff]
  %v55 = vld [vmem:[%s0 + $0x148] sm:$0xff]
  %v56 = vld [vmem:[%s0 + $0x150] sm:$0xff]
  %v57 = vld [vmem:[%s0 + $0x158] sm:$0xff]
  %v58 = vld [vmem:[%s0 + $0x160] sm:$0xff]
  %v59 = vld [vmem:[%s0 + $0x168] sm:$0xff]
  %v60 = vld [vmem:[%s0 + $0x170] sm:$0xff]
  %v61 = vld [vmem:[%s0 + $0x178] sm:$0xff]
  %v62 = vld [vmem:[%s0 + $0x180] sm:$0xff]
  %v63 = vld [vmem:[%s0 + $0x188] sm:$0xff]
  %v64 = vld [vmem:[%s0 + $0x190] sm:$0xff]
  %v65 = vld [vmem:[%s0 + $0x198] sm:$0xff]
  %v66 = vld [vmem:[%s0 + $0x1a0] sm:$0xff]
  %v67 = vld [vmem:[%s0 + $0x1a8] sm:$0xff]
  %v68 = vld [vmem:[%s0 + $0x1b0] sm:$0xff]
  %v69 = vld [vmem:[%s0 + $0x1b8] sm:$0xff]
  %v70 = vld [vmem:[%s1] sm:$0xf]
  %v71 = vld [vmem:[%s1 + $0x4] sm:$0xf]
  %v72 = vld [vmem:[%s1 + $0x8] sm:$0xf]
  %v73 = vld [vmem:[%s1 + $0xc] sm:$0xf]
  %v74 = vld [vmem:[%s1 + $0x10] sm:$0xf]
  %v75 = vld [vmem:[%s1 + $0x14] sm:$0xf]
  %v76 = vld [vmem:[%s1 + $0x18] sm:$0xf]
  %v77 = vld [vmem:[%s1 + $0x1c] sm:$0xf]
  %v78 = vld [vmem:[%s1 + $0x20] sm:$0xf]
  %v79 = vld [vmem:[%s1 + $0x24] sm:$0xf]
  %v80 = vld [vmem:[%s1 + $0x28] sm:$0xf]
  %v81 = vld [vmem:[%s1 + $0x2c] sm:$0xf]
  %v82 = vld [vmem:[%s1 + $0x30] sm:$0xf]
  %v83 = vld [vmem:[%s1 + $0x34] sm:$0xf]
  %v84 = vld [vmem:[%s1 + $0x38] sm:$0xf]
  %v85 = vld [vmem:[%s1 + $0x3c] sm:$0xf]
  %v86 = vld [vmem:[%s1 + $0x40] sm:$0xf]
  %v87 = vld [vmem:[%s1 + $0x44] sm:$0xf]
  %v88 = vld [vmem:[%s1 + $0x48] sm:$0xf]
  %v89 = vld [vmem:[%s1 + $0x4c] sm:$0xf]
  %v90 = vld [vmem:[%s1 + $0x50] sm:$0xf]
  %v91 = vld [vmem:[%s1 + $0x54] sm:$0xf]
  %v92 = vld [vmem:[%s1 + $0x58] sm:$0xf]
  %v93 = vld [vmem:[%s1 + $0x5c] sm:$0xf]
  %v94 = vld [vmem:[%s1 + $0x60] sm:$0xf]
  %v95 = vld [vmem:[%s1 + $0x64] sm:$0xf]
  %v96 = vld [vmem:[%s1 + $0x68] sm:$0xf]
  %v97 = vld [vmem:[%s1 + $0x6c] sm:$0xf]
  %v98 = vld [vmem:[%s1 + $0x70] sm:$0xf]
  %v99 = vld [vmem:[%s1 + $0x74] sm:$0xf]
  %v100 = vld [vmem:[%s1 + $0x78] sm:$0xf]
  %v101 = vld [vmem:[%s1 + $0x7c] sm:$0xf]
  %v102 = vld [vmem:[%s1 + $0x80] sm:$0xf]
  %v103 = vld [vmem:[%s1 + $0x84] sm:$0xf]
  %v104 = vld [vmem:[%s1 + $0x88] sm:$0xf]
  %v105 = vld [vmem:[%s1 + $0x8c] sm:$0xf]
  %v106 = vld [vmem:[%s1 + $0x90] sm:$0xf]
  %v107 = vld [vmem:[%s1 + $0x94] sm:$0xf]
  %v108 = vld [vmem:[%s1 + $0x98] sm:$0xf]
  %v109 = vld [vmem:[%s1 + $0x9c] sm:$0xf]
  %v110 = vld [vmem:[%s1 + $0xa0] sm:$0xf]
  %v111 = vld [vmem:[%s1 + $0xa4] sm:$0xf]
  %v112 = vld [vmem:[%s1 + $0xa8] sm:$0xf]
  %v113 = vld [vmem:[%s1 + $0xac] sm:$0xf]
  %v114 = vld [vmem:[%s1 + $0xb0] sm:$0xf]
  %v115 = vld [vmem:[%s1 + $0xb4] sm:$0xf]
  %v116 = vld [vmem:[%s1 + $0xb8] sm:$0xf]
  %v117 = vld [vmem:[%s1 + $0xbc] sm:$0xf]
  %v118 = vld [vmem:[%s1 + $0xc0] sm:$0xf]
  %v119 = vld [vmem:[%s1 + $0xc4] sm:$0xf]
  %v120 = vld [vmem:[%s1 + $0xc8] sm:$0xf]
  %v121 = vld [vmem:[%s1 + $0xcc] sm:$0xf]
  %v122 = vld [vmem:[%s1 + $0xd0] sm:$0xf]
  %v123 = vld [vmem:[%s1 + $0xd4] sm:$0xf]
  %v124 = vld [vmem:[%s1 + $0xd8] sm:$0xf]
  %v125 = vld [vmem:[%s1 + $0xdc] sm:$0xf]
  %v126 = vld [vmem:[%s1 + $0xe0] sm:$0xf]
  %v127 = vld [vmem:[%s1 + $0xe4] sm:$0xf]
  %v128 = vld [vmem:[%s1 + $0xe8] sm:$0xf]
  %v129 = vld [vmem:[%s1 + $0xec] sm:$0xf]
  %v130 = vld [vmem:[%s1 + $0xf0] sm:$0xf]
  %v131 = vld [vmem:[%s1 + $0xf4] sm:$0xf]
  %v132 = vld [vmem:[%s1 + $0xf8] sm:$0xf]
  %v133 = vld [vmem:[%s1 + $0xfc] sm:$0xf]
  %v134 = vld [vmem:[%s2] sm:$0x1]
  %v136 = vperm.slane %v134, 0
  %v194 = vunpack.c.l.b16 %v14
  %v195 = vunpack.c.h.b16 %v14
  %v196 = vunpack.c.l.b16 %v15
  %v197 = vunpack.c.h.b16 %v15
  %v198 = vunpack.c.l.b16 %v16
  %v199 = vunpack.c.h.b16 %v16
  %v200 = vunpack.c.l.b16 %v17
  %v201 = vunpack.c.h.b16 %v17
  %v202 = vunpack.c.l.b16 %v18
  %v203 = vunpack.c.h.b16 %v18
  %v204 = vunpack.c.l.b16 %v19
  %v205 = vunpack.c.h.b16 %v19
  %v206 = vunpack.c.l.b16 %v20
  %v207 = vunpack.c.h.b16 %v20
  %v208 = vunpack.c.l.b16 %v21
  %v209 = vunpack.c.h.b16 %v21
  %v210 = vunpack.c.l.b16 %v22
  %v211 = vunpack.c.h.b16 %v22
  %v212 = vunpack.c.l.b16 %v23
  %v213 = vunpack.c.h.b16 %v23
  %v214 = vunpack.c.l.b16 %v24
  %v215 = vunpack.c.h.b16 %v24
  %v216 = vunpack.c.l.b16 %v25
  %v217 = vunpack.c.h.b16 %v25
  %v218 = vunpack.c.l.b16 %v26
  %v219 = vunpack.c.h.b16 %v26
  %v220 = vunpack.c.l.b16 %v27
  %v221 = vunpack.c.h.b16 %v27
  %v222 = vunpack.c.l.b16 %v28
  %v223 = vunpack.c.h.b16 %v28
  %v224 = vunpack.c.l.b16 %v29
  %v225 = vunpack.c.h.b16 %v29
  %v226 = vunpack.c.l.b16 %v30
  %v227 = vunpack.c.h.b16 %v30
  %v228 = vunpack.c.l.b16 %v31
  %v229 = vunpack.c.h.b16 %v31
  %v230 = vunpack.c.l.b16 %v32
  %v231 = vunpack.c.h.b16 %v32
  %v232 = vunpack.c.l.b16 %v33
  %v233 = vunpack.c.h.b16 %v33
  %v234 = vunpack.c.l.b16 %v34
  %v235 = vunpack.c.h.b16 %v34
  %v236 = vunpack.c.l.b16 %v35
  %v237 = vunpack.c.h.b16 %v35
  %v238 = vunpack.c.l.b16 %v36
  %v239 = vunpack.c.h.b16 %v36
  %v240 = vunpack.c.l.b16 %v37
  %v241 = vunpack.c.h.b16 %v37
  %v242 = vunpack.c.l.b16 %v38
  %v243 = vunpack.c.h.b16 %v38
  %v244 = vunpack.c.l.b16 %v39
  %v245 = vunpack.c.h.b16 %v39
  %v246 = vunpack.c.l.b16 %v40
  %v247 = vunpack.c.h.b16 %v40
  %v248 = vunpack.c.l.b16 %v41
  %v249 = vunpack.c.h.b16 %v41
  %v250 = vunpack.c.l.b16 %v42
  %v251 = vunpack.c.h.b16 %v42
  %v252 = vunpack.c.l.b16 %v43
  %v253 = vunpack.c.h.b16 %v43
  %v254 = vunpack.c.l.b16 %v44
  %v255 = vunpack.c.h.b16 %v44
  %v256 = vunpack.c.l.b16 %v45
  %v257 = vunpack.c.h.b16 %v45
  %v258 = vunpack.c.l.b16 %v46
  %v259 = vunpack.c.h.b16 %v46
  %v260 = vunpack.c.l.b16 %v47
  %v261 = vunpack.c.h.b16 %v47
  %v262 = vunpack.c.l.b16 %v48
  %v263 = vunpack.c.h.b16 %v48
  %v264 = vunpack.c.l.b16 %v49
  %v265 = vunpack.c.h.b16 %v49
  %v266 = vunpack.c.l.b16 %v50
  %v267 = vunpack.c.h.b16 %v50
  %v268 = vunpack.c.l.b16 %v51
  %v269 = vunpack.c.h.b16 %v51
  %v270 = vunpack.c.l.b16 %v52
  %v271 = vunpack.c.h.b16 %v52
  %v272 = vunpack.c.l.b16 %v53
  %v273 = vunpack.c.h.b16 %v53
  %v274 = vunpack.c.l.b16 %v54
  %v275 = vunpack.c.h.b16 %v54
  %v276 = vunpack.c.l.b16 %v55
  %v277 = vunpack.c.h.b16 %v55
  %v278 = vunpack.c.l.b16 %v56
  %v279 = vunpack.c.h.b16 %v56
  %v280 = vunpack.c.l.b16 %v57
  %v281 = vunpack.c.h.b16 %v57
  %v282 = vunpack.c.l.b16 %v58
  %v283 = vunpack.c.h.b16 %v58
  %v284 = vunpack.c.l.b16 %v59
  %v285 = vunpack.c.h.b16 %v59
  %v286 = vunpack.c.l.b16 %v60
  %v287 = vunpack.c.h.b16 %v60
  %v288 = vunpack.c.l.b16 %v61
  %v289 = vunpack.c.h.b16 %v61
  %v290 = vunpack.c.l.b16 %v62
  %v291 = vunpack.c.h.b16 %v62
  %v292 = vunpack.c.l.b16 %v63
  %v293 = vunpack.c.h.b16 %v63
  %v294 = vunpack.c.l.b16 %v64
  %v295 = vunpack.c.h.b16 %v64
  %v296 = vunpack.c.l.b16 %v65
  %v297 = vunpack.c.h.b16 %v65
  %v298 = vunpack.c.l.b16 %v66
  %v299 = vunpack.c.h.b16 %v66
  %v300 = vunpack.c.l.b16 %v67
  %v301 = vunpack.c.h.b16 %v67
  %v302 = vunpack.c.l.b16 %v68
  %v303 = vunpack.c.h.b16 %v68
  %v304 = vunpack.c.l.b16 %v69
  %v305 = vunpack.c.h.b16 %v69
  %v306 = vpack.c.b16 %v198, %v194
  %v307 = vpack.c.b16 %v199, %v195
  %v308 = vpack.c.b16 %v200, %v196
  %v309 = vpack.c.b16 %v201, %v197
  %v310 = vpack.c.b16 %v206, %v202
  %v311 = vpack.c.b16 %v207, %v203
  %v312 = vpack.c.b16 %v208, %v204
  %v313 = vpack.c.b16 %v209, %v205
  %v314 = vpack.c.b16 %v214, %v210
  %v315 = vpack.c.b16 %v215, %v211
  %v316 = vpack.c.b16 %v216, %v212
  %v317 = vpack.c.b16 %v217, %v213
  %v318 = vpack.c.b16 %v222, %v218
  %v319 = vpack.c.b16 %v223, %v219
  %v320 = vpack.c.b16 %v224, %v220
  %v321 = vpack.c.b16 %v225, %v221
  %v322 = vpack.c.b16 %v230, %v226
  %v323 = vpack.c.b16 %v231, %v227
  %v324 = vpack.c.b16 %v232, %v228
  %v325 = vpack.c.b16 %v233, %v229
  %v326 = vpack.c.b16 %v238, %v234
  %v327 = vpack.c.b16 %v239, %v235
  %v328 = vpack.c.b16 %v240, %v236
  %v329 = vpack.c.b16 %v241, %v237
  %v330 = vpack.c.b16 %v246, %v242
  %v331 = vpack.c.b16 %v247, %v243
  %v332 = vpack.c.b16 %v248, %v244
  %v333 = vpack.c.b16 %v249, %v245
  %v334 = vpack.c.b16 %v254, %v250
  %v335 = vpack.c.b16 %v255, %v251
  %v336 = vpack.c.b16 %v256, %v252
  %v337 = vpack.c.b16 %v257, %v253
  %v338 = vpack.c.b16 %v262, %v258
  %v339 = vpack.c.b16 %v263, %v259
  %v340 = vpack.c.b16 %v264, %v260
  %v341 = vpack.c.b16 %v265, %v261
  %v342 = vpack.c.b16 %v270, %v266
  %v343 = vpack.c.b16 %v271, %v267
  %v344 = vpack.c.b16 %v272, %v268
  %v345 = vpack.c.b16 %v273, %v269
  %v346 = vpack.c.b16 %v278, %v274
  %v347 = vpack.c.b16 %v279, %v275
  %v348 = vpack.c.b16 %v280, %v276
  %v349 = vpack.c.b16 %v281, %v277
  %v350 = vpack.c.b16 %v286, %v282
  %v351 = vpack.c.b16 %v287, %v283
  %v352 = vpack.c.b16 %v288, %v284
  %v353 = vpack.c.b16 %v289, %v285
  %v354 = vpack.c.b16 %v294, %v290
  %v355 = vpack.c.b16 %v295, %v291
  %v356 = vpack.c.b16 %v296, %v292
  %v357 = vpack.c.b16 %v297, %v293
  %v358 = vpack.c.b16 %v302, %v298
  %v359 = vpack.c.b16 %v303, %v299
  %v360 = vpack.c.b16 %v304, %v300
  %v361 = vpack.c.b16 %v305, %v301
  %v482 = vunpack.c.l.b16 %v70
  %v483 = vunpack.c.l.b16 %v71
  %v484 = vunpack.c.l.b16 %v72
  %v485 = vunpack.c.l.b16 %v73
  %v486 = vunpack.c.l.b16 %v74
  %v487 = vunpack.c.l.b16 %v75
  %v488 = vunpack.c.l.b16 %v76
  %v489 = vunpack.c.l.b16 %v77
  %v490 = vunpack.c.l.b16 %v78
  %v491 = vunpack.c.l.b16 %v79
  %v492 = vunpack.c.l.b16 %v80
  %v493 = vunpack.c.l.b16 %v81
  %v494 = vunpack.c.l.b16 %v82
  %v495 = vunpack.c.l.b16 %v83
  %v496 = vunpack.c.l.b16 %v84
  %v497 = vunpack.c.l.b16 %v85
  %v498 = vunpack.c.l.b16 %v86
  %v499 = vunpack.c.l.b16 %v87
  %v500 = vunpack.c.l.b16 %v88
  %v501 = vunpack.c.l.b16 %v89
  %v502 = vunpack.c.l.b16 %v90
  %v503 = vunpack.c.l.b16 %v91
  %v504 = vunpack.c.l.b16 %v92
  %v505 = vunpack.c.l.b16 %v93
  %v506 = vunpack.c.l.b16 %v94
  %v507 = vunpack.c.l.b16 %v95
  %v508 = vunpack.c.l.b16 %v96
  %v509 = vunpack.c.l.b16 %v97
  %v510 = vunpack.c.l.b16 %v98
  %v511 = vunpack.c.l.b16 %v99
  %v512 = vunpack.c.l.b16 %v100
  %v513 = vunpack.c.l.b16 %v101
  %v514 = vunpack.c.l.b16 %v102
  %v515 = vunpack.c.l.b16 %v103
  %v516 = vunpack.c.l.b16 %v104
  %v517 = vunpack.c.l.b16 %v105
  %v518 = vunpack.c.l.b16 %v106
  %v519 = vunpack.c.l.b16 %v107
  %v520 = vunpack.c.l.b16 %v108
  %v521 = vunpack.c.l.b16 %v109
  %v522 = vunpack.c.l.b16 %v110
  %v523 = vunpack.c.l.b16 %v111
  %v524 = vunpack.c.l.b16 %v112
  %v525 = vunpack.c.l.b16 %v113
  %v526 = vunpack.c.l.b16 %v114
  %v527 = vunpack.c.l.b16 %v115
  %v528 = vunpack.c.l.b16 %v116
  %v529 = vunpack.c.l.b16 %v117
  %v530 = vunpack.c.l.b16 %v118
  %v531 = vunpack.c.l.b16 %v119
  %v532 = vunpack.c.l.b16 %v120
  %v533 = vunpack.c.l.b16 %v121
  %v534 = vunpack.c.l.b16 %v122
  %v535 = vunpack.c.l.b16 %v123
  %v536 = vunpack.c.l.b16 %v124
  %v537 = vunpack.c.l.b16 %v125
  %v538 = vunpack.c.l.b16 %v126
  %v539 = vunpack.c.l.b16 %v127
  %v540 = vunpack.c.l.b16 %v128
  %v541 = vunpack.c.l.b16 %v129
  %v542 = vunpack.c.l.b16 %v130
  %v543 = vunpack.c.l.b16 %v131
  %v544 = vunpack.c.l.b16 %v132
  %v545 = vunpack.c.l.b16 %v133
  %v546 = vpack.c.b16 %v483, %v482
  %v547 = vpack.c.b16 %v485, %v484
  %v548 = vpack.c.b16 %v487, %v486
  %v549 = vpack.c.b16 %v489, %v488
  %v550 = vpack.c.b16 %v491, %v490
  %v551 = vpack.c.b16 %v493, %v492
  %v552 = vpack.c.b16 %v495, %v494
  %v553 = vpack.c.b16 %v497, %v496
  %v554 = vpack.c.b16 %v499, %v498
  %v555 = vpack.c.b16 %v501, %v500
  %v556 = vpack.c.b16 %v503, %v502
  %v557 = vpack.c.b16 %v505, %v504
  %v558 = vpack.c.b16 %v507, %v506
  %v559 = vpack.c.b16 %v509, %v508
  %v560 = vpack.c.b16 %v511, %v510
  %v561 = vpack.c.b16 %v513, %v512
  %v562 = vpack.c.b16 %v515, %v514
  %v563 = vpack.c.b16 %v517, %v516
  %v564 = vpack.c.b16 %v519, %v518
  %v565 = vpack.c.b16 %v521, %v520
  %v566 = vpack.c.b16 %v523, %v522
  %v567 = vpack.c.b16 %v525, %v524
  %v568 = vpack.c.b16 %v527, %v526
  %v569 = vpack.c.b16 %v529, %v528
  %v570 = vpack.c.b16 %v531, %v530
  %v571 = vpack.c.b16 %v533, %v532
  %v572 = vpack.c.b16 %v535, %v534
  %v573 = vpack.c.b16 %v537, %v536
  %v574 = vpack.c.b16 %v539, %v538
  %v575 = vpack.c.b16 %v541, %v540
  %v576 = vpack.c.b16 %v543, %v542
  %v577 = vpack.c.b16 %v545, %v544
  %610 = vmatpush.bf16.msra.mxu0 %v553
  %611 = vmatpush.bf16.msra.mxu0 %v552
  %612 = vmatpush.bf16.msra.mxu0 %v551
  %613 = vmatpush.bf16.msra.mxu0 %v550
  %614 = vmatpush.bf16.msra.mxu0 %v549
  %615 = vmatpush.bf16.msra.mxu0 %v548
  %616 = vmatpush.bf16.msra.mxu0 %v547
  %617 = vmatpush.bf16.msra.mxu0 %v546
  %618 = vmatmul.bf16.gmra.mxu0 %v306
  %v619 = vpop.f32.mrf.mxu0
  %v620 = vadd.f32 %v136, %v619
  %v621 = vpop.f32.mrf.mxu0
  %v622 = vadd.f32 %v136, %v621
  %623 = vmatmul.bf16.gmra.mxu0 %v310
  %v624 = vpop.f32.mrf.mxu0
  %v625 = vadd.f32 %v136, %v624
  %v626 = vpop.f32.mrf.mxu0
  %v627 = vadd.f32 %v136, %v626
  %628 = vmatmul.bf16.gmra.mxu0 %v314
  %v629 = vpop.f32.mrf.mxu0
  %v630 = vadd.f32 %v136, %v629
  %v631 = vpop.f32.mrf.mxu0
  %v632 = vadd.f32 %v136, %v631
  %633 = vmatmul.bf16.gmra.mxu0 %v318
  %v634 = vpop.f32.mrf.mxu0
  %v635 = vadd.f32 %v136, %v634
  %v636 = vpop.f32.mrf.mxu0
  %v637 = vadd.f32 %v136, %v636
  %638 = vmatmul.bf16.gmra.mxu0 %v322
  %v639 = vpop.f32.mrf.mxu0
  %v640 = vadd.f32 %v136, %v639
  %v641 = vpop.f32.mrf.mxu0
  %v642 = vadd.f32 %v136, %v641
  %643 = vmatmul.bf16.gmra.mxu0 %v326
  %v644 = vpop.f32.mrf.mxu0
  %v645 = vadd.f32 %v136, %v644
  %v646 = vpop.f32.mrf.mxu0
  %v647 = vadd.f32 %v136, %v646
  %648 = vmatmul.bf16.gmra.mxu0 %v330
  %v649 = vpop.f32.mrf.mxu0
  %v650 = vadd.f32 %v136, %v649
  %v651 = vpop.f32.mrf.mxu0
  %v652 = vadd.f32 %v136, %v651
  %653 = vmatmul.bf16.gmra.mxu0 %v334
  %v654 = vpop.f32.mrf.mxu0
  %v655 = vadd.f32 %v136, %v654
  %v656 = vpop.f32.mrf.mxu0
  %v657 = vadd.f32 %v136, %v656
  %658 = vmatmul.bf16.gmra.mxu0 %v338
  %v659 = vpop.f32.mrf.mxu0
  %v660 = vadd.f32 %v136, %v659
  %v661 = vpop.f32.mrf.mxu0
  %v662 = vadd.f32 %v136, %v661
  %663 = vmatmul.bf16.gmra.mxu0 %v342
  %v664 = vpop.f32.mrf.mxu0
  %v665 = vadd.f32 %v136, %v664
  %v666 = vpop.f32.mrf.mxu0
  %v667 = vadd.f32 %v136, %v666
  %668 = vmatmul.bf16.gmra.mxu0 %v346
  %v669 = vpop.f32.mrf.mxu0
  %v670 = vadd.f32 %v136, %v669
  %v671 = vpop.f32.mrf.mxu0
  %v672 = vadd.f32 %v136, %v671
  %673 = vmatmul.bf16.gmra.mxu0 %v350
  %v674 = vpop.f32.mrf.mxu0
  %v675 = vadd.f32 %v136, %v674
  %v676 = vpop.f32.mrf.mxu0
  %v677 = vadd.f32 %v136, %v676
  %678 = vmatmul.bf16.gmra.mxu0 %v354
  %v679 = vpop.f32.mrf.mxu0
  %v680 = vadd.f32 %v136, %v679
  %v681 = vpop.f32.mrf.mxu0
  %v682 = vadd.f32 %v136, %v681
  %683 = vmatmul.bf16.gmra.mxu0 %v358
  %v684 = vpop.f32.mrf.mxu0
  %v685 = vadd.f32 %v136, %v684
  %v686 = vpop.f32.mrf.mxu0
  %v687 = vadd.f32 %v136, %v686
  %688 = vdwg.mxu0
  %689 = vmatpush.bf16.msra.mxu0 %v561
  %690 = vmatpush.bf16.msra.mxu0 %v560
  %691 = vmatpush.bf16.msra.mxu0 %v559
  %692 = vmatpush.bf16.msra.mxu0 %v558
  %693 = vmatpush.bf16.msra.mxu0 %v557
  %694 = vmatpush.bf16.msra.mxu0 %v556
  %695 = vmatpush.bf16.msra.mxu0 %v555
  %696 = vmatpush.bf16.msra.mxu0 %v554
  %697 = vmatmul.bf16.gmra.mxu0 %v307
  %v698 = vpop.f32.mrf.mxu0
  %v699 = vadd.f32 %v620, %v698
  %v700 = vpop.f32.mrf.mxu0
  %v701 = vadd.f32 %v622, %v700
  %702 = vmatmul.bf16.gmra.mxu0 %v311
  %v703 = vpop.f32.mrf.mxu0
  %v704 = vadd.f32 %v625, %v703
  %v705 = vpop.f32.mrf.mxu0
  %v706 = vadd.f32 %v627, %v705
  %707 = vmatmul.bf16.gmra.mxu0 %v315
  %v708 = vpop.f32.mrf.mxu0
  %v709 = vadd.f32 %v630, %v708
  %v710 = vpop.f32.mrf.mxu0
  %v711 = vadd.f32 %v632, %v710
  %712 = vmatmul.bf16.gmra.mxu0 %v319
  %v713 = vpop.f32.mrf.mxu0
  %v714 = vadd.f32 %v635, %v713
  %v715 = vpop.f32.mrf.mxu0
  %v716 = vadd.f32 %v637, %v715
  %717 = vmatmul.bf16.gmra.mxu0 %v323
  %v718 = vpop.f32.mrf.mxu0
  %v719 = vadd.f32 %v640, %v718
  %v720 = vpop.f32.mrf.mxu0
  %v721 = vadd.f32 %v642, %v720
  %722 = vmatmul.bf16.gmra.mxu0 %v327
  %v723 = vpop.f32.mrf.mxu0
  %v724 = vadd.f32 %v645, %v723
  %v725 = vpop.f32.mrf.mxu0
  %v726 = vadd.f32 %v647, %v725
  %727 = vmatmul.bf16.gmra.mxu0 %v331
  %v728 = vpop.f32.mrf.mxu0
  %v729 = vadd.f32 %v650, %v728
  %v730 = vpop.f32.mrf.mxu0
  %v731 = vadd.f32 %v652, %v730
  %732 = vmatmul.bf16.gmra.mxu0 %v335
  %v733 = vpop.f32.mrf.mxu0
  %v734 = vadd.f32 %v655, %v733
  %v735 = vpop.f32.mrf.mxu0
  %v736 = vadd.f32 %v657, %v735
  %737 = vmatmul.bf16.gmra.mxu0 %v339
  %v738 = vpop.f32.mrf.mxu0
  %v739 = vadd.f32 %v660, %v738
  %v740 = vpop.f32.mrf.mxu0
  %v741 = vadd.f32 %v662, %v740
  %742 = vmatmul.bf16.gmra.mxu0 %v343
  %v743 = vpop.f32.mrf.mxu0
  %v744 = vadd.f32 %v665, %v743
  %v745 = vpop.f32.mrf.mxu0
  %v746 = vadd.f32 %v667, %v745
  %747 = vmatmul.bf16.gmra.mxu0 %v347
  %v748 = vpop.f32.mrf.mxu0
  %v749 = vadd.f32 %v670, %v748
  %v750 = vpop.f32.mrf.mxu0
  %v751 = vadd.f32 %v672, %v750
  %752 = vmatmul.bf16.gmra.mxu0 %v351
  %v753 = vpop.f32.mrf.mxu0
  %v754 = vadd.f32 %v675, %v753
  %v755 = vpop.f32.mrf.mxu0
  %v756 = vadd.f32 %v677, %v755
  %757 = vmatmul.bf16.gmra.mxu0 %v355
  %v758 = vpop.f32.mrf.mxu0
  %v759 = vadd.f32 %v680, %v758
  %v760 = vpop.f32.mrf.mxu0
  %v761 = vadd.f32 %v682, %v760
  %762 = vmatmul.bf16.gmra.mxu0 %v359
  %v763 = vpop.f32.mrf.mxu0
  %v764 = vadd.f32 %v685, %v763
  %v765 = vpop.f32.mrf.mxu0
  %v766 = vadd.f32 %v687, %v765
  %767 = vdwg.mxu0
  %768 = vmatpush.bf16.msra.mxu0 %v569
  %769 = vmatpush.bf16.msra.mxu0 %v568
  %770 = vmatpush.bf16.msra.mxu0 %v567
  %771 = vmatpush.bf16.msra.mxu0 %v566
  %772 = vmatpush.bf16.msra.mxu0 %v565
  %773 = vmatpush.bf16.msra.mxu0 %v564
  %774 = vmatpush.bf16.msra.mxu0 %v563
  %775 = vmatpush.bf16.msra.mxu0 %v562
  %776 = vmatmul.bf16.gmra.mxu0 %v308
  %v777 = vpop.f32.mrf.mxu0
  %v778 = vadd.f32 %v699, %v777
  %v779 = vpop.f32.mrf.mxu0
  %v780 = vadd.f32 %v701, %v779
  %781 = vmatmul.bf16.gmra.mxu0 %v312
  %v782 = vpop.f32.mrf.mxu0
  %v783 = vadd.f32 %v704, %v782
  %v784 = vpop.f32.mrf.mxu0
  %v785 = vadd.f32 %v706, %v784
  %786 = vmatmul.bf16.gmra.mxu0 %v316
  %v787 = vpop.f32.mrf.mxu0
  %v788 = vadd.f32 %v709, %v787
  %v789 = vpop.f32.mrf.mxu0
  %v790 = vadd.f32 %v711, %v789
  %791 = vmatmul.bf16.gmra.mxu0 %v320
  %v792 = vpop.f32.mrf.mxu0
  %v793 = vadd.f32 %v714, %v792
  %v794 = vpop.f32.mrf.mxu0
  %v795 = vadd.f32 %v716, %v794
  %796 = vmatmul.bf16.gmra.mxu0 %v324
  %v797 = vpop.f32.mrf.mxu0
  %v798 = vadd.f32 %v719, %v797
  %v799 = vpop.f32.mrf.mxu0
  %v800 = vadd.f32 %v721, %v799
  %801 = vmatmul.bf16.gmra.mxu0 %v328
  %v802 = vpop.f32.mrf.mxu0
  %v803 = vadd.f32 %v724, %v802
  %v804 = vpop.f32.mrf.mxu0
  %v805 = vadd.f32 %v726, %v804
  %806 = vmatmul.bf16.gmra.mxu0 %v332
  %v807 = vpop.f32.mrf.mxu0
  %v808 = vadd.f32 %v729, %v807
  %v809 = vpop.f32.mrf.mxu0
  %v810 = vadd.f32 %v731, %v809
  %811 = vmatmul.bf16.gmra.mxu0 %v336
  %v812 = vpop.f32.mrf.mxu0
  %v813 = vadd.f32 %v734, %v812
  %v814 = vpop.f32.mrf.mxu0
  %v815 = vadd.f32 %v736, %v814
  %816 = vmatmul.bf16.gmra.mxu0 %v340
  %v817 = vpop.f32.mrf.mxu0
  %v818 = vadd.f32 %v739, %v817
  %v819 = vpop.f32.mrf.mxu0
  %v820 = vadd.f32 %v741, %v819
  %821 = vmatmul.bf16.gmra.mxu0 %v344
  %v822 = vpop.f32.mrf.mxu0
  %v823 = vadd.f32 %v744, %v822
  %v824 = vpop.f32.mrf.mxu0
  %v825 = vadd.f32 %v746, %v824
  %826 = vmatmul.bf16.gmra.mxu0 %v348
  %v827 = vpop.f32.mrf.mxu0
  %v828 = vadd.f32 %v749, %v827
  %v829 = vpop.f32.mrf.mxu0
  %v830 = vadd.f32 %v751, %v829
  %831 = vmatmul.bf16.gmra.mxu0 %v352
  %v832 = vpop.f32.mrf.mxu0
  %v833 = vadd.f32 %v754, %v832
  %v834 = vpop.f32.mrf.mxu0
  %v835 = vadd.f32 %v756, %v834
  %836 = vmatmul.bf16.gmra.mxu0 %v356
  %v837 = vpop.f32.mrf.mxu0
  %v838 = vadd.f32 %v759, %v837
  %v839 = vpop.f32.mrf.mxu0
  %v840 = vadd.f32 %v761, %v839
  %841 = vmatmul.bf16.gmra.mxu0 %v360
  %v842 = vpop.f32.mrf.mxu0
  %v843 = vadd.f32 %v764, %v842
  %v844 = vpop.f32.mrf.mxu0
  %v845 = vadd.f32 %v766, %v844
  %846 = vdwg.mxu0
  %847 = vmatpush.bf16.msra.mxu0 %v577
  %848 = vmatpush.bf16.msra.mxu0 %v576
  %849 = vmatpush.bf16.msra.mxu0 %v575
  %850 = vmatpush.bf16.msra.mxu0 %v574
  %851 = vmatpush.bf16.msra.mxu0 %v573
  %852 = vmatpush.bf16.msra.mxu0 %v572
  %853 = vmatpush.bf16.msra.mxu0 %v571
  %854 = vmatpush.bf16.msra.mxu0 %v570
  %855 = vmatmul.bf16.gmra.mxu0 %v309
  %v856 = vpop.f32.mrf.mxu0
  %v857 = vadd.f32 %v778, %v856
  %v858 = vpop.f32.mrf.mxu0
  %v859 = vadd.f32 %v780, %v858
  %860 = vmatmul.bf16.gmra.mxu0 %v313
  %v861 = vpop.f32.mrf.mxu0
  %v862 = vadd.f32 %v783, %v861
  %v863 = vpop.f32.mrf.mxu0
  %v864 = vadd.f32 %v785, %v863
  %865 = vmatmul.bf16.gmra.mxu0 %v317
  %v866 = vpop.f32.mrf.mxu0
  %v867 = vadd.f32 %v788, %v866
  %v868 = vpop.f32.mrf.mxu0
  %v869 = vadd.f32 %v790, %v868
  %870 = vmatmul.bf16.gmra.mxu0 %v321
  %v871 = vpop.f32.mrf.mxu0
  %v872 = vadd.f32 %v793, %v871
  %v873 = vpop.f32.mrf.mxu0
  %v874 = vadd.f32 %v795, %v873
  %875 = vmatmul.bf16.gmra.mxu0 %v325
  %v876 = vpop.f32.mrf.mxu0
  %v877 = vadd.f32 %v798, %v876
  %v878 = vpop.f32.mrf.mxu0
  %v879 = vadd.f32 %v800, %v878
  %880 = vmatmul.bf16.gmra.mxu0 %v329
  %v881 = vpop.f32.mrf.mxu0
  %v882 = vadd.f32 %v803, %v881
  %v883 = vpop.f32.mrf.mxu0
  %v884 = vadd.f32 %v805, %v883
  %885 = vmatmul.bf16.gmra.mxu0 %v333
  %v886 = vpop.f32.mrf.mxu0
  %v887 = vadd.f32 %v808, %v886
  %v888 = vpop.f32.mrf.mxu0
  %v889 = vadd.f32 %v810, %v888
  %890 = vmatmul.bf16.gmra.mxu0 %v337
  %v891 = vpop.f32.mrf.mxu0
  %v892 = vadd.f32 %v813, %v891
  %v893 = vpop.f32.mrf.mxu0
  %v894 = vadd.f32 %v815, %v893
  %895 = vmatmul.bf16.gmra.mxu0 %v341
  %v896 = vpop.f32.mrf.mxu0
  %v897 = vadd.f32 %v818, %v896
  %v898 = vpop.f32.mrf.mxu0
  %v899 = vadd.f32 %v820, %v898
  %900 = vmatmul.bf16.gmra.mxu0 %v345
  %v901 = vpop.f32.mrf.mxu0
  %v902 = vadd.f32 %v823, %v901
  %v903 = vpop.f32.mrf.mxu0
  %v904 = vadd.f32 %v825, %v903
  %905 = vmatmul.bf16.gmra.mxu0 %v349
  %v906 = vpop.f32.mrf.mxu0
  %v907 = vadd.f32 %v828, %v906
  %v908 = vpop.f32.mrf.mxu0
  %v909 = vadd.f32 %v830, %v908
  %910 = vmatmul.bf16.gmra.mxu0 %v353
  %v911 = vpop.f32.mrf.mxu0
  %v912 = vadd.f32 %v833, %v911
  %v913 = vpop.f32.mrf.mxu0
  %v914 = vadd.f32 %v835, %v913
  %915 = vmatmul.bf16.gmra.mxu0 %v357
  %v916 = vpop.f32.mrf.mxu0
  %v917 = vadd.f32 %v838, %v916
  %v918 = vpop.f32.mrf.mxu0
  %v919 = vadd.f32 %v840, %v918
  %920 = vmatmul.bf16.gmra.mxu0 %v361
  %v921 = vpop.f32.mrf.mxu0
  %v922 = vadd.f32 %v843, %v921
  %v923 = vpop.f32.mrf.mxu0
  %v924 = vadd.f32 %v845, %v923
  %925 = vdwg.mxu0
  %v926 = vmax.f32 %v857, 0.0
  %v927 = vmax.f32 %v859, 0.0
  %v928 = vmax.f32 %v862, 0.0
  %v929 = vmax.f32 %v864, 0.0
  %v930 = vmax.f32 %v867, 0.0
  %v931 = vmax.f32 %v869, 0.0
  %v932 = vmax.f32 %v872, 0.0
  %v933 = vmax.f32 %v874, 0.0
  %v934 = vmax.f32 %v877, 0.0
  %v935 = vmax.f32 %v879, 0.0
  %v936 = vmax.f32 %v882, 0.0
  %v937 = vmax.f32 %v884, 0.0
  %v938 = vmax.f32 %v887, 0.0
  %v939 = vmax.f32 %v889, 0.0
  %v940 = vmax.f32 %v892, 0.0
  %v941 = vmax.f32 %v894, 0.0
  %v942 = vmax.f32 %v897, 0.0
  %v943 = vmax.f32 %v899, 0.0
  %v944 = vmax.f32 %v902, 0.0
  %v945 = vmax.f32 %v904, 0.0
  %v946 = vmax.f32 %v907, 0.0
  %v947 = vmax.f32 %v909, 0.0
  %v948 = vmax.f32 %v912, 0.0
  %v949 = vmax.f32 %v914, 0.0
  %v950 = vmax.f32 %v917, 0.0
  %v951 = vmax.f32 %v919, 0.0
  %v952 = vmax.f32 %v922, 0.0
  %v953 = vmax.f32 %v924, 0.0
  %954 = vst [vmem:[%s3] sm:$0xff] %v926
  %955 = vst [vmem:[%s3 + $0x8] sm:$0xff] %v927
  %956 = vst [vmem:[%s3 + $0x10] sm:$0xff] %v928
  %957 = vst [vmem:[%s3 + $0x18] sm:$0xff] %v929
  %958 = vst [vmem:[%s3 + $0x20] sm:$0xff] %v930
  %959 = vst [vmem:[%s3 + $0x28] sm:$0xff] %v931
  %960 = vst [vmem:[%s3 + $0x30] sm:$0xff] %v932
  %961 = vst [vmem:[%s3 + $0x38] sm:$0xff] %v933
  %962 = vst [vmem:[%s3 + $0x40] sm:$0xff] %v934
  %963 = vst [vmem:[%s3 + $0x48] sm:$0xff] %v935
  %964 = vst [vmem:[%s3 + $0x50] sm:$0xff] %v936
  %965 = vst [vmem:[%s3 + $0x58] sm:$0xff] %v937
  %966 = vst [vmem:[%s3 + $0x60] sm:$0xff] %v938
  %967 = vst [vmem:[%s3 + $0x68] sm:$0xff] %v939
  %968 = vst [vmem:[%s3 + $0x70] sm:$0xff] %v940
  %969 = vst [vmem:[%s3 + $0x78] sm:$0xff] %v941
  %970 = vst [vmem:[%s3 + $0x80] sm:$0xff] %v942
  %971 = vst [vmem:[%s3 + $0x88] sm:$0xff] %v943
  %972 = vst [vmem:[%s3 + $0x90] sm:$0xff] %v944
  %973 = vst [vmem:[%s3 + $0x98] sm:$0xff] %v945
  %974 = vst [vmem:[%s3 + $0xa0] sm:$0xff] %v946
  %975 = vst [vmem:[%s3 + $0xa8] sm:$0xff] %v947
  %976 = vst [vmem:[%s3 + $0xb0] sm:$0xff] %v948
  %977 = vst [vmem:[%s3 + $0xb8] sm:$0xff] %v949
  %978 = vst [vmem:[%s3 + $0xc0] sm:$0xff] %v950
  %979 = vst [vmem:[%s3 + $0xc8] sm:$0xff] %v951
  %980 = vst [vmem:[%s3 + $0xd0] sm:$0xff] %v952
  %981 = vst [vmem:[%s3 + $0xd8] sm:$0xff] %v953
  // Predicated region
  $region14: #{_lambda_.11} parent=0 // pred_check
    _
  $region15: #{_lambda_.11} parent=0 // pred_check_branch
    %983 = sbr.rel (0) target = $region17
  $region16: #{_lambda_.11} parent=0 // pred_region
    _
  $region17: #{_lambda_.11} parent=0 // pred_fallthru
    _
  // Predicated region
  $region18: #{_lambda_.11} parent=0 // pred_check
    _
  $region19: #{_lambda_.11} parent=0 // pred_check_branch
    %985 = sbr.rel (0) target = $region21
  $region20: #{_lambda_.11} parent=0 // pred_region
    _
  $region21: #{_lambda_.11} parent=0 // pred_fallthru
    _

// kernel: _lambda_.12
$region0: #{_lambda_.12}
  #allocation0 [shape = 'u32[]', space=smem, size = 0x4, offset = 0x4, fixed_abs, tag = 'smem constant byte address 0x4 - core index']
  #allocation1 [shape = 'u32[72,128]{1,0:T(1,128)}', space=vmem, size = 0x9000, scoped, tag = 'internal scratch']
  %s0 = inlined_call_operand.vmem [shape: bf16[144,640], index: 0, kind: input, shape index: {}]
  %s1 = inlined_call_operand.vmem [shape: bf16[640,128], index: 1, kind: input, shape index: {}]
  %s2 = inlined_call_operand.vmem [shape: f32[1,128], index: 2, kind: input, shape index: {}]
  %s3 = inlined_call_operand.vmem [shape: f32[144,128], index: 3, kind: output, shape index: {}]
  %s4 = sld [smem:[#allocation0]]
  $region22: #{_lambda_.12} parent=0
    _
  %s6 = ssub.s32 1, %s4
  %s7 = scalar_select 0, %s6, %s4
  // Predicated region
  $region2: #{_lambda_.12} parent=0 // pred_check
    _
  $region3: #{_lambda_.12} parent=0 // pred_check_branch
    %9 = sbr.rel (0) target = $region5
  $region4: #{_lambda_.12} parent=0 // pred_region
    _
  $region5: #{_lambda_.12} parent=0 // pred_fallthru
    _
  // Predicated region
  $region6: #{_lambda_.12} parent=0 // pred_check
    _
  $region7: #{_lambda_.12} parent=0 // pred_check_branch
    %11 = sbr.rel (0) target = $region9
  $region8: #{_lambda_.12} parent=0 // pred_region
    _
  $region9: #{_lambda_.12} parent=0 // pred_fallthru
    _
  // Predicated region
  $region10: #{_lambda_.12} parent=0 // pred_check
    _
  $region11: #{_lambda_.12} parent=0 // pred_check_branch
    %13 = sbr.rel (0) target = $region13
  $region12: #{_lambda_.12} parent=0 // pred_region
    _
  $region13: #{_lambda_.12} parent=0 // pred_fallthru
    _
  %v14 = vld [vmem:[%s0] sm:$0xff]
  %v15 = vld [vmem:[%s0 + $0x8] sm:$0xff]
  %v16 = vld [vmem:[%s0 + $0x10] sm:$0xf]
  %v17 = vld [vmem:[%s0 + $0x14] sm:$0xff]
  %v18 = vld [vmem:[%s0 + $0x1c] sm:$0xff]
  %v19 = vld [vmem:[%s0 + $0x24] sm:$0xf]
  %v20 = vld [vmem:[%s0 + $0x28] sm:$0xff]
  %v21 = vld [vmem:[%s0 + $0x30] sm:$0xff]
  %v22 = vld [vmem:[%s0 + $0x38] sm:$0xf]
  %v23 = vld [vmem:[%s0 + $0x3c] sm:$0xff]
  %v24 = vld [vmem:[%s0 + $0x44] sm:$0xff]
  %v25 = vld [vmem:[%s0 + $0x4c] sm:$0xf]
  %v26 = vld [vmem:[%s0 + $0x50] sm:$0xff]
  %v27 = vld [vmem:[%s0 + $0x58] sm:$0xff]
  %v28 = vld [vmem:[%s0 + $0x60] sm:$0xf]
  %v29 = vld [vmem:[%s0 + $0x64] sm:$0xff]
  %v30 = vld [vmem:[%s0 + $0x6c] sm:$0xff]
  %v31 = vld [vmem:[%s0 + $0x74] sm:$0xf]
  %v32 = vld [vmem:[%s0 + $0x78] sm:$0xff]
  %v33 = vld [vmem:[%s0 + $0x80] sm:$0xff]
  %v34 = vld [vmem:[%s0 + $0x88] sm:$0xf]
  %v35 = vld [vmem:[%s0 + $0x8c] sm:$0xff]
  %v36 = vld [vmem:[%s0 + $0x94] sm:$0xff]
  %v37 = vld [vmem:[%s0 + $0x9c] sm:$0xf]
  %v38 = vld [vmem:[%s0 + $0xa0] sm:$0xff]
  %v39 = vld [vmem:[%s0 + $0xa8] sm:$0xff]
  %v40 = vld [vmem:[%s0 + $0xb0] sm:$0xf]
  %v41 = vld [vmem:[%s0 + $0xb4] sm:$0xff]
  %v42 = vld [vmem:[%s0 + $0xbc] sm:$0xff]
  %v43 = vld [vmem:[%s0 + $0xc4] sm:$0xf]
  %v44 = vld [vmem:[%s0 + $0xc8] sm:$0xff]
  %v45 = vld [vmem:[%s0 + $0xd0] sm:$0xff]
  %v46 = vld [vmem:[%s0 + $0xd8] sm:$0xf]
  %v47 = vld [vmem:[%s0 + $0xdc] sm:$0xff]
  %v48 = vld [vmem:[%s0 + $0xe4] sm:$0xff]
  %v49 = vld [vmem:[%s0 + $0xec] sm:$0xf]
  %v50 = vld [vmem:[%s0 + $0xf0] sm:$0xff]
  %v51 = vld [vmem:[%s0 + $0xf8] sm:$0xff]
  %v52 = vld [vmem:[%s0 + $0x100] sm:$0xf]
  %v53 = vld [vmem:[%s0 + $0x104] sm:$0xff]
  %v54 = vld [vmem:[%s0 + $0x10c] sm:$0xff]
  %v55 = vld [vmem:[%s0 + $0x114] sm:$0xf]
  %v56 = vld [vmem:[%s0 + $0x118] sm:$0xff]
  %v57 = vld [vmem:[%s0 + $0x120] sm:$0xff]
  %v58 = vld [vmem:[%s0 + $0x128] sm:$0xf]
  %v59 = vld [vmem:[%s0 + $0x12c] sm:$0xff]
  %v60 = vld [vmem:[%s0 + $0x134] sm:$0xff]
  %v61 = vld [vmem:[%s0 + $0x13c] sm:$0xf]
  %v62 = vld [vmem:[%s0 + $0x140] sm:$0xff]
  %v63 = vld [vmem:[%s0 + $0x148] sm:$0xff]
  %v64 = vld [vmem:[%s0 + $0x150] sm:$0xf]
  %v65 = vld [vmem:[%s0 + $0x154] sm:$0xff]
  %v66 = vld [vmem:[%s0 + $0x15c] sm:$0xff]
  %v67 = vld [vmem:[%s0 + $0x164] sm:$0xf]
  %v68 = vld [vmem:[%s1] sm:$0xf]
  %v69 = vld [vmem:[%s1 + $0x4] sm:$0xf]
  %v70 = vld [vmem:[%s1 + $0x8] sm:$0xf]
  %v71 = vld [vmem:[%s1 + $0xc] sm:$0xf]
  %v72 = vld [vmem:[%s1 + $0x10] sm:$0xf]
  %v73 = vld [vmem:[%s1 + $0x14] sm:$0xf]
  %v74 = vld [vmem:[%s1 + $0x18] sm:$0xf]
  %v75 = vld [vmem:[%s1 + $0x1c] sm:$0xf]
  %v76 = vld [vmem:[%s1 + $0x20] sm:$0xf]
  %v77 = vld [vmem:[%s1 + $0x24] sm:$0xf]
  %v78 = vld [vmem:[%s1 + $0x28] sm:$0xf]
  %v79 = vld [vmem:[%s1 + $0x2c] sm:$0xf]
  %v80 = vld [vmem:[%s1 + $0x30] sm:$0xf]
  %v81 = vld [vmem:[%s1 + $0x34] sm:$0xf]
  %v82 = vld [vmem:[%s1 + $0x38] sm:$0xf]
  %v83 = vld [vmem:[%s1 + $0x3c] sm:$0xf]
  %v84 = vld [vmem:[%s1 + $0x40] sm:$0xf]
  %v85 = vld [vmem:[%s1 + $0x44] sm:$0xf]
  %v86 = vld [vmem:[%s1 + $0x48] sm:$0xf]
  %v87 = vld [vmem:[%s1 + $0x4c] sm:$0xf]
  %v88 = vld [vmem:[%s1 + $0x50] sm:$0xf]
  %v89 = vld [vmem:[%s1 + $0x54] sm:$0xf]
  %v90 = vld [vmem:[%s1 + $0x58] sm:$0xf]
  %v91 = vld [vmem:[%s1 + $0x5c] sm:$0xf]
  %v92 = vld [vmem:[%s1 + $0x60] sm:$0xf]
  %v93 = vld [vmem:[%s1 + $0x64] sm:$0xf]
  %v94 = vld [vmem:[%s1 + $0x68] sm:$0xf]
  %v95 = vld [vmem:[%s1 + $0x6c] sm:$0xf]
  %v96 = vld [vmem:[%s1 + $0x70] sm:$0xf]
  %v97 = vld [vmem:[%s1 + $0x74] sm:$0xf]
  %v98 = vld [vmem:[%s1 + $0x78] sm:$0xf]
  %v99 = vld [vmem:[%s1 + $0x7c] sm:$0xf]
  %v100 = vld [vmem:[%s1 + $0x80] sm:$0xf]
  %v101 = vld [vmem:[%s1 + $0x84] sm:$0xf]
  %v102 = vld [vmem:[%s1 + $0x88] sm:$0xf]
  %v103 = vld [vmem:[%s1 + $0x8c] sm:$0xf]
  %v104 = vld [vmem:[%s1 + $0x90] sm:$0xf]
  %v105 = vld [vmem:[%s1 + $0x94] sm:$0xf]
  %v106 = vld [vmem:[%s1 + $0x98] sm:$0xf]
  %v107 = vld [vmem:[%s1 + $0x9c] sm:$0xf]
  %v108 = vld [vmem:[%s1 + $0xa0] sm:$0xf]
  %v109 = vld [vmem:[%s1 + $0xa4] sm:$0xf]
  %v110 = vld [vmem:[%s1 + $0xa8] sm:$0xf]
  %v111 = vld [vmem:[%s1 + $0xac] sm:$0xf]
  %v112 = vld [vmem:[%s1 + $0xb0] sm:$0xf]
  %v113 = vld [vmem:[%s1 + $0xb4] sm:$0xf]
  %v114 = vld [vmem:[%s1 + $0xb8] sm:$0xf]
  %v115 = vld [vmem:[%s1 + $0xbc] sm:$0xf]
  %v116 = vld [vmem:[%s1 + $0xc0] sm:$0xf]
  %v117 = vld [vmem:[%s1 + $0xc4] sm:$0xf]
  %v118 = vld [vmem:[%s1 + $0xc8] sm:$0xf]
  %v119 = vld [vmem:[%s1 + $0xcc] sm:$0xf]
  %v120 = vld [vmem:[%s1 + $0xd0] sm:$0xf]
  %v121 = vld [vmem:[%s1 + $0xd4] sm:$0xf]
  %v122 = vld [vmem:[%s1 + $0xd8] sm:$0xf]
  %v123 = vld [vmem:[%s1 + $0xdc] sm:$0xf]
  %v124 = vld [vmem:[%s1 + $0xe0] sm:$0xf]
  %v125 = vld [vmem:[%s1 + $0xe4] sm:$0xf]
  %v126 = vld [vmem:[%s1 + $0xe8] sm:$0xf]
  %v127 = vld [vmem:[%s1 + $0xec] sm:$0xf]
  %v128 = vld [vmem:[%s1 + $0xf0] sm:$0xf]
  %v129 = vld [vmem:[%s1 + $0xf4] sm:$0xf]
  %v130 = vld [vmem:[%s1 + $0xf8] sm:$0xf]
  %v131 = vld [vmem:[%s1 + $0xfc] sm:$0xf]
  %v132 = vld [vmem:[%s1 + $0x100] sm:$0xf]
  %v133 = vld [vmem:[%s1 + $0x104] sm:$0xf]
  %v134 = vld [vmem:[%s1 + $0x108] sm:$0xf]
  %v135 = vld [vmem:[%s1 + $0x10c] sm:$0xf]
  %v136 = vld [vmem:[%s1 + $0x110] sm:$0xf]
  %v137 = vld [vmem:[%s1 + $0x114] sm:$0xf]
  %v138 = vld [vmem:[%s1 + $0x118] sm:$0xf]
  %v139 = vld [vmem:[%s1 + $0x11c] sm:$0xf]
  %v140 = vld [vmem:[%s1 + $0x120] sm:$0xf]
  %v141 = vld [vmem:[%s1 + $0x124] sm:$0xf]
  %v142 = vld [vmem:[%s1 + $0x128] sm:$0xf]
  %v143 = vld [vmem:[%s1 + $0x12c] sm:$0xf]
  %v144 = vld [vmem:[%s1 + $0x130] sm:$0xf]
  %v145 = vld [vmem:[%s1 + $0x134] sm:$0xf]
  %v146 = vld [vmem:[%s1 + $0x138] sm:$0xf]
  %v147 = vld [vmem:[%s1 + $0x13c] sm:$0xf]
  %v148 = vld [vmem:[%s2] sm:$0x1]
  %v150 = vperm.slane %v148, 0
  %v206 = vunpack.c.l.b16 %v14
  %v207 = vunpack.c.h.b16 %v14
  %v208 = vunpack.c.l.b16 %v15
  %v209 = vunpack.c.h.b16 %v15
  %v210 = vunpack.c.l.b16 %v16
  %v211 = vunpack.c.l.b16 %v17
  %v212 = vunpack.c.h.b16 %v17
  %v213 = vunpack.c.l.b16 %v18
  %v214 = vunpack.c.h.b16 %v18
  %v215 = vunpack.c.l.b16 %v19
  %v216 = vunpack.c.l.b16 %v20
  %v217 = vunpack.c.h.b16 %v20
  %v218 = vunpack.c.l.b16 %v21
  %v219 = vunpack.c.h.b16 %v21
  %v220 = vunpack.c.l.b16 %v22
  %v221 = vunpack.c.l.b16 %v23
  %v222 = vunpack.c.h.b16 %v23
  %v223 = vunpack.c.l.b16 %v24
  %v224 = vunpack.c.h.b16 %v24
  %v225 = vunpack.c.l.b16 %v25
  %v226 = vunpack.c.l.b16 %v26
  %v227 = vunpack.c.h.b16 %v26
  %v228 = vunpack.c.l.b16 %v27
  %v229 = vunpack.c.h.b16 %v27
  %v230 = vunpack.c.l.b16 %v28
  %v231 = vunpack.c.l.b16 %v29
  %v232 = vunpack.c.h.b16 %v29
  %v233 = vunpack.c.l.b16 %v30
  %v234 = vunpack.c.h.b16 %v30
  %v235 = vunpack.c.l.b16 %v31
  %v236 = vunpack.c.l.b16 %v32
  %v237 = vunpack.c.h.b16 %v32
  %v238 = vunpack.c.l.b16 %v33
  %v239 = vunpack.c.h.b16 %v33
  %v240 = vunpack.c.l.b16 %v34
  %v241 = vunpack.c.l.b16 %v35
  %v242 = vunpack.c.h.b16 %v35
  %v243 = vunpack.c.l.b16 %v36
  %v244 = vunpack.c.h.b16 %v36
  %v245 = vunpack.c.l.b16 %v37
  %v246 = vunpack.c.l.b16 %v38
  %v247 = vunpack.c.h.b16 %v38
  %v248 = vunpack.c.l.b16 %v39
  %v249 = vunpack.c.h.b16 %v39
  %v250 = vunpack.c.l.b16 %v40
  %v251 = vunpack.c.l.b16 %v41
  %v252 = vunpack.c.h.b16 %v41
  %v253 = vunpack.c.l.b16 %v42
  %v254 = vunpack.c.h.b16 %v42
  %v255 = vunpack.c.l.b16 %v43
  %v256 = vunpack.c.l.b16 %v44
  %v257 = vunpack.c.h.b16 %v44
  %v258 = vunpack.c.l.b16 %v45
  %v259 = vunpack.c.h.b16 %v45
  %v260 = vunpack.c.l.b16 %v46
  %v261 = vunpack.c.l.b16 %v47
  %v262 = vunpack.c.h.b16 %v47
  %v263 = vunpack.c.l.b16 %v48
  %v264 = vunpack.c.h.b16 %v48
  %v265 = vunpack.c.l.b16 %v49
  %v266 = vunpack.c.l.b16 %v50
  %v267 = vunpack.c.h.b16 %v50
  %v268 = vunpack.c.l.b16 %v51
  %v269 = vunpack.c.h.b16 %v51
  %v270 = vunpack.c.l.b16 %v52
  %v271 = vunpack.c.l.b16 %v53
  %v272 = vunpack.c.h.b16 %v53
  %v273 = vunpack.c.l.b16 %v54
  %v274 = vunpack.c.h.b16 %v54
  %v275 = vunpack.c.l.b16 %v55
  %v276 = vunpack.c.l.b16 %v56
  %v277 = vunpack.c.h.b16 %v56
  %v278 = vunpack.c.l.b16 %v57
  %v279 = vunpack.c.h.b16 %v57
  %v280 = vunpack.c.l.b16 %v58
  %v281 = vunpack.c.l.b16 %v59
  %v282 = vunpack.c.h.b16 %v59
  %v283 = vunpack.c.l.b16 %v60
  %v284 = vunpack.c.h.b16 %v60
  %v285 = vunpack.c.l.b16 %v61
  %v286 = vunpack.c.l.b16 %v62
  %v287 = vunpack.c.h.b16 %v62
  %v288 = vunpack.c.l.b16 %v63
  %v289 = vunpack.c.h.b16 %v63
  %v290 = vunpack.c.l.b16 %v64
  %v291 = vunpack.c.l.b16 %v65
  %v292 = vunpack.c.h.b16 %v65
  %v293 = vunpack.c.l.b16 %v66
  %v294 = vunpack.c.h.b16 %v66
  %v295 = vunpack.c.l.b16 %v67
  %v296 = vpack.c.b16 %v211, %v206
  %v297 = vpack.c.b16 %v212, %v207
  %v298 = vpack.c.b16 %v213, %v208
  %v299 = vpack.c.b16 %v214, %v209
  %v300 = vpack.c.b16 %v215, %v210
  %v301 = vpack.c.b16 %v221, %v216
  %v302 = vpack.c.b16 %v222, %v217
  %v303 = vpack.c.b16 %v223, %v218
  %v304 = vpack.c.b16 %v224, %v219
  %v305 = vpack.c.b16 %v225, %v220
  %v306 = vpack.c.b16 %v231, %v226
  %v307 = vpack.c.b16 %v232, %v227
  %v308 = vpack.c.b16 %v233, %v228
  %v309 = vpack.c.b16 %v234, %v229
  %v310 = vpack.c.b16 %v235, %v230
  %v311 = vpack.c.b16 %v241, %v236
  %v312 = vpack.c.b16 %v242, %v237
  %v313 = vpack.c.b16 %v243, %v238
  %v314 = vpack.c.b16 %v244, %v239
  %v315 = vpack.c.b16 %v245, %v240
  %v316 = vpack.c.b16 %v251, %v246
  %v317 = vpack.c.b16 %v252, %v247
  %v318 = vpack.c.b16 %v253, %v248
  %v319 = vpack.c.b16 %v254, %v249
  %v320 = vpack.c.b16 %v255, %v250
  %v321 = vpack.c.b16 %v261, %v256
  %v322 = vpack.c.b16 %v262, %v257
  %v323 = vpack.c.b16 %v263, %v258
  %v324 = vpack.c.b16 %v264, %v259
  %v325 = vpack.c.b16 %v265, %v260
  %v326 = vpack.c.b16 %v271, %v266
  %v327 = vpack.c.b16 %v272, %v267
  %v328 = vpack.c.b16 %v273, %v268
  %v329 = vpack.c.b16 %v274, %v269
  %v330 = vpack.c.b16 %v275, %v270
  %v331 = vpack.c.b16 %v281, %v276
  %v332 = vpack.c.b16 %v282, %v277
  %v333 = vpack.c.b16 %v283, %v278
  %v334 = vpack.c.b16 %v284, %v279
  %v335 = vpack.c.b16 %v285, %v280
  %v336 = vpack.c.b16 %v291, %v286
  %v337 = vpack.c.b16 %v292, %v287
  %v338 = vpack.c.b16 %v293, %v288
  %v339 = vpack.c.b16 %v294, %v289
  %v340 = vpack.c.b16 %v295, %v290
  %v466 = vunpack.c.l.b16 %v68
  %v467 = vunpack.c.l.b16 %v69
  %v468 = vunpack.c.l.b16 %v70
  %v469 = vunpack.c.l.b16 %v71
  %v470 = vunpack.c.l.b16 %v72
  %v471 = vunpack.c.l.b16 %v73
  %v472 = vunpack.c.l.b16 %v74
  %v473 = vunpack.c.l.b16 %v75
  %v474 = vunpack.c.l.b16 %v76
  %v475 = vunpack.c.l.b16 %v77
  %v476 = vunpack.c.l.b16 %v78
  %v477 = vunpack.c.l.b16 %v79
  %v478 = vunpack.c.l.b16 %v80
  %v479 = vunpack.c.l.b16 %v81
  %v480 = vunpack.c.l.b16 %v82
  %v481 = vunpack.c.l.b16 %v83
  %v482 = vunpack.c.l.b16 %v84
  %v483 = vunpack.c.l.b16 %v85
  %v484 = vunpack.c.l.b16 %v86
  %v485 = vunpack.c.l.b16 %v87
  %v486 = vunpack.c.l.b16 %v88
  %v487 = vunpack.c.l.b16 %v89
  %v488 = vunpack.c.l.b16 %v90
  %v489 = vunpack.c.l.b16 %v91
  %v490 = vunpack.c.l.b16 %v92
  %v491 = vunpack.c.l.b16 %v93
  %v492 = vunpack.c.l.b16 %v94
  %v493 = vunpack.c.l.b16 %v95
  %v494 = vunpack.c.l.b16 %v96
  %v495 = vunpack.c.l.b16 %v97
  %v496 = vunpack.c.l.b16 %v98
  %v497 = vunpack.c.l.b16 %v99
  %v498 = vunpack.c.l.b16 %v100
  %v499 = vunpack.c.l.b16 %v101
  %v500 = vunpack.c.l.b16 %v102
  %v501 = vunpack.c.l.b16 %v103
  %v502 = vunpack.c.l.b16 %v104
  %v503 = vunpack.c.l.b16 %v105
  %v504 = vunpack.c.l.b16 %v106
  %v505 = vunpack.c.l.b16 %v107
  %v506 = vunpack.c.l.b16 %v108
  %v507 = vunpack.c.l.b16 %v109
  %v508 = vunpack.c.l.b16 %v110
  %v509 = vunpack.c.l.b16 %v111
  %v510 = vunpack.c.l.b16 %v112
  %v511 = vunpack.c.l.b16 %v113
  %v512 = vunpack.c.l.b16 %v114
  %v513 = vunpack.c.l.b16 %v115
  %v514 = vunpack.c.l.b16 %v116
  %v515 = vunpack.c.l.b16 %v117
  %v516 = vunpack.c.l.b16 %v118
  %v517 = vunpack.c.l.b16 %v119
  %v518 = vunpack.c.l.b16 %v120
  %v519 = vunpack.c.l.b16 %v121
  %v520 = vunpack.c.l.b16 %v122
  %v521 = vunpack.c.l.b16 %v123
  %v522 = vunpack.c.l.b16 %v124
  %v523 = vunpack.c.l.b16 %v125
  %v524 = vunpack.c.l.b16 %v126
  %v525 = vunpack.c.l.b16 %v127
  %v526 = vunpack.c.l.b16 %v128
  %v527 = vunpack.c.l.b16 %v129
  %v528 = vunpack.c.l.b16 %v130
  %v529 = vunpack.c.l.b16 %v131
  %v530 = vunpack.c.l.b16 %v132
  %v531 = vunpack.c.l.b16 %v133
  %v532 = vunpack.c.l.b16 %v134
  %v533 = vunpack.c.l.b16 %v135
  %v534 = vunpack.c.l.b16 %v136
  %v535 = vunpack.c.l.b16 %v137
  %v536 = vunpack.c.l.b16 %v138
  %v537 = vunpack.c.l.b16 %v139
  %v538 = vunpack.c.l.b16 %v140
  %v539 = vunpack.c.l.b16 %v141
  %v540 = vunpack.c.l.b16 %v142
  %v541 = vunpack.c.l.b16 %v143
  %v542 = vunpack.c.l.b16 %v144
  %v543 = vunpack.c.l.b16 %v145
  %v544 = vunpack.c.l.b16 %v146
  %v545 = vunpack.c.l.b16 %v147
  %v546 = vpack.c.b16 %v467, %v466
  %v547 = vpack.c.b16 %v469, %v468
  %v548 = vpack.c.b16 %v471, %v470
  %v549 = vpack.c.b16 %v473, %v472
  %v550 = vpack.c.b16 %v475, %v474
  %v551 = vpack.c.b16 %v477, %v476
  %v552 = vpack.c.b16 %v479, %v478
  %v553 = vpack.c.b16 %v481, %v480
  %v554 = vpack.c.b16 %v483, %v482
  %v555 = vpack.c.b16 %v485, %v484
  %v556 = vpack.c.b16 %v487, %v486
  %v557 = vpack.c.b16 %v489, %v488
  %v558 = vpack.c.b16 %v491, %v490
  %v559 = vpack.c.b16 %v493, %v492
  %v560 = vpack.c.b16 %v495, %v494
  %v561 = vpack.c.b16 %v497, %v496
  %v562 = vpack.c.b16 %v499, %v498
  %v563 = vpack.c.b16 %v501, %v500
  %v564 = vpack.c.b16 %v503, %v502
  %v565 = vpack.c.b16 %v505, %v504
  %v566 = vpack.c.b16 %v507, %v506
  %v567 = vpack.c.b16 %v509, %v508
  %v568 = vpack.c.b16 %v511, %v510
  %v569 = vpack.c.b16 %v513, %v512
  %v570 = vpack.c.b16 %v515, %v514
  %v571 = vpack.c.b16 %v517, %v516
  %v572 = vpack.c.b16 %v519, %v518
  %v573 = vpack.c.b16 %v521, %v520
  %v574 = vpack.c.b16 %v523, %v522
  %v575 = vpack.c.b16 %v525, %v524
  %v576 = vpack.c.b16 %v527, %v526
  %v577 = vpack.c.b16 %v529, %v528
  %v578 = vpack.c.b16 %v531, %v530
  %v579 = vpack.c.b16 %v533, %v532
  %v580 = vpack.c.b16 %v535, %v534
  %v581 = vpack.c.b16 %v537, %v536
  %v582 = vpack.c.b16 %v539, %v538
  %v583 = vpack.c.b16 %v541, %v540
  %v584 = vpack.c.b16 %v543, %v542
  %v585 = vpack.c.b16 %v545, %v544
  %626 = vmatpush.bf16.msra.mxu0 %v553
  %627 = vmatpush.bf16.msra.mxu0 %v552
  %628 = vmatpush.bf16.msra.mxu0 %v551
  %629 = vmatpush.bf16.msra.mxu0 %v550
  %630 = vmatpush.bf16.msra.mxu0 %v549
  %631 = vmatpush.bf16.msra.mxu0 %v548
  %632 = vmatpush.bf16.msra.mxu0 %v547
  %633 = vmatpush.bf16.msra.mxu0 %v546
  %634 = vmatmul.bf16.gmra.mxu0 %v296
  %v635 = vpop.f32.mrf.mxu0
  %v636 = vadd.f32 %v150, %v635
  %v637 = vpop.f32.mrf.mxu0
  %v638 = vadd.f32 %v150, %v637
  %639 = vmatmul.bf16.gmra.mxu0 %v301
  %v640 = vpop.f32.mrf.mxu0
  %v641 = vadd.f32 %v150, %v640
  %v642 = vpop.f32.mrf.mxu0
  %v643 = vadd.f32 %v150, %v642
  %644 = vmatmul.bf16.gmra.mxu0 %v306
  %v645 = vpop.f32.mrf.mxu0
  %v646 = vadd.f32 %v150, %v645
  %v647 = vpop.f32.mrf.mxu0
  %v648 = vadd.f32 %v150, %v647
  %649 = vmatmul.bf16.gmra.mxu0 %v311
  %v650 = vpop.f32.mrf.mxu0
  %v651 = vadd.f32 %v150, %v650
  %v652 = vpop.f32.mrf.mxu0
  %v653 = vadd.f32 %v150, %v652
  %654 = vmatmul.bf16.gmra.mxu0 %v316
  %v655 = vpop.f32.mrf.mxu0
  %v656 = vadd.f32 %v150, %v655
  %v657 = vpop.f32.mrf.mxu0
  %v658 = vadd.f32 %v150, %v657
  %659 = vmatmul.bf16.gmra.mxu0 %v321
  %v660 = vpop.f32.mrf.mxu0
  %v661 = vadd.f32 %v150, %v660
  %v662 = vpop.f32.mrf.mxu0
  %v663 = vadd.f32 %v150, %v662
  %664 = vmatmul.bf16.gmra.mxu0 %v326
  %v665 = vpop.f32.mrf.mxu0
  %v666 = vadd.f32 %v150, %v665
  %v667 = vpop.f32.mrf.mxu0
  %v668 = vadd.f32 %v150, %v667
  %669 = vmatmul.bf16.gmra.mxu0 %v331
  %v670 = vpop.f32.mrf.mxu0
  %v671 = vadd.f32 %v150, %v670
  %v672 = vpop.f32.mrf.mxu0
  %v673 = vadd.f32 %v150, %v672
  %674 = vmatmul.bf16.gmra.mxu0 %v336
  %v675 = vpop.f32.mrf.mxu0
  %v676 = vadd.f32 %v150, %v675
  %v677 = vpop.f32.mrf.mxu0
  %v678 = vadd.f32 %v150, %v677
  %679 = vdwg.mxu0
  %680 = vmatpush.bf16.msra.mxu0 %v561
  %681 = vmatpush.bf16.msra.mxu0 %v560
  %682 = vmatpush.bf16.msra.mxu0 %v559
  %683 = vmatpush.bf16.msra.mxu0 %v558
  %684 = vmatpush.bf16.msra.mxu0 %v557
  %685 = vmatpush.bf16.msra.mxu0 %v556
  %686 = vmatpush.bf16.msra.mxu0 %v555
  %687 = vmatpush.bf16.msra.mxu0 %v554
  %688 = vmatmul.bf16.gmra.mxu0 %v297
  %v689 = vpop.f32.mrf.mxu0
  %v690 = vadd.f32 %v636, %v689
  %v691 = vpop.f32.mrf.mxu0
  %v692 = vadd.f32 %v638, %v691
  %693 = vmatmul.bf16.gmra.mxu0 %v302
  %v694 = vpop.f32.mrf.mxu0
  %v695 = vadd.f32 %v641, %v694
  %v696 = vpop.f32.mrf.mxu0
  %v697 = vadd.f32 %v643, %v696
  %698 = vmatmul.bf16.gmra.mxu0 %v307
  %v699 = vpop.f32.mrf.mxu0
  %v700 = vadd.f32 %v646, %v699
  %v701 = vpop.f32.mrf.mxu0
  %v702 = vadd.f32 %v648, %v701
  %703 = vmatmul.bf16.gmra.mxu0 %v312
  %v704 = vpop.f32.mrf.mxu0
  %v705 = vadd.f32 %v651, %v704
  %v706 = vpop.f32.mrf.mxu0
  %v707 = vadd.f32 %v653, %v706
  %708 = vmatmul.bf16.gmra.mxu0 %v317
  %v709 = vpop.f32.mrf.mxu0
  %v710 = vadd.f32 %v656, %v709
  %v711 = vpop.f32.mrf.mxu0
  %v712 = vadd.f32 %v658, %v711
  %713 = vmatmul.bf16.gmra.mxu0 %v322
  %v714 = vpop.f32.mrf.mxu0
  %v715 = vadd.f32 %v661, %v714
  %v716 = vpop.f32.mrf.mxu0
  %v717 = vadd.f32 %v663, %v716
  %718 = vmatmul.bf16.gmra.mxu0 %v327
  %v719 = vpop.f32.mrf.mxu0
  %v720 = vadd.f32 %v666, %v719
  %v721 = vpop.f32.mrf.mxu0
  %v722 = vadd.f32 %v668, %v721
  %723 = vmatmul.bf16.gmra.mxu0 %v332
  %v724 = vpop.f32.mrf.mxu0
  %v725 = vadd.f32 %v671, %v724
  %v726 = vpop.f32.mrf.mxu0
  %v727 = vadd.f32 %v673, %v726
  %728 = vmatmul.bf16.gmra.mxu0 %v337
  %v729 = vpop.f32.mrf.mxu0
  %v730 = vadd.f32 %v676, %v729
  %v731 = vpop.f32.mrf.mxu0
  %v732 = vadd.f32 %v678, %v731
  %733 = vdwg.mxu0
  %734 = vmatpush.bf16.msra.mxu0 %v569
  %735 = vmatpush.bf16.msra.mxu0 %v568
  %736 = vmatpush.bf16.msra.mxu0 %v567
  %737 = vmatpush.bf16.msra.mxu0 %v566
  %738 = vmatpush.bf16.msra.mxu0 %v565
  %739 = vmatpush.bf16.msra.mxu0 %v564
  %740 = vmatpush.bf16.msra.mxu0 %v563
  %741 = vmatpush.bf16.msra.mxu0 %v562
  %742 = vmatmul.bf16.gmra.mxu0 %v298
  %v743 = vpop.f32.mrf.mxu0
  %v744 = vadd.f32 %v690, %v743
  %v745 = vpop.f32.mrf.mxu0
  %v746 = vadd.f32 %v692, %v745
  %747 = vmatmul.bf16.gmra.mxu0 %v303
  %v748 = vpop.f32.mrf.mxu0
  %v749 = vadd.f32 %v695, %v748
  %v750 = vpop.f32.mrf.mxu0
  %v751 = vadd.f32 %v697, %v750
  %752 = vmatmul.bf16.gmra.mxu0 %v308
  %v753 = vpop.f32.mrf.mxu0
  %v754 = vadd.f32 %v700, %v753
  %v755 = vpop.f32.mrf.mxu0
  %v756 = vadd.f32 %v702, %v755
  %757 = vmatmul.bf16.gmra.mxu0 %v313
  %v758 = vpop.f32.mrf.mxu0
  %v759 = vadd.f32 %v705, %v758
  %v760 = vpop.f32.mrf.mxu0
  %v761 = vadd.f32 %v707, %v760
  %762 = vmatmul.bf16.gmra.mxu0 %v318
  %v763 = vpop.f32.mrf.mxu0
  %v764 = vadd.f32 %v710, %v763
  %v765 = vpop.f32.mrf.mxu0
  %v766 = vadd.f32 %v712, %v765
  %767 = vmatmul.bf16.gmra.mxu0 %v323
  %v768 = vpop.f32.mrf.mxu0
  %v769 = vadd.f32 %v715, %v768
  %v770 = vpop.f32.mrf.mxu0
  %v771 = vadd.f32 %v717, %v770
  %772 = vmatmul.bf16.gmra.mxu0 %v328
  %v773 = vpop.f32.mrf.mxu0
  %v774 = vadd.f32 %v720, %v773
  %v775 = vpop.f32.mrf.mxu0
  %v776 = vadd.f32 %v722, %v775
  %777 = vmatmul.bf16.gmra.mxu0 %v333
  %v778 = vpop.f32.mrf.mxu0
  %v779 = vadd.f32 %v725, %v778
  %v780 = vpop.f32.mrf.mxu0
  %v781 = vadd.f32 %v727, %v780
  %782 = vmatmul.bf16.gmra.mxu0 %v338
  %v783 = vpop.f32.mrf.mxu0
  %v784 = vadd.f32 %v730, %v783
  %v785 = vpop.f32.mrf.mxu0
  %v786 = vadd.f32 %v732, %v785
  %787 = vdwg.mxu0
  %788 = vmatpush.bf16.msra.mxu0 %v577
  %789 = vmatpush.bf16.msra.mxu0 %v576
  %790 = vmatpush.bf16.msra.mxu0 %v575
  %791 = vmatpush.bf16.msra.mxu0 %v574
  %792 = vmatpush.bf16.msra.mxu0 %v573
  %793 = vmatpush.bf16.msra.mxu0 %v572
  %794 = vmatpush.bf16.msra.mxu0 %v571
  %795 = vmatpush.bf16.msra.mxu0 %v570
  %796 = vmatmul.bf16.gmra.mxu0 %v299
  %v797 = vpop.f32.mrf.mxu0
  %v798 = vadd.f32 %v744, %v797
  %v799 = vpop.f32.mrf.mxu0
  %v800 = vadd.f32 %v746, %v799
  %801 = vmatmul.bf16.gmra.mxu0 %v304
  %v802 = vpop.f32.mrf.mxu0
  %v803 = vadd.f32 %v749, %v802
  %v804 = vpop.f32.mrf.mxu0
  %v805 = vadd.f32 %v751, %v804
  %806 = vmatmul.bf16.gmra.mxu0 %v309
  %v807 = vpop.f32.mrf.mxu0
  %v808 = vadd.f32 %v754, %v807
  %v809 = vpop.f32.mrf.mxu0
  %v810 = vadd.f32 %v756, %v809
  %811 = vmatmul.bf16.gmra.mxu0 %v314
  %v812 = vpop.f32.mrf.mxu0
  %v813 = vadd.f32 %v759, %v812
  %v814 = vpop.f32.mrf.mxu0
  %v815 = vadd.f32 %v761, %v814
  %816 = vmatmul.bf16.gmra.mxu0 %v319
  %v817 = vpop.f32.mrf.mxu0
  %v818 = vadd.f32 %v764, %v817
  %v819 = vpop.f32.mrf.mxu0
  %v820 = vadd.f32 %v766, %v819
  %821 = vmatmul.bf16.gmra.mxu0 %v324
  %v822 = vpop.f32.mrf.mxu0
  %v823 = vadd.f32 %v769, %v822
  %v824 = vpop.f32.mrf.mxu0
  %v825 = vadd.f32 %v771, %v824
  %826 = vmatmul.bf16.gmra.mxu0 %v329
  %v827 = vpop.f32.mrf.mxu0
  %v828 = vadd.f32 %v774, %v827
  %v829 = vpop.f32.mrf.mxu0
  %v830 = vadd.f32 %v776, %v829
  %831 = vmatmul.bf16.gmra.mxu0 %v334
  %v832 = vpop.f32.mrf.mxu0
  %v833 = vadd.f32 %v779, %v832
  %v834 = vpop.f32.mrf.mxu0
  %v835 = vadd.f32 %v781, %v834
  %836 = vmatmul.bf16.gmra.mxu0 %v339
  %v837 = vpop.f32.mrf.mxu0
  %v838 = vadd.f32 %v784, %v837
  %v839 = vpop.f32.mrf.mxu0
  %v840 = vadd.f32 %v786, %v839
  %841 = vdwg.mxu0
  %842 = vmatpush.bf16.msra.mxu0 %v585
  %843 = vmatpush.bf16.msra.mxu0 %v584
  %844 = vmatpush.bf16.msra.mxu0 %v583
  %845 = vmatpush.bf16.msra.mxu0 %v582
  %846 = vmatpush.bf16.msra.mxu0 %v581
  %847 = vmatpush.bf16.msra.mxu0 %v580
  %848 = vmatpush.bf16.msra.mxu0 %v579
  %849 = vmatpush.bf16.msra.mxu0 %v578
  %850 = vmatmul.bf16.gmra.mxu0 %v300
  %v851 = vpop.f32.mrf.mxu0
  %v852 = vadd.f32 %v798, %v851
  %v853 = vpop.f32.mrf.mxu0
  %v854 = vadd.f32 %v800, %v853
  %855 = vmatmul.bf16.gmra.mxu0 %v305
  %v856 = vpop.f32.mrf.mxu0
  %v857 = vadd.f32 %v803, %v856
  %v858 = vpop.f32.mrf.mxu0
  %v859 = vadd.f32 %v805, %v858
  %860 = vmatmul.bf16.gmra.mxu0 %v310
  %v861 = vpop.f32.mrf.mxu0
  %v862 = vadd.f32 %v808, %v861
  %v863 = vpop.f32.mrf.mxu0
  %v864 = vadd.f32 %v810, %v863
  %865 = vmatmul.bf16.gmra.mxu0 %v315
  %v866 = vpop.f32.mrf.mxu0
  %v867 = vadd.f32 %v813, %v866
  %v868 = vpop.f32.mrf.mxu0
  %v869 = vadd.f32 %v815, %v868
  %870 = vmatmul.bf16.gmra.mxu0 %v320
  %v871 = vpop.f32.mrf.mxu0
  %v872 = vadd.f32 %v818, %v871
  %v873 = vpop.f32.mrf.mxu0
  %v874 = vadd.f32 %v820, %v873
  %875 = vmatmul.bf16.gmra.mxu0 %v325
  %v876 = vpop.f32.mrf.mxu0
  %v877 = vadd.f32 %v823, %v876
  %v878 = vpop.f32.mrf.mxu0
  %v879 = vadd.f32 %v825, %v878
  %880 = vmatmul.bf16.gmra.mxu0 %v330
  %v881 = vpop.f32.mrf.mxu0
  %v882 = vadd.f32 %v828, %v881
  %v883 = vpop.f32.mrf.mxu0
  %v884 = vadd.f32 %v830, %v883
  %885 = vmatmul.bf16.gmra.mxu0 %v335
  %v886 = vpop.f32.mrf.mxu0
  %v887 = vadd.f32 %v833, %v886
  %v888 = vpop.f32.mrf.mxu0
  %v889 = vadd.f32 %v835, %v888
  %890 = vmatmul.bf16.gmra.mxu0 %v340
  %v891 = vpop.f32.mrf.mxu0
  %v892 = vadd.f32 %v838, %v891
  %v893 = vpop.f32.mrf.mxu0
  %v894 = vadd.f32 %v840, %v893
  %895 = vdwg.mxu0
  %v896 = vmax.f32 %v852, 0.0
  %v897 = vmax.f32 %v854, 0.0
  %v898 = vmax.f32 %v857, 0.0
  %v899 = vmax.f32 %v859, 0.0
  %v900 = vmax.f32 %v862, 0.0
  %v901 = vmax.f32 %v864, 0.0
  %v902 = vmax.f32 %v867, 0.0
  %v903 = vmax.f32 %v869, 0.0
  %v904 = vmax.f32 %v872, 0.0
  %v905 = vmax.f32 %v874, 0.0
  %v906 = vmax.f32 %v877, 0.0
  %v907 = vmax.f32 %v879, 0.0
  %v908 = vmax.f32 %v882, 0.0
  %v909 = vmax.f32 %v884, 0.0
  %v910 = vmax.f32 %v887, 0.0
  %v911 = vmax.f32 %v889, 0.0
  %v912 = vmax.f32 %v892, 0.0
  %v913 = vmax.f32 %v894, 0.0
  %914 = vst [vmem:[%s3] sm:$0xff] %v896
  %915 = vst [vmem:[%s3 + $0x8] sm:$0xff] %v897
  %916 = vst [vmem:[%s3 + $0x10] sm:$0xff] %v898
  %917 = vst [vmem:[%s3 + $0x18] sm:$0xff] %v899
  %918 = vst [vmem:[%s3 + $0x20] sm:$0xff] %v900
  %919 = vst [vmem:[%s3 + $0x28] sm:$0xff] %v901
  %920 = vst [vmem:[%s3 + $0x30] sm:$0xff] %v902
  %921 = vst [vmem:[%s3 + $0x38] sm:$0xff] %v903
  %922 = vst [vmem:[%s3 + $0x40] sm:$0xff] %v904
  %923 = vst [vmem:[%s3 + $0x48] sm:$0xff] %v905
  %924 = vst [vmem:[%s3 + $0x50] sm:$0xff] %v906
  %925 = vst [vmem:[%s3 + $0x58] sm:$0xff] %v907
  %926 = vst [vmem:[%s3 + $0x60] sm:$0xff] %v908
  %927 = vst [vmem:[%s3 + $0x68] sm:$0xff] %v909
  %928 = vst [vmem:[%s3 + $0x70] sm:$0xff] %v910
  %929 = vst [vmem:[%s3 + $0x78] sm:$0xff] %v911
  %930 = vst [vmem:[%s3 + $0x80] sm:$0xff] %v912
  %931 = vst [vmem:[%s3 + $0x88] sm:$0xff] %v913
  // Predicated region
  $region14: #{_lambda_.12} parent=0 // pred_check
    _
  $region15: #{_lambda_.12} parent=0 // pred_check_branch
    %933 = sbr.rel (0) target = $region17
  $region16: #{_lambda_.12} parent=0 // pred_region
    _
  $region17: #{_lambda_.12} parent=0 // pred_fallthru
    _
  // Predicated region
  $region18: #{_lambda_.12} parent=0 // pred_check
    _
  $region19: #{_lambda_.12} parent=0 // pred_check_branch
    %935 = sbr.rel (0) target = $region21
  $region20: #{_lambda_.12} parent=0 // pred_region
    _
  $region21: #{_lambda_.12} parent=0 // pred_fallthru
    _

// kernel: _lambda_.13
$region0: #{_lambda_.13}
  #allocation0 [shape = 'u32[]', space=smem, size = 0x4, offset = 0x4, fixed_abs, tag = 'smem constant byte address 0x4 - core index']
  #allocation1 [shape = 'u32[72,128]{1,0:T(1,128)}', space=vmem, size = 0x9000, scoped, tag = 'internal scratch']
  %s0 = inlined_call_operand.vmem [shape: bf16[80,640], index: 0, kind: input, shape index: {}]
  %s1 = inlined_call_operand.vmem [shape: bf16[640,128], index: 1, kind: input, shape index: {}]
  %s2 = inlined_call_operand.vmem [shape: f32[1,128], index: 2, kind: input, shape index: {}]
  %s3 = inlined_call_operand.vmem [shape: f32[80,128], index: 3, kind: output, shape index: {}]
  %s4 = sld [smem:[#allocation0]]
  $region22: #{_lambda_.13} parent=0
    _
  %s6 = ssub.s32 1, %s4
  %s7 = scalar_select 0, %s6, %s4
  // Predicated region
  $region2: #{_lambda_.13} parent=0 // pred_check
    _
  $region3: #{_lambda_.13} parent=0 // pred_check_branch
    %9 = sbr.rel (0) target = $region5
  $region4: #{_lambda_.13} parent=0 // pred_region
    _
  $region5: #{_lambda_.13} parent=0 // pred_fallthru
    _
  // Predicated region
  $region6: #{_lambda_.13} parent=0 // pred_check
    _
  $region7: #{_lambda_.13} parent=0 // pred_check_branch
    %11 = sbr.rel (0) target = $region9
  $region8: #{_lambda_.13} parent=0 // pred_region
    _
  $region9: #{_lambda_.13} parent=0 // pred_fallthru
    _
  // Predicated region
  $region10: #{_lambda_.13} parent=0 // pred_check
    _
  $region11: #{_lambda_.13} parent=0 // pred_check_branch
    %13 = sbr.rel (0) target = $region13
  $region12: #{_lambda_.13} parent=0 // pred_region
    _
  $region13: #{_lambda_.13} parent=0 // pred_fallthru
    _
  %v14 = vld [vmem:[%s0] sm:$0xff]
  %v15 = vld [vmem:[%s0 + $0x8] sm:$0xff]
  %v16 = vld [vmem:[%s0 + $0x10] sm:$0xf]
  %v17 = vld [vmem:[%s0 + $0x14] sm:$0xff]
  %v18 = vld [vmem:[%s0 + $0x1c] sm:$0xff]
  %v19 = vld [vmem:[%s0 + $0x24] sm:$0xf]
  %v20 = vld [vmem:[%s0 + $0x28] sm:$0xff]
  %v21 = vld [vmem:[%s0 + $0x30] sm:$0xff]
  %v22 = vld [vmem:[%s0 + $0x38] sm:$0xf]
  %v23 = vld [vmem:[%s0 + $0x3c] sm:$0xff]
  %v24 = vld [vmem:[%s0 + $0x44] sm:$0xff]
  %v25 = vld [vmem:[%s0 + $0x4c] sm:$0xf]
  %v26 = vld [vmem:[%s0 + $0x50] sm:$0xff]
  %v27 = vld [vmem:[%s0 + $0x58] sm:$0xff]
  %v28 = vld [vmem:[%s0 + $0x60] sm:$0xf]
  %v29 = vld [vmem:[%s0 + $0x64] sm:$0xff]
  %v30 = vld [vmem:[%s0 + $0x6c] sm:$0xff]
  %v31 = vld [vmem:[%s0 + $0x74] sm:$0xf]
  %v32 = vld [vmem:[%s0 + $0x78] sm:$0xff]
  %v33 = vld [vmem:[%s0 + $0x80] sm:$0xff]
  %v34 = vld [vmem:[%s0 + $0x88] sm:$0xf]
  %v35 = vld [vmem:[%s0 + $0x8c] sm:$0xff]
  %v36 = vld [vmem:[%s0 + $0x94] sm:$0xff]
  %v37 = vld [vmem:[%s0 + $0x9c] sm:$0xf]
  %v38 = vld [vmem:[%s0 + $0xa0] sm:$0xff]
  %v39 = vld [vmem:[%s0 + $0xa8] sm:$0xff]
  %v40 = vld [vmem:[%s0 + $0xb0] sm:$0xf]
  %v41 = vld [vmem:[%s0 + $0xb4] sm:$0xff]
  %v42 = vld [vmem:[%s0 + $0xbc] sm:$0xff]
  %v43 = vld [vmem:[%s0 + $0xc4] sm:$0xf]
  %v44 = vld [vmem:[%s1] sm:$0xf]
  %v45 = vld [vmem:[%s1 + $0x4] sm:$0xf]
  %v46 = vld [vmem:[%s1 + $0x8] sm:$0xf]
  %v47 = vld [vmem:[%s1 + $0xc] sm:$0xf]
  %v48 = vld [vmem:[%s1 + $0x10] sm:$0xf]
  %v49 = vld [vmem:[%s1 + $0x14] sm:$0xf]
  %v50 = vld [vmem:[%s1 + $0x18] sm:$0xf]
  %v51 = vld [vmem:[%s1 + $0x1c] sm:$0xf]
  %v52 = vld [vmem:[%s1 + $0x20] sm:$0xf]
  %v53 = vld [vmem:[%s1 + $0x24] sm:$0xf]
  %v54 = vld [vmem:[%s1 + $0x28] sm:$0xf]
  %v55 = vld [vmem:[%s1 + $0x2c] sm:$0xf]
  %v56 = vld [vmem:[%s1 + $0x30] sm:$0xf]
  %v57 = vld [vmem:[%s1 + $0x34] sm:$0xf]
  %v58 = vld [vmem:[%s1 + $0x38] sm:$0xf]
  %v59 = vld [vmem:[%s1 + $0x3c] sm:$0xf]
  %v60 = vld [vmem:[%s1 + $0x40] sm:$0xf]
  %v61 = vld [vmem:[%s1 + $0x44] sm:$0xf]
  %v62 = vld [vmem:[%s1 + $0x48] sm:$0xf]
  %v63 = vld [vmem:[%s1 + $0x4c] sm:$0xf]
  %v64 = vld [vmem:[%s1 + $0x50] sm:$0xf]
  %v65 = vld [vmem:[%s1 + $0x54] sm:$0xf]
  %v66 = vld [vmem:[%s1 + $0x58] sm:$0xf]
  %v67 = vld [vmem:[%s1 + $0x5c] sm:$0xf]
  %v68 = vld [vmem:[%s1 + $0x60] sm:$0xf]
  %v69 = vld [vmem:[%s1 + $0x64] sm:$0xf]
  %v70 = vld [vmem:[%s1 + $0x68] sm:$0xf]
  %v71 = vld [vmem:[%s1 + $0x6c] sm:$0xf]
  %v72 = vld [vmem:[%s1 + $0x70] sm:$0xf]
  %v73 = vld [vmem:[%s1 + $0x74] sm:$0xf]
  %v74 = vld [vmem:[%s1 + $0x78] sm:$0xf]
  %v75 = vld [vmem:[%s1 + $0x7c] sm:$0xf]
  %v76 = vld [vmem:[%s1 + $0x80] sm:$0xf]
  %v77 = vld [vmem:[%s1 + $0x84] sm:$0xf]
  %v78 = vld [vmem:[%s1 + $0x88] sm:$0xf]
  %v79 = vld [vmem:[%s1 + $0x8c] sm:$0xf]
  %v80 = vld [vmem:[%s1 + $0x90] sm:$0xf]
  %v81 = vld [vmem:[%s1 + $0x94] sm:$0xf]
  %v82 = vld [vmem:[%s1 + $0x98] sm:$0xf]
  %v83 = vld [vmem:[%s1 + $0x9c] sm:$0xf]
  %v84 = vld [vmem:[%s1 + $0xa0] sm:$0xf]
  %v85 = vld [vmem:[%s1 + $0xa4] sm:$0xf]
  %v86 = vld [vmem:[%s1 + $0xa8] sm:$0xf]
  %v87 = vld [vmem:[%s1 + $0xac] sm:$0xf]
  %v88 = vld [vmem:[%s1 + $0xb0] sm:$0xf]
  %v89 = vld [vmem:[%s1 + $0xb4] sm:$0xf]
  %v90 = vld [vmem:[%s1 + $0xb8] sm:$0xf]
  %v91 = vld [vmem:[%s1 + $0xbc] sm:$0xf]
  %v92 = vld [vmem:[%s1 + $0xc0] sm:$0xf]
  %v93 = vld [vmem:[%s1 + $0xc4] sm:$0xf]
  %v94 = vld [vmem:[%s1 + $0xc8] sm:$0xf]
  %v95 = vld [vmem:[%s1 + $0xcc] sm:$0xf]
  %v96 = vld [vmem:[%s1 + $0xd0] sm:$0xf]
  %v97 = vld [vmem:[%s1 + $0xd4] sm:$0xf]
  %v98 = vld [vmem:[%s1 + $0xd8] sm:$0xf]
  %v99 = vld [vmem:[%s1 + $0xdc] sm:$0xf]
  %v100 = vld [vmem:[%s1 + $0xe0] sm:$0xf]
  %v101 = vld [vmem:[%s1 + $0xe4] sm:$0xf]
  %v102 = vld [vmem:[%s1 + $0xe8] sm:$0xf]
  %v103 = vld [vmem:[%s1 + $0xec] sm:$0xf]
  %v104 = vld [vmem:[%s1 + $0xf0] sm:$0xf]
  %v105 = vld [vmem:[%s1 + $0xf4] sm:$0xf]
  %v106 = vld [vmem:[%s1 + $0xf8] sm:$0xf]
  %v107 = vld [vmem:[%s1 + $0xfc] sm:$0xf]
  %v108 = vld [vmem:[%s1 + $0x100] sm:$0xf]
  %v109 = vld [vmem:[%s1 + $0x104] sm:$0xf]
  %v110 = vld [vmem:[%s1 + $0x108] sm:$0xf]
  %v111 = vld [vmem:[%s1 + $0x10c] sm:$0xf]
  %v112 = vld [vmem:[%s1 + $0x110] sm:$0xf]
  %v113 = vld [vmem:[%s1 + $0x114] sm:$0xf]
  %v114 = vld [vmem:[%s1 + $0x118] sm:$0xf]
  %v115 = vld [vmem:[%s1 + $0x11c] sm:$0xf]
  %v116 = vld [vmem:[%s1 + $0x120] sm:$0xf]
  %v117 = vld [vmem:[%s1 + $0x124] sm:$0xf]
  %v118 = vld [vmem:[%s1 + $0x128] sm:$0xf]
  %v119 = vld [vmem:[%s1 + $0x12c] sm:$0xf]
  %v120 = vld [vmem:[%s1 + $0x130] sm:$0xf]
  %v121 = vld [vmem:[%s1 + $0x134] sm:$0xf]
  %v122 = vld [vmem:[%s1 + $0x138] sm:$0xf]
  %v123 = vld [vmem:[%s1 + $0x13c] sm:$0xf]
  %v124 = vld [vmem:[%s2] sm:$0x1]
  %v126 = vperm.slane %v124, 0
  %v158 = vunpack.c.l.b16 %v14
  %v159 = vunpack.c.h.b16 %v14
  %v160 = vunpack.c.l.b16 %v15
  %v161 = vunpack.c.h.b16 %v15
  %v162 = vunpack.c.l.b16 %v16
  %v163 = vunpack.c.l.b16 %v17
  %v164 = vunpack.c.h.b16 %v17
  %v165 = vunpack.c.l.b16 %v18
  %v166 = vunpack.c.h.b16 %v18
  %v167 = vunpack.c.l.b16 %v19
  %v168 = vunpack.c.l.b16 %v20
  %v169 = vunpack.c.h.b16 %v20
  %v170 = vunpack.c.l.b16 %v21
  %v171 = vunpack.c.h.b16 %v21
  %v172 = vunpack.c.l.b16 %v22
  %v173 = vunpack.c.l.b16 %v23
  %v174 = vunpack.c.h.b16 %v23
  %v175 = vunpack.c.l.b16 %v24
  %v176 = vunpack.c.h.b16 %v24
  %v177 = vunpack.c.l.b16 %v25
  %v178 = vunpack.c.l.b16 %v26
  %v179 = vunpack.c.h.b16 %v26
  %v180 = vunpack.c.l.b16 %v27
  %v181 = vunpack.c.h.b16 %v27
  %v182 = vunpack.c.l.b16 %v28
  %v183 = vunpack.c.l.b16 %v29
  %v184 = vunpack.c.h.b16 %v29
  %v185 = vunpack.c.l.b16 %v30
  %v186 = vunpack.c.h.b16 %v30
  %v187 = vunpack.c.l.b16 %v31
  %v188 = vunpack.c.l.b16 %v32
  %v189 = vunpack.c.h.b16 %v32
  %v190 = vunpack.c.l.b16 %v33
  %v191 = vunpack.c.h.b16 %v33
  %v192 = vunpack.c.l.b16 %v34
  %v193 = vunpack.c.l.b16 %v35
  %v194 = vunpack.c.h.b16 %v35
  %v195 = vunpack.c.l.b16 %v36
  %v196 = vunpack.c.h.b16 %v36
  %v197 = vunpack.c.l.b16 %v37
  %v198 = vunpack.c.l.b16 %v38
  %v199 = vunpack.c.h.b16 %v38
  %v200 = vunpack.c.l.b16 %v39
  %v201 = vunpack.c.h.b16 %v39
  %v202 = vunpack.c.l.b16 %v40
  %v203 = vunpack.c.l.b16 %v41
  %v204 = vunpack.c.h.b16 %v41
  %v205 = vunpack.c.l.b16 %v42
  %v206 = vunpack.c.h.b16 %v42
  %v207 = vunpack.c.l.b16 %v43
  %v208 = vpack.c.b16 %v163, %v158
  %v209 = vpack.c.b16 %v164, %v159
  %v210 = vpack.c.b16 %v165, %v160
  %v211 = vpack.c.b16 %v166, %v161
  %v212 = vpack.c.b16 %v167, %v162
  %v213 = vpack.c.b16 %v173, %v168
  %v214 = vpack.c.b16 %v174, %v169
  %v215 = vpack.c.b16 %v175, %v170
  %v216 = vpack.c.b16 %v176, %v171
  %v217 = vpack.c.b16 %v177, %v172
  %v218 = vpack.c.b16 %v183, %v178
  %v219 = vpack.c.b16 %v184, %v179
  %v220 = vpack.c.b16 %v185, %v180
  %v221 = vpack.c.b16 %v186, %v181
  %v222 = vpack.c.b16 %v187, %v182
  %v223 = vpack.c.b16 %v193, %v188
  %v224 = vpack.c.b16 %v194, %v189
  %v225 = vpack.c.b16 %v195, %v190
  %v226 = vpack.c.b16 %v196, %v191
  %v227 = vpack.c.b16 %v197, %v192
  %v228 = vpack.c.b16 %v203, %v198
  %v229 = vpack.c.b16 %v204, %v199
  %v230 = vpack.c.b16 %v205, %v200
  %v231 = vpack.c.b16 %v206, %v201
  %v232 = vpack.c.b16 %v207, %v202
  %v338 = vunpack.c.l.b16 %v44
  %v339 = vunpack.c.l.b16 %v45
  %v340 = vunpack.c.l.b16 %v46
  %v341 = vunpack.c.l.b16 %v47
  %v342 = vunpack.c.l.b16 %v48
  %v343 = vunpack.c.l.b16 %v49
  %v344 = vunpack.c.l.b16 %v50
  %v345 = vunpack.c.l.b16 %v51
  %v346 = vunpack.c.l.b16 %v52
  %v347 = vunpack.c.l.b16 %v53
  %v348 = vunpack.c.l.b16 %v54
  %v349 = vunpack.c.l.b16 %v55
  %v350 = vunpack.c.l.b16 %v56
  %v351 = vunpack.c.l.b16 %v57
  %v352 = vunpack.c.l.b16 %v58
  %v353 = vunpack.c.l.b16 %v59
  %v354 = vunpack.c.l.b16 %v60
  %v355 = vunpack.c.l.b16 %v61
  %v356 = vunpack.c.l.b16 %v62
  %v357 = vunpack.c.l.b16 %v63
  %v358 = vunpack.c.l.b16 %v64
  %v359 = vunpack.c.l.b16 %v65
  %v360 = vunpack.c.l.b16 %v66
  %v361 = vunpack.c.l.b16 %v67
  %v362 = vunpack.c.l.b16 %v68
  %v363 = vunpack.c.l.b16 %v69
  %v364 = vunpack.c.l.b16 %v70
  %v365 = vunpack.c.l.b16 %v71
  %v366 = vunpack.c.l.b16 %v72
  %v367 = vunpack.c.l.b16 %v73
  %v368 = vunpack.c.l.b16 %v74
  %v369 = vunpack.c.l.b16 %v75
  %v370 = vunpack.c.l.b16 %v76
  %v371 = vunpack.c.l.b16 %v77
  %v372 = vunpack.c.l.b16 %v78
  %v373 = vunpack.c.l.b16 %v79
  %v374 = vunpack.c.l.b16 %v80
  %v375 = vunpack.c.l.b16 %v81
  %v376 = vunpack.c.l.b16 %v82
  %v377 = vunpack.c.l.b16 %v83
  %v378 = vunpack.c.l.b16 %v84
  %v379 = vunpack.c.l.b16 %v85
  %v380 = vunpack.c.l.b16 %v86
  %v381 = vunpack.c.l.b16 %v87
  %v382 = vunpack.c.l.b16 %v88
  %v383 = vunpack.c.l.b16 %v89
  %v384 = vunpack.c.l.b16 %v90
  %v385 = vunpack.c.l.b16 %v91
  %v386 = vunpack.c.l.b16 %v92
  %v387 = vunpack.c.l.b16 %v93
  %v388 = vunpack.c.l.b16 %v94
  %v389 = vunpack.c.l.b16 %v95
  %v390 = vunpack.c.l.b16 %v96
  %v391 = vunpack.c.l.b16 %v97
  %v392 = vunpack.c.l.b16 %v98
  %v393 = vunpack.c.l.b16 %v99
  %v394 = vunpack.c.l.b16 %v100
  %v395 = vunpack.c.l.b16 %v101
  %v396 = vunpack.c.l.b16 %v102
  %v397 = vunpack.c.l.b16 %v103
  %v398 = vunpack.c.l.b16 %v104
  %v399 = vunpack.c.l.b16 %v105
  %v400 = vunpack.c.l.b16 %v106
  %v401 = vunpack.c.l.b16 %v107
  %v402 = vunpack.c.l.b16 %v108
  %v403 = vunpack.c.l.b16 %v109
  %v404 = vunpack.c.l.b16 %v110
  %v405 = vunpack.c.l.b16 %v111
  %v406 = vunpack.c.l.b16 %v112
  %v407 = vunpack.c.l.b16 %v113
  %v408 = vunpack.c.l.b16 %v114
  %v409 = vunpack.c.l.b16 %v115
  %v410 = vunpack.c.l.b16 %v116
  %v411 = vunpack.c.l.b16 %v117
  %v412 = vunpack.c.l.b16 %v118
  %v413 = vunpack.c.l.b16 %v119
  %v414 = vunpack.c.l.b16 %v120
  %v415 = vunpack.c.l.b16 %v121
  %v416 = vunpack.c.l.b16 %v122
  %v417 = vunpack.c.l.b16 %v123
  %v418 = vpack.c.b16 %v339, %v338
  %v419 = vpack.c.b16 %v341, %v340
  %v420 = vpack.c.b16 %v343, %v342
  %v421 = vpack.c.b16 %v345, %v344
  %v422 = vpack.c.b16 %v347, %v346
  %v423 = vpack.c.b16 %v349, %v348
  %v424 = vpack.c.b16 %v351, %v350
  %v425 = vpack.c.b16 %v353, %v352
  %v426 = vpack.c.b16 %v355, %v354
  %v427 = vpack.c.b16 %v357, %v356
  %v428 = vpack.c.b16 %v359, %v358
  %v429 = vpack.c.b16 %v361, %v360
  %v430 = vpack.c.b16 %v363, %v362
  %v431 = vpack.c.b16 %v365, %v364
  %v432 = vpack.c.b16 %v367, %v366
  %v433 = vpack.c.b16 %v369, %v368
  %v434 = vpack.c.b16 %v371, %v370
  %v435 = vpack.c.b16 %v373, %v372
  %v436 = vpack.c.b16 %v375, %v374
  %v437 = vpack.c.b16 %v377, %v376
  %v438 = vpack.c.b16 %v379, %v378
  %v439 = vpack.c.b16 %v381, %v380
  %v440 = vpack.c.b16 %v383, %v382
  %v441 = vpack.c.b16 %v385, %v384
  %v442 = vpack.c.b16 %v387, %v386
  %v443 = vpack.c.b16 %v389, %v388
  %v444 = vpack.c.b16 %v391, %v390
  %v445 = vpack.c.b16 %v393, %v392
  %v446 = vpack.c.b16 %v395, %v394
  %v447 = vpack.c.b16 %v397, %v396
  %v448 = vpack.c.b16 %v399, %v398
  %v449 = vpack.c.b16 %v401, %v400
  %v450 = vpack.c.b16 %v403, %v402
  %v451 = vpack.c.b16 %v405, %v404
  %v452 = vpack.c.b16 %v407, %v406
  %v453 = vpack.c.b16 %v409, %v408
  %v454 = vpack.c.b16 %v411, %v410
  %v455 = vpack.c.b16 %v413, %v412
  %v456 = vpack.c.b16 %v415, %v414
  %v457 = vpack.c.b16 %v417, %v416
  %498 = vmatpush.bf16.msra.mxu0 %v425
  %499 = vmatpush.bf16.msra.mxu0 %v424
  %500 = vmatpush.bf16.msra.mxu0 %v423
  %501 = vmatpush.bf16.msra.mxu0 %v422
  %502 = vmatpush.bf16.msra.mxu0 %v421
  %503 = vmatpush.bf16.msra.mxu0 %v420
  %504 = vmatpush.bf16.msra.mxu0 %v419
  %505 = vmatpush.bf16.msra.mxu0 %v418
  %506 = vmatmul.bf16.gmra.mxu0 %v208
  %v507 = vpop.f32.mrf.mxu0
  %v508 = vadd.f32 %v126, %v507
  %v509 = vpop.f32.mrf.mxu0
  %v510 = vadd.f32 %v126, %v509
  %511 = vmatmul.bf16.gmra.mxu0 %v213
  %v512 = vpop.f32.mrf.mxu0
  %v513 = vadd.f32 %v126, %v512
  %v514 = vpop.f32.mrf.mxu0
  %v515 = vadd.f32 %v126, %v514
  %516 = vmatmul.bf16.gmra.mxu0 %v218
  %v517 = vpop.f32.mrf.mxu0
  %v518 = vadd.f32 %v126, %v517
  %v519 = vpop.f32.mrf.mxu0
  %v520 = vadd.f32 %v126, %v519
  %521 = vmatmul.bf16.gmra.mxu0 %v223
  %v522 = vpop.f32.mrf.mxu0
  %v523 = vadd.f32 %v126, %v522
  %v524 = vpop.f32.mrf.mxu0
  %v525 = vadd.f32 %v126, %v524
  %526 = vmatmul.bf16.gmra.mxu0 %v228
  %v527 = vpop.f32.mrf.mxu0
  %v528 = vadd.f32 %v126, %v527
  %v529 = vpop.f32.mrf.mxu0
  %v530 = vadd.f32 %v126, %v529
  %531 = vdwg.mxu0
  %532 = vmatpush.bf16.msra.mxu0 %v433
  %533 = vmatpush.bf16.msra.mxu0 %v432
  %534 = vmatpush.bf16.msra.mxu0 %v431
  %535 = vmatpush.bf16.msra.mxu0 %v430
  %536 = vmatpush.bf16.msra.mxu0 %v429
  %537 = vmatpush.bf16.msra.mxu0 %v428
  %538 = vmatpush.bf16.msra.mxu0 %v427
  %539 = vmatpush.bf16.msra.mxu0 %v426
  %540 = vmatmul.bf16.gmra.mxu0 %v209
  %v541 = vpop.f32.mrf.mxu0
  %v542 = vadd.f32 %v508, %v541
  %v543 = vpop.f32.mrf.mxu0
  %v544 = vadd.f32 %v510, %v543
  %545 = vmatmul.bf16.gmra.mxu0 %v214
  %v546 = vpop.f32.mrf.mxu0
  %v547 = vadd.f32 %v513, %v546
  %v548 = vpop.f32.mrf.mxu0
  %v549 = vadd.f32 %v515, %v548
  %550 = vmatmul.bf16.gmra.mxu0 %v219
  %v551 = vpop.f32.mrf.mxu0
  %v552 = vadd.f32 %v518, %v551
  %v553 = vpop.f32.mrf.mxu0
  %v554 = vadd.f32 %v520, %v553
  %555 = vmatmul.bf16.gmra.mxu0 %v224
  %v556 = vpop.f32.mrf.mxu0
  %v557 = vadd.f32 %v523, %v556
  %v558 = vpop.f32.mrf.mxu0
  %v559 = vadd.f32 %v525, %v558
  %560 = vmatmul.bf16.gmra.mxu0 %v229
  %v561 = vpop.f32.mrf.mxu0
  %v562 = vadd.f32 %v528, %v561
  %v563 = vpop.f32.mrf.mxu0
  %v564 = vadd.f32 %v530, %v563
  %565 = vdwg.mxu0
  %566 = vmatpush.bf16.msra.mxu0 %v441
  %567 = vmatpush.bf16.msra.mxu0 %v440
  %568 = vmatpush.bf16.msra.mxu0 %v439
  %569 = vmatpush.bf16.msra.mxu0 %v438
  %570 = vmatpush.bf16.msra.mxu0 %v437
  %571 = vmatpush.bf16.msra.mxu0 %v436
  %572 = vmatpush.bf16.msra.mxu0 %v435
  %573 = vmatpush.bf16.msra.mxu0 %v434
  %574 = vmatmul.bf16.gmra.mxu0 %v210
  %v575 = vpop.f32.mrf.mxu0
  %v576 = vadd.f32 %v542, %v575
  %v577 = vpop.f32.mrf.mxu0
  %v578 = vadd.f32 %v544, %v577
  %579 = vmatmul.bf16.gmra.mxu0 %v215
  %v580 = vpop.f32.mrf.mxu0
  %v581 = vadd.f32 %v547, %v580
  %v582 = vpop.f32.mrf.mxu0
  %v583 = vadd.f32 %v549, %v582
  %584 = vmatmul.bf16.gmra.mxu0 %v220
  %v585 = vpop.f32.mrf.mxu0
  %v586 = vadd.f32 %v552, %v585
  %v587 = vpop.f32.mrf.mxu0
  %v588 = vadd.f32 %v554, %v587
  %589 = vmatmul.bf16.gmra.mxu0 %v225
  %v590 = vpop.f32.mrf.mxu0
  %v591 = vadd.f32 %v557, %v590
  %v592 = vpop.f32.mrf.mxu0
  %v593 = vadd.f32 %v559, %v592
  %594 = vmatmul.bf16.gmra.mxu0 %v230
  %v595 = vpop.f32.mrf.mxu0
  %v596 = vadd.f32 %v562, %v595
  %v597 = vpop.f32.mrf.mxu0
  %v598 = vadd.f32 %v564, %v597
  %599 = vdwg.mxu0
  %600 = vmatpush.bf16.msra.mxu0 %v449
  %601 = vmatpush.bf16.msra.mxu0 %v448
  %602 = vmatpush.bf16.msra.mxu0 %v447
  %603 = vmatpush.bf16.msra.mxu0 %v446
  %604 = vmatpush.bf16.msra.mxu0 %v445
  %605 = vmatpush.bf16.msra.mxu0 %v444
  %606 = vmatpush.bf16.msra.mxu0 %v443
  %607 = vmatpush.bf16.msra.mxu0 %v442
  %608 = vmatmul.bf16.gmra.mxu0 %v211
  %v609 = vpop.f32.mrf.mxu0
  %v610 = vadd.f32 %v576, %v609
  %v611 = vpop.f32.mrf.mxu0
  %v612 = vadd.f32 %v578, %v611
  %613 = vmatmul.bf16.gmra.mxu0 %v216
  %v614 = vpop.f32.mrf.mxu0
  %v615 = vadd.f32 %v581, %v614
  %v616 = vpop.f32.mrf.mxu0
  %v617 = vadd.f32 %v583, %v616
  %618 = vmatmul.bf16.gmra.mxu0 %v221
  %v619 = vpop.f32.mrf.mxu0
  %v620 = vadd.f32 %v586, %v619
  %v621 = vpop.f32.mrf.mxu0
  %v622 = vadd.f32 %v588, %v621
  %623 = vmatmul.bf16.gmra.mxu0 %v226
  %v624 = vpop.f32.mrf.mxu0
  %v625 = vadd.f32 %v591, %v624
  %v626 = vpop.f32.mrf.mxu0
  %v627 = vadd.f32 %v593, %v626
  %628 = vmatmul.bf16.gmra.mxu0 %v231
  %v629 = vpop.f32.mrf.mxu0
  %v630 = vadd.f32 %v596, %v629
  %v631 = vpop.f32.mrf.mxu0
  %v632 = vadd.f32 %v598, %v631
  %633 = vdwg.mxu0
  %634 = vmatpush.bf16.msra.mxu0 %v457
  %635 = vmatpush.bf16.msra.mxu0 %v456
  %636 = vmatpush.bf16.msra.mxu0 %v455
  %637 = vmatpush.bf16.msra.mxu0 %v454
  %638 = vmatpush.bf16.msra.mxu0 %v453
  %639 = vmatpush.bf16.msra.mxu0 %v452
  %640 = vmatpush.bf16.msra.mxu0 %v451
  %641 = vmatpush.bf16.msra.mxu0 %v450
  %642 = vmatmul.bf16.gmra.mxu0 %v212
  %v643 = vpop.f32.mrf.mxu0
  %v644 = vadd.f32 %v610, %v643
  %v645 = vpop.f32.mrf.mxu0
  %v646 = vadd.f32 %v612, %v645
  %647 = vmatmul.bf16.gmra.mxu0 %v217
  %v648 = vpop.f32.mrf.mxu0
  %v649 = vadd.f32 %v615, %v648
  %v650 = vpop.f32.mrf.mxu0
  %v651 = vadd.f32 %v617, %v650
  %652 = vmatmul.bf16.gmra.mxu0 %v222
  %v653 = vpop.f32.mrf.mxu0
  %v654 = vadd.f32 %v620, %v653
  %v655 = vpop.f32.mrf.mxu0
  %v656 = vadd.f32 %v622, %v655
  %657 = vmatmul.bf16.gmra.mxu0 %v227
  %v658 = vpop.f32.mrf.mxu0
  %v659 = vadd.f32 %v625, %v658
  %v660 = vpop.f32.mrf.mxu0
  %v661 = vadd.f32 %v627, %v660
  %662 = vmatmul.bf16.gmra.mxu0 %v232
  %v663 = vpop.f32.mrf.mxu0
  %v664 = vadd.f32 %v630, %v663
  %v665 = vpop.f32.mrf.mxu0
  %v666 = vadd.f32 %v632, %v665
  %667 = vdwg.mxu0
  %v668 = vmax.f32 %v644, 0.0
  %v669 = vmax.f32 %v646, 0.0
  %v670 = vmax.f32 %v649, 0.0
  %v671 = vmax.f32 %v651, 0.0
  %v672 = vmax.f32 %v654, 0.0
  %v673 = vmax.f32 %v656, 0.0
  %v674 = vmax.f32 %v659, 0.0
  %v675 = vmax.f32 %v661, 0.0
  %v676 = vmax.f32 %v664, 0.0
  %v677 = vmax.f32 %v666, 0.0
  %678 = vst [vmem:[%s3] sm:$0xff] %v668
  %679 = vst [vmem:[%s3 + $0x8] sm:$0xff] %v669
  %680 = vst [vmem:[%s3 + $0x10] sm:$0xff] %v670
  %681 = vst [vmem:[%s3 + $0x18] sm:$0xff] %v671
  %682 = vst [vmem:[%s3 + $0x20] sm:$0xff] %v672
  %683 = vst [vmem:[%s3 + $0x28] sm:$0xff] %v673
  %684 = vst [vmem:[%s3 + $0x30] sm:$0xff] %v674
  %685 = vst [vmem:[%s3 + $0x38] sm:$0xff] %v675
  %686 = vst [vmem:[%s3 + $0x40] sm:$0xff] %v676
  %687 = vst [vmem:[%s3 + $0x48] sm:$0xff] %v677
  // Predicated region
  $region14: #{_lambda_.13} parent=0 // pred_check
    _
  $region15: #{_lambda_.13} parent=0 // pred_check_branch
    %689 = sbr.rel (0) target = $region17
  $region16: #{_lambda_.13} parent=0 // pred_region
    _
  $region17: #{_lambda_.13} parent=0 // pred_fallthru
    _
  // Predicated region
  $region18: #{_lambda_.13} parent=0 // pred_check
    _
  $region19: #{_lambda_.13} parent=0 // pred_check_branch
    %691 = sbr.rel (0) target = $region21
  $region20: #{_lambda_.13} parent=0 // pred_region
    _
  $region21: #{_lambda_.13} parent=0 // pred_fallthru
    _

// kernel: _lambda_.14
$region0: #{_lambda_.14}
  #allocation0 [shape = 'u32[]', space=smem, size = 0x4, offset = 0x4, fixed_abs, tag = 'smem constant byte address 0x4 - core index']
  #allocation1 [shape = 'u32[72,128]{1,0:T(1,128)}', space=vmem, size = 0x9000, scoped, tag = 'internal scratch']
  %s0 = inlined_call_operand.vmem [shape: bf16[16,640], index: 0, kind: input, shape index: {}]
  %s1 = inlined_call_operand.vmem [shape: bf16[640,128], index: 1, kind: input, shape index: {}]
  %s2 = inlined_call_operand.vmem [shape: f32[1,128], index: 2, kind: input, shape index: {}]
  %s3 = inlined_call_operand.vmem [shape: f32[16,128], index: 3, kind: output, shape index: {}]
  %s4 = sld [smem:[#allocation0]]
  $region22: #{_lambda_.14} parent=0
    _
  %s6 = ssub.s32 1, %s4
  %s7 = scalar_select 0, %s6, %s4
  // Predicated region
  $region2: #{_lambda_.14} parent=0 // pred_check
    _
  $region3: #{_lambda_.14} parent=0 // pred_check_branch
    %9 = sbr.rel (0) target = $region5
  $region4: #{_lambda_.14} parent=0 // pred_region
    _
  $region5: #{_lambda_.14} parent=0 // pred_fallthru
    _
  // Predicated region
  $region6: #{_lambda_.14} parent=0 // pred_check
    _
  $region7: #{_lambda_.14} parent=0 // pred_check_branch
    %11 = sbr.rel (0) target = $region9
  $region8: #{_lambda_.14} parent=0 // pred_region
    _
  $region9: #{_lambda_.14} parent=0 // pred_fallthru
    _
  // Predicated region
  $region10: #{_lambda_.14} parent=0 // pred_check
    _
  $region11: #{_lambda_.14} parent=0 // pred_check_branch
    %13 = sbr.rel (0) target = $region13
  $region12: #{_lambda_.14} parent=0 // pred_region
    _
  $region13: #{_lambda_.14} parent=0 // pred_fallthru
    _
  %v14 = vld [vmem:[%s0] sm:$0xff]
  %v15 = vld [vmem:[%s0 + $0x8] sm:$0xff]
  %v16 = vld [vmem:[%s0 + $0x10] sm:$0xf]
  %v17 = vld [vmem:[%s0 + $0x14] sm:$0xff]
  %v18 = vld [vmem:[%s0 + $0x1c] sm:$0xff]
  %v19 = vld [vmem:[%s0 + $0x24] sm:$0xf]
  %v20 = vld [vmem:[%s1] sm:$0xf]
  %v21 = vld [vmem:[%s1 + $0x4] sm:$0xf]
  %v22 = vld [vmem:[%s1 + $0x8] sm:$0xf]
  %v23 = vld [vmem:[%s1 + $0xc] sm:$0xf]
  %v24 = vld [vmem:[%s1 + $0x10] sm:$0xf]
  %v25 = vld [vmem:[%s1 + $0x14] sm:$0xf]
  %v26 = vld [vmem:[%s1 + $0x18] sm:$0xf]
  %v27 = vld [vmem:[%s1 + $0x1c] sm:$0xf]
  %v28 = vld [vmem:[%s1 + $0x20] sm:$0xf]
  %v29 = vld [vmem:[%s1 + $0x24] sm:$0xf]
  %v30 = vld [vmem:[%s1 + $0x28] sm:$0xf]
  %v31 = vld [vmem:[%s1 + $0x2c] sm:$0xf]
  %v32 = vld [vmem:[%s1 + $0x30] sm:$0xf]
  %v33 = vld [vmem:[%s1 + $0x34] sm:$0xf]
  %v34 = vld [vmem:[%s1 + $0x38] sm:$0xf]
  %v35 = vld [vmem:[%s1 + $0x3c] sm:$0xf]
  %v36 = vld [vmem:[%s1 + $0x40] sm:$0xf]
  %v37 = vld [vmem:[%s1 + $0x44] sm:$0xf]
  %v38 = vld [vmem:[%s1 + $0x48] sm:$0xf]
  %v39 = vld [vmem:[%s1 + $0x4c] sm:$0xf]
  %v40 = vld [vmem:[%s1 + $0x50] sm:$0xf]
  %v41 = vld [vmem:[%s1 + $0x54] sm:$0xf]
  %v42 = vld [vmem:[%s1 + $0x58] sm:$0xf]
  %v43 = vld [vmem:[%s1 + $0x5c] sm:$0xf]
  %v44 = vld [vmem:[%s1 + $0x60] sm:$0xf]
  %v45 = vld [vmem:[%s1 + $0x64] sm:$0xf]
  %v46 = vld [vmem:[%s1 + $0x68] sm:$0xf]
  %v47 = vld [vmem:[%s1 + $0x6c] sm:$0xf]
  %v48 = vld [vmem:[%s1 + $0x70] sm:$0xf]
  %v49 = vld [vmem:[%s1 + $0x74] sm:$0xf]
  %v50 = vld [vmem:[%s1 + $0x78] sm:$0xf]
  %v51 = vld [vmem:[%s1 + $0x7c] sm:$0xf]
  %v52 = vld [vmem:[%s1 + $0x80] sm:$0xf]
  %v53 = vld [vmem:[%s1 + $0x84] sm:$0xf]
  %v54 = vld [vmem:[%s1 + $0x88] sm:$0xf]
  %v55 = vld [vmem:[%s1 + $0x8c] sm:$0xf]
  %v56 = vld [vmem:[%s1 + $0x90] sm:$0xf]
  %v57 = vld [vmem:[%s1 + $0x94] sm:$0xf]
  %v58 = vld [vmem:[%s1 + $0x98] sm:$0xf]
  %v59 = vld [vmem:[%s1 + $0x9c] sm:$0xf]
  %v60 = vld [vmem:[%s1 + $0xa0] sm:$0xf]
  %v61 = vld [vmem:[%s1 + $0xa4] sm:$0xf]
  %v62 = vld [vmem:[%s1 + $0xa8] sm:$0xf]
  %v63 = vld [vmem:[%s1 + $0xac] sm:$0xf]
  %v64 = vld [vmem:[%s1 + $0xb0] sm:$0xf]
  %v65 = vld [vmem:[%s1 + $0xb4] sm:$0xf]
  %v66 = vld [vmem:[%s1 + $0xb8] sm:$0xf]
  %v67 = vld [vmem:[%s1 + $0xbc] sm:$0xf]
  %v68 = vld [vmem:[%s1 + $0xc0] sm:$0xf]
  %v69 = vld [vmem:[%s1 + $0xc4] sm:$0xf]
  %v70 = vld [vmem:[%s1 + $0xc8] sm:$0xf]
  %v71 = vld [vmem:[%s1 + $0xcc] sm:$0xf]
  %v72 = vld [vmem:[%s1 + $0xd0] sm:$0xf]
  %v73 = vld [vmem:[%s1 + $0xd4] sm:$0xf]
  %v74 = vld [vmem:[%s1 + $0xd8] sm:$0xf]
  %v75 = vld [vmem:[%s1 + $0xdc] sm:$0xf]
  %v76 = vld [vmem:[%s1 + $0xe0] sm:$0xf]
  %v77 = vld [vmem:[%s1 + $0xe4] sm:$0xf]
  %v78 = vld [vmem:[%s1 + $0xe8] sm:$0xf]
  %v79 = vld [vmem:[%s1 + $0xec] sm:$0xf]
  %v80 = vld [vmem:[%s1 + $0xf0] sm:$0xf]
  %v81 = vld [vmem:[%s1 + $0xf4] sm:$0xf]
  %v82 = vld [vmem:[%s1 + $0xf8] sm:$0xf]
  %v83 = vld [vmem:[%s1 + $0xfc] sm:$0xf]
  %v84 = vld [vmem:[%s1 + $0x100] sm:$0xf]
  %v85 = vld [vmem:[%s1 + $0x104] sm:$0xf]
  %v86 = vld [vmem:[%s1 + $0x108] sm:$0xf]
  %v87 = vld [vmem:[%s1 + $0x10c] sm:$0xf]
  %v88 = vld [vmem:[%s1 + $0x110] sm:$0xf]
  %v89 = vld [vmem:[%s1 + $0x114] sm:$0xf]
  %v90 = vld [vmem:[%s1 + $0x118] sm:$0xf]
  %v91 = vld [vmem:[%s1 + $0x11c] sm:$0xf]
  %v92 = vld [vmem:[%s1 + $0x120] sm:$0xf]
  %v93 = vld [vmem:[%s1 + $0x124] sm:$0xf]
  %v94 = vld [vmem:[%s1 + $0x128] sm:$0xf]
  %v95 = vld [vmem:[%s1 + $0x12c] sm:$0xf]
  %v96 = vld [vmem:[%s1 + $0x130] sm:$0xf]
  %v97 = vld [vmem:[%s1 + $0x134] sm:$0xf]
  %v98 = vld [vmem:[%s1 + $0x138] sm:$0xf]
  %v99 = vld [vmem:[%s1 + $0x13c] sm:$0xf]
  %v100 = vld [vmem:[%s2] sm:$0x1]
  %v102 = vperm.slane %v100, 0
  %v110 = vunpack.c.l.b16 %v14
  %v111 = vunpack.c.h.b16 %v14
  %v112 = vunpack.c.l.b16 %v15
  %v113 = vunpack.c.h.b16 %v15
  %v114 = vunpack.c.l.b16 %v16
  %v115 = vunpack.c.l.b16 %v17
  %v116 = vunpack.c.h.b16 %v17
  %v117 = vunpack.c.l.b16 %v18
  %v118 = vunpack.c.h.b16 %v18
  %v119 = vunpack.c.l.b16 %v19
  %v120 = vpack.c.b16 %v115, %v110
  %v121 = vpack.c.b16 %v116, %v111
  %v122 = vpack.c.b16 %v117, %v112
  %v123 = vpack.c.b16 %v118, %v113
  %v124 = vpack.c.b16 %v119, %v114
  %v210 = vunpack.c.l.b16 %v20
  %v211 = vunpack.c.l.b16 %v21
  %v212 = vunpack.c.l.b16 %v22
  %v213 = vunpack.c.l.b16 %v23
  %v214 = vunpack.c.l.b16 %v24
  %v215 = vunpack.c.l.b16 %v25
  %v216 = vunpack.c.l.b16 %v26
  %v217 = vunpack.c.l.b16 %v27
  %v218 = vunpack.c.l.b16 %v28
  %v219 = vunpack.c.l.b16 %v29
  %v220 = vunpack.c.l.b16 %v30
  %v221 = vunpack.c.l.b16 %v31
  %v222 = vunpack.c.l.b16 %v32
  %v223 = vunpack.c.l.b16 %v33
  %v224 = vunpack.c.l.b16 %v34
  %v225 = vunpack.c.l.b16 %v35
  %v226 = vunpack.c.l.b16 %v36
  %v227 = vunpack.c.l.b16 %v37
  %v228 = vunpack.c.l.b16 %v38
  %v229 = vunpack.c.l.b16 %v39
  %v230 = vunpack.c.l.b16 %v40
  %v231 = vunpack.c.l.b16 %v41
  %v232 = vunpack.c.l.b16 %v42
  %v233 = vunpack.c.l.b16 %v43
  %v234 = vunpack.c.l.b16 %v44
  %v235 = vunpack.c.l.b16 %v45
  %v236 = vunpack.c.l.b16 %v46
  %v237 = vunpack.c.l.b16 %v47
  %v238 = vunpack.c.l.b16 %v48
  %v239 = vunpack.c.l.b16 %v49
  %v240 = vunpack.c.l.b16 %v50
  %v241 = vunpack.c.l.b16 %v51
  %v242 = vunpack.c.l.b16 %v52
  %v243 = vunpack.c.l.b16 %v53
  %v244 = vunpack.c.l.b16 %v54
  %v245 = vunpack.c.l.b16 %v55
  %v246 = vunpack.c.l.b16 %v56
  %v247 = vunpack.c.l.b16 %v57
  %v248 = vunpack.c.l.b16 %v58
  %v249 = vunpack.c.l.b16 %v59
  %v250 = vunpack.c.l.b16 %v60
  %v251 = vunpack.c.l.b16 %v61
  %v252 = vunpack.c.l.b16 %v62
  %v253 = vunpack.c.l.b16 %v63
  %v254 = vunpack.c.l.b16 %v64
  %v255 = vunpack.c.l.b16 %v65
  %v256 = vunpack.c.l.b16 %v66
  %v257 = vunpack.c.l.b16 %v67
  %v258 = vunpack.c.l.b16 %v68
  %v259 = vunpack.c.l.b16 %v69
  %v260 = vunpack.c.l.b16 %v70
  %v261 = vunpack.c.l.b16 %v71
  %v262 = vunpack.c.l.b16 %v72
  %v263 = vunpack.c.l.b16 %v73
  %v264 = vunpack.c.l.b16 %v74
  %v265 = vunpack.c.l.b16 %v75
  %v266 = vunpack.c.l.b16 %v76
  %v267 = vunpack.c.l.b16 %v77
  %v268 = vunpack.c.l.b16 %v78
  %v269 = vunpack.c.l.b16 %v79
  %v270 = vunpack.c.l.b16 %v80
  %v271 = vunpack.c.l.b16 %v81
  %v272 = vunpack.c.l.b16 %v82
  %v273 = vunpack.c.l.b16 %v83
  %v274 = vunpack.c.l.b16 %v84
  %v275 = vunpack.c.l.b16 %v85
  %v276 = vunpack.c.l.b16 %v86
  %v277 = vunpack.c.l.b16 %v87
  %v278 = vunpack.c.l.b16 %v88
  %v279 = vunpack.c.l.b16 %v89
  %v280 = vunpack.c.l.b16 %v90
  %v281 = vunpack.c.l.b16 %v91
  %v282 = vunpack.c.l.b16 %v92
  %v283 = vunpack.c.l.b16 %v93
  %v284 = vunpack.c.l.b16 %v94
  %v285 = vunpack.c.l.b16 %v95
  %v286 = vunpack.c.l.b16 %v96
  %v287 = vunpack.c.l.b16 %v97
  %v288 = vunpack.c.l.b16 %v98
  %v289 = vunpack.c.l.b16 %v99
  %v290 = vpack.c.b16 %v211, %v210
  %v291 = vpack.c.b16 %v213, %v212
  %v292 = vpack.c.b16 %v215, %v214
  %v293 = vpack.c.b16 %v217, %v216
  %v294 = vpack.c.b16 %v219, %v218
  %v295 = vpack.c.b16 %v221, %v220
  %v296 = vpack.c.b16 %v223, %v222
  %v297 = vpack.c.b16 %v225, %v224
  %v298 = vpack.c.b16 %v227, %v226
  %v299 = vpack.c.b16 %v229, %v228
  %v300 = vpack.c.b16 %v231, %v230
  %v301 = vpack.c.b16 %v233, %v232
  %v302 = vpack.c.b16 %v235, %v234
  %v303 = vpack.c.b16 %v237, %v236
  %v304 = vpack.c.b16 %v239, %v238
  %v305 = vpack.c.b16 %v241, %v240
  %v306 = vpack.c.b16 %v243, %v242
  %v307 = vpack.c.b16 %v245, %v244
  %v308 = vpack.c.b16 %v247, %v246
  %v309 = vpack.c.b16 %v249, %v248
  %v310 = vpack.c.b16 %v251, %v250
  %v311 = vpack.c.b16 %v253, %v252
  %v312 = vpack.c.b16 %v255, %v254
  %v313 = vpack.c.b16 %v257, %v256
  %v314 = vpack.c.b16 %v259, %v258
  %v315 = vpack.c.b16 %v261, %v260
  %v316 = vpack.c.b16 %v263, %v262
  %v317 = vpack.c.b16 %v265, %v264
  %v318 = vpack.c.b16 %v267, %v266
  %v319 = vpack.c.b16 %v269, %v268
  %v320 = vpack.c.b16 %v271, %v270
  %v321 = vpack.c.b16 %v273, %v272
  %v322 = vpack.c.b16 %v275, %v274
  %v323 = vpack.c.b16 %v277, %v276
  %v324 = vpack.c.b16 %v279, %v278
  %v325 = vpack.c.b16 %v281, %v280
  %v326 = vpack.c.b16 %v283, %v282
  %v327 = vpack.c.b16 %v285, %v284
  %v328 = vpack.c.b16 %v287, %v286
  %v329 = vpack.c.b16 %v289, %v288
  %370 = vmatpush.bf16.msra.mxu0 %v297
  %371 = vmatpush.bf16.msra.mxu0 %v296
  %372 = vmatpush.bf16.msra.mxu0 %v295
  %373 = vmatpush.bf16.msra.mxu0 %v294
  %374 = vmatpush.bf16.msra.mxu0 %v293
  %375 = vmatpush.bf16.msra.mxu0 %v292
  %376 = vmatpush.bf16.msra.mxu0 %v291
  %377 = vmatpush.bf16.msra.mxu0 %v290
  %378 = vmatmul.bf16.gmra.mxu0 %v120
  %v379 = vpop.f32.mrf.mxu0
  %v380 = vadd.f32 %v102, %v379
  %v381 = vpop.f32.mrf.mxu0
  %v382 = vadd.f32 %v102, %v381
  %383 = vdwg.mxu0
  %384 = vmatpush.bf16.msra.mxu0 %v305
  %385 = vmatpush.bf16.msra.mxu0 %v304
  %386 = vmatpush.bf16.msra.mxu0 %v303
  %387 = vmatpush.bf16.msra.mxu0 %v302
  %388 = vmatpush.bf16.msra.mxu0 %v301
  %389 = vmatpush.bf16.msra.mxu0 %v300
  %390 = vmatpush.bf16.msra.mxu0 %v299
  %391 = vmatpush.bf16.msra.mxu0 %v298
  %392 = vmatmul.bf16.gmra.mxu0 %v121
  %v393 = vpop.f32.mrf.mxu0
  %v394 = vadd.f32 %v380, %v393
  %v395 = vpop.f32.mrf.mxu0
  %v396 = vadd.f32 %v382, %v395
  %397 = vdwg.mxu0
  %398 = vmatpush.bf16.msra.mxu0 %v313
  %399 = vmatpush.bf16.msra.mxu0 %v312
  %400 = vmatpush.bf16.msra.mxu0 %v311
  %401 = vmatpush.bf16.msra.mxu0 %v310
  %402 = vmatpush.bf16.msra.mxu0 %v309
  %403 = vmatpush.bf16.msra.mxu0 %v308
  %404 = vmatpush.bf16.msra.mxu0 %v307
  %405 = vmatpush.bf16.msra.mxu0 %v306
  %406 = vmatmul.bf16.gmra.mxu0 %v122
  %v407 = vpop.f32.mrf.mxu0
  %v408 = vadd.f32 %v394, %v407
  %v409 = vpop.f32.mrf.mxu0
  %v410 = vadd.f32 %v396, %v409
  %411 = vdwg.mxu0
  %412 = vmatpush.bf16.msra.mxu0 %v321
  %413 = vmatpush.bf16.msra.mxu0 %v320
  %414 = vmatpush.bf16.msra.mxu0 %v319
  %415 = vmatpush.bf16.msra.mxu0 %v318
  %416 = vmatpush.bf16.msra.mxu0 %v317
  %417 = vmatpush.bf16.msra.mxu0 %v316
  %418 = vmatpush.bf16.msra.mxu0 %v315
  %419 = vmatpush.bf16.msra.mxu0 %v314
  %420 = vmatmul.bf16.gmra.mxu0 %v123
  %v421 = vpop.f32.mrf.mxu0
  %v422 = vadd.f32 %v408, %v421
  %v423 = vpop.f32.mrf.mxu0
  %v424 = vadd.f32 %v410, %v423
  %425 = vdwg.mxu0
  %426 = vmatpush.bf16.msra.mxu0 %v329
  %427 = vmatpush.bf16.msra.mxu0 %v328
  %428 = vmatpush.bf16.msra.mxu0 %v327
  %429 = vmatpush.bf16.msra.mxu0 %v326
  %430 = vmatpush.bf16.msra.mxu0 %v325
  %431 = vmatpush.bf16.msra.mxu0 %v324
  %432 = vmatpush.bf16.msra.mxu0 %v323
  %433 = vmatpush.bf16.msra.mxu0 %v322
  %434 = vmatmul.bf16.gmra.mxu0 %v124
  %v435 = vpop.f32.mrf.mxu0
  %v436 = vadd.f32 %v422, %v435
  %v437 = vpop.f32.mrf.mxu0
  %v438 = vadd.f32 %v424, %v437
  %439 = vdwg.mxu0
  %v440 = vmax.f32 %v436, 0.0
  %v441 = vmax.f32 %v438, 0.0
  %442 = vst [vmem:[%s3] sm:$0xff] %v440
  %443 = vst [vmem:[%s3 + $0x8] sm:$0xff] %v441
  // Predicated region
  $region14: #{_lambda_.14} parent=0 // pred_check
    _
  $region15: #{_lambda_.14} parent=0 // pred_check_branch
    %445 = sbr.rel (0) target = $region17
  $region16: #{_lambda_.14} parent=0 // pred_region
    _
  $region17: #{_lambda_.14} parent=0 // pred_fallthru
    _
  // Predicated region
  $region18: #{_lambda_.14} parent=0 // pred_check
    _
  $region19: #{_lambda_.14} parent=0 // pred_check_branch
    %447 = sbr.rel (0) target = $region21
  $region20: #{_lambda_.14} parent=0 // pred_region
    _
  $region21: #{_lambda_.14} parent=0 // pred_fallthru
    _

// kernel: _lambda_.15
$region0: #{_lambda_.15}
  #allocation0 [shape = 'u32[]', space=smem, size = 0x4, offset = 0x4, fixed_abs, tag = 'smem constant byte address 0x4 - core index']
  #allocation1 [shape = 'u32[72,128]{1,0:T(1,128)}', space=vmem, size = 0x9000, scoped, tag = 'internal scratch']
  %s0 = inlined_call_operand.vmem [shape: bf16[16,128], index: 0, kind: input, shape index: {}]
  %s1 = inlined_call_operand.vmem [shape: bf16[128,640], index: 1, kind: input, shape index: {}]
  %s2 = inlined_call_operand.vmem [shape: f32[1,640], index: 2, kind: input, shape index: {}]
  %s3 = inlined_call_operand.vmem [shape: f32[16,640], index: 3, kind: output, shape index: {}]
  %s4 = sld [smem:[#allocation0]]
  $region22: #{_lambda_.15} parent=0
    _
  %s6 = ssub.s32 1, %s4
  %s7 = scalar_select 0, %s6, %s4
  // Predicated region
  $region2: #{_lambda_.15} parent=0 // pred_check
    _
  $region3: #{_lambda_.15} parent=0 // pred_check_branch
    %9 = sbr.rel (0) target = $region5
  $region4: #{_lambda_.15} parent=0 // pred_region
    _
  $region5: #{_lambda_.15} parent=0 // pred_fallthru
    _
  // Predicated region
  $region6: #{_lambda_.15} parent=0 // pred_check
    _
  $region7: #{_lambda_.15} parent=0 // pred_check_branch
    %11 = sbr.rel (0) target = $region9
  $region8: #{_lambda_.15} parent=0 // pred_region
    _
  $region9: #{_lambda_.15} parent=0 // pred_fallthru
    _
  // Predicated region
  $region10: #{_lambda_.15} parent=0 // pred_check
    _
  $region11: #{_lambda_.15} parent=0 // pred_check_branch
    %13 = sbr.rel (0) target = $region13
  $region12: #{_lambda_.15} parent=0 // pred_region
    _
  $region13: #{_lambda_.15} parent=0 // pred_fallthru
    _
  %v14 = vld [vmem:[%s0] sm:$0xf]
  %v15 = vld [vmem:[%s0 + $0x4] sm:$0xf]
  %v16 = vld [vmem:[%s1] sm:$0xff]
  %v17 = vld [vmem:[%s1 + $0x8] sm:$0xff]
  %v18 = vld [vmem:[%s1 + $0x10] sm:$0xf]
  %v19 = vld [vmem:[%s1 + $0x14] sm:$0xff]
  %v20 = vld [vmem:[%s1 + $0x1c] sm:$0xff]
  %v21 = vld [vmem:[%s1 + $0x24] sm:$0xf]
  %v22 = vld [vmem:[%s1 + $0x28] sm:$0xff]
  %v23 = vld [vmem:[%s1 + $0x30] sm:$0xff]
  %v24 = vld [vmem:[%s1 + $0x38] sm:$0xf]
  %v25 = vld [vmem:[%s1 + $0x3c] sm:$0xff]
  %v26 = vld [vmem:[%s1 + $0x44] sm:$0xff]
  %v27 = vld [vmem:[%s1 + $0x4c] sm:$0xf]
  %v28 = vld [vmem:[%s1 + $0x50] sm:$0xff]
  %v29 = vld [vmem:[%s1 + $0x58] sm:$0xff]
  %v30 = vld [vmem:[%s1 + $0x60] sm:$0xf]
  %v31 = vld [vmem:[%s1 + $0x64] sm:$0xff]
  %v32 = vld [vmem:[%s1 + $0x6c] sm:$0xff]
  %v33 = vld [vmem:[%s1 + $0x74] sm:$0xf]
  %v34 = vld [vmem:[%s1 + $0x78] sm:$0xff]
  %v35 = vld [vmem:[%s1 + $0x80] sm:$0xff]
  %v36 = vld [vmem:[%s1 + $0x88] sm:$0xf]
  %v37 = vld [vmem:[%s1 + $0x8c] sm:$0xff]
  %v38 = vld [vmem:[%s1 + $0x94] sm:$0xff]
  %v39 = vld [vmem:[%s1 + $0x9c] sm:$0xf]
  %v40 = vld [vmem:[%s1 + $0xa0] sm:$0xff]
  %v41 = vld [vmem:[%s1 + $0xa8] sm:$0xff]
  %v42 = vld [vmem:[%s1 + $0xb0] sm:$0xf]
  %v43 = vld [vmem:[%s1 + $0xb4] sm:$0xff]
  %v44 = vld [vmem:[%s1 + $0xbc] sm:$0xff]
  %v45 = vld [vmem:[%s1 + $0xc4] sm:$0xf]
  %v46 = vld [vmem:[%s1 + $0xc8] sm:$0xff]
  %v47 = vld [vmem:[%s1 + $0xd0] sm:$0xff]
  %v48 = vld [vmem:[%s1 + $0xd8] sm:$0xf]
  %v49 = vld [vmem:[%s1 + $0xdc] sm:$0xff]
  %v50 = vld [vmem:[%s1 + $0xe4] sm:$0xff]
  %v51 = vld [vmem:[%s1 + $0xec] sm:$0xf]
  %v52 = vld [vmem:[%s1 + $0xf0] sm:$0xff]
  %v53 = vld [vmem:[%s1 + $0xf8] sm:$0xff]
  %v54 = vld [vmem:[%s1 + $0x100] sm:$0xf]
  %v55 = vld [vmem:[%s1 + $0x104] sm:$0xff]
  %v56 = vld [vmem:[%s1 + $0x10c] sm:$0xff]
  %v57 = vld [vmem:[%s1 + $0x114] sm:$0xf]
  %v58 = vld [vmem:[%s1 + $0x118] sm:$0xff]
  %v59 = vld [vmem:[%s1 + $0x120] sm:$0xff]
  %v60 = vld [vmem:[%s1 + $0x128] sm:$0xf]
  %v61 = vld [vmem:[%s1 + $0x12c] sm:$0xff]
  %v62 = vld [vmem:[%s1 + $0x134] sm:$0xff]
  %v63 = vld [vmem:[%s1 + $0x13c] sm:$0xf]
  %v64 = vld [vmem:[%s2] sm:$0x1f]
  %v66 = vperm.slane %v64, 0
  %v67 = vperm.slane %v64, 1
  %v68 = vperm.slane %v64, 2
  %v69 = vperm.slane %v64, 3
  %v70 = vperm.slane %v64, 4
  %v78 = vunpack.c.l.b16 %v14
  %v79 = vunpack.c.l.b16 %v15
  %v80 = vpack.c.b16 %v79, %v78
  %v130 = vunpack.c.l.b16 %v16
  %v131 = vunpack.c.h.b16 %v16
  %v132 = vunpack.c.l.b16 %v17
  %v133 = vunpack.c.h.b16 %v17
  %v134 = vunpack.c.l.b16 %v18
  %v135 = vunpack.c.l.b16 %v19
  %v136 = vunpack.c.h.b16 %v19
  %v137 = vunpack.c.l.b16 %v20
  %v138 = vunpack.c.h.b16 %v20
  %v139 = vunpack.c.l.b16 %v21
  %v140 = vunpack.c.l.b16 %v22
  %v141 = vunpack.c.h.b16 %v22
  %v142 = vunpack.c.l.b16 %v23
  %v143 = vunpack.c.h.b16 %v23
  %v144 = vunpack.c.l.b16 %v24
  %v145 = vunpack.c.l.b16 %v25
  %v146 = vunpack.c.h.b16 %v25
  %v147 = vunpack.c.l.b16 %v26
  %v148 = vunpack.c.h.b16 %v26
  %v149 = vunpack.c.l.b16 %v27
  %v150 = vunpack.c.l.b16 %v28
  %v151 = vunpack.c.h.b16 %v28
  %v152 = vunpack.c.l.b16 %v29
  %v153 = vunpack.c.h.b16 %v29
  %v154 = vunpack.c.l.b16 %v30
  %v155 = vunpack.c.l.b16 %v31
  %v156 = vunpack.c.h.b16 %v31
  %v157 = vunpack.c.l.b16 %v32
  %v158 = vunpack.c.h.b16 %v32
  %v159 = vunpack.c.l.b16 %v33
  %v160 = vunpack.c.l.b16 %v34
  %v161 = vunpack.c.h.b16 %v34
  %v162 = vunpack.c.l.b16 %v35
  %v163 = vunpack.c.h.b16 %v35
  %v164 = vunpack.c.l.b16 %v36
  %v165 = vunpack.c.l.b16 %v37
  %v166 = vunpack.c.h.b16 %v37
  %v167 = vunpack.c.l.b16 %v38
  %v168 = vunpack.c.h.b16 %v38
  %v169 = vunpack.c.l.b16 %v39
  %v170 = vunpack.c.l.b16 %v40
  %v171 = vunpack.c.h.b16 %v40
  %v172 = vunpack.c.l.b16 %v41
  %v173 = vunpack.c.h.b16 %v41
  %v174 = vunpack.c.l.b16 %v42
  %v175 = vunpack.c.l.b16 %v43
  %v176 = vunpack.c.h.b16 %v43
  %v177 = vunpack.c.l.b16 %v44
  %v178 = vunpack.c.h.b16 %v44
  %v179 = vunpack.c.l.b16 %v45
  %v180 = vunpack.c.l.b16 %v46
  %v181 = vunpack.c.h.b16 %v46
  %v182 = vunpack.c.l.b16 %v47
  %v183 = vunpack.c.h.b16 %v47
  %v184 = vunpack.c.l.b16 %v48
  %v185 = vunpack.c.l.b16 %v49
  %v186 = vunpack.c.h.b16 %v49
  %v187 = vunpack.c.l.b16 %v50
  %v188 = vunpack.c.h.b16 %v50
  %v189 = vunpack.c.l.b16 %v51
  %v190 = vunpack.c.l.b16 %v52
  %v191 = vunpack.c.h.b16 %v52
  %v192 = vunpack.c.l.b16 %v53
  %v193 = vunpack.c.h.b16 %v53
  %v194 = vunpack.c.l.b16 %v54
  %v195 = vunpack.c.l.b16 %v55
  %v196 = vunpack.c.h.b16 %v55
  %v197 = vunpack.c.l.b16 %v56
  %v198 = vunpack.c.h.b16 %v56
  %v199 = vunpack.c.l.b16 %v57
  %v200 = vunpack.c.l.b16 %v58
  %v201 = vunpack.c.h.b16 %v58
  %v202 = vunpack.c.l.b16 %v59
  %v203 = vunpack.c.h.b16 %v59
  %v204 = vunpack.c.l.b16 %v60
  %v205 = vunpack.c.l.b16 %v61
  %v206 = vunpack.c.h.b16 %v61
  %v207 = vunpack.c.l.b16 %v62
  %v208 = vunpack.c.h.b16 %v62
  %v209 = vunpack.c.l.b16 %v63
  %v210 = vpack.c.b16 %v135, %v130
  %v211 = vpack.c.b16 %v136, %v131
  %v212 = vpack.c.b16 %v137, %v132
  %v213 = vpack.c.b16 %v138, %v133
  %v214 = vpack.c.b16 %v139, %v134
  %v215 = vpack.c.b16 %v145, %v140
  %v216 = vpack.c.b16 %v146, %v141
  %v217 = vpack.c.b16 %v147, %v142
  %v218 = vpack.c.b16 %v148, %v143
  %v219 = vpack.c.b16 %v149, %v144
  %v220 = vpack.c.b16 %v155, %v150
  %v221 = vpack.c.b16 %v156, %v151
  %v222 = vpack.c.b16 %v157, %v152
  %v223 = vpack.c.b16 %v158, %v153
  %v224 = vpack.c.b16 %v159, %v154
  %v225 = vpack.c.b16 %v165, %v160
  %v226 = vpack.c.b16 %v166, %v161
  %v227 = vpack.c.b16 %v167, %v162
  %v228 = vpack.c.b16 %v168, %v163
  %v229 = vpack.c.b16 %v169, %v164
  %v230 = vpack.c.b16 %v175, %v170
  %v231 = vpack.c.b16 %v176, %v171
  %v232 = vpack.c.b16 %v177, %v172
  %v233 = vpack.c.b16 %v178, %v173
  %v234 = vpack.c.b16 %v179, %v174
  %v235 = vpack.c.b16 %v185, %v180
  %v236 = vpack.c.b16 %v186, %v181
  %v237 = vpack.c.b16 %v187, %v182
  %v238 = vpack.c.b16 %v188, %v183
  %v239 = vpack.c.b16 %v189, %v184
  %v240 = vpack.c.b16 %v195, %v190
  %v241 = vpack.c.b16 %v196, %v191
  %v242 = vpack.c.b16 %v197, %v192
  %v243 = vpack.c.b16 %v198, %v193
  %v244 = vpack.c.b16 %v199, %v194
  %v245 = vpack.c.b16 %v205, %v200
  %v246 = vpack.c.b16 %v206, %v201
  %v247 = vpack.c.b16 %v207, %v202
  %v248 = vpack.c.b16 %v208, %v203
  %v249 = vpack.c.b16 %v209, %v204
  %290 = vmatpush.bf16.msra.mxu0 %v245
  %291 = vmatpush.bf16.msra.mxu0 %v240
  %292 = vmatpush.bf16.msra.mxu0 %v235
  %293 = vmatpush.bf16.msra.mxu0 %v230
  %294 = vmatpush.bf16.msra.mxu0 %v225
  %295 = vmatpush.bf16.msra.mxu0 %v220
  %296 = vmatpush.bf16.msra.mxu0 %v215
  %297 = vmatpush.bf16.msra.mxu0 %v210
  %298 = vmatmul.bf16.gmra.mxu0 %v80
  %v299 = vpop.f32.mrf.mxu0
  %v300 = vadd.f32 %v66, %v299
  %v301 = vpop.f32.mrf.mxu0
  %v302 = vadd.f32 %v66, %v301
  %303 = vdwg.mxu0
  %304 = vmatpush.bf16.msra.mxu0 %v246
  %305 = vmatpush.bf16.msra.mxu0 %v241
  %306 = vmatpush.bf16.msra.mxu0 %v236
  %307 = vmatpush.bf16.msra.mxu0 %v231
  %308 = vmatpush.bf16.msra.mxu0 %v226
  %309 = vmatpush.bf16.msra.mxu0 %v221
  %310 = vmatpush.bf16.msra.mxu0 %v216
  %311 = vmatpush.bf16.msra.mxu0 %v211
  %312 = vmatmul.bf16.gmra.mxu0 %v80
  %v313 = vpop.f32.mrf.mxu0
  %v314 = vadd.f32 %v67, %v313
  %v315 = vpop.f32.mrf.mxu0
  %v316 = vadd.f32 %v67, %v315
  %317 = vdwg.mxu0
  %318 = vmatpush.bf16.msra.mxu0 %v247
  %319 = vmatpush.bf16.msra.mxu0 %v242
  %320 = vmatpush.bf16.msra.mxu0 %v237
  %321 = vmatpush.bf16.msra.mxu0 %v232
  %322 = vmatpush.bf16.msra.mxu0 %v227
  %323 = vmatpush.bf16.msra.mxu0 %v222
  %324 = vmatpush.bf16.msra.mxu0 %v217
  %325 = vmatpush.bf16.msra.mxu0 %v212
  %326 = vmatmul.bf16.gmra.mxu0 %v80
  %v327 = vpop.f32.mrf.mxu0
  %v328 = vadd.f32 %v68, %v327
  %v329 = vpop.f32.mrf.mxu0
  %v330 = vadd.f32 %v68, %v329
  %331 = vdwg.mxu0
  %332 = vmatpush.bf16.msra.mxu0 %v248
  %333 = vmatpush.bf16.msra.mxu0 %v243
  %334 = vmatpush.bf16.msra.mxu0 %v238
  %335 = vmatpush.bf16.msra.mxu0 %v233
  %336 = vmatpush.bf16.msra.mxu0 %v228
  %337 = vmatpush.bf16.msra.mxu0 %v223
  %338 = vmatpush.bf16.msra.mxu0 %v218
  %339 = vmatpush.bf16.msra.mxu0 %v213
  %340 = vmatmul.bf16.gmra.mxu0 %v80
  %v341 = vpop.f32.mrf.mxu0
  %v342 = vadd.f32 %v69, %v341
  %v343 = vpop.f32.mrf.mxu0
  %v344 = vadd.f32 %v69, %v343
  %345 = vdwg.mxu0
  %346 = vmatpush.bf16.msra.mxu0 %v249
  %347 = vmatpush.bf16.msra.mxu0 %v244
  %348 = vmatpush.bf16.msra.mxu0 %v239
  %349 = vmatpush.bf16.msra.mxu0 %v234
  %350 = vmatpush.bf16.msra.mxu0 %v229
  %351 = vmatpush.bf16.msra.mxu0 %v224
  %352 = vmatpush.bf16.msra.mxu0 %v219
  %353 = vmatpush.bf16.msra.mxu0 %v214
  %354 = vmatmul.bf16.gmra.mxu0 %v80
  %v355 = vpop.f32.mrf.mxu0
  %v356 = vadd.f32 %v70, %v355
  %v357 = vpop.f32.mrf.mxu0
  %v358 = vadd.f32 %v70, %v357
  %359 = vdwg.mxu0
  %v360 = vmax.f32 %v300, 0.0
  %v361 = vmax.f32 %v314, 0.0
  %v362 = vmax.f32 %v328, 0.0
  %v363 = vmax.f32 %v342, 0.0
  %v364 = vmax.f32 %v356, 0.0
  %v365 = vmax.f32 %v302, 0.0
  %v366 = vmax.f32 %v316, 0.0
  %v367 = vmax.f32 %v330, 0.0
  %v368 = vmax.f32 %v344, 0.0
  %v369 = vmax.f32 %v358, 0.0
  %370 = vst [vmem:[%s3] sm:$0xff] %v360
  %371 = vst [vmem:[%s3 + $0x8] sm:$0xff] %v361
  %372 = vst [vmem:[%s3 + $0x10] sm:$0xff] %v362
  %373 = vst [vmem:[%s3 + $0x18] sm:$0xff] %v363
  %374 = vst [vmem:[%s3 + $0x20] sm:$0xff] %v364
  %375 = vst [vmem:[%s3 + $0x28] sm:$0xff] %v365
  %376 = vst [vmem:[%s3 + $0x30] sm:$0xff] %v366
  %377 = vst [vmem:[%s3 + $0x38] sm:$0xff] %v367
  %378 = vst [vmem:[%s3 + $0x40] sm:$0xff] %v368
  %379 = vst [vmem:[%s3 + $0x48] sm:$0xff] %v369
  // Predicated region
  $region14: #{_lambda_.15} parent=0 // pred_check
    _
  $region15: #{_lambda_.15} parent=0 // pred_check_branch
    %381 = sbr.rel (0) target = $region17
  $region16: #{_lambda_.15} parent=0 // pred_region
    _
  $region17: #{_lambda_.15} parent=0 // pred_fallthru
    _
  // Predicated region
  $region18: #{_lambda_.15} parent=0 // pred_check
    _
  $region19: #{_lambda_.15} parent=0 // pred_check_branch
    %383 = sbr.rel (0) target = $region21
  $region20: #{_lambda_.15} parent=0 // pred_region
    _
  $region21: #{_lambda_.15} parent=0 // pred_fallthru
    _

// kernel: reverse.5
$region0: #{reverse.5}
  #allocation0 [shape = 's32[1]{0}', space=sflag, size = 0x4, scoped, tag = 'scoped memory for reverse.5']
  %s0 = inlined_call_operand.vmem [shape: f32[16,16,3,3], index: 0, kind: input, shape index: {}]
  %s1 = inlined_call_operand.vmem [shape: bf16[16,16,3,3], index: 1, kind: output, shape index: {}]
  %s2 = scalar_lea.vmem %s0, 128
  %v3 = vld [vmem:[%s2] sm:$0xff]
  %v4 = vpack.c.bf16 0.0, %v3
  %5 = vst [vmem:[%s1] sm:$0xf] %v4
  %s6 = scalar_lea.vmem %s0, 80
  %v7 = vld [vmem:[%s6] sm:$0xff]
  %s8 = scalar_lea.vmem %s1, 24
  %v9 = vpack.c.bf16 0.0, %v7
  %10 = vst [vmem:[%s8] sm:$0xf] %v9
  %s11 = scalar_lea.vmem %s0, 32
  %v12 = vld [vmem:[%s11] sm:$0xff]
  %s13 = scalar_lea.vmem %s1, 48
  %v14 = vpack.c.bf16 0.0, %v12
  %15 = vst [vmem:[%s13] sm:$0xf] %v14
  %s16 = scalar_lea.vmem %s0, 112
  %v17 = vld [vmem:[%s16] sm:$0xff]
  %s18 = scalar_lea.vmem %s1, 8
  %v19 = vpack.c.bf16 0.0, %v17
  %20 = vst [vmem:[%s18] sm:$0xf] %v19
  %s21 = scalar_lea.vmem %s0, 64
  %v22 = vld [vmem:[%s21] sm:$0xff]
  %s23 = scalar_lea.vmem %s1, 32
  %v24 = vpack.c.bf16 0.0, %v22
  %25 = vst [vmem:[%s23] sm:$0xf] %v24
  %s26 = scalar_lea.vmem %s0, 16
  %v27 = vld [vmem:[%s26] sm:$0xff]
  %s28 = scalar_lea.vmem %s1, 56
  %v29 = vpack.c.bf16 0.0, %v27
  %30 = vst [vmem:[%s28] sm:$0xf] %v29
  %s31 = scalar_lea.vmem %s0, 96
  %v32 = vld [vmem:[%s31] sm:$0xff]
  %s33 = scalar_lea.vmem %s1, 16
  %v34 = vpack.c.bf16 0.0, %v32
  %35 = vst [vmem:[%s33] sm:$0xf] %v34
  %s36 = scalar_lea.vmem %s0, 48
  %v37 = vld [vmem:[%s36] sm:$0xff]
  %s38 = scalar_lea.vmem %s1, 40
  %v39 = vpack.c.bf16 0.0, %v37
  %40 = vst [vmem:[%s38] sm:$0xf] %v39
  %v41 = vld [vmem:[%s0] sm:$0xff]
  %s42 = scalar_lea.vmem %s1, 64
  %v43 = vpack.c.bf16 0.0, %v41
  %44 = vst [vmem:[%s42] sm:$0xf] %v43
  %s45 = scalar_lea.vmem %s0, 136
  %v46 = vld [vmem:[%s45] sm:$0xff]
  %s47 = scalar_lea.vmem %s1, 4
  %v48 = vpack.c.bf16 0.0, %v46
  %49 = vst [vmem:[%s47] sm:$0xf] %v48
  %s50 = scalar_lea.vmem %s0, 88
  %v51 = vld [vmem:[%s50] sm:$0xff]
  %s52 = scalar_lea.vmem %s1, 28
  %v53 = vpack.c.bf16 0.0, %v51
  %54 = vst [vmem:[%s52] sm:$0xf] %v53
  %s55 = scalar_lea.vmem %s0, 40
  %v56 = vld [vmem:[%s55] sm:$0xff]
  %s57 = scalar_lea.vmem %s1, 52
  %v58 = vpack.c.bf16 0.0, %v56
  %59 = vst [vmem:[%s57] sm:$0xf] %v58
  %s60 = scalar_lea.vmem %s0, 120
  %v61 = vld [vmem:[%s60] sm:$0xff]
  %s62 = scalar_lea.vmem %s1, 12
  %v63 = vpack.c.bf16 0.0, %v61
  %64 = vst [vmem:[%s62] sm:$0xf] %v63
  %s65 = scalar_lea.vmem %s0, 72
  %v66 = vld [vmem:[%s65] sm:$0xff]
  %s67 = scalar_lea.vmem %s1, 36
  %v68 = vpack.c.bf16 0.0, %v66
  %69 = vst [vmem:[%s67] sm:$0xf] %v68
  %s70 = scalar_lea.vmem %s0, 24
  %v71 = vld [vmem:[%s70] sm:$0xff]
  %s72 = scalar_lea.vmem %s1, 60
  %v73 = vpack.c.bf16 0.0, %v71
  %74 = vst [vmem:[%s72] sm:$0xf] %v73
  %s75 = scalar_lea.vmem %s0, 104
  %v76 = vld [vmem:[%s75] sm:$0xff]
  %s77 = scalar_lea.vmem %s1, 20
  %v78 = vpack.c.bf16 0.0, %v76
  %79 = vst [vmem:[%s77] sm:$0xf] %v78
  %s80 = scalar_lea.vmem %s0, 56
  %v81 = vld [vmem:[%s80] sm:$0xff]
  %s82 = scalar_lea.vmem %s1, 44
  %v83 = vpack.c.bf16 0.0, %v81
  %84 = vst [vmem:[%s82] sm:$0xf] %v83
  %s85 = scalar_lea.vmem %s0, 8
  %v86 = vld [vmem:[%s85] sm:$0xff]
  %s87 = scalar_lea.vmem %s1, 68
  %v88 = vpack.c.bf16 0.0, %v86
  %89 = vst [vmem:[%s87] sm:$0xf] %v88

// kernel: _lambda_.16
$region0: #{_lambda_.16}
  #allocation0 [shape = 'u32[]', space=smem, size = 0x4, offset = 0x4, fixed_abs, tag = 'smem constant byte address 0x4 - core index']
  #allocation1 [shape = 'u32[72,128]{1,0:T(1,128)}', space=vmem, size = 0x9000, scoped, tag = 'internal scratch']
  %s0 = inlined_call_operand.vmem [shape: bf16[144,256], index: 0, kind: input, shape index: {}]
  %s1 = inlined_call_operand.vmem [shape: bf16[256,128], index: 1, kind: input, shape index: {}]
  %s2 = inlined_call_operand.vmem [shape: f32[1,128], index: 2, kind: input, shape index: {}]
  %s3 = inlined_call_operand.vmem [shape: f32[144,128], index: 3, kind: output, shape index: {}]
  %s4 = sld [smem:[#allocation0]]
  $region22: #{_lambda_.16} parent=0
    _
  %s6 = ssub.s32 1, %s4
  %s7 = scalar_select 0, %s6, %s4
  // Predicated region
  $region2: #{_lambda_.16} parent=0 // pred_check
    _
  $region3: #{_lambda_.16} parent=0 // pred_check_branch
    %9 = sbr.rel (0) target = $region5
  $region4: #{_lambda_.16} parent=0 // pred_region
    _
  $region5: #{_lambda_.16} parent=0 // pred_fallthru
    _
  // Predicated region
  $region6: #{_lambda_.16} parent=0 // pred_check
    _
  $region7: #{_lambda_.16} parent=0 // pred_check_branch
    %11 = sbr.rel (0) target = $region9
  $region8: #{_lambda_.16} parent=0 // pred_region
    _
  $region9: #{_lambda_.16} parent=0 // pred_fallthru
    _
  // Predicated region
  $region10: #{_lambda_.16} parent=0 // pred_check
    _
  $region11: #{_lambda_.16} parent=0 // pred_check_branch
    %13 = sbr.rel (0) target = $region13
  $region12: #{_lambda_.16} parent=0 // pred_region
    _
  $region13: #{_lambda_.16} parent=0 // pred_fallthru
    _
  %v14 = vld [vmem:[%s0] sm:$0xff]
  %v15 = vld [vmem:[%s0 + $0x8] sm:$0xff]
  %v16 = vld [vmem:[%s0 + $0x10] sm:$0xff]
  %v17 = vld [vmem:[%s0 + $0x18] sm:$0xff]
  %v18 = vld [vmem:[%s0 + $0x20] sm:$0xff]
  %v19 = vld [vmem:[%s0 + $0x28] sm:$0xff]
  %v20 = vld [vmem:[%s0 + $0x30] sm:$0xff]
  %v21 = vld [vmem:[%s0 + $0x38] sm:$0xff]
  %v22 = vld [vmem:[%s0 + $0x40] sm:$0xff]
  %v23 = vld [vmem:[%s0 + $0x48] sm:$0xff]
  %v24 = vld [vmem:[%s0 + $0x50] sm:$0xff]
  %v25 = vld [vmem:[%s0 + $0x58] sm:$0xff]
  %v26 = vld [vmem:[%s0 + $0x60] sm:$0xff]
  %v27 = vld [vmem:[%s0 + $0x68] sm:$0xff]
  %v28 = vld [vmem:[%s0 + $0x70] sm:$0xff]
  %v29 = vld [vmem:[%s0 + $0x78] sm:$0xff]
  %v30 = vld [vmem:[%s0 + $0x80] sm:$0xff]
  %v31 = vld [vmem:[%s0 + $0x88] sm:$0xff]
  %v32 = vld [vmem:[%s1] sm:$0xf]
  %v33 = vld [vmem:[%s1 + $0x4] sm:$0xf]
  %v34 = vld [vmem:[%s1 + $0x8] sm:$0xf]
  %v35 = vld [vmem:[%s1 + $0xc] sm:$0xf]
  %v36 = vld [vmem:[%s1 + $0x10] sm:$0xf]
  %v37 = vld [vmem:[%s1 + $0x14] sm:$0xf]
  %v38 = vld [vmem:[%s1 + $0x18] sm:$0xf]
  %v39 = vld [vmem:[%s1 + $0x1c] sm:$0xf]
  %v40 = vld [vmem:[%s1 + $0x20] sm:$0xf]
  %v41 = vld [vmem:[%s1 + $0x24] sm:$0xf]
  %v42 = vld [vmem:[%s1 + $0x28] sm:$0xf]
  %v43 = vld [vmem:[%s1 + $0x2c] sm:$0xf]
  %v44 = vld [vmem:[%s1 + $0x30] sm:$0xf]
  %v45 = vld [vmem:[%s1 + $0x34] sm:$0xf]
  %v46 = vld [vmem:[%s1 + $0x38] sm:$0xf]
  %v47 = vld [vmem:[%s1 + $0x3c] sm:$0xf]
  %v48 = vld [vmem:[%s1 + $0x40] sm:$0xf]
  %v49 = vld [vmem:[%s1 + $0x44] sm:$0xf]
  %v50 = vld [vmem:[%s1 + $0x48] sm:$0xf]
  %v51 = vld [vmem:[%s1 + $0x4c] sm:$0xf]
  %v52 = vld [vmem:[%s1 + $0x50] sm:$0xf]
  %v53 = vld [vmem:[%s1 + $0x54] sm:$0xf]
  %v54 = vld [vmem:[%s1 + $0x58] sm:$0xf]
  %v55 = vld [vmem:[%s1 + $0x5c] sm:$0xf]
  %v56 = vld [vmem:[%s1 + $0x60] sm:$0xf]
  %v57 = vld [vmem:[%s1 + $0x64] sm:$0xf]
  %v58 = vld [vmem:[%s1 + $0x68] sm:$0xf]
  %v59 = vld [vmem:[%s1 + $0x6c] sm:$0xf]
  %v60 = vld [vmem:[%s1 + $0x70] sm:$0xf]
  %v61 = vld [vmem:[%s1 + $0x74] sm:$0xf]
  %v62 = vld [vmem:[%s1 + $0x78] sm:$0xf]
  %v63 = vld [vmem:[%s1 + $0x7c] sm:$0xf]
  %v64 = vld [vmem:[%s2] sm:$0x1]
  %v66 = vperm.slane %v64, 0
  %v86 = vunpack.c.l.b16 %v14
  %v87 = vunpack.c.h.b16 %v14
  %v88 = vunpack.c.l.b16 %v15
  %v89 = vunpack.c.h.b16 %v15
  %v90 = vunpack.c.l.b16 %v16
  %v91 = vunpack.c.h.b16 %v16
  %v92 = vunpack.c.l.b16 %v17
  %v93 = vunpack.c.h.b16 %v17
  %v94 = vunpack.c.l.b16 %v18
  %v95 = vunpack.c.h.b16 %v18
  %v96 = vunpack.c.l.b16 %v19
  %v97 = vunpack.c.h.b16 %v19
  %v98 = vunpack.c.l.b16 %v20
  %v99 = vunpack.c.h.b16 %v20
  %v100 = vunpack.c.l.b16 %v21
  %v101 = vunpack.c.h.b16 %v21
  %v102 = vunpack.c.l.b16 %v22
  %v103 = vunpack.c.h.b16 %v22
  %v104 = vunpack.c.l.b16 %v23
  %v105 = vunpack.c.h.b16 %v23
  %v106 = vunpack.c.l.b16 %v24
  %v107 = vunpack.c.h.b16 %v24
  %v108 = vunpack.c.l.b16 %v25
  %v109 = vunpack.c.h.b16 %v25
  %v110 = vunpack.c.l.b16 %v26
  %v111 = vunpack.c.h.b16 %v26
  %v112 = vunpack.c.l.b16 %v27
  %v113 = vunpack.c.h.b16 %v27
  %v114 = vunpack.c.l.b16 %v28
  %v115 = vunpack.c.h.b16 %v28
  %v116 = vunpack.c.l.b16 %v29
  %v117 = vunpack.c.h.b16 %v29
  %v118 = vunpack.c.l.b16 %v30
  %v119 = vunpack.c.h.b16 %v30
  %v120 = vunpack.c.l.b16 %v31
  %v121 = vunpack.c.h.b16 %v31
  %v122 = vpack.c.b16 %v88, %v86
  %v123 = vpack.c.b16 %v89, %v87
  %v124 = vpack.c.b16 %v92, %v90
  %v125 = vpack.c.b16 %v93, %v91
  %v126 = vpack.c.b16 %v96, %v94
  %v127 = vpack.c.b16 %v97, %v95
  %v128 = vpack.c.b16 %v100, %v98
  %v129 = vpack.c.b16 %v101, %v99
  %v130 = vpack.c.b16 %v104, %v102
  %v131 = vpack.c.b16 %v105, %v103
  %v132 = vpack.c.b16 %v108, %v106
  %v133 = vpack.c.b16 %v109, %v107
  %v134 = vpack.c.b16 %v112, %v110
  %v135 = vpack.c.b16 %v113, %v111
  %v136 = vpack.c.b16 %v116, %v114
  %v137 = vpack.c.b16 %v117, %v115
  %v138 = vpack.c.b16 %v120, %v118
  %v139 = vpack.c.b16 %v121, %v119
  %v190 = vunpack.c.l.b16 %v32
  %v191 = vunpack.c.l.b16 %v33
  %v192 = vunpack.c.l.b16 %v34
  %v193 = vunpack.c.l.b16 %v35
  %v194 = vunpack.c.l.b16 %v36
  %v195 = vunpack.c.l.b16 %v37
  %v196 = vunpack.c.l.b16 %v38
  %v197 = vunpack.c.l.b16 %v39
  %v198 = vunpack.c.l.b16 %v40
  %v199 = vunpack.c.l.b16 %v41
  %v200 = vunpack.c.l.b16 %v42
  %v201 = vunpack.c.l.b16 %v43
  %v202 = vunpack.c.l.b16 %v44
  %v203 = vunpack.c.l.b16 %v45
  %v204 = vunpack.c.l.b16 %v46
  %v205 = vunpack.c.l.b16 %v47
  %v206 = vunpack.c.l.b16 %v48
  %v207 = vunpack.c.l.b16 %v49
  %v208 = vunpack.c.l.b16 %v50
  %v209 = vunpack.c.l.b16 %v51
  %v210 = vunpack.c.l.b16 %v52
  %v211 = vunpack.c.l.b16 %v53
  %v212 = vunpack.c.l.b16 %v54
  %v213 = vunpack.c.l.b16 %v55
  %v214 = vunpack.c.l.b16 %v56
  %v215 = vunpack.c.l.b16 %v57
  %v216 = vunpack.c.l.b16 %v58
  %v217 = vunpack.c.l.b16 %v59
  %v218 = vunpack.c.l.b16 %v60
  %v219 = vunpack.c.l.b16 %v61
  %v220 = vunpack.c.l.b16 %v62
  %v221 = vunpack.c.l.b16 %v63
  %v222 = vpack.c.b16 %v191, %v190
  %v223 = vpack.c.b16 %v193, %v192
  %v224 = vpack.c.b16 %v195, %v194
  %v225 = vpack.c.b16 %v197, %v196
  %v226 = vpack.c.b16 %v199, %v198
  %v227 = vpack.c.b16 %v201, %v200
  %v228 = vpack.c.b16 %v203, %v202
  %v229 = vpack.c.b16 %v205, %v204
  %v230 = vpack.c.b16 %v207, %v206
  %v231 = vpack.c.b16 %v209, %v208
  %v232 = vpack.c.b16 %v211, %v210
  %v233 = vpack.c.b16 %v213, %v212
  %v234 = vpack.c.b16 %v215, %v214
  %v235 = vpack.c.b16 %v217, %v216
  %v236 = vpack.c.b16 %v219, %v218
  %v237 = vpack.c.b16 %v221, %v220
  %254 = vmatpush.bf16.msra.mxu0 %v229
  %255 = vmatpush.bf16.msra.mxu0 %v228
  %256 = vmatpush.bf16.msra.mxu0 %v227
  %257 = vmatpush.bf16.msra.mxu0 %v226
  %258 = vmatpush.bf16.msra.mxu0 %v225
  %259 = vmatpush.bf16.msra.mxu0 %v224
  %260 = vmatpush.bf16.msra.mxu0 %v223
  %261 = vmatpush.bf16.msra.mxu0 %v222
  %262 = vmatmul.bf16.gmra.mxu0 %v122
  %v263 = vpop.f32.mrf.mxu0
  %v264 = vadd.f32 %v66, %v263
  %v265 = vpop.f32.mrf.mxu0
  %v266 = vadd.f32 %v66, %v265
  %267 = vmatmul.bf16.gmra.mxu0 %v124
  %v268 = vpop.f32.mrf.mxu0
  %v269 = vadd.f32 %v66, %v268
  %v270 = vpop.f32.mrf.mxu0
  %v271 = vadd.f32 %v66, %v270
  %272 = vmatmul.bf16.gmra.mxu0 %v126
  %v273 = vpop.f32.mrf.mxu0
  %v274 = vadd.f32 %v66, %v273
  %v275 = vpop.f32.mrf.mxu0
  %v276 = vadd.f32 %v66, %v275
  %277 = vmatmul.bf16.gmra.mxu0 %v128
  %v278 = vpop.f32.mrf.mxu0
  %v279 = vadd.f32 %v66, %v278
  %v280 = vpop.f32.mrf.mxu0
  %v281 = vadd.f32 %v66, %v280
  %282 = vmatmul.bf16.gmra.mxu0 %v130
  %v283 = vpop.f32.mrf.mxu0
  %v284 = vadd.f32 %v66, %v283
  %v285 = vpop.f32.mrf.mxu0
  %v286 = vadd.f32 %v66, %v285
  %287 = vmatmul.bf16.gmra.mxu0 %v132
  %v288 = vpop.f32.mrf.mxu0
  %v289 = vadd.f32 %v66, %v288
  %v290 = vpop.f32.mrf.mxu0
  %v291 = vadd.f32 %v66, %v290
  %292 = vmatmul.bf16.gmra.mxu0 %v134
  %v293 = vpop.f32.mrf.mxu0
  %v294 = vadd.f32 %v66, %v293
  %v295 = vpop.f32.mrf.mxu0
  %v296 = vadd.f32 %v66, %v295
  %297 = vmatmul.bf16.gmra.mxu0 %v136
  %v298 = vpop.f32.mrf.mxu0
  %v299 = vadd.f32 %v66, %v298
  %v300 = vpop.f32.mrf.mxu0
  %v301 = vadd.f32 %v66, %v300
  %302 = vmatmul.bf16.gmra.mxu0 %v138
  %v303 = vpop.f32.mrf.mxu0
  %v304 = vadd.f32 %v66, %v303
  %v305 = vpop.f32.mrf.mxu0
  %v306 = vadd.f32 %v66, %v305
  %307 = vdwg.mxu0
  %308 = vmatpush.bf16.msra.mxu0 %v237
  %309 = vmatpush.bf16.msra.mxu0 %v236
  %310 = vmatpush.bf16.msra.mxu0 %v235
  %311 = vmatpush.bf16.msra.mxu0 %v234
  %312 = vmatpush.bf16.msra.mxu0 %v233
  %313 = vmatpush.bf16.msra.mxu0 %v232
  %314 = vmatpush.bf16.msra.mxu0 %v231
  %315 = vmatpush.bf16.msra.mxu0 %v230
  %316 = vmatmul.bf16.gmra.mxu0 %v123
  %v317 = vpop.f32.mrf.mxu0
  %v318 = vadd.f32 %v264, %v317
  %v319 = vpop.f32.mrf.mxu0
  %v320 = vadd.f32 %v266, %v319
  %321 = vmatmul.bf16.gmra.mxu0 %v125
  %v322 = vpop.f32.mrf.mxu0
  %v323 = vadd.f32 %v269, %v322
  %v324 = vpop.f32.mrf.mxu0
  %v325 = vadd.f32 %v271, %v324
  %326 = vmatmul.bf16.gmra.mxu0 %v127
  %v327 = vpop.f32.mrf.mxu0
  %v328 = vadd.f32 %v274, %v327
  %v329 = vpop.f32.mrf.mxu0
  %v330 = vadd.f32 %v276, %v329
  %331 = vmatmul.bf16.gmra.mxu0 %v129
  %v332 = vpop.f32.mrf.mxu0
  %v333 = vadd.f32 %v279, %v332
  %v334 = vpop.f32.mrf.mxu0
  %v335 = vadd.f32 %v281, %v334
  %336 = vmatmul.bf16.gmra.mxu0 %v131
  %v337 = vpop.f32.mrf.mxu0
  %v338 = vadd.f32 %v284, %v337
  %v339 = vpop.f32.mrf.mxu0
  %v340 = vadd.f32 %v286, %v339
  %341 = vmatmul.bf16.gmra.mxu0 %v133
  %v342 = vpop.f32.mrf.mxu0
  %v343 = vadd.f32 %v289, %v342
  %v344 = vpop.f32.mrf.mxu0
  %v345 = vadd.f32 %v291, %v344
  %346 = vmatmul.bf16.gmra.mxu0 %v135
  %v347 = vpop.f32.mrf.mxu0
  %v348 = vadd.f32 %v294, %v347
  %v349 = vpop.f32.mrf.mxu0
  %v350 = vadd.f32 %v296, %v349
  %351 = vmatmul.bf16.gmra.mxu0 %v137
  %v352 = vpop.f32.mrf.mxu0
  %v353 = vadd.f32 %v299, %v352
  %v354 = vpop.f32.mrf.mxu0
  %v355 = vadd.f32 %v301, %v354
  %356 = vmatmul.bf16.gmra.mxu0 %v139
  %v357 = vpop.f32.mrf.mxu0
  %v358 = vadd.f32 %v304, %v357
  %v359 = vpop.f32.mrf.mxu0
  %v360 = vadd.f32 %v306, %v359
  %361 = vdwg.mxu0
  %v362 = vmax.f32 %v318, 0.0
  %v363 = vmax.f32 %v320, 0.0
  %v364 = vmax.f32 %v323, 0.0
  %v365 = vmax.f32 %v325, 0.0
  %v366 = vmax.f32 %v328, 0.0
  %v367 = vmax.f32 %v330, 0.0
  %v368 = vmax.f32 %v333, 0.0
  %v369 = vmax.f32 %v335, 0.0
  %v370 = vmax.f32 %v338, 0.0
  %v371 = vmax.f32 %v340, 0.0
  %v372 = vmax.f32 %v343, 0.0
  %v373 = vmax.f32 %v345, 0.0
  %v374 = vmax.f32 %v348, 0.0
  %v375 = vmax.f32 %v350, 0.0
  %v376 = vmax.f32 %v353, 0.0
  %v377 = vmax.f32 %v355, 0.0
  %v378 = vmax.f32 %v358, 0.0
  %v379 = vmax.f32 %v360, 0.0
  %380 = vst [vmem:[%s3] sm:$0xff] %v362
  %381 = vst [vmem:[%s3 + $0x8] sm:$0xff] %v363
  %382 = vst [vmem:[%s3 + $0x10] sm:$0xff] %v364
  %383 = vst [vmem:[%s3 + $0x18] sm:$0xff] %v365
  %384 = vst [vmem:[%s3 + $0x20] sm:$0xff] %v366
  %385 = vst [vmem:[%s3 + $0x28] sm:$0xff] %v367
  %386 = vst [vmem:[%s3 + $0x30] sm:$0xff] %v368
  %387 = vst [vmem:[%s3 + $0x38] sm:$0xff] %v369
  %388 = vst [vmem:[%s3 + $0x40] sm:$0xff] %v370
  %389 = vst [vmem:[%s3 + $0x48] sm:$0xff] %v371
  %390 = vst [vmem:[%s3 + $0x50] sm:$0xff] %v372
  %391 = vst [vmem:[%s3 + $0x58] sm:$0xff] %v373
  %392 = vst [vmem:[%s3 + $0x60] sm:$0xff] %v374
  %393 = vst [vmem:[%s3 + $0x68] sm:$0xff] %v375
  %394 = vst [vmem:[%s3 + $0x70] sm:$0xff] %v376
  %395 = vst [vmem:[%s3 + $0x78] sm:$0xff] %v377
  %396 = vst [vmem:[%s3 + $0x80] sm:$0xff] %v378
  %397 = vst [vmem:[%s3 + $0x88] sm:$0xff] %v379
  // Predicated region
  $region14: #{_lambda_.16} parent=0 // pred_check
    _
  $region15: #{_lambda_.16} parent=0 // pred_check_branch
    %399 = sbr.rel (0) target = $region17
  $region16: #{_lambda_.16} parent=0 // pred_region
    _
  $region17: #{_lambda_.16} parent=0 // pred_fallthru
    _
  // Predicated region
  $region18: #{_lambda_.16} parent=0 // pred_check
    _
  $region19: #{_lambda_.16} parent=0 // pred_check_branch
    %401 = sbr.rel (0) target = $region21
  $region20: #{_lambda_.16} parent=0 // pred_region
    _
  $region21: #{_lambda_.16} parent=0 // pred_fallthru
    _

// kernel: reverse.4
$region0: #{reverse.4}
  #allocation0 [shape = 's32[1]{0}', space=sflag, size = 0x4, scoped, tag = 'scoped memory for reverse.4']
  %s0 = inlined_call_operand.vmem [shape: f32[16,64,3,3], index: 0, kind: input, shape index: {}]
  %s1 = inlined_call_operand.vmem [shape: bf16[16,64,3,3], index: 1, kind: output, shape index: {}]
  %s2 = scalar_lea.vmem %s0, 128
  %v3 = vld [vmem:[%s2] sm:$0xff]
  %v4 = vpack.c.bf16 0.0, %v3
  %5 = vst [vmem:[%s1] sm:$0xf] %v4
  %s6 = scalar_lea.vmem %s0, 80
  %v7 = vld [vmem:[%s6] sm:$0xff]
  %s8 = scalar_lea.vmem %s1, 24
  %v9 = vpack.c.bf16 0.0, %v7
  %10 = vst [vmem:[%s8] sm:$0xf] %v9
  %s11 = scalar_lea.vmem %s0, 32
  %v12 = vld [vmem:[%s11] sm:$0xff]
  %s13 = scalar_lea.vmem %s1, 48
  %v14 = vpack.c.bf16 0.0, %v12
  %15 = vst [vmem:[%s13] sm:$0xf] %v14
  %s16 = scalar_lea.vmem %s0, 112
  %v17 = vld [vmem:[%s16] sm:$0xff]
  %s18 = scalar_lea.vmem %s1, 8
  %v19 = vpack.c.bf16 0.0, %v17
  %20 = vst [vmem:[%s18] sm:$0xf] %v19
  %s21 = scalar_lea.vmem %s0, 64
  %v22 = vld [vmem:[%s21] sm:$0xff]
  %s23 = scalar_lea.vmem %s1, 32
  %v24 = vpack.c.bf16 0.0, %v22
  %25 = vst [vmem:[%s23] sm:$0xf] %v24
  %s26 = scalar_lea.vmem %s0, 16
  %v27 = vld [vmem:[%s26] sm:$0xff]
  %s28 = scalar_lea.vmem %s1, 56
  %v29 = vpack.c.bf16 0.0, %v27
  %30 = vst [vmem:[%s28] sm:$0xf] %v29
  %s31 = scalar_lea.vmem %s0, 96
  %v32 = vld [vmem:[%s31] sm:$0xff]
  %s33 = scalar_lea.vmem %s1, 16
  %v34 = vpack.c.bf16 0.0, %v32
  %35 = vst [vmem:[%s33] sm:$0xf] %v34
  %s36 = scalar_lea.vmem %s0, 48
  %v37 = vld [vmem:[%s36] sm:$0xff]
  %s38 = scalar_lea.vmem %s1, 40
  %v39 = vpack.c.bf16 0.0, %v37
  %40 = vst [vmem:[%s38] sm:$0xf] %v39
  %v41 = vld [vmem:[%s0] sm:$0xff]
  %s42 = scalar_lea.vmem %s1, 64
  %v43 = vpack.c.bf16 0.0, %v41
  %44 = vst [vmem:[%s42] sm:$0xf] %v43
  %s45 = scalar_lea.vmem %s0, 136
  %v46 = vld [vmem:[%s45] sm:$0xff]
  %s47 = scalar_lea.vmem %s1, 4
  %v48 = vpack.c.bf16 0.0, %v46
  %49 = vst [vmem:[%s47] sm:$0xf] %v48
  %s50 = scalar_lea.vmem %s0, 88
  %v51 = vld [vmem:[%s50] sm:$0xff]
  %s52 = scalar_lea.vmem %s1, 28
  %v53 = vpack.c.bf16 0.0, %v51
  %54 = vst [vmem:[%s52] sm:$0xf] %v53
  %s55 = scalar_lea.vmem %s0, 40
  %v56 = vld [vmem:[%s55] sm:$0xff]
  %s57 = scalar_lea.vmem %s1, 52
  %v58 = vpack.c.bf16 0.0, %v56
  %59 = vst [vmem:[%s57] sm:$0xf] %v58
  %s60 = scalar_lea.vmem %s0, 120
  %v61 = vld [vmem:[%s60] sm:$0xff]
  %s62 = scalar_lea.vmem %s1, 12
  %v63 = vpack.c.bf16 0.0, %v61
  %64 = vst [vmem:[%s62] sm:$0xf] %v63
  %s65 = scalar_lea.vmem %s0, 72
  %v66 = vld [vmem:[%s65] sm:$0xff]
  %s67 = scalar_lea.vmem %s1, 36
  %v68 = vpack.c.bf16 0.0, %v66
  %69 = vst [vmem:[%s67] sm:$0xf] %v68
  %s70 = scalar_lea.vmem %s0, 24
  %v71 = vld [vmem:[%s70] sm:$0xff]
  %s72 = scalar_lea.vmem %s1, 60
  %v73 = vpack.c.bf16 0.0, %v71
  %74 = vst [vmem:[%s72] sm:$0xf] %v73
  %s75 = scalar_lea.vmem %s0, 104
  %v76 = vld [vmem:[%s75] sm:$0xff]
  %s77 = scalar_lea.vmem %s1, 20
  %v78 = vpack.c.bf16 0.0, %v76
  %79 = vst [vmem:[%s77] sm:$0xf] %v78
  %s80 = scalar_lea.vmem %s0, 56
  %v81 = vld [vmem:[%s80] sm:$0xff]
  %s82 = scalar_lea.vmem %s1, 44
  %v83 = vpack.c.bf16 0.0, %v81
  %84 = vst [vmem:[%s82] sm:$0xf] %v83
  %s85 = scalar_lea.vmem %s0, 8
  %v86 = vld [vmem:[%s85] sm:$0xff]
  %s87 = scalar_lea.vmem %s1, 68
  %v88 = vpack.c.bf16 0.0, %v86
  %89 = vst [vmem:[%s87] sm:$0xf] %v88

// kernel: _lambda_.17
$region0: #{_lambda_.17}
  #allocation0 [shape = 'u32[]', space=smem, size = 0x4, offset = 0x4, fixed_abs, tag = 'smem constant byte address 0x4 - core index']
  #allocation1 [shape = 'u32[72,128]{1,0:T(1,128)}', space=vmem, size = 0x9000, scoped, tag = 'internal scratch']
  %s0 = inlined_call_operand.vmem [shape: bf16[224,256], index: 0, kind: input, shape index: {}]
  %s1 = inlined_call_operand.vmem [shape: bf16[256,128], index: 1, kind: input, shape index: {}]
  %s2 = inlined_call_operand.vmem [shape: f32[1,128], index: 2, kind: input, shape index: {}]
  %s3 = inlined_call_operand.vmem [shape: f32[224,128], index: 3, kind: output, shape index: {}]
  %s4 = sld [smem:[#allocation0]]
  $region22: #{_lambda_.17} parent=0
    _
  %s6 = ssub.s32 1, %s4
  %s7 = scalar_select 0, %s6, %s4
  // Predicated region
  $region2: #{_lambda_.17} parent=0 // pred_check
    _
  $region3: #{_lambda_.17} parent=0 // pred_check_branch
    %9 = sbr.rel (0) target = $region5
  $region4: #{_lambda_.17} parent=0 // pred_region
    _
  $region5: #{_lambda_.17} parent=0 // pred_fallthru
    _
  // Predicated region
  $region6: #{_lambda_.17} parent=0 // pred_check
    _
  $region7: #{_lambda_.17} parent=0 // pred_check_branch
    %11 = sbr.rel (0) target = $region9
  $region8: #{_lambda_.17} parent=0 // pred_region
    _
  $region9: #{_lambda_.17} parent=0 // pred_fallthru
    _
  // Predicated region
  $region10: #{_lambda_.17} parent=0 // pred_check
    _
  $region11: #{_lambda_.17} parent=0 // pred_check_branch
    %13 = sbr.rel (0) target = $region13
  $region12: #{_lambda_.17} parent=0 // pred_region
    _
  $region13: #{_lambda_.17} parent=0 // pred_fallthru
    _
  %v14 = vld [vmem:[%s0] sm:$0xff]
  %v15 = vld [vmem:[%s0 + $0x8] sm:$0xff]
  %v16 = vld [vmem:[%s0 + $0x10] sm:$0xff]
  %v17 = vld [vmem:[%s0 + $0x18] sm:$0xff]
  %v18 = vld [vmem:[%s0 + $0x20] sm:$0xff]
  %v19 = vld [vmem:[%s0 + $0x28] sm:$0xff]
  %v20 = vld [vmem:[%s0 + $0x30] sm:$0xff]
  %v21 = vld [vmem:[%s0 + $0x38] sm:$0xff]
  %v22 = vld [vmem:[%s0 + $0x40] sm:$0xff]
  %v23 = vld [vmem:[%s0 + $0x48] sm:$0xff]
  %v24 = vld [vmem:[%s0 + $0x50] sm:$0xff]
  %v25 = vld [vmem:[%s0 + $0x58] sm:$0xff]
  %v26 = vld [vmem:[%s0 + $0x60] sm:$0xff]
  %v27 = vld [vmem:[%s0 + $0x68] sm:$0xff]
  %v28 = vld [vmem:[%s0 + $0x70] sm:$0xff]
  %v29 = vld [vmem:[%s0 + $0x78] sm:$0xff]
  %v30 = vld [vmem:[%s0 + $0x80] sm:$0xff]
  %v31 = vld [vmem:[%s0 + $0x88] sm:$0xff]
  %v32 = vld [vmem:[%s0 + $0x90] sm:$0xff]
  %v33 = vld [vmem:[%s0 + $0x98] sm:$0xff]
  %v34 = vld [vmem:[%s0 + $0xa0] sm:$0xff]
  %v35 = vld [vmem:[%s0 + $0xa8] sm:$0xff]
  %v36 = vld [vmem:[%s0 + $0xb0] sm:$0xff]
  %v37 = vld [vmem:[%s0 + $0xb8] sm:$0xff]
  %v38 = vld [vmem:[%s0 + $0xc0] sm:$0xff]
  %v39 = vld [vmem:[%s0 + $0xc8] sm:$0xff]
  %v40 = vld [vmem:[%s0 + $0xd0] sm:$0xff]
  %v41 = vld [vmem:[%s0 + $0xd8] sm:$0xff]
  %v42 = vld [vmem:[%s1] sm:$0xf]
  %v43 = vld [vmem:[%s1 + $0x4] sm:$0xf]
  %v44 = vld [vmem:[%s1 + $0x8] sm:$0xf]
  %v45 = vld [vmem:[%s1 + $0xc] sm:$0xf]
  %v46 = vld [vmem:[%s1 + $0x10] sm:$0xf]
  %v47 = vld [vmem:[%s1 + $0x14] sm:$0xf]
  %v48 = vld [vmem:[%s1 + $0x18] sm:$0xf]
  %v49 = vld [vmem:[%s1 + $0x1c] sm:$0xf]
  %v50 = vld [vmem:[%s1 + $0x20] sm:$0xf]
  %v51 = vld [vmem:[%s1 + $0x24] sm:$0xf]
  %v52 = vld [vmem:[%s1 + $0x28] sm:$0xf]
  %v53 = vld [vmem:[%s1 + $0x2c] sm:$0xf]
  %v54 = vld [vmem:[%s1 + $0x30] sm:$0xf]
  %v55 = vld [vmem:[%s1 + $0x34] sm:$0xf]
  %v56 = vld [vmem:[%s1 + $0x38] sm:$0xf]
  %v57 = vld [vmem:[%s1 + $0x3c] sm:$0xf]
  %v58 = vld [vmem:[%s1 + $0x40] sm:$0xf]
  %v59 = vld [vmem:[%s1 + $0x44] sm:$0xf]
  %v60 = vld [vmem:[%s1 + $0x48] sm:$0xf]
  %v61 = vld [vmem:[%s1 + $0x4c] sm:$0xf]
  %v62 = vld [vmem:[%s1 + $0x50] sm:$0xf]
  %v63 = vld [vmem:[%s1 + $0x54] sm:$0xf]
  %v64 = vld [vmem:[%s1 + $0x58] sm:$0xf]
  %v65 = vld [vmem:[%s1 + $0x5c] sm:$0xf]
  %v66 = vld [vmem:[%s1 + $0x60] sm:$0xf]
  %v67 = vld [vmem:[%s1 + $0x64] sm:$0xf]
  %v68 = vld [vmem:[%s1 + $0x68] sm:$0xf]
  %v69 = vld [vmem:[%s1 + $0x6c] sm:$0xf]
  %v70 = vld [vmem:[%s1 + $0x70] sm:$0xf]
  %v71 = vld [vmem:[%s1 + $0x74] sm:$0xf]
  %v72 = vld [vmem:[%s1 + $0x78] sm:$0xf]
  %v73 = vld [vmem:[%s1 + $0x7c] sm:$0xf]
  %v74 = vld [vmem:[%s2] sm:$0x1]
  %v76 = vperm.slane %v74, 0
  %v106 = vunpack.c.l.b16 %v14
  %v107 = vunpack.c.h.b16 %v14
  %v108 = vunpack.c.l.b16 %v15
  %v109 = vunpack.c.h.b16 %v15
  %v110 = vunpack.c.l.b16 %v16
  %v111 = vunpack.c.h.b16 %v16
  %v112 = vunpack.c.l.b16 %v17
  %v113 = vunpack.c.h.b16 %v17
  %v114 = vunpack.c.l.b16 %v18
  %v115 = vunpack.c.h.b16 %v18
  %v116 = vunpack.c.l.b16 %v19
  %v117 = vunpack.c.h.b16 %v19
  %v118 = vunpack.c.l.b16 %v20
  %v119 = vunpack.c.h.b16 %v20
  %v120 = vunpack.c.l.b16 %v21
  %v121 = vunpack.c.h.b16 %v21
  %v122 = vunpack.c.l.b16 %v22
  %v123 = vunpack.c.h.b16 %v22
  %v124 = vunpack.c.l.b16 %v23
  %v125 = vunpack.c.h.b16 %v23
  %v126 = vunpack.c.l.b16 %v24
  %v127 = vunpack.c.h.b16 %v24
  %v128 = vunpack.c.l.b16 %v25
  %v129 = vunpack.c.h.b16 %v25
  %v130 = vunpack.c.l.b16 %v26
  %v131 = vunpack.c.h.b16 %v26
  %v132 = vunpack.c.l.b16 %v27
  %v133 = vunpack.c.h.b16 %v27
  %v134 = vunpack.c.l.b16 %v28
  %v135 = vunpack.c.h.b16 %v28
  %v136 = vunpack.c.l.b16 %v29
  %v137 = vunpack.c.h.b16 %v29
  %v138 = vunpack.c.l.b16 %v30
  %v139 = vunpack.c.h.b16 %v30
  %v140 = vunpack.c.l.b16 %v31
  %v141 = vunpack.c.h.b16 %v31
  %v142 = vunpack.c.l.b16 %v32
  %v143 = vunpack.c.h.b16 %v32
  %v144 = vunpack.c.l.b16 %v33
  %v145 = vunpack.c.h.b16 %v33
  %v146 = vunpack.c.l.b16 %v34
  %v147 = vunpack.c.h.b16 %v34
  %v148 = vunpack.c.l.b16 %v35
  %v149 = vunpack.c.h.b16 %v35
  %v150 = vunpack.c.l.b16 %v36
  %v151 = vunpack.c.h.b16 %v36
  %v152 = vunpack.c.l.b16 %v37
  %v153 = vunpack.c.h.b16 %v37
  %v154 = vunpack.c.l.b16 %v38
  %v155 = vunpack.c.h.b16 %v38
  %v156 = vunpack.c.l.b16 %v39
  %v157 = vunpack.c.h.b16 %v39
  %v158 = vunpack.c.l.b16 %v40
  %v159 = vunpack.c.h.b16 %v40
  %v160 = vunpack.c.l.b16 %v41
  %v161 = vunpack.c.h.b16 %v41
  %v162 = vpack.c.b16 %v108, %v106
  %v163 = vpack.c.b16 %v109, %v107
  %v164 = vpack.c.b16 %v112, %v110
  %v165 = vpack.c.b16 %v113, %v111
  %v166 = vpack.c.b16 %v116, %v114
  %v167 = vpack.c.b16 %v117, %v115
  %v168 = vpack.c.b16 %v120, %v118
  %v169 = vpack.c.b16 %v121, %v119
  %v170 = vpack.c.b16 %v124, %v122
  %v171 = vpack.c.b16 %v125, %v123
  %v172 = vpack.c.b16 %v128, %v126
  %v173 = vpack.c.b16 %v129, %v127
  %v174 = vpack.c.b16 %v132, %v130
  %v175 = vpack.c.b16 %v133, %v131
  %v176 = vpack.c.b16 %v136, %v134
  %v177 = vpack.c.b16 %v137, %v135
  %v178 = vpack.c.b16 %v140, %v138
  %v179 = vpack.c.b16 %v141, %v139
  %v180 = vpack.c.b16 %v144, %v142
  %v181 = vpack.c.b16 %v145, %v143
  %v182 = vpack.c.b16 %v148, %v146
  %v183 = vpack.c.b16 %v149, %v147
  %v184 = vpack.c.b16 %v152, %v150
  %v185 = vpack.c.b16 %v153, %v151
  %v186 = vpack.c.b16 %v156, %v154
  %v187 = vpack.c.b16 %v157, %v155
  %v188 = vpack.c.b16 %v160, %v158
  %v189 = vpack.c.b16 %v161, %v159
  %v250 = vunpack.c.l.b16 %v42
  %v251 = vunpack.c.l.b16 %v43
  %v252 = vunpack.c.l.b16 %v44
  %v253 = vunpack.c.l.b16 %v45
  %v254 = vunpack.c.l.b16 %v46
  %v255 = vunpack.c.l.b16 %v47
  %v256 = vunpack.c.l.b16 %v48
  %v257 = vunpack.c.l.b16 %v49
  %v258 = vunpack.c.l.b16 %v50
  %v259 = vunpack.c.l.b16 %v51
  %v260 = vunpack.c.l.b16 %v52
  %v261 = vunpack.c.l.b16 %v53
  %v262 = vunpack.c.l.b16 %v54
  %v263 = vunpack.c.l.b16 %v55
  %v264 = vunpack.c.l.b16 %v56
  %v265 = vunpack.c.l.b16 %v57
  %v266 = vunpack.c.l.b16 %v58
  %v267 = vunpack.c.l.b16 %v59
  %v268 = vunpack.c.l.b16 %v60
  %v269 = vunpack.c.l.b16 %v61
  %v270 = vunpack.c.l.b16 %v62
  %v271 = vunpack.c.l.b16 %v63
  %v272 = vunpack.c.l.b16 %v64
  %v273 = vunpack.c.l.b16 %v65
  %v274 = vunpack.c.l.b16 %v66
  %v275 = vunpack.c.l.b16 %v67
  %v276 = vunpack.c.l.b16 %v68
  %v277 = vunpack.c.l.b16 %v69
  %v278 = vunpack.c.l.b16 %v70
  %v279 = vunpack.c.l.b16 %v71
  %v280 = vunpack.c.l.b16 %v72
  %v281 = vunpack.c.l.b16 %v73
  %v282 = vpack.c.b16 %v251, %v250
  %v283 = vpack.c.b16 %v253, %v252
  %v284 = vpack.c.b16 %v255, %v254
  %v285 = vpack.c.b16 %v257, %v256
  %v286 = vpack.c.b16 %v259, %v258
  %v287 = vpack.c.b16 %v261, %v260
  %v288 = vpack.c.b16 %v263, %v262
  %v289 = vpack.c.b16 %v265, %v264
  %v290 = vpack.c.b16 %v267, %v266
  %v291 = vpack.c.b16 %v269, %v268
  %v292 = vpack.c.b16 %v271, %v270
  %v293 = vpack.c.b16 %v273, %v272
  %v294 = vpack.c.b16 %v275, %v274
  %v295 = vpack.c.b16 %v277, %v276
  %v296 = vpack.c.b16 %v279, %v278
  %v297 = vpack.c.b16 %v281, %v280
  %314 = vmatpush.bf16.msra.mxu0 %v289
  %315 = vmatpush.bf16.msra.mxu0 %v288
  %316 = vmatpush.bf16.msra.mxu0 %v287
  %317 = vmatpush.bf16.msra.mxu0 %v286
  %318 = vmatpush.bf16.msra.mxu0 %v285
  %319 = vmatpush.bf16.msra.mxu0 %v284
  %320 = vmatpush.bf16.msra.mxu0 %v283
  %321 = vmatpush.bf16.msra.mxu0 %v282
  %322 = vmatmul.bf16.gmra.mxu0 %v162
  %v323 = vpop.f32.mrf.mxu0
  %v324 = vadd.f32 %v76, %v323
  %v325 = vpop.f32.mrf.mxu0
  %v326 = vadd.f32 %v76, %v325
  %327 = vmatmul.bf16.gmra.mxu0 %v164
  %v328 = vpop.f32.mrf.mxu0
  %v329 = vadd.f32 %v76, %v328
  %v330 = vpop.f32.mrf.mxu0
  %v331 = vadd.f32 %v76, %v330
  %332 = vmatmul.bf16.gmra.mxu0 %v166
  %v333 = vpop.f32.mrf.mxu0
  %v334 = vadd.f32 %v76, %v333
  %v335 = vpop.f32.mrf.mxu0
  %v336 = vadd.f32 %v76, %v335
  %337 = vmatmul.bf16.gmra.mxu0 %v168
  %v338 = vpop.f32.mrf.mxu0
  %v339 = vadd.f32 %v76, %v338
  %v340 = vpop.f32.mrf.mxu0
  %v341 = vadd.f32 %v76, %v340
  %342 = vmatmul.bf16.gmra.mxu0 %v170
  %v343 = vpop.f32.mrf.mxu0
  %v344 = vadd.f32 %v76, %v343
  %v345 = vpop.f32.mrf.mxu0
  %v346 = vadd.f32 %v76, %v345
  %347 = vmatmul.bf16.gmra.mxu0 %v172
  %v348 = vpop.f32.mrf.mxu0
  %v349 = vadd.f32 %v76, %v348
  %v350 = vpop.f32.mrf.mxu0
  %v351 = vadd.f32 %v76, %v350
  %352 = vmatmul.bf16.gmra.mxu0 %v174
  %v353 = vpop.f32.mrf.mxu0
  %v354 = vadd.f32 %v76, %v353
  %v355 = vpop.f32.mrf.mxu0
  %v356 = vadd.f32 %v76, %v355
  %357 = vmatmul.bf16.gmra.mxu0 %v176
  %v358 = vpop.f32.mrf.mxu0
  %v359 = vadd.f32 %v76, %v358
  %v360 = vpop.f32.mrf.mxu0
  %v361 = vadd.f32 %v76, %v360
  %362 = vmatmul.bf16.gmra.mxu0 %v178
  %v363 = vpop.f32.mrf.mxu0
  %v364 = vadd.f32 %v76, %v363
  %v365 = vpop.f32.mrf.mxu0
  %v366 = vadd.f32 %v76, %v365
  %367 = vmatmul.bf16.gmra.mxu0 %v180
  %v368 = vpop.f32.mrf.mxu0
  %v369 = vadd.f32 %v76, %v368
  %v370 = vpop.f32.mrf.mxu0
  %v371 = vadd.f32 %v76, %v370
  %372 = vmatmul.bf16.gmra.mxu0 %v182
  %v373 = vpop.f32.mrf.mxu0
  %v374 = vadd.f32 %v76, %v373
  %v375 = vpop.f32.mrf.mxu0
  %v376 = vadd.f32 %v76, %v375
  %377 = vmatmul.bf16.gmra.mxu0 %v184
  %v378 = vpop.f32.mrf.mxu0
  %v379 = vadd.f32 %v76, %v378
  %v380 = vpop.f32.mrf.mxu0
  %v381 = vadd.f32 %v76, %v380
  %382 = vmatmul.bf16.gmra.mxu0 %v186
  %v383 = vpop.f32.mrf.mxu0
  %v384 = vadd.f32 %v76, %v383
  %v385 = vpop.f32.mrf.mxu0
  %v386 = vadd.f32 %v76, %v385
  %387 = vmatmul.bf16.gmra.mxu0 %v188
  %v388 = vpop.f32.mrf.mxu0
  %v389 = vadd.f32 %v76, %v388
  %v390 = vpop.f32.mrf.mxu0
  %v391 = vadd.f32 %v76, %v390
  %392 = vdwg.mxu0
  %393 = vmatpush.bf16.msra.mxu0 %v297
  %394 = vmatpush.bf16.msra.mxu0 %v296
  %395 = vmatpush.bf16.msra.mxu0 %v295
  %396 = vmatpush.bf16.msra.mxu0 %v294
  %397 = vmatpush.bf16.msra.mxu0 %v293
  %398 = vmatpush.bf16.msra.mxu0 %v292
  %399 = vmatpush.bf16.msra.mxu0 %v291
  %400 = vmatpush.bf16.msra.mxu0 %v290
  %401 = vmatmul.bf16.gmra.mxu0 %v163
  %v402 = vpop.f32.mrf.mxu0
  %v403 = vadd.f32 %v324, %v402
  %v404 = vpop.f32.mrf.mxu0
  %v405 = vadd.f32 %v326, %v404
  %406 = vmatmul.bf16.gmra.mxu0 %v165
  %v407 = vpop.f32.mrf.mxu0
  %v408 = vadd.f32 %v329, %v407
  %v409 = vpop.f32.mrf.mxu0
  %v410 = vadd.f32 %v331, %v409
  %411 = vmatmul.bf16.gmra.mxu0 %v167
  %v412 = vpop.f32.mrf.mxu0
  %v413 = vadd.f32 %v334, %v412
  %v414 = vpop.f32.mrf.mxu0
  %v415 = vadd.f32 %v336, %v414
  %416 = vmatmul.bf16.gmra.mxu0 %v169
  %v417 = vpop.f32.mrf.mxu0
  %v418 = vadd.f32 %v339, %v417
  %v419 = vpop.f32.mrf.mxu0
  %v420 = vadd.f32 %v341, %v419
  %421 = vmatmul.bf16.gmra.mxu0 %v171
  %v422 = vpop.f32.mrf.mxu0
  %v423 = vadd.f32 %v344, %v422
  %v424 = vpop.f32.mrf.mxu0
  %v425 = vadd.f32 %v346, %v424
  %426 = vmatmul.bf16.gmra.mxu0 %v173
  %v427 = vpop.f32.mrf.mxu0
  %v428 = vadd.f32 %v349, %v427
  %v429 = vpop.f32.mrf.mxu0
  %v430 = vadd.f32 %v351, %v429
  %431 = vmatmul.bf16.gmra.mxu0 %v175
  %v432 = vpop.f32.mrf.mxu0
  %v433 = vadd.f32 %v354, %v432
  %v434 = vpop.f32.mrf.mxu0
  %v435 = vadd.f32 %v356, %v434
  %436 = vmatmul.bf16.gmra.mxu0 %v177
  %v437 = vpop.f32.mrf.mxu0
  %v438 = vadd.f32 %v359, %v437
  %v439 = vpop.f32.mrf.mxu0
  %v440 = vadd.f32 %v361, %v439
  %441 = vmatmul.bf16.gmra.mxu0 %v179
  %v442 = vpop.f32.mrf.mxu0
  %v443 = vadd.f32 %v364, %v442
  %v444 = vpop.f32.mrf.mxu0
  %v445 = vadd.f32 %v366, %v444
  %446 = vmatmul.bf16.gmra.mxu0 %v181
  %v447 = vpop.f32.mrf.mxu0
  %v448 = vadd.f32 %v369, %v447
  %v449 = vpop.f32.mrf.mxu0
  %v450 = vadd.f32 %v371, %v449
  %451 = vmatmul.bf16.gmra.mxu0 %v183
  %v452 = vpop.f32.mrf.mxu0
  %v453 = vadd.f32 %v374, %v452
  %v454 = vpop.f32.mrf.mxu0
  %v455 = vadd.f32 %v376, %v454
  %456 = vmatmul.bf16.gmra.mxu0 %v185
  %v457 = vpop.f32.mrf.mxu0
  %v458 = vadd.f32 %v379, %v457
  %v459 = vpop.f32.mrf.mxu0
  %v460 = vadd.f32 %v381, %v459
  %461 = vmatmul.bf16.gmra.mxu0 %v187
  %v462 = vpop.f32.mrf.mxu0
  %v463 = vadd.f32 %v384, %v462
  %v464 = vpop.f32.mrf.mxu0
  %v465 = vadd.f32 %v386, %v464
  %466 = vmatmul.bf16.gmra.mxu0 %v189
  %v467 = vpop.f32.mrf.mxu0
  %v468 = vadd.f32 %v389, %v467
  %v469 = vpop.f32.mrf.mxu0
  %v470 = vadd.f32 %v391, %v469
  %471 = vdwg.mxu0
  %v472 = vmax.f32 %v403, 0.0
  %v473 = vmax.f32 %v405, 0.0
  %v474 = vmax.f32 %v408, 0.0
  %v475 = vmax.f32 %v410, 0.0
  %v476 = vmax.f32 %v413, 0.0
  %v477 = vmax.f32 %v415, 0.0
  %v478 = vmax.f32 %v418, 0.0
  %v479 = vmax.f32 %v420, 0.0
  %v480 = vmax.f32 %v423, 0.0
  %v481 = vmax.f32 %v425, 0.0
  %v482 = vmax.f32 %v428, 0.0
  %v483 = vmax.f32 %v430, 0.0
  %v484 = vmax.f32 %v433, 0.0
  %v485 = vmax.f32 %v435, 0.0
  %v486 = vmax.f32 %v438, 0.0
  %v487 = vmax.f32 %v440, 0.0
  %v488 = vmax.f32 %v443, 0.0
  %v489 = vmax.f32 %v445, 0.0
  %v490 = vmax.f32 %v448, 0.0
  %v491 = vmax.f32 %v450, 0.0
  %v492 = vmax.f32 %v453, 0.0
  %v493 = vmax.f32 %v455, 0.0
  %v494 = vmax.f32 %v458, 0.0
  %v495 = vmax.f32 %v460, 0.0
  %v496 = vmax.f32 %v463, 0.0
  %v497 = vmax.f32 %v465, 0.0
  %v498 = vmax.f32 %v468, 0.0
  %v499 = vmax.f32 %v470, 0.0
  %500 = vst [vmem:[%s3] sm:$0xff] %v472
  %501 = vst [vmem:[%s3 + $0x8] sm:$0xff] %v473
  %502 = vst [vmem:[%s3 + $0x10] sm:$0xff] %v474
  %503 = vst [vmem:[%s3 + $0x18] sm:$0xff] %v475
  %504 = vst [vmem:[%s3 + $0x20] sm:$0xff] %v476
  %505 = vst [vmem:[%s3 + $0x28] sm:$0xff] %v477
  %506 = vst [vmem:[%s3 + $0x30] sm:$0xff] %v478
  %507 = vst [vmem:[%s3 + $0x38] sm:$0xff] %v479
  %508 = vst [vmem:[%s3 + $0x40] sm:$0xff] %v480
  %509 = vst [vmem:[%s3 + $0x48] sm:$0xff] %v481
  %510 = vst [vmem:[%s3 + $0x50] sm:$0xff] %v482
  %511 = vst [vmem:[%s3 + $0x58] sm:$0xff] %v483
  %512 = vst [vmem:[%s3 + $0x60] sm:$0xff] %v484
  %513 = vst [vmem:[%s3 + $0x68] sm:$0xff] %v485
  %514 = vst [vmem:[%s3 + $0x70] sm:$0xff] %v486
  %515 = vst [vmem:[%s3 + $0x78] sm:$0xff] %v487
  %516 = vst [vmem:[%s3 + $0x80] sm:$0xff] %v488
  %517 = vst [vmem:[%s3 + $0x88] sm:$0xff] %v489
  %518 = vst [vmem:[%s3 + $0x90] sm:$0xff] %v490
  %519 = vst [vmem:[%s3 + $0x98] sm:$0xff] %v491
  %520 = vst [vmem:[%s3 + $0xa0] sm:$0xff] %v492
  %521 = vst [vmem:[%s3 + $0xa8] sm:$0xff] %v493
  %522 = vst [vmem:[%s3 + $0xb0] sm:$0xff] %v494
  %523 = vst [vmem:[%s3 + $0xb8] sm:$0xff] %v495
  %524 = vst [vmem:[%s3 + $0xc0] sm:$0xff] %v496
  %525 = vst [vmem:[%s3 + $0xc8] sm:$0xff] %v497
  %526 = vst [vmem:[%s3 + $0xd0] sm:$0xff] %v498
  %527 = vst [vmem:[%s3 + $0xd8] sm:$0xff] %v499
  // Predicated region
  $region14: #{_lambda_.17} parent=0 // pred_check
    _
  $region15: #{_lambda_.17} parent=0 // pred_check_branch
    %529 = sbr.rel (0) target = $region17
  $region16: #{_lambda_.17} parent=0 // pred_region
    _
  $region17: #{_lambda_.17} parent=0 // pred_fallthru
    _
  // Predicated region
  $region18: #{_lambda_.17} parent=0 // pred_check
    _
  $region19: #{_lambda_.17} parent=0 // pred_check_branch
    %531 = sbr.rel (0) target = $region21
  $region20: #{_lambda_.17} parent=0 // pred_region
    _
  $region21: #{_lambda_.17} parent=0 // pred_fallthru
    _

// kernel: tile.18
$region0: #{tile.18}
  #allocation0 [shape = 's32[1]{0}', space=sflag, size = 0x4, scoped, tag = 'scoped memory for tile.18']
  %s0 = inlined_call_operand.vmem [shape: f32[64], index: 0, kind: input, shape index: {}]
  %s1 = inlined_call_operand.vmem [shape: f32[4,64], index: 1, kind: output, shape index: {}]
  // Predicated region
  $region2: #{tile.18} parent=0 // pred_check
    _
  $region3: #{tile.18} parent=0 // pred_check_branch
    %3 = sbr.rel (0) target = $region5
  $region4: #{tile.18} parent=0 // pred_region
    _
  $region5: #{tile.18} parent=0 // pred_fallthru
    _
  %v4 = vld [vmem:[%s0] ss:$0 sm:$0xff]
  %5 = vst [vmem:[%s1] sm:$0xf] %v4

// kernel: _lambda_.18
$region0: #{_lambda_.18}
  #allocation0 [shape = 'u32[]', space=smem, size = 0x4, offset = 0x4, fixed_abs, tag = 'smem constant byte address 0x4 - core index']
  #allocation1 [shape = 'u32[72,128]{1,0:T(1,128)}', space=vmem, size = 0x9000, scoped, tag = 'internal scratch']
  %s0 = inlined_call_operand.vmem [shape: bf16[272,256], index: 0, kind: input, shape index: {}]
  %s1 = inlined_call_operand.vmem [shape: bf16[256,256], index: 1, kind: input, shape index: {}]
  %s2 = inlined_call_operand.vmem [shape: f32[1,256], index: 2, kind: input, shape index: {}]
  %s3 = inlined_call_operand.vmem [shape: f32[272,256], index: 3, kind: output, shape index: {}]
  %s4 = sld [smem:[#allocation0]]
  $region22: #{_lambda_.18} parent=0
    _
  %s6 = ssub.s32 1, %s4
  %s7 = scalar_select 0, %s6, %s4
  // Predicated region
  $region2: #{_lambda_.18} parent=0 // pred_check
    _
  $region3: #{_lambda_.18} parent=0 // pred_check_branch
    %9 = sbr.rel (0) target = $region5
  $region4: #{_lambda_.18} parent=0 // pred_region
    _
  $region5: #{_lambda_.18} parent=0 // pred_fallthru
    _
  // Predicated region
  $region6: #{_lambda_.18} parent=0 // pred_check
    _
  $region7: #{_lambda_.18} parent=0 // pred_check_branch
    %11 = sbr.rel (0) target = $region9
  $region8: #{_lambda_.18} parent=0 // pred_region
    _
  $region9: #{_lambda_.18} parent=0 // pred_fallthru
    _
  // Predicated region
  $region10: #{_lambda_.18} parent=0 // pred_check
    _
  $region11: #{_lambda_.18} parent=0 // pred_check_branch
    %13 = sbr.rel (0) target = $region13
  $region12: #{_lambda_.18} parent=0 // pred_region
    _
  $region13: #{_lambda_.18} parent=0 // pred_fallthru
    _
  %v14 = vld [vmem:[%s0] sm:$0xff]
  %v15 = vld [vmem:[%s0 + $0x8] sm:$0xff]
  %v16 = vld [vmem:[%s0 + $0x10] sm:$0xff]
  %v17 = vld [vmem:[%s0 + $0x18] sm:$0xff]
  %v18 = vld [vmem:[%s0 + $0x20] sm:$0xff]
  %v19 = vld [vmem:[%s0 + $0x28] sm:$0xff]
  %v20 = vld [vmem:[%s0 + $0x30] sm:$0xff]
  %v21 = vld [vmem:[%s0 + $0x38] sm:$0xff]
  %v22 = vld [vmem:[%s0 + $0x40] sm:$0xff]
  %v23 = vld [vmem:[%s0 + $0x48] sm:$0xff]
  %v24 = vld [vmem:[%s0 + $0x50] sm:$0xff]
  %v25 = vld [vmem:[%s0 + $0x58] sm:$0xff]
  %v26 = vld [vmem:[%s0 + $0x60] sm:$0xff]
  %v27 = vld [vmem:[%s0 + $0x68] sm:$0xff]
  %v28 = vld [vmem:[%s0 + $0x70] sm:$0xff]
  %v29 = vld [vmem:[%s0 + $0x78] sm:$0xff]
  %v30 = vld [vmem:[%s0 + $0x80] sm:$0xff]
  %v31 = vld [vmem:[%s0 + $0x88] sm:$0xff]
  %v32 = vld [vmem:[%s0 + $0x90] sm:$0xff]
  %v33 = vld [vmem:[%s0 + $0x98] sm:$0xff]
  %v34 = vld [vmem:[%s0 + $0xa0] sm:$0xff]
  %v35 = vld [vmem:[%s0 + $0xa8] sm:$0xff]
  %v36 = vld [vmem:[%s0 + $0xb0] sm:$0xff]
  %v37 = vld [vmem:[%s0 + $0xb8] sm:$0xff]
  %v38 = vld [vmem:[%s0 + $0xc0] sm:$0xff]
  %v39 = vld [vmem:[%s0 + $0xc8] sm:$0xff]
  %v40 = vld [vmem:[%s0 + $0xd0] sm:$0xff]
  %v41 = vld [vmem:[%s0 + $0xd8] sm:$0xff]
  %v42 = vld [vmem:[%s0 + $0xe0] sm:$0xff]
  %v43 = vld [vmem:[%s0 + $0xe8] sm:$0xff]
  %v44 = vld [vmem:[%s0 + $0xf0] sm:$0xff]
  %v45 = vld [vmem:[%s0 + $0xf8] sm:$0xff]
  %v46 = vld [vmem:[%s0 + $0x100] sm:$0xff]
  %v47 = vld [vmem:[%s0 + $0x108] sm:$0xff]
  %v48 = vld [vmem:[%s1] sm:$0xff]
  %v49 = vld [vmem:[%s1 + $0x8] sm:$0xff]
  %v50 = vld [vmem:[%s1 + $0x10] sm:$0xff]
  %v51 = vld [vmem:[%s1 + $0x18] sm:$0xff]
  %v52 = vld [vmem:[%s1 + $0x20] sm:$0xff]
  %v53 = vld [vmem:[%s1 + $0x28] sm:$0xff]
  %v54 = vld [vmem:[%s1 + $0x30] sm:$0xff]
  %v55 = vld [vmem:[%s1 + $0x38] sm:$0xff]
  %v56 = vld [vmem:[%s1 + $0x40] sm:$0xff]
  %v57 = vld [vmem:[%s1 + $0x48] sm:$0xff]
  %v58 = vld [vmem:[%s1 + $0x50] sm:$0xff]
  %v59 = vld [vmem:[%s1 + $0x58] sm:$0xff]
  %v60 = vld [vmem:[%s1 + $0x60] sm:$0xff]
  %v61 = vld [vmem:[%s1 + $0x68] sm:$0xff]
  %v62 = vld [vmem:[%s1 + $0x70] sm:$0xff]
  %v63 = vld [vmem:[%s1 + $0x78] sm:$0xff]
  %v64 = vld [vmem:[%s1 + $0x80] sm:$0xff]
  %v65 = vld [vmem:[%s1 + $0x88] sm:$0xff]
  %v66 = vld [vmem:[%s1 + $0x90] sm:$0xff]
  %v67 = vld [vmem:[%s1 + $0x98] sm:$0xff]
  %v68 = vld [vmem:[%s1 + $0xa0] sm:$0xff]
  %v69 = vld [vmem:[%s1 + $0xa8] sm:$0xff]
  %v70 = vld [vmem:[%s1 + $0xb0] sm:$0xff]
  %v71 = vld [vmem:[%s1 + $0xb8] sm:$0xff]
  %v72 = vld [vmem:[%s1 + $0xc0] sm:$0xff]
  %v73 = vld [vmem:[%s1 + $0xc8] sm:$0xff]
  %v74 = vld [vmem:[%s1 + $0xd0] sm:$0xff]
  %v75 = vld [vmem:[%s1 + $0xd8] sm:$0xff]
  %v76 = vld [vmem:[%s1 + $0xe0] sm:$0xff]
  %v77 = vld [vmem:[%s1 + $0xe8] sm:$0xff]
  %v78 = vld [vmem:[%s1 + $0xf0] sm:$0xff]
  %v79 = vld [vmem:[%s1 + $0xf8] sm:$0xff]
  %v80 = vld [vmem:[%s2] sm:$0x3]
  %v82 = vperm.slane %v80, 0
  %v83 = vperm.slane %v80, 1
  %v120 = vunpack.c.l.b16 %v14
  %v121 = vunpack.c.h.b16 %v14
  %v122 = vunpack.c.l.b16 %v15
  %v123 = vunpack.c.h.b16 %v15
  %v124 = vunpack.c.l.b16 %v16
  %v125 = vunpack.c.h.b16 %v16
  %v126 = vunpack.c.l.b16 %v17
  %v127 = vunpack.c.h.b16 %v17
  %v128 = vunpack.c.l.b16 %v18
  %v129 = vunpack.c.h.b16 %v18
  %v130 = vunpack.c.l.b16 %v19
  %v131 = vunpack.c.h.b16 %v19
  %v132 = vunpack.c.l.b16 %v20
  %v133 = vunpack.c.h.b16 %v20
  %v134 = vunpack.c.l.b16 %v21
  %v135 = vunpack.c.h.b16 %v21
  %v136 = vunpack.c.l.b16 %v22
  %v137 = vunpack.c.h.b16 %v22
  %v138 = vunpack.c.l.b16 %v23
  %v139 = vunpack.c.h.b16 %v23
  %v140 = vunpack.c.l.b16 %v24
  %v141 = vunpack.c.h.b16 %v24
  %v142 = vunpack.c.l.b16 %v25
  %v143 = vunpack.c.h.b16 %v25
  %v144 = vunpack.c.l.b16 %v26
  %v145 = vunpack.c.h.b16 %v26
  %v146 = vunpack.c.l.b16 %v27
  %v147 = vunpack.c.h.b16 %v27
  %v148 = vunpack.c.l.b16 %v28
  %v149 = vunpack.c.h.b16 %v28
  %v150 = vunpack.c.l.b16 %v29
  %v151 = vunpack.c.h.b16 %v29
  %v152 = vunpack.c.l.b16 %v30
  %v153 = vunpack.c.h.b16 %v30
  %v154 = vunpack.c.l.b16 %v31
  %v155 = vunpack.c.h.b16 %v31
  %v156 = vunpack.c.l.b16 %v32
  %v157 = vunpack.c.h.b16 %v32
  %v158 = vunpack.c.l.b16 %v33
  %v159 = vunpack.c.h.b16 %v33
  %v160 = vunpack.c.l.b16 %v34
  %v161 = vunpack.c.h.b16 %v34
  %v162 = vunpack.c.l.b16 %v35
  %v163 = vunpack.c.h.b16 %v35
  %v164 = vunpack.c.l.b16 %v36
  %v165 = vunpack.c.h.b16 %v36
  %v166 = vunpack.c.l.b16 %v37
  %v167 = vunpack.c.h.b16 %v37
  %v168 = vunpack.c.l.b16 %v38
  %v169 = vunpack.c.h.b16 %v38
  %v170 = vunpack.c.l.b16 %v39
  %v171 = vunpack.c.h.b16 %v39
  %v172 = vunpack.c.l.b16 %v40
  %v173 = vunpack.c.h.b16 %v40
  %v174 = vunpack.c.l.b16 %v41
  %v175 = vunpack.c.h.b16 %v41
  %v176 = vunpack.c.l.b16 %v42
  %v177 = vunpack.c.h.b16 %v42
  %v178 = vunpack.c.l.b16 %v43
  %v179 = vunpack.c.h.b16 %v43
  %v180 = vunpack.c.l.b16 %v44
  %v181 = vunpack.c.h.b16 %v44
  %v182 = vunpack.c.l.b16 %v45
  %v183 = vunpack.c.h.b16 %v45
  %v184 = vunpack.c.l.b16 %v46
  %v185 = vunpack.c.h.b16 %v46
  %v186 = vunpack.c.l.b16 %v47
  %v187 = vunpack.c.h.b16 %v47
  %v188 = vpack.c.b16 %v122, %v120
  %v189 = vpack.c.b16 %v123, %v121
  %v190 = vpack.c.b16 %v126, %v124
  %v191 = vpack.c.b16 %v127, %v125
  %v192 = vpack.c.b16 %v130, %v128
  %v193 = vpack.c.b16 %v131, %v129
  %v194 = vpack.c.b16 %v134, %v132
  %v195 = vpack.c.b16 %v135, %v133
  %v196 = vpack.c.b16 %v138, %v136
  %v197 = vpack.c.b16 %v139, %v137
  %v198 = vpack.c.b16 %v142, %v140
  %v199 = vpack.c.b16 %v143, %v141
  %v200 = vpack.c.b16 %v146, %v144
  %v201 = vpack.c.b16 %v147, %v145
  %v202 = vpack.c.b16 %v150, %v148
  %v203 = vpack.c.b16 %v151, %v149
  %v204 = vpack.c.b16 %v154, %v152
  %v205 = vpack.c.b16 %v155, %v153
  %v206 = vpack.c.b16 %v158, %v156
  %v207 = vpack.c.b16 %v159, %v157
  %v208 = vpack.c.b16 %v162, %v160
  %v209 = vpack.c.b16 %v163, %v161
  %v210 = vpack.c.b16 %v166, %v164
  %v211 = vpack.c.b16 %v167, %v165
  %v212 = vpack.c.b16 %v170, %v168
  %v213 = vpack.c.b16 %v171, %v169
  %v214 = vpack.c.b16 %v174, %v172
  %v215 = vpack.c.b16 %v175, %v173
  %v216 = vpack.c.b16 %v178, %v176
  %v217 = vpack.c.b16 %v179, %v177
  %v218 = vpack.c.b16 %v182, %v180
  %v219 = vpack.c.b16 %v183, %v181
  %v220 = vpack.c.b16 %v186, %v184
  %v221 = vpack.c.b16 %v187, %v185
  %v288 = vunpack.c.l.b16 %v48
  %v289 = vunpack.c.h.b16 %v48
  %v290 = vunpack.c.l.b16 %v49
  %v291 = vunpack.c.h.b16 %v49
  %v292 = vunpack.c.l.b16 %v50
  %v293 = vunpack.c.h.b16 %v50
  %v294 = vunpack.c.l.b16 %v51
  %v295 = vunpack.c.h.b16 %v51
  %v296 = vunpack.c.l.b16 %v52
  %v297 = vunpack.c.h.b16 %v52
  %v298 = vunpack.c.l.b16 %v53
  %v299 = vunpack.c.h.b16 %v53
  %v300 = vunpack.c.l.b16 %v54
  %v301 = vunpack.c.h.b16 %v54
  %v302 = vunpack.c.l.b16 %v55
  %v303 = vunpack.c.h.b16 %v55
  %v304 = vunpack.c.l.b16 %v56
  %v305 = vunpack.c.h.b16 %v56
  %v306 = vunpack.c.l.b16 %v57
  %v307 = vunpack.c.h.b16 %v57
  %v308 = vunpack.c.l.b16 %v58
  %v309 = vunpack.c.h.b16 %v58
  %v310 = vunpack.c.l.b16 %v59
  %v311 = vunpack.c.h.b16 %v59
  %v312 = vunpack.c.l.b16 %v60
  %v313 = vunpack.c.h.b16 %v60
  %v314 = vunpack.c.l.b16 %v61
  %v315 = vunpack.c.h.b16 %v61
  %v316 = vunpack.c.l.b16 %v62
  %v317 = vunpack.c.h.b16 %v62
  %v318 = vunpack.c.l.b16 %v63
  %v319 = vunpack.c.h.b16 %v63
  %v320 = vunpack.c.l.b16 %v64
  %v321 = vunpack.c.h.b16 %v64
  %v322 = vunpack.c.l.b16 %v65
  %v323 = vunpack.c.h.b16 %v65
  %v324 = vunpack.c.l.b16 %v66
  %v325 = vunpack.c.h.b16 %v66
  %v326 = vunpack.c.l.b16 %v67
  %v327 = vunpack.c.h.b16 %v67
  %v328 = vunpack.c.l.b16 %v68
  %v329 = vunpack.c.h.b16 %v68
  %v330 = vunpack.c.l.b16 %v69
  %v331 = vunpack.c.h.b16 %v69
  %v332 = vunpack.c.l.b16 %v70
  %v333 = vunpack.c.h.b16 %v70
  %v334 = vunpack.c.l.b16 %v71
  %v335 = vunpack.c.h.b16 %v71
  %v336 = vunpack.c.l.b16 %v72
  %v337 = vunpack.c.h.b16 %v72
  %v338 = vunpack.c.l.b16 %v73
  %v339 = vunpack.c.h.b16 %v73
  %v340 = vunpack.c.l.b16 %v74
  %v341 = vunpack.c.h.b16 %v74
  %v342 = vunpack.c.l.b16 %v75
  %v343 = vunpack.c.h.b16 %v75
  %v344 = vunpack.c.l.b16 %v76
  %v345 = vunpack.c.h.b16 %v76
  %v346 = vunpack.c.l.b16 %v77
  %v347 = vunpack.c.h.b16 %v77
  %v348 = vunpack.c.l.b16 %v78
  %v349 = vunpack.c.h.b16 %v78
  %v350 = vunpack.c.l.b16 %v79
  %v351 = vunpack.c.h.b16 %v79
  %v352 = vpack.c.b16 %v290, %v288
  %v353 = vpack.c.b16 %v291, %v289
  %v354 = vpack.c.b16 %v294, %v292
  %v355 = vpack.c.b16 %v295, %v293
  %v356 = vpack.c.b16 %v298, %v296
  %v357 = vpack.c.b16 %v299, %v297
  %v358 = vpack.c.b16 %v302, %v300
  %v359 = vpack.c.b16 %v303, %v301
  %v360 = vpack.c.b16 %v306, %v304
  %v361 = vpack.c.b16 %v307, %v305
  %v362 = vpack.c.b16 %v310, %v308
  %v363 = vpack.c.b16 %v311, %v309
  %v364 = vpack.c.b16 %v314, %v312
  %v365 = vpack.c.b16 %v315, %v313
  %v366 = vpack.c.b16 %v318, %v316
  %v367 = vpack.c.b16 %v319, %v317
  %v368 = vpack.c.b16 %v322, %v320
  %v369 = vpack.c.b16 %v323, %v321
  %v370 = vpack.c.b16 %v326, %v324
  %v371 = vpack.c.b16 %v327, %v325
  %v372 = vpack.c.b16 %v330, %v328
  %v373 = vpack.c.b16 %v331, %v329
  %v374 = vpack.c.b16 %v334, %v332
  %v375 = vpack.c.b16 %v335, %v333
  %v376 = vpack.c.b16 %v338, %v336
  %v377 = vpack.c.b16 %v339, %v337
  %v378 = vpack.c.b16 %v342, %v340
  %v379 = vpack.c.b16 %v343, %v341
  %v380 = vpack.c.b16 %v346, %v344
  %v381 = vpack.c.b16 %v347, %v345
  %v382 = vpack.c.b16 %v350, %v348
  %v383 = vpack.c.b16 %v351, %v349
  %416 = vmatpush.bf16.msra.mxu0 %v366
  %417 = vmatpush.bf16.msra.mxu0 %v364
  %418 = vmatpush.bf16.msra.mxu0 %v362
  %419 = vmatpush.bf16.msra.mxu0 %v360
  %420 = vmatpush.bf16.msra.mxu0 %v358
  %421 = vmatpush.bf16.msra.mxu0 %v356
  %422 = vmatpush.bf16.msra.mxu0 %v354
  %423 = vmatpush.bf16.msra.mxu0 %v352
  %424 = vmatmul.bf16.gmra.mxu0 %v188
  %v425 = vpop.f32.mrf.mxu0
  %v426 = vadd.f32 %v82, %v425
  %v427 = vpop.f32.mrf.mxu0
  %v428 = vadd.f32 %v82, %v427
  %429 = vmatmul.bf16.gmra.mxu0 %v190
  %v430 = vpop.f32.mrf.mxu0
  %v431 = vadd.f32 %v82, %v430
  %v432 = vpop.f32.mrf.mxu0
  %v433 = vadd.f32 %v82, %v432
  %434 = vmatmul.bf16.gmra.mxu0 %v192
  %v435 = vpop.f32.mrf.mxu0
  %v436 = vadd.f32 %v82, %v435
  %v437 = vpop.f32.mrf.mxu0
  %v438 = vadd.f32 %v82, %v437
  %439 = vmatmul.bf16.gmra.mxu0 %v194
  %v440 = vpop.f32.mrf.mxu0
  %v441 = vadd.f32 %v82, %v440
  %v442 = vpop.f32.mrf.mxu0
  %v443 = vadd.f32 %v82, %v442
  %444 = vmatmul.bf16.gmra.mxu0 %v196
  %v445 = vpop.f32.mrf.mxu0
  %v446 = vadd.f32 %v82, %v445
  %v447 = vpop.f32.mrf.mxu0
  %v448 = vadd.f32 %v82, %v447
  %449 = vmatmul.bf16.gmra.mxu0 %v198
  %v450 = vpop.f32.mrf.mxu0
  %v451 = vadd.f32 %v82, %v450
  %v452 = vpop.f32.mrf.mxu0
  %v453 = vadd.f32 %v82, %v452
  %454 = vmatmul.bf16.gmra.mxu0 %v200
  %v455 = vpop.f32.mrf.mxu0
  %v456 = vadd.f32 %v82, %v455
  %v457 = vpop.f32.mrf.mxu0
  %v458 = vadd.f32 %v82, %v457
  %459 = vmatmul.bf16.gmra.mxu0 %v202
  %v460 = vpop.f32.mrf.mxu0
  %v461 = vadd.f32 %v82, %v460
  %v462 = vpop.f32.mrf.mxu0
  %v463 = vadd.f32 %v82, %v462
  %464 = vmatmul.bf16.gmra.mxu0 %v204
  %v465 = vpop.f32.mrf.mxu0
  %v466 = vadd.f32 %v82, %v465
  %v467 = vpop.f32.mrf.mxu0
  %v468 = vadd.f32 %v82, %v467
  %469 = vmatmul.bf16.gmra.mxu0 %v206
  %v470 = vpop.f32.mrf.mxu0
  %v471 = vadd.f32 %v82, %v470
  %v472 = vpop.f32.mrf.mxu0
  %v473 = vadd.f32 %v82, %v472
  %474 = vmatmul.bf16.gmra.mxu0 %v208
  %v475 = vpop.f32.mrf.mxu0
  %v476 = vadd.f32 %v82, %v475
  %v477 = vpop.f32.mrf.mxu0
  %v478 = vadd.f32 %v82, %v477
  %479 = vmatmul.bf16.gmra.mxu0 %v210
  %v480 = vpop.f32.mrf.mxu0
  %v481 = vadd.f32 %v82, %v480
  %v482 = vpop.f32.mrf.mxu0
  %v483 = vadd.f32 %v82, %v482
  %484 = vmatmul.bf16.gmra.mxu0 %v212
  %v485 = vpop.f32.mrf.mxu0
  %v486 = vadd.f32 %v82, %v485
  %v487 = vpop.f32.mrf.mxu0
  %v488 = vadd.f32 %v82, %v487
  %489 = vmatmul.bf16.gmra.mxu0 %v214
  %v490 = vpop.f32.mrf.mxu0
  %v491 = vadd.f32 %v82, %v490
  %v492 = vpop.f32.mrf.mxu0
  %v493 = vadd.f32 %v82, %v492
  %494 = vmatmul.bf16.gmra.mxu0 %v216
  %v495 = vpop.f32.mrf.mxu0
  %v496 = vadd.f32 %v82, %v495
  %v497 = vpop.f32.mrf.mxu0
  %v498 = vadd.f32 %v82, %v497
  %499 = vmatmul.bf16.gmra.mxu0 %v218
  %v500 = vpop.f32.mrf.mxu0
  %v501 = vadd.f32 %v82, %v500
  %v502 = vpop.f32.mrf.mxu0
  %v503 = vadd.f32 %v82, %v502
  %504 = vmatmul.bf16.gmra.mxu0 %v220
  %v505 = vpop.f32.mrf.mxu0
  %v506 = vadd.f32 %v82, %v505
  %v507 = vpop.f32.mrf.mxu0
  %v508 = vadd.f32 %v82, %v507
  %509 = vdwg.mxu0
  %510 = vmatpush.bf16.msra.mxu0 %v382
  %511 = vmatpush.bf16.msra.mxu0 %v380
  %512 = vmatpush.bf16.msra.mxu0 %v378
  %513 = vmatpush.bf16.msra.mxu0 %v376
  %514 = vmatpush.bf16.msra.mxu0 %v374
  %515 = vmatpush.bf16.msra.mxu0 %v372
  %516 = vmatpush.bf16.msra.mxu0 %v370
  %517 = vmatpush.bf16.msra.mxu0 %v368
  %518 = vmatmul.bf16.gmra.mxu0 %v189
  %v519 = vpop.f32.mrf.mxu0
  %v520 = vadd.f32 %v426, %v519
  %v521 = vpop.f32.mrf.mxu0
  %v522 = vadd.f32 %v428, %v521
  %523 = vmatmul.bf16.gmra.mxu0 %v191
  %v524 = vpop.f32.mrf.mxu0
  %v525 = vadd.f32 %v431, %v524
  %v526 = vpop.f32.mrf.mxu0
  %v527 = vadd.f32 %v433, %v526
  %528 = vmatmul.bf16.gmra.mxu0 %v193
  %v529 = vpop.f32.mrf.mxu0
  %v530 = vadd.f32 %v436, %v529
  %v531 = vpop.f32.mrf.mxu0
  %v532 = vadd.f32 %v438, %v531
  %533 = vmatmul.bf16.gmra.mxu0 %v195
  %v534 = vpop.f32.mrf.mxu0
  %v535 = vadd.f32 %v441, %v534
  %v536 = vpop.f32.mrf.mxu0
  %v537 = vadd.f32 %v443, %v536
  %538 = vmatmul.bf16.gmra.mxu0 %v197
  %v539 = vpop.f32.mrf.mxu0
  %v540 = vadd.f32 %v446, %v539
  %v541 = vpop.f32.mrf.mxu0
  %v542 = vadd.f32 %v448, %v541
  %543 = vmatmul.bf16.gmra.mxu0 %v199
  %v544 = vpop.f32.mrf.mxu0
  %v545 = vadd.f32 %v451, %v544
  %v546 = vpop.f32.mrf.mxu0
  %v547 = vadd.f32 %v453, %v546
  %548 = vmatmul.bf16.gmra.mxu0 %v201
  %v549 = vpop.f32.mrf.mxu0
  %v550 = vadd.f32 %v456, %v549
  %v551 = vpop.f32.mrf.mxu0
  %v552 = vadd.f32 %v458, %v551
  %553 = vmatmul.bf16.gmra.mxu0 %v203
  %v554 = vpop.f32.mrf.mxu0
  %v555 = vadd.f32 %v461, %v554
  %v556 = vpop.f32.mrf.mxu0
  %v557 = vadd.f32 %v463, %v556
  %558 = vmatmul.bf16.gmra.mxu0 %v205
  %v559 = vpop.f32.mrf.mxu0
  %v560 = vadd.f32 %v466, %v559
  %v561 = vpop.f32.mrf.mxu0
  %v562 = vadd.f32 %v468, %v561
  %563 = vmatmul.bf16.gmra.mxu0 %v207
  %v564 = vpop.f32.mrf.mxu0
  %v565 = vadd.f32 %v471, %v564
  %v566 = vpop.f32.mrf.mxu0
  %v567 = vadd.f32 %v473, %v566
  %568 = vmatmul.bf16.gmra.mxu0 %v209
  %v569 = vpop.f32.mrf.mxu0
  %v570 = vadd.f32 %v476, %v569
  %v571 = vpop.f32.mrf.mxu0
  %v572 = vadd.f32 %v478, %v571
  %573 = vmatmul.bf16.gmra.mxu0 %v211
  %v574 = vpop.f32.mrf.mxu0
  %v575 = vadd.f32 %v481, %v574
  %v576 = vpop.f32.mrf.mxu0
  %v577 = vadd.f32 %v483, %v576
  %578 = vmatmul.bf16.gmra.mxu0 %v213
  %v579 = vpop.f32.mrf.mxu0
  %v580 = vadd.f32 %v486, %v579
  %v581 = vpop.f32.mrf.mxu0
  %v582 = vadd.f32 %v488, %v581
  %583 = vmatmul.bf16.gmra.mxu0 %v215
  %v584 = vpop.f32.mrf.mxu0
  %v585 = vadd.f32 %v491, %v584
  %v586 = vpop.f32.mrf.mxu0
  %v587 = vadd.f32 %v493, %v586
  %588 = vmatmul.bf16.gmra.mxu0 %v217
  %v589 = vpop.f32.mrf.mxu0
  %v590 = vadd.f32 %v496, %v589
  %v591 = vpop.f32.mrf.mxu0
  %v592 = vadd.f32 %v498, %v591
  %593 = vmatmul.bf16.gmra.mxu0 %v219
  %v594 = vpop.f32.mrf.mxu0
  %v595 = vadd.f32 %v501, %v594
  %v596 = vpop.f32.mrf.mxu0
  %v597 = vadd.f32 %v503, %v596
  %598 = vmatmul.bf16.gmra.mxu0 %v221
  %v599 = vpop.f32.mrf.mxu0
  %v600 = vadd.f32 %v506, %v599
  %v601 = vpop.f32.mrf.mxu0
  %v602 = vadd.f32 %v508, %v601
  %603 = vdwg.mxu0
  %604 = vmatpush.bf16.msra.mxu0 %v367
  %605 = vmatpush.bf16.msra.mxu0 %v365
  %606 = vmatpush.bf16.msra.mxu0 %v363
  %607 = vmatpush.bf16.msra.mxu0 %v361
  %608 = vmatpush.bf16.msra.mxu0 %v359
  %609 = vmatpush.bf16.msra.mxu0 %v357
  %610 = vmatpush.bf16.msra.mxu0 %v355
  %611 = vmatpush.bf16.msra.mxu0 %v353
  %612 = vmatmul.bf16.gmra.mxu0 %v188
  %v613 = vpop.f32.mrf.mxu0
  %v614 = vadd.f32 %v83, %v613
  %v615 = vpop.f32.mrf.mxu0
  %v616 = vadd.f32 %v83, %v615
  %617 = vmatmul.bf16.gmra.mxu0 %v190
  %v618 = vpop.f32.mrf.mxu0
  %v619 = vadd.f32 %v83, %v618
  %v620 = vpop.f32.mrf.mxu0
  %v621 = vadd.f32 %v83, %v620
  %622 = vmatmul.bf16.gmra.mxu0 %v192
  %v623 = vpop.f32.mrf.mxu0
  %v624 = vadd.f32 %v83, %v623
  %v625 = vpop.f32.mrf.mxu0
  %v626 = vadd.f32 %v83, %v625
  %627 = vmatmul.bf16.gmra.mxu0 %v194
  %v628 = vpop.f32.mrf.mxu0
  %v629 = vadd.f32 %v83, %v628
  %v630 = vpop.f32.mrf.mxu0
  %v631 = vadd.f32 %v83, %v630
  %632 = vmatmul.bf16.gmra.mxu0 %v196
  %v633 = vpop.f32.mrf.mxu0
  %v634 = vadd.f32 %v83, %v633
  %v635 = vpop.f32.mrf.mxu0
  %v636 = vadd.f32 %v83, %v635
  %637 = vmatmul.bf16.gmra.mxu0 %v198
  %v638 = vpop.f32.mrf.mxu0
  %v639 = vadd.f32 %v83, %v638
  %v640 = vpop.f32.mrf.mxu0
  %v641 = vadd.f32 %v83, %v640
  %642 = vmatmul.bf16.gmra.mxu0 %v200
  %v643 = vpop.f32.mrf.mxu0
  %v644 = vadd.f32 %v83, %v643
  %v645 = vpop.f32.mrf.mxu0
  %v646 = vadd.f32 %v83, %v645
  %647 = vmatmul.bf16.gmra.mxu0 %v202
  %v648 = vpop.f32.mrf.mxu0
  %v649 = vadd.f32 %v83, %v648
  %v650 = vpop.f32.mrf.mxu0
  %v651 = vadd.f32 %v83, %v650
  %652 = vmatmul.bf16.gmra.mxu0 %v204
  %v653 = vpop.f32.mrf.mxu0
  %v654 = vadd.f32 %v83, %v653
  %v655 = vpop.f32.mrf.mxu0
  %v656 = vadd.f32 %v83, %v655
  %657 = vmatmul.bf16.gmra.mxu0 %v206
  %v658 = vpop.f32.mrf.mxu0
  %v659 = vadd.f32 %v83, %v658
  %v660 = vpop.f32.mrf.mxu0
  %v661 = vadd.f32 %v83, %v660
  %662 = vmatmul.bf16.gmra.mxu0 %v208
  %v663 = vpop.f32.mrf.mxu0
  %v664 = vadd.f32 %v83, %v663
  %v665 = vpop.f32.mrf.mxu0
  %v666 = vadd.f32 %v83, %v665
  %667 = vmatmul.bf16.gmra.mxu0 %v210
  %v668 = vpop.f32.mrf.mxu0
  %v669 = vadd.f32 %v83, %v668
  %v670 = vpop.f32.mrf.mxu0
  %v671 = vadd.f32 %v83, %v670
  %672 = vmatmul.bf16.gmra.mxu0 %v212
  %v673 = vpop.f32.mrf.mxu0
  %v674 = vadd.f32 %v83, %v673
  %v675 = vpop.f32.mrf.mxu0
  %v676 = vadd.f32 %v83, %v675
  %677 = vmatmul.bf16.gmra.mxu0 %v214
  %v678 = vpop.f32.mrf.mxu0
  %v679 = vadd.f32 %v83, %v678
  %v680 = vpop.f32.mrf.mxu0
  %v681 = vadd.f32 %v83, %v680
  %682 = vmatmul.bf16.gmra.mxu0 %v216
  %v683 = vpop.f32.mrf.mxu0
  %v684 = vadd.f32 %v83, %v683
  %v685 = vpop.f32.mrf.mxu0
  %v686 = vadd.f32 %v83, %v685
  %687 = vmatmul.bf16.gmra.mxu0 %v218
  %v688 = vpop.f32.mrf.mxu0
  %v689 = vadd.f32 %v83, %v688
  %v690 = vpop.f32.mrf.mxu0
  %v691 = vadd.f32 %v83, %v690
  %692 = vmatmul.bf16.gmra.mxu0 %v220
  %v693 = vpop.f32.mrf.mxu0
  %v694 = vadd.f32 %v83, %v693
  %v695 = vpop.f32.mrf.mxu0
  %v696 = vadd.f32 %v83, %v695
  %697 = vdwg.mxu0
  %698 = vmatpush.bf16.msra.mxu0 %v383
  %699 = vmatpush.bf16.msra.mxu0 %v381
  %700 = vmatpush.bf16.msra.mxu0 %v379
  %701 = vmatpush.bf16.msra.mxu0 %v377
  %702 = vmatpush.bf16.msra.mxu0 %v375
  %703 = vmatpush.bf16.msra.mxu0 %v373
  %704 = vmatpush.bf16.msra.mxu0 %v371
  %705 = vmatpush.bf16.msra.mxu0 %v369
  %706 = vmatmul.bf16.gmra.mxu0 %v189
  %v707 = vpop.f32.mrf.mxu0
  %v708 = vadd.f32 %v614, %v707
  %v709 = vpop.f32.mrf.mxu0
  %v710 = vadd.f32 %v616, %v709
  %711 = vmatmul.bf16.gmra.mxu0 %v191
  %v712 = vpop.f32.mrf.mxu0
  %v713 = vadd.f32 %v619, %v712
  %v714 = vpop.f32.mrf.mxu0
  %v715 = vadd.f32 %v621, %v714
  %716 = vmatmul.bf16.gmra.mxu0 %v193
  %v717 = vpop.f32.mrf.mxu0
  %v718 = vadd.f32 %v624, %v717
  %v719 = vpop.f32.mrf.mxu0
  %v720 = vadd.f32 %v626, %v719
  %721 = vmatmul.bf16.gmra.mxu0 %v195
  %v722 = vpop.f32.mrf.mxu0
  %v723 = vadd.f32 %v629, %v722
  %v724 = vpop.f32.mrf.mxu0
  %v725 = vadd.f32 %v631, %v724
  %726 = vmatmul.bf16.gmra.mxu0 %v197
  %v727 = vpop.f32.mrf.mxu0
  %v728 = vadd.f32 %v634, %v727
  %v729 = vpop.f32.mrf.mxu0
  %v730 = vadd.f32 %v636, %v729
  %731 = vmatmul.bf16.gmra.mxu0 %v199
  %v732 = vpop.f32.mrf.mxu0
  %v733 = vadd.f32 %v639, %v732
  %v734 = vpop.f32.mrf.mxu0
  %v735 = vadd.f32 %v641, %v734
  %736 = vmatmul.bf16.gmra.mxu0 %v201
  %v737 = vpop.f32.mrf.mxu0
  %v738 = vadd.f32 %v644, %v737
  %v739 = vpop.f32.mrf.mxu0
  %v740 = vadd.f32 %v646, %v739
  %741 = vmatmul.bf16.gmra.mxu0 %v203
  %v742 = vpop.f32.mrf.mxu0
  %v743 = vadd.f32 %v649, %v742
  %v744 = vpop.f32.mrf.mxu0
  %v745 = vadd.f32 %v651, %v744
  %746 = vmatmul.bf16.gmra.mxu0 %v205
  %v747 = vpop.f32.mrf.mxu0
  %v748 = vadd.f32 %v654, %v747
  %v749 = vpop.f32.mrf.mxu0
  %v750 = vadd.f32 %v656, %v749
  %751 = vmatmul.bf16.gmra.mxu0 %v207
  %v752 = vpop.f32.mrf.mxu0
  %v753 = vadd.f32 %v659, %v752
  %v754 = vpop.f32.mrf.mxu0
  %v755 = vadd.f32 %v661, %v754
  %756 = vmatmul.bf16.gmra.mxu0 %v209
  %v757 = vpop.f32.mrf.mxu0
  %v758 = vadd.f32 %v664, %v757
  %v759 = vpop.f32.mrf.mxu0
  %v760 = vadd.f32 %v666, %v759
  %761 = vmatmul.bf16.gmra.mxu0 %v211
  %v762 = vpop.f32.mrf.mxu0
  %v763 = vadd.f32 %v669, %v762
  %v764 = vpop.f32.mrf.mxu0
  %v765 = vadd.f32 %v671, %v764
  %766 = vmatmul.bf16.gmra.mxu0 %v213
  %v767 = vpop.f32.mrf.mxu0
  %v768 = vadd.f32 %v674, %v767
  %v769 = vpop.f32.mrf.mxu0
  %v770 = vadd.f32 %v676, %v769
  %771 = vmatmul.bf16.gmra.mxu0 %v215
  %v772 = vpop.f32.mrf.mxu0
  %v773 = vadd.f32 %v679, %v772
  %v774 = vpop.f32.mrf.mxu0
  %v775 = vadd.f32 %v681, %v774
  %776 = vmatmul.bf16.gmra.mxu0 %v217
  %v777 = vpop.f32.mrf.mxu0
  %v778 = vadd.f32 %v684, %v777
  %v779 = vpop.f32.mrf.mxu0
  %v780 = vadd.f32 %v686, %v779
  %781 = vmatmul.bf16.gmra.mxu0 %v219
  %v782 = vpop.f32.mrf.mxu0
  %v783 = vadd.f32 %v689, %v782
  %v784 = vpop.f32.mrf.mxu0
  %v785 = vadd.f32 %v691, %v784
  %786 = vmatmul.bf16.gmra.mxu0 %v221
  %v787 = vpop.f32.mrf.mxu0
  %v788 = vadd.f32 %v694, %v787
  %v789 = vpop.f32.mrf.mxu0
  %v790 = vadd.f32 %v696, %v789
  %791 = vdwg.mxu0
  %v792 = vmax.f32 %v520, 0.0
  %v793 = vmax.f32 %v708, 0.0
  %v794 = vmax.f32 %v522, 0.0
  %v795 = vmax.f32 %v710, 0.0
  %v796 = vmax.f32 %v525, 0.0
  %v797 = vmax.f32 %v713, 0.0
  %v798 = vmax.f32 %v527, 0.0
  %v799 = vmax.f32 %v715, 0.0
  %v800 = vmax.f32 %v530, 0.0
  %v801 = vmax.f32 %v718, 0.0
  %v802 = vmax.f32 %v532, 0.0
  %v803 = vmax.f32 %v720, 0.0
  %v804 = vmax.f32 %v535, 0.0
  %v805 = vmax.f32 %v723, 0.0
  %v806 = vmax.f32 %v537, 0.0
  %v807 = vmax.f32 %v725, 0.0
  %v808 = vmax.f32 %v540, 0.0
  %v809 = vmax.f32 %v728, 0.0
  %v810 = vmax.f32 %v542, 0.0
  %v811 = vmax.f32 %v730, 0.0
  %v812 = vmax.f32 %v545, 0.0
  %v813 = vmax.f32 %v733, 0.0
  %v814 = vmax.f32 %v547, 0.0
  %v815 = vmax.f32 %v735, 0.0
  %v816 = vmax.f32 %v550, 0.0
  %v817 = vmax.f32 %v738, 0.0
  %v818 = vmax.f32 %v552, 0.0
  %v819 = vmax.f32 %v740, 0.0
  %v820 = vmax.f32 %v555, 0.0
  %v821 = vmax.f32 %v743, 0.0
  %v822 = vmax.f32 %v557, 0.0
  %v823 = vmax.f32 %v745, 0.0
  %v824 = vmax.f32 %v560, 0.0
  %v825 = vmax.f32 %v748, 0.0
  %v826 = vmax.f32 %v562, 0.0
  %v827 = vmax.f32 %v750, 0.0
  %v828 = vmax.f32 %v565, 0.0
  %v829 = vmax.f32 %v753, 0.0
  %v830 = vmax.f32 %v567, 0.0
  %v831 = vmax.f32 %v755, 0.0
  %v832 = vmax.f32 %v570, 0.0
  %v833 = vmax.f32 %v758, 0.0
  %v834 = vmax.f32 %v572, 0.0
  %v835 = vmax.f32 %v760, 0.0
  %v836 = vmax.f32 %v575, 0.0
  %v837 = vmax.f32 %v763, 0.0
  %v838 = vmax.f32 %v577, 0.0
  %v839 = vmax.f32 %v765, 0.0
  %v840 = vmax.f32 %v580, 0.0
  %v841 = vmax.f32 %v768, 0.0
  %v842 = vmax.f32 %v582, 0.0
  %v843 = vmax.f32 %v770, 0.0
  %v844 = vmax.f32 %v585, 0.0
  %v845 = vmax.f32 %v773, 0.0
  %v846 = vmax.f32 %v587, 0.0
  %v847 = vmax.f32 %v775, 0.0
  %v848 = vmax.f32 %v590, 0.0
  %v849 = vmax.f32 %v778, 0.0
  %v850 = vmax.f32 %v592, 0.0
  %v851 = vmax.f32 %v780, 0.0
  %v852 = vmax.f32 %v595, 0.0
  %v853 = vmax.f32 %v783, 0.0
  %v854 = vmax.f32 %v597, 0.0
  %v855 = vmax.f32 %v785, 0.0
  %v856 = vmax.f32 %v600, 0.0
  %v857 = vmax.f32 %v788, 0.0
  %v858 = vmax.f32 %v602, 0.0
  %v859 = vmax.f32 %v790, 0.0
  %860 = vst [vmem:[%s3] sm:$0xff] %v792
  %861 = vst [vmem:[%s3 + $0x8] sm:$0xff] %v793
  %862 = vst [vmem:[%s3 + $0x10] sm:$0xff] %v794
  %863 = vst [vmem:[%s3 + $0x18] sm:$0xff] %v795
  %864 = vst [vmem:[%s3 + $0x20] sm:$0xff] %v796
  %865 = vst [vmem:[%s3 + $0x28] sm:$0xff] %v797
  %866 = vst [vmem:[%s3 + $0x30] sm:$0xff] %v798
  %867 = vst [vmem:[%s3 + $0x38] sm:$0xff] %v799
  %868 = vst [vmem:[%s3 + $0x40] sm:$0xff] %v800
  %869 = vst [vmem:[%s3 + $0x48] sm:$0xff] %v801
  %870 = vst [vmem:[%s3 + $0x50] sm:$0xff] %v802
  %871 = vst [vmem:[%s3 + $0x58] sm:$0xff] %v803
  %872 = vst [vmem:[%s3 + $0x60] sm:$0xff] %v804
  %873 = vst [vmem:[%s3 + $0x68] sm:$0xff] %v805
  %874 = vst [vmem:[%s3 + $0x70] sm:$0xff] %v806
  %875 = vst [vmem:[%s3 + $0x78] sm:$0xff] %v807
  %876 = vst [vmem:[%s3 + $0x80] sm:$0xff] %v808
  %877 = vst [vmem:[%s3 + $0x88] sm:$0xff] %v809
  %878 = vst [vmem:[%s3 + $0x90] sm:$0xff] %v810
  %879 = vst [vmem:[%s3 + $0x98] sm:$0xff] %v811
  %880 = vst [vmem:[%s3 + $0xa0] sm:$0xff] %v812
  %881 = vst [vmem:[%s3 + $0xa8] sm:$0xff] %v813
  %882 = vst [vmem:[%s3 + $0xb0] sm:$0xff] %v814
  %883 = vst [vmem:[%s3 + $0xb8] sm:$0xff] %v815
  %884 = vst [vmem:[%s3 + $0xc0] sm:$0xff] %v816
  %885 = vst [vmem:[%s3 + $0xc8] sm:$0xff] %v817
  %886 = vst [vmem:[%s3 + $0xd0] sm:$0xff] %v818
  %887 = vst [vmem:[%s3 + $0xd8] sm:$0xff] %v819
  %888 = vst [vmem:[%s3 + $0xe0] sm:$0xff] %v820
  %889 = vst [vmem:[%s3 + $0xe8] sm:$0xff] %v821
  %890 = vst [vmem:[%s3 + $0xf0] sm:$0xff] %v822
  %891 = vst [vmem:[%s3 + $0xf8] sm:$0xff] %v823
  %892 = vst [vmem:[%s3 + $0x100] sm:$0xff] %v824
  %893 = vst [vmem:[%s3 + $0x108] sm:$0xff] %v825
  %894 = vst [vmem:[%s3 + $0x110] sm:$0xff] %v826
  %895 = vst [vmem:[%s3 + $0x118] sm:$0xff] %v827
  %896 = vst [vmem:[%s3 + $0x120] sm:$0xff] %v828
  %897 = vst [vmem:[%s3 + $0x128] sm:$0xff] %v829
  %898 = vst [vmem:[%s3 + $0x130] sm:$0xff] %v830
  %899 = vst [vmem:[%s3 + $0x138] sm:$0xff] %v831
  %900 = vst [vmem:[%s3 + $0x140] sm:$0xff] %v832
  %901 = vst [vmem:[%s3 + $0x148] sm:$0xff] %v833
  %902 = vst [vmem:[%s3 + $0x150] sm:$0xff] %v834
  %903 = vst [vmem:[%s3 + $0x158] sm:$0xff] %v835
  %904 = vst [vmem:[%s3 + $0x160] sm:$0xff] %v836
  %905 = vst [vmem:[%s3 + $0x168] sm:$0xff] %v837
  %906 = vst [vmem:[%s3 + $0x170] sm:$0xff] %v838
  %907 = vst [vmem:[%s3 + $0x178] sm:$0xff] %v839
  %908 = vst [vmem:[%s3 + $0x180] sm:$0xff] %v840
  %909 = vst [vmem:[%s3 + $0x188] sm:$0xff] %v841
  %910 = vst [vmem:[%s3 + $0x190] sm:$0xff] %v842
  %911 = vst [vmem:[%s3 + $0x198] sm:$0xff] %v843
  %912 = vst [vmem:[%s3 + $0x1a0] sm:$0xff] %v844
  %913 = vst [vmem:[%s3 + $0x1a8] sm:$0xff] %v845
  %914 = vst [vmem:[%s3 + $0x1b0] sm:$0xff] %v846
  %915 = vst [vmem:[%s3 + $0x1b8] sm:$0xff] %v847
  %916 = vst [vmem:[%s3 + $0x1c0] sm:$0xff] %v848
  %917 = vst [vmem:[%s3 + $0x1c8] sm:$0xff] %v849
  %918 = vst [vmem:[%s3 + $0x1d0] sm:$0xff] %v850
  %919 = vst [vmem:[%s3 + $0x1d8] sm:$0xff] %v851
  %920 = vst [vmem:[%s3 + $0x1e0] sm:$0xff] %v852
  %921 = vst [vmem:[%s3 + $0x1e8] sm:$0xff] %v853
  %922 = vst [vmem:[%s3 + $0x1f0] sm:$0xff] %v854
  %923 = vst [vmem:[%s3 + $0x1f8] sm:$0xff] %v855
  %924 = vst [vmem:[%s3 + $0x200] sm:$0xff] %v856
  %925 = vst [vmem:[%s3 + $0x208] sm:$0xff] %v857
  %926 = vst [vmem:[%s3 + $0x210] sm:$0xff] %v858
  %927 = vst [vmem:[%s3 + $0x218] sm:$0xff] %v859
  // Predicated region
  $region14: #{_lambda_.18} parent=0 // pred_check
    _
  $region15: #{_lambda_.18} parent=0 // pred_check_branch
    %929 = sbr.rel (0) target = $region17
  $region16: #{_lambda_.18} parent=0 // pred_region
    _
  $region17: #{_lambda_.18} parent=0 // pred_fallthru
    _
  // Predicated region
  $region18: #{_lambda_.18} parent=0 // pred_check
    _
  $region19: #{_lambda_.18} parent=0 // pred_check_branch
    %931 = sbr.rel (0) target = $region21
  $region20: #{_lambda_.18} parent=0 // pred_region
    _
  $region21: #{_lambda_.18} parent=0 // pred_fallthru
    _

// kernel: tile.23
$region0: #{tile.23}
  #allocation0 [shape = 's32[1]{0}', space=sflag, size = 0x4, scoped, tag = 'scoped memory for tile.23']
  %s0 = inlined_call_operand.vmem [shape: f32[32], index: 0, kind: input, shape index: {}]
  %s1 = inlined_call_operand.vmem [shape: f32[16,32], index: 1, kind: output, shape index: {}]
  // Predicated region
  $region2: #{tile.23} parent=0 // pred_check
    _
  $region3: #{tile.23} parent=0 // pred_check_branch
    %3 = sbr.rel (0) target = $region5
  $region4: #{tile.23} parent=0 // pred_region
    _
  $region5: #{tile.23} parent=0 // pred_fallthru
    _
  %v4 = vld [vmem:[%s0] ss:$0 sm:$0xff]
  %5 = vst [vmem:[%s1] sm:$0xff] %v4
  %s6 = scalar_lea.vmem %s1, 8
  %7 = vst [vmem:[%s6] sm:$0xff] %v4

// kernel: tile.28
$region0: #{tile.28}
  #allocation0 [shape = 's32[1]{0}', space=sflag, size = 0x4, scoped, tag = 'scoped memory for tile.28']
  %s0 = inlined_call_operand.vmem [shape: f32[4], index: 0, kind: input, shape index: {}]
  %s1 = inlined_call_operand.vmem [shape: f32[16,4], index: 1, kind: output, shape index: {}]
  // Predicated region
  $region2: #{tile.28} parent=0 // pred_check
    _
  $region3: #{tile.28} parent=0 // pred_check_branch
    %3 = sbr.rel (0) target = $region5
  $region4: #{tile.28} parent=0 // pred_region
    _
  $region5: #{tile.28} parent=0 // pred_fallthru
    _
  %v4 = vld [vmem:[%s0] ss:$0 sm:$0xff]
  %5 = vst [vmem:[%s1] sm:$0xff] %v4
  %s6 = scalar_lea.vmem %s1, 8
  %7 = vst [vmem:[%s6] sm:$0xff] %v4

// kernel: tile.29
$region0: #{tile.29}
  %s0 = inlined_call_operand.vmem [shape: f32[16,4], index: 0, kind: input, shape index: {}]
  %s1 = inlined_call_operand.vmem [shape: f32[64], index: 1, kind: output, shape index: {}]
  $region1: #{tile.29} parent=0
    #allocation0 [shape = 'u8[4096]{0}', space=vmem, size = 0x1000, scoped, tag = 'scoped mem for output reshape']
    %v2 = vld [vmem:[%s0] sm:$0x1]
    %vm3 = vcmask 31744
    %4 = vst.msk [vmem:[#allocation0] sm:$0x1] %vm3, %v2
    %s5 = scalar_lea.vmem %s0, 15
    %v6 = vld [vmem:[%s5] sm:$0x1]
    %7 = vrot.lane.b32.xlu0 %v6, 60
    %v8 = vpop.permute.xlu0 %7
    %vm9 = vcmask 523744
    %10 = vst.msk [vmem:[#allocation0] sm:$0x1] %vm9, %v8
    %s11 = scalar_lea.vmem %s0, 14
    %v12 = vld [vmem:[%s11] sm:$0x1]
    %13 = vrot.lane.b32.xlu0 %v12, 56
    %v14 = vpop.permute.xlu0 %13
    %vm15 = vcmask 490944
    %16 = vst.msk [vmem:[#allocation0] sm:$0x1] %vm15, %v14
    %s17 = scalar_lea.vmem %s0, 13
    %v18 = vld [vmem:[%s17] sm:$0x1]
    %19 = vrot.lane.b32.xlu0 %v18, 52
    %v20 = vpop.permute.xlu0 %19
    %vm21 = vcmask 458144
    %22 = vst.msk [vmem:[#allocation0] sm:$0x1] %vm21, %v20
    %s23 = scalar_lea.vmem %s0, 12
    %v24 = vld [vmem:[%s23] sm:$0x1]
    %25 = vrot.lane.b32.xlu0 %v24, 48
    %v26 = vpop.permute.xlu0 %25
    %vm27 = vcmask 425344
    %28 = vst.msk [vmem:[#allocation0] sm:$0x1] %vm27, %v26
    %s29 = scalar_lea.vmem %s0, 11
    %v30 = vld [vmem:[%s29] sm:$0x1]
    %31 = vrot.lane.b32.xlu0 %v30, 44
    %v32 = vpop.permute.xlu0 %31
    %vm33 = vcmask 392544
    %34 = vst.msk [vmem:[#allocation0] sm:$0x1] %vm33, %v32
    %s35 = scalar_lea.vmem %s0, 10
    %v36 = vld [vmem:[%s35] sm:$0x1]
    %37 = vrot.lane.b32.xlu0 %v36, 40
    %v38 = vpop.permute.xlu0 %37
    %vm39 = vcmask 359744
    %40 = vst.msk [vmem:[#allocation0] sm:$0x1] %vm39, %v38
    %s41 = scalar_lea.vmem %s0, 9
    %v42 = vld [vmem:[%s41] sm:$0x1]
    %43 = vrot.lane.b32.xlu0 %v42, 36
    %v44 = vpop.permute.xlu0 %43
    %vm45 = vcmask 326944
    %46 = vst.msk [vmem:[#allocation0] sm:$0x1] %vm45, %v44
    %s47 = scalar_lea.vmem %s0, 8
    %v48 = vld [vmem:[%s47] sm:$0x1]
    %49 = vrot.lane.b32.xlu0 %v48, 32
    %v50 = vpop.permute.xlu0 %49
    %vm51 = vcmask 294144
    %52 = vst.msk [vmem:[#allocation0] sm:$0x1] %vm51, %v50
    %s53 = scalar_lea.vmem %s0, 7
    %v54 = vld [vmem:[%s53] sm:$0x1]
    %55 = vrot.lane.b32.xlu0 %v54, 28
    %v56 = vpop.permute.xlu0 %55
    %vm57 = vcmask 261344
    %58 = vst.msk [vmem:[#allocation0] sm:$0x1] %vm57, %v56
    %s59 = scalar_lea.vmem %s0, 6
    %v60 = vld [vmem:[%s59] sm:$0x1]
    %61 = vrot.lane.b32.xlu0 %v60, 24
    %v62 = vpop.permute.xlu0 %61
    %vm63 = vcmask 228544
    %64 = vst.msk [vmem:[#allocation0] sm:$0x1] %vm63, %v62
    %s65 = scalar_lea.vmem %s0, 5
    %v66 = vld [vmem:[%s65] sm:$0x1]
    %67 = vrot.lane.b32.xlu0 %v66, 20
    %v68 = vpop.permute.xlu0 %67
    %vm69 = vcmask 195744
    %70 = vst.msk [vmem:[#allocation0] sm:$0x1] %vm69, %v68
    %s71 = scalar_lea.vmem %s0, 4
    %v72 = vld [vmem:[%s71] sm:$0x1]
    %73 = vrot.lane.b32.xlu0 %v72, 16
    %v74 = vpop.permute.xlu0 %73
    %vm75 = vcmask 162944
    %76 = vst.msk [vmem:[#allocation0] sm:$0x1] %vm75, %v74
    %s77 = scalar_lea.vmem %s0, 3
    %v78 = vld [vmem:[%s77] sm:$0x1]
    %79 = vrot.lane.b32.xlu0 %v78, 12
    %v80 = vpop.permute.xlu0 %79
    %vm81 = vcmask 130144
    %82 = vst.msk [vmem:[#allocation0] sm:$0x1] %vm81, %v80
    %s83 = scalar_lea.vmem %s0, 2
    %v84 = vld [vmem:[%s83] sm:$0x1]
    %85 = vrot.lane.b32.xlu0 %v84, 8
    %v86 = vpop.permute.xlu0 %85
    %vm87 = vcmask 97344
    %88 = vst.msk [vmem:[#allocation0] sm:$0x1] %vm87, %v86
    %s89 = scalar_lea.vmem %s0, 1
    %v90 = vld [vmem:[%s89] sm:$0x1]
    %91 = vrot.lane.b32.xlu0 %v90, 4
    %v92 = vpop.permute.xlu0 %91
    %vm93 = vcmask 64544
    %94 = vst.msk [vmem:[#allocation0] sm:$0x1] %vm93, %v92
    %s96 = ssub.s32 2, 1
    %v97 = vld [vmem:[#allocation0] sm:%s96]
    %s99 = ssub.s32 2, 1
    %100 = vst [vmem:[%s1] sm:%s99] %v97

// kernel: _lambda_.19
$region0: #{_lambda_.19}
  #allocation0 [shape = 'u32[]', space=smem, size = 0x4, offset = 0x4, fixed_abs, tag = 'smem constant byte address 0x4 - core index']
  #allocation1 [shape = 'u32[72,128]{1,0:T(1,128)}', space=vmem, size = 0x9000, scoped, tag = 'internal scratch']
  %s0 = inlined_call_operand.vmem [shape: bf16[1280,256], index: 0, kind: input, shape index: {}]
  %s1 = inlined_call_operand.vmem [shape: bf16[256,512], index: 1, kind: input, shape index: {}]
  %s2 = inlined_call_operand.vmem [shape: f32[1,512], index: 2, kind: input, shape index: {}]
  %s3 = inlined_call_operand.vmem [shape: bf16[512,128], index: 3, kind: input, shape index: {}]
  %s4 = inlined_call_operand.vmem [shape: f32[1,128], index: 4, kind: input, shape index: {}]
  %s5 = inlined_call_operand.vmem [shape: f32[1280,128], index: 5, kind: output, shape index: {}]
  %s6 = sld [smem:[#allocation0]]
  $region53: #{_lambda_.19} parent=0
    _
  %s8 = ssub.s32 1, %s6
  %s9 = scalar_select 0, %s8, %s6
  loop: start=0, step=1, limit=7
  $region2: #{_lambda_.19} parent=0 // loop_pre_header
    _
  $region3: #{_lambda_.19} parent=0 // loop_header
    %s11 = sphi 0, %s15
    %p12 = scmp.ge.s32.totalorder %s11, 7
    %s21 = sphi 0, %s23
    %s24 = sphi 0, %s21
    %s25 = sphi 0, %s24
    %s41 = sphi 0, %s25
    %s45 = sphi 0, %s45
    %s47 = sphi 0, %s45
    %s48 = sphi 0, %s47
    %s62 = sphi 0, %s48
    %s66 = sphi 0, %s66
    %s68 = sphi 0, %s66
    %s69 = sphi 0, %s68
    %s83 = sphi 0, %s69
    %s87 = sphi 0, %s87
    %s89 = sphi 0, %s87
    %s90 = sphi 0, %s89
    %s104 = sphi 0, %s90
    %s108 = sphi 0, %s108
    %s110 = sphi 0, %s108
    %s111 = sphi 0, %s110
    %s125 = sphi 0, %s111
    %s131 = sphi 0, %s133
    %s134 = sphi 0, %s131
    %s135 = sphi 0, %s134
    %s151 = sphi 0, %s135
  $region4: #{_lambda_.19} parent=0 // loop_header_branch
    %14 = sbr.rel (%p12) target = $region8
  $region5: #{_lambda_.19} parent=0 // loop_body
    %s16 = ssub.s32 %s11, 1
    %s17 = ssub.s32 %s11, 2
    %s18 = sadd.s32 %s11, 1
    %s19 = ssub.s32 %s11, %s18
    %p20 = scmp.eq.s32.totalorder %s19, 0
    %s22 = sadd.s32 %s21, 1
    %s23 = scalar_select %p20, %s21, %s22
    %p26 = pneg %p20
    %p27 = scmp.eq.s32.totalorder %s11, 4
    %p28 = por %p26, %p27
    %p29 = scmp.ne.s32.totalorder %s21, %s24
    %p30 = scmp.eq.s32.totalorder %s11, 0
    %p31 = por %p29, %p30
    %p32 = scmp.ne.s32.totalorder %s21, %s24
    %p33 = scmp.eq.s32.totalorder %s16, 4
    %p34 = por %p32, %p33
    %p35 = scmp.ne.s32.totalorder %s24, %s25
    %p36 = scmp.eq.s32.totalorder %s16, 0
    %p37 = por %p35, %p36
    %p38 = scmp.ne.s32.totalorder %s24, %s25
    %p39 = scmp.eq.s32.totalorder %s17, 4
    %p40 = por %p38, %p39
    %p42 = scmp.ne.s32.totalorder %s25, %s41
    %p43 = scmp.eq.s32.totalorder %s17, 0
    %p44 = por %p42, %p43
    %s46 = sadd.s32 %s45, 1
    %p49 = scmp.eq.s32.totalorder %s11, 4
    %p50 = scmp.ne.s32.totalorder %s45, %s47
    %p51 = scmp.eq.s32.totalorder %s11, 0
    %p52 = por %p50, %p51
    %p53 = scmp.ne.s32.totalorder %s45, %s47
    %p54 = scmp.eq.s32.totalorder %s16, 4
    %p55 = por %p53, %p54
    %p56 = scmp.ne.s32.totalorder %s47, %s48
    %p57 = scmp.eq.s32.totalorder %s16, 0
    %p58 = por %p56, %p57
    %p59 = scmp.ne.s32.totalorder %s47, %s48
    %p60 = scmp.eq.s32.totalorder %s17, 4
    %p61 = por %p59, %p60
    %p63 = scmp.ne.s32.totalorder %s48, %s62
    %p64 = scmp.eq.s32.totalorder %s17, 0
    %p65 = por %p63, %p64
    %s67 = sadd.s32 %s66, 1
    %p70 = scmp.eq.s32.totalorder %s11, 4
    %p71 = scmp.ne.s32.totalorder %s66, %s68
    %p72 = scmp.eq.s32.totalorder %s11, 0
    %p73 = por %p71, %p72
    %p74 = scmp.ne.s32.totalorder %s66, %s68
    %p75 = scmp.eq.s32.totalorder %s16, 4
    %p76 = por %p74, %p75
    %p77 = scmp.ne.s32.totalorder %s68, %s69
    %p78 = scmp.eq.s32.totalorder %s16, 0
    %p79 = por %p77, %p78
    %p80 = scmp.ne.s32.totalorder %s68, %s69
    %p81 = scmp.eq.s32.totalorder %s17, 4
    %p82 = por %p80, %p81
    %p84 = scmp.ne.s32.totalorder %s69, %s83
    %p85 = scmp.eq.s32.totalorder %s17, 0
    %p86 = por %p84, %p85
    %s88 = sadd.s32 %s87, 1
    %p91 = scmp.eq.s32.totalorder %s11, 4
    %p92 = scmp.ne.s32.totalorder %s87, %s89
    %p93 = scmp.eq.s32.totalorder %s11, 0
    %p94 = por %p92, %p93
    %p95 = scmp.ne.s32.totalorder %s87, %s89
    %p96 = scmp.eq.s32.totalorder %s16, 4
    %p97 = por %p95, %p96
    %p98 = scmp.ne.s32.totalorder %s89, %s90
    %p99 = scmp.eq.s32.totalorder %s16, 0
    %p100 = por %p98, %p99
    %p101 = scmp.ne.s32.totalorder %s89, %s90
    %p102 = scmp.eq.s32.totalorder %s17, 4
    %p103 = por %p101, %p102
    %p105 = scmp.ne.s32.totalorder %s90, %s104
    %p106 = scmp.eq.s32.totalorder %s17, 0
    %p107 = por %p105, %p106
    %s109 = sadd.s32 %s108, 1
    %p112 = scmp.eq.s32.totalorder %s11, 4
    %p113 = scmp.ne.s32.totalorder %s108, %s110
    %p114 = scmp.eq.s32.totalorder %s11, 0
    %p115 = por %p113, %p114
    %p116 = scmp.ne.s32.totalorder %s108, %s110
    %p117 = scmp.eq.s32.totalorder %s16, 4
    %p118 = por %p116, %p117
    %p119 = scmp.ne.s32.totalorder %s110, %s111
    %p120 = scmp.eq.s32.totalorder %s16, 0
    %p121 = por %p119, %p120
    %p122 = scmp.ne.s32.totalorder %s110, %s111
    %p123 = scmp.eq.s32.totalorder %s17, 4
    %p124 = por %p122, %p123
    %p126 = scmp.ne.s32.totalorder %s111, %s125
    %p127 = scmp.eq.s32.totalorder %s17, 0
    %p128 = por %p126, %p127
    %s129 = ssub.s32 %s11, %s18
    %p130 = scmp.eq.s32.totalorder %s129, 0
    %s132 = sadd.s32 %s131, 1
    %s133 = scalar_select %p130, %s131, %s132
    %p136 = pneg %p130
    %p137 = scmp.eq.s32.totalorder %s11, 4
    %p138 = por %p136, %p137
    %p139 = scmp.ne.s32.totalorder %s131, %s134
    %p140 = scmp.eq.s32.totalorder %s11, 0
    %p141 = por %p139, %p140
    %p142 = scmp.ne.s32.totalorder %s131, %s134
    %p143 = scmp.eq.s32.totalorder %s16, 4
    %p144 = por %p142, %p143
    %p145 = scmp.ne.s32.totalorder %s134, %s135
    %p146 = scmp.eq.s32.totalorder %s16, 0
    %p147 = por %p145, %p146
    %p148 = scmp.ne.s32.totalorder %s134, %s135
    %p149 = scmp.eq.s32.totalorder %s17, 4
    %p150 = por %p148, %p149
    %p152 = scmp.ne.s32.totalorder %s135, %s151
    %p153 = scmp.eq.s32.totalorder %s17, 0
    %p154 = por %p152, %p153
    %p155 = scmp.le.s32.totalorder 1, %s11
    %p156 = scmp.lt.s32.totalorder %s11, 6
    %p157 = pnand %p155, %p156
    %p158 = pneg %p157
    // Predicated region
    $region9: #{_lambda_.19} parent=5 // pred_check
      _
    $region10: #{_lambda_.19} parent=5 // pred_check_branch
      %160 = sbr.rel (%p157) target = $region12
    $region11: #{_lambda_.19} parent=5 // pred_region
      %s161 = ssub.s32 %s11, 1
      // Predicated region
      $region13: #{_lambda_.19} parent=11 // pred_check
        %p162 = pneg %p58
      $region14: #{_lambda_.19} parent=11 // pred_check_branch
        %164 = sbr.rel (%p162) target = $region16
      $region15: #{_lambda_.19} parent=11 // pred_region
        _
      $region16: #{_lambda_.19} parent=11 // pred_fallthru
        _
      // Predicated region
      $region17: #{_lambda_.19} parent=11 // pred_check
        %p165 = pneg %p79
      $region18: #{_lambda_.19} parent=11 // pred_check_branch
        %167 = sbr.rel (%p165) target = $region20
      $region19: #{_lambda_.19} parent=11 // pred_region
        _
      $region20: #{_lambda_.19} parent=11 // pred_fallthru
        _
      // Predicated region
      $region21: #{_lambda_.19} parent=11 // pred_check
        %p168 = pneg %p100
      $region22: #{_lambda_.19} parent=11 // pred_check_branch
        %170 = sbr.rel (%p168) target = $region24
      $region23: #{_lambda_.19} parent=11 // pred_region
        _
      $region24: #{_lambda_.19} parent=11 // pred_fallthru
        _
      // Predicated region
      $region25: #{_lambda_.19} parent=11 // pred_check
        %p171 = pneg %p121
      $region26: #{_lambda_.19} parent=11 // pred_check_branch
        %173 = sbr.rel (%p171) target = $region28
      $region27: #{_lambda_.19} parent=11 // pred_region
        _
      $region28: #{_lambda_.19} parent=11 // pred_fallthru
        _
    $region12: #{_lambda_.19} parent=5 // pred_fallthru
      _
    %p174 = scmp.lt.s32.totalorder %s11, 5
    // Predicated region
    $region29: #{_lambda_.19} parent=5 // pred_check
      %p175 = pneg %p174
    $region30: #{_lambda_.19} parent=5 // pred_check_branch
      %177 = sbr.rel (%p175) target = $region32
    $region31: #{_lambda_.19} parent=5 // pred_region
      // Predicated region
      $region33: #{_lambda_.19} parent=31 // pred_check
        %p178 = pneg %p31
      $region34: #{_lambda_.19} parent=31 // pred_check_branch
        %180 = sbr.rel (%p178) target = $region36
      $region35: #{_lambda_.19} parent=31 // pred_region
        %s181 = smul.u32 32, %s11
        %p182 = scmp.lt.s32.totalorder %s181, 159
        %s183 = scalar_select %p182, %s181, 159
        %s184 = smul.addr %s183, 2
        %s185 = smul.addr %s184, 4
        %s186 = scalar_lea.vmem %s0, %s185
        %s187 = smul.u32 32, %s11
      $region36: #{_lambda_.19} parent=31 // pred_fallthru
        _
    $region32: #{_lambda_.19} parent=5 // pred_fallthru
      _
    %p188 = scmp.le.s32.totalorder 1, %s11
    %p189 = scmp.lt.s32.totalorder %s11, 6
    %p190 = pnand %p188, %p189
    %p191 = pneg %p190
    // Predicated region
    $region37: #{_lambda_.19} parent=5 // pred_check
      _
    $region38: #{_lambda_.19} parent=5 // pred_check_branch
      %193 = sbr.rel (%p190) target = $region40
    $region39: #{_lambda_.19} parent=5 // pred_region
      %s194 = ssub.s32 %s11, 1
      %s195 = smul.u32 32, %s16
      %p196 = scmp.lt.s32.totalorder %s195, 159
      %s197 = scalar_select %p196, %s195, 159
      %s198 = smul.addr %s197, 2
      %s199 = smul.addr %s198, 4
      %s200 = scalar_lea.vmem %s0, %s199
      %p201 = pneg %p37
      %p202 = pneg %p34
      %p203 = pneg %p58
      %p204 = pneg %p55
      %p205 = pneg %p79
      %p206 = pneg %p76
      %p207 = pneg %p100
      %p208 = pneg %p97
      %p209 = pneg %p121
      %p210 = pneg %p118
      %p211 = pneg %p147
      %p212 = pneg %p144
      %s213 = smul.u32 32, %s16
      %p214 = scmp.lt.s32.totalorder %s213, 159
      %s215 = scalar_select %p214, %s213, 159
      %s216 = smul.addr %s215, 8
      %s217 = scalar_lea.vmem %s5, %s216
      %s218 = smul.u32 32, %s16
      %p219 = scmp.lt.s32.totalorder %s218, 159
      %s220 = scalar_select %p219, %s218, 159
      %s221 = smul.addr %s220, 2
      %s222 = smul.addr %s221, 4
      %s223 = scalar_lea.vmem %s0, %s222
      %s224 = smul.u32 32, %s16
      %s225 = smul.u32 32, %s16
      %p226 = scmp.lt.s32.totalorder %s225, 159
      %s227 = scalar_select %p226, %s225, 159
      %s228 = smul.addr %s227, 8
      %s229 = scalar_lea.vmem %s5, %s228
      %s230 = smul.u32 32, %s16
      %v231 = vld [vmem:[%s223] sm:$0xff]
      %v232 = vld [vmem:[%s223 + $0x8] sm:$0xff]
      %v233 = vld [vmem:[%s223 + $0x10] sm:$0xff]
      %v234 = vld [vmem:[%s223 + $0x18] sm:$0xff]
      %v235 = vld [vmem:[%s223 + $0x20] sm:$0xff]
      %v236 = vld [vmem:[%s223 + $0x28] sm:$0xff]
      %v237 = vld [vmem:[%s223 + $0x30] sm:$0xff]
      %v238 = vld [vmem:[%s223 + $0x38] sm:$0xff]
      %v239 = vld [vmem:[%s223 + $0x40] sm:$0xff]
      %v240 = vld [vmem:[%s223 + $0x48] sm:$0xff]
      %v241 = vld [vmem:[%s223 + $0x50] sm:$0xff]
      %v242 = vld [vmem:[%s223 + $0x58] sm:$0xff]
      %v243 = vld [vmem:[%s223 + $0x60] sm:$0xff]
      %v244 = vld [vmem:[%s223 + $0x68] sm:$0xff]
      %v245 = vld [vmem:[%s223 + $0x70] sm:$0xff]
      %v246 = vld [vmem:[%s223 + $0x78] sm:$0xff]
      %v247 = vld [vmem:[%s223 + $0x80] sm:$0xff]
      %v248 = vld [vmem:[%s223 + $0x88] sm:$0xff]
      %v249 = vld [vmem:[%s223 + $0x90] sm:$0xff]
      %v250 = vld [vmem:[%s223 + $0x98] sm:$0xff]
      %v251 = vld [vmem:[%s223 + $0xa0] sm:$0xff]
      %v252 = vld [vmem:[%s223 + $0xa8] sm:$0xff]
      %v253 = vld [vmem:[%s223 + $0xb0] sm:$0xff]
      %v254 = vld [vmem:[%s223 + $0xb8] sm:$0xff]
      %v255 = vld [vmem:[%s223 + $0xc0] sm:$0xff]
      %v256 = vld [vmem:[%s223 + $0xc8] sm:$0xff]
      %v257 = vld [vmem:[%s223 + $0xd0] sm:$0xff]
      %v258 = vld [vmem:[%s223 + $0xd8] sm:$0xff]
      %v259 = vld [vmem:[%s223 + $0xe0] sm:$0xff]
      %v260 = vld [vmem:[%s223 + $0xe8] sm:$0xff]
      %v261 = vld [vmem:[%s223 + $0xf0] sm:$0xff]
      %v262 = vld [vmem:[%s223 + $0xf8] sm:$0xff]
      %v263 = vld [vmem:[%s1] sm:$0xff]
      %v264 = vld [vmem:[%s1 + $0x8] sm:$0xff]
      %v265 = vld [vmem:[%s1 + $0x10] sm:$0xff]
      %v266 = vld [vmem:[%s1 + $0x18] sm:$0xff]
      %v267 = vld [vmem:[%s1 + $0x20] sm:$0xff]
      %v268 = vld [vmem:[%s1 + $0x28] sm:$0xff]
      %v269 = vld [vmem:[%s1 + $0x30] sm:$0xff]
      %v270 = vld [vmem:[%s1 + $0x38] sm:$0xff]
      %v271 = vld [vmem:[%s1 + $0x40] sm:$0xff]
      %v272 = vld [vmem:[%s1 + $0x48] sm:$0xff]
      %v273 = vld [vmem:[%s1 + $0x50] sm:$0xff]
      %v274 = vld [vmem:[%s1 + $0x58] sm:$0xff]
      %v275 = vld [vmem:[%s1 + $0x60] sm:$0xff]
      %v276 = vld [vmem:[%s1 + $0x68] sm:$0xff]
      %v277 = vld [vmem:[%s1 + $0x70] sm:$0xff]
      %v278 = vld [vmem:[%s1 + $0x78] sm:$0xff]
      %v279 = vld [vmem:[%s1 + $0x80] sm:$0xff]
      %v280 = vld [vmem:[%s1 + $0x88] sm:$0xff]
      %v281 = vld [vmem:[%s1 + $0x90] sm:$0xff]
      %v282 = vld [vmem:[%s1 + $0x98] sm:$0xff]
      %v283 = vld [vmem:[%s1 + $0xa0] sm:$0xff]
      %v284 = vld [vmem:[%s1 + $0xa8] sm:$0xff]
      %v285 = vld [vmem:[%s1 + $0xb0] sm:$0xff]
      %v286 = vld [vmem:[%s1 + $0xb8] sm:$0xff]
      %v287 = vld [vmem:[%s1 + $0xc0] sm:$0xff]
      %v288 = vld [vmem:[%s1 + $0xc8] sm:$0xff]
      %v289 = vld [vmem:[%s1 + $0xd0] sm:$0xff]
      %v290 = vld [vmem:[%s1 + $0xd8] sm:$0xff]
      %v291 = vld [vmem:[%s1 + $0xe0] sm:$0xff]
      %v292 = vld [vmem:[%s1 + $0xe8] sm:$0xff]
      %v293 = vld [vmem:[%s1 + $0xf0] sm:$0xff]
      %v294 = vld [vmem:[%s1 + $0xf8] sm:$0xff]
      %v295 = vld [vmem:[%s1 + $0x100] sm:$0xff]
      %v296 = vld [vmem:[%s1 + $0x108] sm:$0xff]
      %v297 = vld [vmem:[%s1 + $0x110] sm:$0xff]
      %v298 = vld [vmem:[%s1 + $0x118] sm:$0xff]
      %v299 = vld [vmem:[%s1 + $0x120] sm:$0xff]
      %v300 = vld [vmem:[%s1 + $0x128] sm:$0xff]
      %v301 = vld [vmem:[%s1 + $0x130] sm:$0xff]
      %v302 = vld [vmem:[%s1 + $0x138] sm:$0xff]
      %v303 = vld [vmem:[%s1 + $0x140] sm:$0xff]
      %v304 = vld [vmem:[%s1 + $0x148] sm:$0xff]
      %v305 = vld [vmem:[%s1 + $0x150] sm:$0xff]
      %v306 = vld [vmem:[%s1 + $0x158] sm:$0xff]
      %v307 = vld [vmem:[%s1 + $0x160] sm:$0xff]
      %v308 = vld [vmem:[%s1 + $0x168] sm:$0xff]
      %v309 = vld [vmem:[%s1 + $0x170] sm:$0xff]
      %v310 = vld [vmem:[%s1 + $0x178] sm:$0xff]
      %v311 = vld [vmem:[%s1 + $0x180] sm:$0xff]
      %v312 = vld [vmem:[%s1 + $0x188] sm:$0xff]
      %v313 = vld [vmem:[%s1 + $0x190] sm:$0xff]
      %v314 = vld [vmem:[%s1 + $0x198] sm:$0xff]
      %v315 = vld [vmem:[%s1 + $0x1a0] sm:$0xff]
      %v316 = vld [vmem:[%s1 + $0x1a8] sm:$0xff]
      %v317 = vld [vmem:[%s1 + $0x1b0] sm:$0xff]
      %v318 = vld [vmem:[%s1 + $0x1b8] sm:$0xff]
      %v319 = vld [vmem:[%s1 + $0x1c0] sm:$0xff]
      %v320 = vld [vmem:[%s1 + $0x1c8] sm:$0xff]
      %v321 = vld [vmem:[%s1 + $0x1d0] sm:$0xff]
      %v322 = vld [vmem:[%s1 + $0x1d8] sm:$0xff]
      %v323 = vld [vmem:[%s1 + $0x1e0] sm:$0xff]
      %v324 = vld [vmem:[%s1 + $0x1e8] sm:$0xff]
      %v325 = vld [vmem:[%s1 + $0x1f0] sm:$0xff]
      %v326 = vld [vmem:[%s1 + $0x1f8] sm:$0xff]
      %v327 = vld [vmem:[%s2] sm:$0xf]
      %v329 = vperm.slane %v327, 0
      %v330 = vperm.slane %v327, 1
      %v331 = vperm.slane %v327, 2
      %v332 = vperm.slane %v327, 3
      %v369 = vunpack.c.l.b16 %v231
      %v370 = vunpack.c.h.b16 %v231
      %v371 = vunpack.c.l.b16 %v232
      %v372 = vunpack.c.h.b16 %v232
      %v373 = vunpack.c.l.b16 %v233
      %v374 = vunpack.c.h.b16 %v233
      %v375 = vunpack.c.l.b16 %v234
      %v376 = vunpack.c.h.b16 %v234
      %v377 = vunpack.c.l.b16 %v235
      %v378 = vunpack.c.h.b16 %v235
      %v379 = vunpack.c.l.b16 %v236
      %v380 = vunpack.c.h.b16 %v236
      %v381 = vunpack.c.l.b16 %v237
      %v382 = vunpack.c.h.b16 %v237
      %v383 = vunpack.c.l.b16 %v238
      %v384 = vunpack.c.h.b16 %v238
      %v385 = vunpack.c.l.b16 %v239
      %v386 = vunpack.c.h.b16 %v239
      %v387 = vunpack.c.l.b16 %v240
      %v388 = vunpack.c.h.b16 %v240
      %v389 = vunpack.c.l.b16 %v241
      %v390 = vunpack.c.h.b16 %v241
      %v391 = vunpack.c.l.b16 %v242
      %v392 = vunpack.c.h.b16 %v242
      %v393 = vunpack.c.l.b16 %v243
      %v394 = vunpack.c.h.b16 %v243
      %v395 = vunpack.c.l.b16 %v244
      %v396 = vunpack.c.h.b16 %v244
      %v397 = vunpack.c.l.b16 %v245
      %v398 = vunpack.c.h.b16 %v245
      %v399 = vunpack.c.l.b16 %v246
      %v400 = vunpack.c.h.b16 %v246
      %v401 = vunpack.c.l.b16 %v247
      %v402 = vunpack.c.h.b16 %v247
      %v403 = vunpack.c.l.b16 %v248
      %v404 = vunpack.c.h.b16 %v248
      %v405 = vunpack.c.l.b16 %v249
      %v406 = vunpack.c.h.b16 %v249
      %v407 = vunpack.c.l.b16 %v250
      %v408 = vunpack.c.h.b16 %v250
      %v409 = vunpack.c.l.b16 %v251
      %v410 = vunpack.c.h.b16 %v251
      %v411 = vunpack.c.l.b16 %v252
      %v412 = vunpack.c.h.b16 %v252
      %v413 = vunpack.c.l.b16 %v253
      %v414 = vunpack.c.h.b16 %v253
      %v415 = vunpack.c.l.b16 %v254
      %v416 = vunpack.c.h.b16 %v254
      %v417 = vunpack.c.l.b16 %v255
      %v418 = vunpack.c.h.b16 %v255
      %v419 = vunpack.c.l.b16 %v256
      %v420 = vunpack.c.h.b16 %v256
      %v421 = vunpack.c.l.b16 %v257
      %v422 = vunpack.c.h.b16 %v257
      %v423 = vunpack.c.l.b16 %v258
      %v424 = vunpack.c.h.b16 %v258
      %v425 = vunpack.c.l.b16 %v259
      %v426 = vunpack.c.h.b16 %v259
      %v427 = vunpack.c.l.b16 %v260
      %v428 = vunpack.c.h.b16 %v260
      %v429 = vunpack.c.l.b16 %v261
      %v430 = vunpack.c.h.b16 %v261
      %v431 = vunpack.c.l.b16 %v262
      %v432 = vunpack.c.h.b16 %v262
      %v433 = vpack.c.b16 %v371, %v369
      %v434 = vpack.c.b16 %v372, %v370
      %v435 = vpack.c.b16 %v375, %v373
      %v436 = vpack.c.b16 %v376, %v374
      %v437 = vpack.c.b16 %v379, %v377
      %v438 = vpack.c.b16 %v380, %v378
      %v439 = vpack.c.b16 %v383, %v381
      %v440 = vpack.c.b16 %v384, %v382
      %v441 = vpack.c.b16 %v387, %v385
      %v442 = vpack.c.b16 %v388, %v386
      %v443 = vpack.c.b16 %v391, %v389
      %v444 = vpack.c.b16 %v392, %v390
      %v445 = vpack.c.b16 %v395, %v393
      %v446 = vpack.c.b16 %v396, %v394
      %v447 = vpack.c.b16 %v399, %v397
      %v448 = vpack.c.b16 %v400, %v398
      %v449 = vpack.c.b16 %v403, %v401
      %v450 = vpack.c.b16 %v404, %v402
      %v451 = vpack.c.b16 %v407, %v405
      %v452 = vpack.c.b16 %v408, %v406
      %v453 = vpack.c.b16 %v411, %v409
      %v454 = vpack.c.b16 %v412, %v410
      %v455 = vpack.c.b16 %v415, %v413
      %v456 = vpack.c.b16 %v416, %v414
      %v457 = vpack.c.b16 %v419, %v417
      %v458 = vpack.c.b16 %v420, %v418
      %v459 = vpack.c.b16 %v423, %v421
      %v460 = vpack.c.b16 %v424, %v422
      %v461 = vpack.c.b16 %v427, %v425
      %v462 = vpack.c.b16 %v428, %v426
      %v463 = vpack.c.b16 %v431, %v429
      %v464 = vpack.c.b16 %v432, %v430
      %v561 = vunpack.c.l.b16 %v263
      %v562 = vunpack.c.h.b16 %v263
      %v563 = vunpack.c.l.b16 %v264
      %v564 = vunpack.c.h.b16 %v264
      %v565 = vunpack.c.l.b16 %v265
      %v566 = vunpack.c.h.b16 %v265
      %v567 = vunpack.c.l.b16 %v266
      %v568 = vunpack.c.h.b16 %v266
      %v569 = vunpack.c.l.b16 %v267
      %v570 = vunpack.c.h.b16 %v267
      %v571 = vunpack.c.l.b16 %v268
      %v572 = vunpack.c.h.b16 %v268
      %v573 = vunpack.c.l.b16 %v269
      %v574 = vunpack.c.h.b16 %v269
      %v575 = vunpack.c.l.b16 %v270
      %v576 = vunpack.c.h.b16 %v270
      %v577 = vunpack.c.l.b16 %v271
      %v578 = vunpack.c.h.b16 %v271
      %v579 = vunpack.c.l.b16 %v272
      %v580 = vunpack.c.h.b16 %v272
      %v581 = vunpack.c.l.b16 %v273
      %v582 = vunpack.c.h.b16 %v273
      %v583 = vunpack.c.l.b16 %v274
      %v584 = vunpack.c.h.b16 %v274
      %v585 = vunpack.c.l.b16 %v275
      %v586 = vunpack.c.h.b16 %v275
      %v587 = vunpack.c.l.b16 %v276
      %v588 = vunpack.c.h.b16 %v276
      %v589 = vunpack.c.l.b16 %v277
      %v590 = vunpack.c.h.b16 %v277
      %v591 = vunpack.c.l.b16 %v278
      %v592 = vunpack.c.h.b16 %v278
      %v593 = vunpack.c.l.b16 %v279
      %v594 = vunpack.c.h.b16 %v279
      %v595 = vunpack.c.l.b16 %v280
      %v596 = vunpack.c.h.b16 %v280
      %v597 = vunpack.c.l.b16 %v281
      %v598 = vunpack.c.h.b16 %v281
      %v599 = vunpack.c.l.b16 %v282
      %v600 = vunpack.c.h.b16 %v282
      %v601 = vunpack.c.l.b16 %v283
      %v602 = vunpack.c.h.b16 %v283
      %v603 = vunpack.c.l.b16 %v284
      %v604 = vunpack.c.h.b16 %v284
      %v605 = vunpack.c.l.b16 %v285
      %v606 = vunpack.c.h.b16 %v285
      %v607 = vunpack.c.l.b16 %v286
      %v608 = vunpack.c.h.b16 %v286
      %v609 = vunpack.c.l.b16 %v287
      %v610 = vunpack.c.h.b16 %v287
      %v611 = vunpack.c.l.b16 %v288
      %v612 = vunpack.c.h.b16 %v288
      %v613 = vunpack.c.l.b16 %v289
      %v614 = vunpack.c.h.b16 %v289
      %v615 = vunpack.c.l.b16 %v290
      %v616 = vunpack.c.h.b16 %v290
      %v617 = vunpack.c.l.b16 %v291
      %v618 = vunpack.c.h.b16 %v291
      %v619 = vunpack.c.l.b16 %v292
      %v620 = vunpack.c.h.b16 %v292
      %v621 = vunpack.c.l.b16 %v293
      %v622 = vunpack.c.h.b16 %v293
      %v623 = vunpack.c.l.b16 %v294
      %v624 = vunpack.c.h.b16 %v294
      %v625 = vunpack.c.l.b16 %v295
      %v626 = vunpack.c.h.b16 %v295
      %v627 = vunpack.c.l.b16 %v296
      %v628 = vunpack.c.h.b16 %v296
      %v629 = vunpack.c.l.b16 %v297
      %v630 = vunpack.c.h.b16 %v297
      %v631 = vunpack.c.l.b16 %v298
      %v632 = vunpack.c.h.b16 %v298
      %v633 = vunpack.c.l.b16 %v299
      %v634 = vunpack.c.h.b16 %v299
      %v635 = vunpack.c.l.b16 %v300
      %v636 = vunpack.c.h.b16 %v300
      %v637 = vunpack.c.l.b16 %v301
      %v638 = vunpack.c.h.b16 %v301
      %v639 = vunpack.c.l.b16 %v302
      %v640 = vunpack.c.h.b16 %v302
      %v641 = vunpack.c.l.b16 %v303
      %v642 = vunpack.c.h.b16 %v303
      %v643 = vunpack.c.l.b16 %v304
      %v644 = vunpack.c.h.b16 %v304
      %v645 = vunpack.c.l.b16 %v305
      %v646 = vunpack.c.h.b16 %v305
      %v647 = vunpack.c.l.b16 %v306
      %v648 = vunpack.c.h.b16 %v306
      %v649 = vunpack.c.l.b16 %v307
      %v650 = vunpack.c.h.b16 %v307
      %v651 = vunpack.c.l.b16 %v308
      %v652 = vunpack.c.h.b16 %v308
      %v653 = vunpack.c.l.b16 %v309
      %v654 = vunpack.c.h.b16 %v309
      %v655 = vunpack.c.l.b16 %v310
      %v656 = vunpack.c.h.b16 %v310
      %v657 = vunpack.c.l.b16 %v311
      %v658 = vunpack.c.h.b16 %v311
      %v659 = vunpack.c.l.b16 %v312
      %v660 = vunpack.c.h.b16 %v312
      %v661 = vunpack.c.l.b16 %v313
      %v662 = vunpack.c.h.b16 %v313
      %v663 = vunpack.c.l.b16 %v314
      %v664 = vunpack.c.h.b16 %v314
      %v665 = vunpack.c.l.b16 %v315
      %v666 = vunpack.c.h.b16 %v315
      %v667 = vunpack.c.l.b16 %v316
      %v668 = vunpack.c.h.b16 %v316
      %v669 = vunpack.c.l.b16 %v317
      %v670 = vunpack.c.h.b16 %v317
      %v671 = vunpack.c.l.b16 %v318
      %v672 = vunpack.c.h.b16 %v318
      %v673 = vunpack.c.l.b16 %v319
      %v674 = vunpack.c.h.b16 %v319
      %v675 = vunpack.c.l.b16 %v320
      %v676 = vunpack.c.h.b16 %v320
      %v677 = vunpack.c.l.b16 %v321
      %v678 = vunpack.c.h.b16 %v321
      %v679 = vunpack.c.l.b16 %v322
      %v680 = vunpack.c.h.b16 %v322
      %v681 = vunpack.c.l.b16 %v323
      %v682 = vunpack.c.h.b16 %v323
      %v683 = vunpack.c.l.b16 %v324
      %v684 = vunpack.c.h.b16 %v324
      %v685 = vunpack.c.l.b16 %v325
      %v686 = vunpack.c.h.b16 %v325
      %v687 = vunpack.c.l.b16 %v326
      %v688 = vunpack.c.h.b16 %v326
      %v689 = vpack.c.b16 %v565, %v561
      %v690 = vpack.c.b16 %v566, %v562
      %v691 = vpack.c.b16 %v567, %v563
      %v692 = vpack.c.b16 %v568, %v564
      %v693 = vpack.c.b16 %v573, %v569
      %v694 = vpack.c.b16 %v574, %v570
      %v695 = vpack.c.b16 %v575, %v571
      %v696 = vpack.c.b16 %v576, %v572
      %v697 = vpack.c.b16 %v581, %v577
      %v698 = vpack.c.b16 %v582, %v578
      %v699 = vpack.c.b16 %v583, %v579
      %v700 = vpack.c.b16 %v584, %v580
      %v701 = vpack.c.b16 %v589, %v585
      %v702 = vpack.c.b16 %v590, %v586
      %v703 = vpack.c.b16 %v591, %v587
      %v704 = vpack.c.b16 %v592, %v588
      %v705 = vpack.c.b16 %v597, %v593
      %v706 = vpack.c.b16 %v598, %v594
      %v707 = vpack.c.b16 %v599, %v595
      %v708 = vpack.c.b16 %v600, %v596
      %v709 = vpack.c.b16 %v605, %v601
      %v710 = vpack.c.b16 %v606, %v602
      %v711 = vpack.c.b16 %v607, %v603
      %v712 = vpack.c.b16 %v608, %v604
      %v713 = vpack.c.b16 %v613, %v609
      %v714 = vpack.c.b16 %v614, %v610
      %v715 = vpack.c.b16 %v615, %v611
      %v716 = vpack.c.b16 %v616, %v612
      %v717 = vpack.c.b16 %v621, %v617
      %v718 = vpack.c.b16 %v622, %v618
      %v719 = vpack.c.b16 %v623, %v619
      %v720 = vpack.c.b16 %v624, %v620
      %v721 = vpack.c.b16 %v629, %v625
      %v722 = vpack.c.b16 %v630, %v626
      %v723 = vpack.c.b16 %v631, %v627
      %v724 = vpack.c.b16 %v632, %v628
      %v725 = vpack.c.b16 %v637, %v633
      %v726 = vpack.c.b16 %v638, %v634
      %v727 = vpack.c.b16 %v639, %v635
      %v728 = vpack.c.b16 %v640, %v636
      %v729 = vpack.c.b16 %v645, %v641
      %v730 = vpack.c.b16 %v646, %v642
      %v731 = vpack.c.b16 %v647, %v643
      %v732 = vpack.c.b16 %v648, %v644
      %v733 = vpack.c.b16 %v653, %v649
      %v734 = vpack.c.b16 %v654, %v650
      %v735 = vpack.c.b16 %v655, %v651
      %v736 = vpack.c.b16 %v656, %v652
      %v737 = vpack.c.b16 %v661, %v657
      %v738 = vpack.c.b16 %v662, %v658
      %v739 = vpack.c.b16 %v663, %v659
      %v740 = vpack.c.b16 %v664, %v660
      %v741 = vpack.c.b16 %v669, %v665
      %v742 = vpack.c.b16 %v670, %v666
      %v743 = vpack.c.b16 %v671, %v667
      %v744 = vpack.c.b16 %v672, %v668
      %v745 = vpack.c.b16 %v677, %v673
      %v746 = vpack.c.b16 %v678, %v674
      %v747 = vpack.c.b16 %v679, %v675
      %v748 = vpack.c.b16 %v680, %v676
      %v749 = vpack.c.b16 %v685, %v681
      %v750 = vpack.c.b16 %v686, %v682
      %v751 = vpack.c.b16 %v687, %v683
      %v752 = vpack.c.b16 %v688, %v684
      %817 = vmatpush.bf16.msra.mxu0 %v717
      %818 = vmatpush.bf16.msra.mxu0 %v713
      %819 = vmatpush.bf16.msra.mxu0 %v709
      %820 = vmatpush.bf16.msra.mxu0 %v705
      %821 = vmatpush.bf16.msra.mxu0 %v701
      %822 = vmatpush.bf16.msra.mxu0 %v697
      %823 = vmatpush.bf16.msra.mxu0 %v693
      %824 = vmatpush.bf16.msra.mxu0 %v689
      %825 = vmatmul.bf16.gmra.mxu0 %v433
      %v826 = vpop.f32.mrf.mxu0
      %v827 = vadd.f32 %v329, %v826
      %v828 = vpop.f32.mrf.mxu0
      %v829 = vadd.f32 %v329, %v828
      %830 = vmatmul.bf16.gmra.mxu0 %v435
      %v831 = vpop.f32.mrf.mxu0
      %v832 = vadd.f32 %v329, %v831
      %v833 = vpop.f32.mrf.mxu0
      %v834 = vadd.f32 %v329, %v833
      %835 = vmatmul.bf16.gmra.mxu0 %v437
      %v836 = vpop.f32.mrf.mxu0
      %v837 = vadd.f32 %v329, %v836
      %v838 = vpop.f32.mrf.mxu0
      %v839 = vadd.f32 %v329, %v838
      %840 = vmatmul.bf16.gmra.mxu0 %v439
      %v841 = vpop.f32.mrf.mxu0
      %v842 = vadd.f32 %v329, %v841
      %v843 = vpop.f32.mrf.mxu0
      %v844 = vadd.f32 %v329, %v843
      %845 = vmatmul.bf16.gmra.mxu0 %v441
      %v846 = vpop.f32.mrf.mxu0
      %v847 = vadd.f32 %v329, %v846
      %v848 = vpop.f32.mrf.mxu0
      %v849 = vadd.f32 %v329, %v848
      %850 = vmatmul.bf16.gmra.mxu0 %v443
      %v851 = vpop.f32.mrf.mxu0
      %v852 = vadd.f32 %v329, %v851
      %v853 = vpop.f32.mrf.mxu0
      %v854 = vadd.f32 %v329, %v853
      %855 = vmatmul.bf16.gmra.mxu0 %v445
      %v856 = vpop.f32.mrf.mxu0
      %v857 = vadd.f32 %v329, %v856
      %v858 = vpop.f32.mrf.mxu0
      %v859 = vadd.f32 %v329, %v858
      %860 = vmatmul.bf16.gmra.mxu0 %v447
      %v861 = vpop.f32.mrf.mxu0
      %v862 = vadd.f32 %v329, %v861
      %v863 = vpop.f32.mrf.mxu0
      %v864 = vadd.f32 %v329, %v863
      %865 = vmatmul.bf16.gmra.mxu0 %v449
      %v866 = vpop.f32.mrf.mxu0
      %v867 = vadd.f32 %v329, %v866
      %v868 = vpop.f32.mrf.mxu0
      %v869 = vadd.f32 %v329, %v868
      %870 = vmatmul.bf16.gmra.mxu0 %v451
      %v871 = vpop.f32.mrf.mxu0
      %v872 = vadd.f32 %v329, %v871
      %v873 = vpop.f32.mrf.mxu0
      %v874 = vadd.f32 %v329, %v873
      %875 = vmatmul.bf16.gmra.mxu0 %v453
      %v876 = vpop.f32.mrf.mxu0
      %v877 = vadd.f32 %v329, %v876
      %v878 = vpop.f32.mrf.mxu0
      %v879 = vadd.f32 %v329, %v878
      %880 = vmatmul.bf16.gmra.mxu0 %v455
      %v881 = vpop.f32.mrf.mxu0
      %v882 = vadd.f32 %v329, %v881
      %v883 = vpop.f32.mrf.mxu0
      %v884 = vadd.f32 %v329, %v883
      %885 = vmatmul.bf16.gmra.mxu0 %v457
      %v886 = vpop.f32.mrf.mxu0
      %v887 = vadd.f32 %v329, %v886
      %v888 = vpop.f32.mrf.mxu0
      %v889 = vadd.f32 %v329, %v888
      %890 = vmatmul.bf16.gmra.mxu0 %v459
      %v891 = vpop.f32.mrf.mxu0
      %v892 = vadd.f32 %v329, %v891
      %v893 = vpop.f32.mrf.mxu0
      %v894 = vadd.f32 %v329, %v893
      %895 = vmatmul.bf16.gmra.mxu0 %v461
      %v896 = vpop.f32.mrf.mxu0
      %v897 = vadd.f32 %v329, %v896
      %v898 = vpop.f32.mrf.mxu0
      %v899 = vadd.f32 %v329, %v898
      %900 = vmatmul.bf16.gmra.mxu0 %v463
      %v901 = vpop.f32.mrf.mxu0
      %v902 = vadd.f32 %v329, %v901
      %v903 = vpop.f32.mrf.mxu0
      %v904 = vadd.f32 %v329, %v903
      %905 = vdwg.mxu0
      %906 = vmatpush.bf16.msra.mxu0 %v749
      %907 = vmatpush.bf16.msra.mxu0 %v745
      %908 = vmatpush.bf16.msra.mxu0 %v741
      %909 = vmatpush.bf16.msra.mxu0 %v737
      %910 = vmatpush.bf16.msra.mxu0 %v733
      %911 = vmatpush.bf16.msra.mxu0 %v729
      %912 = vmatpush.bf16.msra.mxu0 %v725
      %913 = vmatpush.bf16.msra.mxu0 %v721
      %914 = vmatmul.bf16.gmra.mxu0 %v434
      %v915 = vpop.f32.mrf.mxu0
      %v916 = vadd.f32 %v827, %v915
      %v917 = vpop.f32.mrf.mxu0
      %v918 = vadd.f32 %v829, %v917
      %919 = vmatmul.bf16.gmra.mxu0 %v436
      %v920 = vpop.f32.mrf.mxu0
      %v921 = vadd.f32 %v832, %v920
      %v922 = vpop.f32.mrf.mxu0
      %v923 = vadd.f32 %v834, %v922
      %924 = vmatmul.bf16.gmra.mxu0 %v438
      %v925 = vpop.f32.mrf.mxu0
      %v926 = vadd.f32 %v837, %v925
      %v927 = vpop.f32.mrf.mxu0
      %v928 = vadd.f32 %v839, %v927
      %929 = vmatmul.bf16.gmra.mxu0 %v440
      %v930 = vpop.f32.mrf.mxu0
      %v931 = vadd.f32 %v842, %v930
      %v932 = vpop.f32.mrf.mxu0
      %v933 = vadd.f32 %v844, %v932
      %934 = vmatmul.bf16.gmra.mxu0 %v442
      %v935 = vpop.f32.mrf.mxu0
      %v936 = vadd.f32 %v847, %v935
      %v937 = vpop.f32.mrf.mxu0
      %v938 = vadd.f32 %v849, %v937
      %939 = vmatmul.bf16.gmra.mxu0 %v444
      %v940 = vpop.f32.mrf.mxu0
      %v941 = vadd.f32 %v852, %v940
      %v942 = vpop.f32.mrf.mxu0
      %v943 = vadd.f32 %v854, %v942
      %944 = vmatmul.bf16.gmra.mxu0 %v446
      %v945 = vpop.f32.mrf.mxu0
      %v946 = vadd.f32 %v857, %v945
      %v947 = vpop.f32.mrf.mxu0
      %v948 = vadd.f32 %v859, %v947
      %949 = vmatmul.bf16.gmra.mxu0 %v448
      %v950 = vpop.f32.mrf.mxu0
      %v951 = vadd.f32 %v862, %v950
      %v952 = vpop.f32.mrf.mxu0
      %v953 = vadd.f32 %v864, %v952
      %954 = vmatmul.bf16.gmra.mxu0 %v450
      %v955 = vpop.f32.mrf.mxu0
      %v956 = vadd.f32 %v867, %v955
      %v957 = vpop.f32.mrf.mxu0
      %v958 = vadd.f32 %v869, %v957
      %959 = vmatmul.bf16.gmra.mxu0 %v452
      %v960 = vpop.f32.mrf.mxu0
      %v961 = vadd.f32 %v872, %v960
      %v962 = vpop.f32.mrf.mxu0
      %v963 = vadd.f32 %v874, %v962
      %964 = vmatmul.bf16.gmra.mxu0 %v454
      %v965 = vpop.f32.mrf.mxu0
      %v966 = vadd.f32 %v877, %v965
      %v967 = vpop.f32.mrf.mxu0
      %v968 = vadd.f32 %v879, %v967
      %969 = vmatmul.bf16.gmra.mxu0 %v456
      %v970 = vpop.f32.mrf.mxu0
      %v971 = vadd.f32 %v882, %v970
      %v972 = vpop.f32.mrf.mxu0
      %v973 = vadd.f32 %v884, %v972
      %974 = vmatmul.bf16.gmra.mxu0 %v458
      %v975 = vpop.f32.mrf.mxu0
      %v976 = vadd.f32 %v887, %v975
      %v977 = vpop.f32.mrf.mxu0
      %v978 = vadd.f32 %v889, %v977
      %979 = vmatmul.bf16.gmra.mxu0 %v460
      %v980 = vpop.f32.mrf.mxu0
      %v981 = vadd.f32 %v892, %v980
      %v982 = vpop.f32.mrf.mxu0
      %v983 = vadd.f32 %v894, %v982
      %984 = vmatmul.bf16.gmra.mxu0 %v462
      %v985 = vpop.f32.mrf.mxu0
      %v986 = vadd.f32 %v897, %v985
      %v987 = vpop.f32.mrf.mxu0
      %v988 = vadd.f32 %v899, %v987
      %989 = vmatmul.bf16.gmra.mxu0 %v464
      %v990 = vpop.f32.mrf.mxu0
      %v991 = vadd.f32 %v902, %v990
      %v992 = vpop.f32.mrf.mxu0
      %v993 = vadd.f32 %v904, %v992
      %994 = vdwg.mxu0
      %995 = vmatpush.bf16.msra.mxu0 %v718
      %996 = vmatpush.bf16.msra.mxu0 %v714
      %997 = vmatpush.bf16.msra.mxu0 %v710
      %998 = vmatpush.bf16.msra.mxu0 %v706
      %999 = vmatpush.bf16.msra.mxu0 %v702
      %1000 = vmatpush.bf16.msra.mxu0 %v698
      %1001 = vmatpush.bf16.msra.mxu0 %v694
      %1002 = vmatpush.bf16.msra.mxu0 %v690
      %1003 = vmatmul.bf16.gmra.mxu0 %v433
      %v1004 = vpop.f32.mrf.mxu0
      %v1005 = vadd.f32 %v330, %v1004
      %v1006 = vpop.f32.mrf.mxu0
      %v1007 = vadd.f32 %v330, %v1006
      %1008 = vmatmul.bf16.gmra.mxu0 %v435
      %v1009 = vpop.f32.mrf.mxu0
      %v1010 = vadd.f32 %v330, %v1009
      %v1011 = vpop.f32.mrf.mxu0
      %v1012 = vadd.f32 %v330, %v1011
      %1013 = vmatmul.bf16.gmra.mxu0 %v437
      %v1014 = vpop.f32.mrf.mxu0
      %v1015 = vadd.f32 %v330, %v1014
      %v1016 = vpop.f32.mrf.mxu0
      %v1017 = vadd.f32 %v330, %v1016
      %1018 = vmatmul.bf16.gmra.mxu0 %v439
      %v1019 = vpop.f32.mrf.mxu0
      %v1020 = vadd.f32 %v330, %v1019
      %v1021 = vpop.f32.mrf.mxu0
      %v1022 = vadd.f32 %v330, %v1021
      %1023 = vmatmul.bf16.gmra.mxu0 %v441
      %v1024 = vpop.f32.mrf.mxu0
      %v1025 = vadd.f32 %v330, %v1024
      %v1026 = vpop.f32.mrf.mxu0
      %v1027 = vadd.f32 %v330, %v1026
      %1028 = vmatmul.bf16.gmra.mxu0 %v443
      %v1029 = vpop.f32.mrf.mxu0
      %v1030 = vadd.f32 %v330, %v1029
      %v1031 = vpop.f32.mrf.mxu0
      %v1032 = vadd.f32 %v330, %v1031
      %1033 = vmatmul.bf16.gmra.mxu0 %v445
      %v1034 = vpop.f32.mrf.mxu0
      %v1035 = vadd.f32 %v330, %v1034
      %v1036 = vpop.f32.mrf.mxu0
      %v1037 = vadd.f32 %v330, %v1036
      %1038 = vmatmul.bf16.gmra.mxu0 %v447
      %v1039 = vpop.f32.mrf.mxu0
      %v1040 = vadd.f32 %v330, %v1039
      %v1041 = vpop.f32.mrf.mxu0
      %v1042 = vadd.f32 %v330, %v1041
      %1043 = vmatmul.bf16.gmra.mxu0 %v449
      %v1044 = vpop.f32.mrf.mxu0
      %v1045 = vadd.f32 %v330, %v1044
      %v1046 = vpop.f32.mrf.mxu0
      %v1047 = vadd.f32 %v330, %v1046
      %1048 = vmatmul.bf16.gmra.mxu0 %v451
      %v1049 = vpop.f32.mrf.mxu0
      %v1050 = vadd.f32 %v330, %v1049
      %v1051 = vpop.f32.mrf.mxu0
      %v1052 = vadd.f32 %v330, %v1051
      %1053 = vmatmul.bf16.gmra.mxu0 %v453
      %v1054 = vpop.f32.mrf.mxu0
      %v1055 = vadd.f32 %v330, %v1054
      %v1056 = vpop.f32.mrf.mxu0
      %v1057 = vadd.f32 %v330, %v1056
      %1058 = vmatmul.bf16.gmra.mxu0 %v455
      %v1059 = vpop.f32.mrf.mxu0
      %v1060 = vadd.f32 %v330, %v1059
      %v1061 = vpop.f32.mrf.mxu0
      %v1062 = vadd.f32 %v330, %v1061
      %1063 = vmatmul.bf16.gmra.mxu0 %v457
      %v1064 = vpop.f32.mrf.mxu0
      %v1065 = vadd.f32 %v330, %v1064
      %v1066 = vpop.f32.mrf.mxu0
      %v1067 = vadd.f32 %v330, %v1066
      %1068 = vmatmul.bf16.gmra.mxu0 %v459
      %v1069 = vpop.f32.mrf.mxu0
      %v1070 = vadd.f32 %v330, %v1069
      %v1071 = vpop.f32.mrf.mxu0
      %v1072 = vadd.f32 %v330, %v1071
      %1073 = vmatmul.bf16.gmra.mxu0 %v461
      %v1074 = vpop.f32.mrf.mxu0
      %v1075 = vadd.f32 %v330, %v1074
      %v1076 = vpop.f32.mrf.mxu0
      %v1077 = vadd.f32 %v330, %v1076
      %1078 = vmatmul.bf16.gmra.mxu0 %v463
      %v1079 = vpop.f32.mrf.mxu0
      %v1080 = vadd.f32 %v330, %v1079
      %v1081 = vpop.f32.mrf.mxu0
      %v1082 = vadd.f32 %v330, %v1081
      %1083 = vdwg.mxu0
      %1084 = vmatpush.bf16.msra.mxu0 %v750
      %1085 = vmatpush.bf16.msra.mxu0 %v746
      %1086 = vmatpush.bf16.msra.mxu0 %v742
      %1087 = vmatpush.bf16.msra.mxu0 %v738
      %1088 = vmatpush.bf16.msra.mxu0 %v734
      %1089 = vmatpush.bf16.msra.mxu0 %v730
      %1090 = vmatpush.bf16.msra.mxu0 %v726
      %1091 = vmatpush.bf16.msra.mxu0 %v722
      %1092 = vmatmul.bf16.gmra.mxu0 %v434
      %v1093 = vpop.f32.mrf.mxu0
      %v1094 = vadd.f32 %v1005, %v1093
      %v1095 = vpop.f32.mrf.mxu0
      %v1096 = vadd.f32 %v1007, %v1095
      %1097 = vmatmul.bf16.gmra.mxu0 %v436
      %v1098 = vpop.f32.mrf.mxu0
      %v1099 = vadd.f32 %v1010, %v1098
      %v1100 = vpop.f32.mrf.mxu0
      %v1101 = vadd.f32 %v1012, %v1100
      %1102 = vmatmul.bf16.gmra.mxu0 %v438
      %v1103 = vpop.f32.mrf.mxu0
      %v1104 = vadd.f32 %v1015, %v1103
      %v1105 = vpop.f32.mrf.mxu0
      %v1106 = vadd.f32 %v1017, %v1105
      %1107 = vmatmul.bf16.gmra.mxu0 %v440
      %v1108 = vpop.f32.mrf.mxu0
      %v1109 = vadd.f32 %v1020, %v1108
      %v1110 = vpop.f32.mrf.mxu0
      %v1111 = vadd.f32 %v1022, %v1110
      %1112 = vmatmul.bf16.gmra.mxu0 %v442
      %v1113 = vpop.f32.mrf.mxu0
      %v1114 = vadd.f32 %v1025, %v1113
      %v1115 = vpop.f32.mrf.mxu0
      %v1116 = vadd.f32 %v1027, %v1115
      %1117 = vmatmul.bf16.gmra.mxu0 %v444
      %v1118 = vpop.f32.mrf.mxu0
      %v1119 = vadd.f32 %v1030, %v1118
      %v1120 = vpop.f32.mrf.mxu0
      %v1121 = vadd.f32 %v1032, %v1120
      %1122 = vmatmul.bf16.gmra.mxu0 %v446
      %v1123 = vpop.f32.mrf.mxu0
      %v1124 = vadd.f32 %v1035, %v1123
      %v1125 = vpop.f32.mrf.mxu0
      %v1126 = vadd.f32 %v1037, %v1125
      %1127 = vmatmul.bf16.gmra.mxu0 %v448
      %v1128 = vpop.f32.mrf.mxu0
      %v1129 = vadd.f32 %v1040, %v1128
      %v1130 = vpop.f32.mrf.mxu0
      %v1131 = vadd.f32 %v1042, %v1130
      %1132 = vmatmul.bf16.gmra.mxu0 %v450
      %v1133 = vpop.f32.mrf.mxu0
      %v1134 = vadd.f32 %v1045, %v1133
      %v1135 = vpop.f32.mrf.mxu0
      %v1136 = vadd.f32 %v1047, %v1135
      %1137 = vmatmul.bf16.gmra.mxu0 %v452
      %v1138 = vpop.f32.mrf.mxu0
      %v1139 = vadd.f32 %v1050, %v1138
      %v1140 = vpop.f32.mrf.mxu0
      %v1141 = vadd.f32 %v1052, %v1140
      %1142 = vmatmul.bf16.gmra.mxu0 %v454
      %v1143 = vpop.f32.mrf.mxu0
      %v1144 = vadd.f32 %v1055, %v1143
      %v1145 = vpop.f32.mrf.mxu0
      %v1146 = vadd.f32 %v1057, %v1145
      %1147 = vmatmul.bf16.gmra.mxu0 %v456
      %v1148 = vpop.f32.mrf.mxu0
      %v1149 = vadd.f32 %v1060, %v1148
      %v1150 = vpop.f32.mrf.mxu0
      %v1151 = vadd.f32 %v1062, %v1150
      %1152 = vmatmul.bf16.gmra.mxu0 %v458
      %v1153 = vpop.f32.mrf.mxu0
      %v1154 = vadd.f32 %v1065, %v1153
      %v1155 = vpop.f32.mrf.mxu0
      %v1156 = vadd.f32 %v1067, %v1155
      %1157 = vmatmul.bf16.gmra.mxu0 %v460
      %v1158 = vpop.f32.mrf.mxu0
      %v1159 = vadd.f32 %v1070, %v1158
      %v1160 = vpop.f32.mrf.mxu0
      %v1161 = vadd.f32 %v1072, %v1160
      %1162 = vmatmul.bf16.gmra.mxu0 %v462
      %v1163 = vpop.f32.mrf.mxu0
      %v1164 = vadd.f32 %v1075, %v1163
      %v1165 = vpop.f32.mrf.mxu0
      %v1166 = vadd.f32 %v1077, %v1165
      %1167 = vmatmul.bf16.gmra.mxu0 %v464
      %v1168 = vpop.f32.mrf.mxu0
      %v1169 = vadd.f32 %v1080, %v1168
      %v1170 = vpop.f32.mrf.mxu0
      %v1171 = vadd.f32 %v1082, %v1170
      %1172 = vdwg.mxu0
      %1173 = vmatpush.bf16.msra.mxu0 %v719
      %1174 = vmatpush.bf16.msra.mxu0 %v715
      %1175 = vmatpush.bf16.msra.mxu0 %v711
      %1176 = vmatpush.bf16.msra.mxu0 %v707
      %1177 = vmatpush.bf16.msra.mxu0 %v703
      %1178 = vmatpush.bf16.msra.mxu0 %v699
      %1179 = vmatpush.bf16.msra.mxu0 %v695
      %1180 = vmatpush.bf16.msra.mxu0 %v691
      %1181 = vmatmul.bf16.gmra.mxu0 %v433
      %v1182 = vpop.f32.mrf.mxu0
      %v1183 = vadd.f32 %v331, %v1182
      %v1184 = vpop.f32.mrf.mxu0
      %v1185 = vadd.f32 %v331, %v1184
      %1186 = vmatmul.bf16.gmra.mxu0 %v435
      %v1187 = vpop.f32.mrf.mxu0
      %v1188 = vadd.f32 %v331, %v1187
      %v1189 = vpop.f32.mrf.mxu0
      %v1190 = vadd.f32 %v331, %v1189
      %1191 = vmatmul.bf16.gmra.mxu0 %v437
      %v1192 = vpop.f32.mrf.mxu0
      %v1193 = vadd.f32 %v331, %v1192
      %v1194 = vpop.f32.mrf.mxu0
      %v1195 = vadd.f32 %v331, %v1194
      %1196 = vmatmul.bf16.gmra.mxu0 %v439
      %v1197 = vpop.f32.mrf.mxu0
      %v1198 = vadd.f32 %v331, %v1197
      %v1199 = vpop.f32.mrf.mxu0
      %v1200 = vadd.f32 %v331, %v1199
      %1201 = vmatmul.bf16.gmra.mxu0 %v441
      %v1202 = vpop.f32.mrf.mxu0
      %v1203 = vadd.f32 %v331, %v1202
      %v1204 = vpop.f32.mrf.mxu0
      %v1205 = vadd.f32 %v331, %v1204
      %1206 = vmatmul.bf16.gmra.mxu0 %v443
      %v1207 = vpop.f32.mrf.mxu0
      %v1208 = vadd.f32 %v331, %v1207
      %v1209 = vpop.f32.mrf.mxu0
      %v1210 = vadd.f32 %v331, %v1209
      %1211 = vmatmul.bf16.gmra.mxu0 %v445
      %v1212 = vpop.f32.mrf.mxu0
      %v1213 = vadd.f32 %v331, %v1212
      %v1214 = vpop.f32.mrf.mxu0
      %v1215 = vadd.f32 %v331, %v1214
      %1216 = vmatmul.bf16.gmra.mxu0 %v447
      %v1217 = vpop.f32.mrf.mxu0
      %v1218 = vadd.f32 %v331, %v1217
      %v1219 = vpop.f32.mrf.mxu0
      %v1220 = vadd.f32 %v331, %v1219
      %1221 = vmatmul.bf16.gmra.mxu0 %v449
      %v1222 = vpop.f32.mrf.mxu0
      %v1223 = vadd.f32 %v331, %v1222
      %v1224 = vpop.f32.mrf.mxu0
      %v1225 = vadd.f32 %v331, %v1224
      %1226 = vmatmul.bf16.gmra.mxu0 %v451
      %v1227 = vpop.f32.mrf.mxu0
      %v1228 = vadd.f32 %v331, %v1227
      %v1229 = vpop.f32.mrf.mxu0
      %v1230 = vadd.f32 %v331, %v1229
      %1231 = vmatmul.bf16.gmra.mxu0 %v453
      %v1232 = vpop.f32.mrf.mxu0
      %v1233 = vadd.f32 %v331, %v1232
      %v1234 = vpop.f32.mrf.mxu0
      %v1235 = vadd.f32 %v331, %v1234
      %1236 = vmatmul.bf16.gmra.mxu0 %v455
      %v1237 = vpop.f32.mrf.mxu0
      %v1238 = vadd.f32 %v331, %v1237
      %v1239 = vpop.f32.mrf.mxu0
      %v1240 = vadd.f32 %v331, %v1239
      %1241 = vmatmul.bf16.gmra.mxu0 %v457
      %v1242 = vpop.f32.mrf.mxu0
      %v1243 = vadd.f32 %v331, %v1242
      %v1244 = vpop.f32.mrf.mxu0
      %v1245 = vadd.f32 %v331, %v1244
      %1246 = vmatmul.bf16.gmra.mxu0 %v459
      %v1247 = vpop.f32.mrf.mxu0
      %v1248 = vadd.f32 %v331, %v1247
      %v1249 = vpop.f32.mrf.mxu0
      %v1250 = vadd.f32 %v331, %v1249
      %1251 = vmatmul.bf16.gmra.mxu0 %v461
      %v1252 = vpop.f32.mrf.mxu0
      %v1253 = vadd.f32 %v331, %v1252
      %v1254 = vpop.f32.mrf.mxu0
      %v1255 = vadd.f32 %v331, %v1254
      %1256 = vmatmul.bf16.gmra.mxu0 %v463
      %v1257 = vpop.f32.mrf.mxu0
      %v1258 = vadd.f32 %v331, %v1257
      %v1259 = vpop.f32.mrf.mxu0
      %v1260 = vadd.f32 %v331, %v1259
      %1261 = vdwg.mxu0
      %1262 = vmatpush.bf16.msra.mxu0 %v751
      %1263 = vmatpush.bf16.msra.mxu0 %v747
      %1264 = vmatpush.bf16.msra.mxu0 %v743
      %1265 = vmatpush.bf16.msra.mxu0 %v739
      %1266 = vmatpush.bf16.msra.mxu0 %v735
      %1267 = vmatpush.bf16.msra.mxu0 %v731
      %1268 = vmatpush.bf16.msra.mxu0 %v727
      %1269 = vmatpush.bf16.msra.mxu0 %v723
      %1270 = vmatmul.bf16.gmra.mxu0 %v434
      %v1271 = vpop.f32.mrf.mxu0
      %v1272 = vadd.f32 %v1183, %v1271
      %v1273 = vpop.f32.mrf.mxu0
      %v1274 = vadd.f32 %v1185, %v1273
      %1275 = vmatmul.bf16.gmra.mxu0 %v436
      %v1276 = vpop.f32.mrf.mxu0
      %v1277 = vadd.f32 %v1188, %v1276
      %v1278 = vpop.f32.mrf.mxu0
      %v1279 = vadd.f32 %v1190, %v1278
      %1280 = vmatmul.bf16.gmra.mxu0 %v438
      %v1281 = vpop.f32.mrf.mxu0
      %v1282 = vadd.f32 %v1193, %v1281
      %v1283 = vpop.f32.mrf.mxu0
      %v1284 = vadd.f32 %v1195, %v1283
      %1285 = vmatmul.bf16.gmra.mxu0 %v440
      %v1286 = vpop.f32.mrf.mxu0
      %v1287 = vadd.f32 %v1198, %v1286
      %v1288 = vpop.f32.mrf.mxu0
      %v1289 = vadd.f32 %v1200, %v1288
      %1290 = vmatmul.bf16.gmra.mxu0 %v442
      %v1291 = vpop.f32.mrf.mxu0
      %v1292 = vadd.f32 %v1203, %v1291
      %v1293 = vpop.f32.mrf.mxu0
      %v1294 = vadd.f32 %v1205, %v1293
      %1295 = vmatmul.bf16.gmra.mxu0 %v444
      %v1296 = vpop.f32.mrf.mxu0
      %v1297 = vadd.f32 %v1208, %v1296
      %v1298 = vpop.f32.mrf.mxu0
      %v1299 = vadd.f32 %v1210, %v1298
      %1300 = vmatmul.bf16.gmra.mxu0 %v446
      %v1301 = vpop.f32.mrf.mxu0
      %v1302 = vadd.f32 %v1213, %v1301
      %v1303 = vpop.f32.mrf.mxu0
      %v1304 = vadd.f32 %v1215, %v1303
      %1305 = vmatmul.bf16.gmra.mxu0 %v448
      %v1306 = vpop.f32.mrf.mxu0
      %v1307 = vadd.f32 %v1218, %v1306
      %v1308 = vpop.f32.mrf.mxu0
      %v1309 = vadd.f32 %v1220, %v1308
      %1310 = vmatmul.bf16.gmra.mxu0 %v450
      %v1311 = vpop.f32.mrf.mxu0
      %v1312 = vadd.f32 %v1223, %v1311
      %v1313 = vpop.f32.mrf.mxu0
      %v1314 = vadd.f32 %v1225, %v1313
      %1315 = vmatmul.bf16.gmra.mxu0 %v452
      %v1316 = vpop.f32.mrf.mxu0
      %v1317 = vadd.f32 %v1228, %v1316
      %v1318 = vpop.f32.mrf.mxu0
      %v1319 = vadd.f32 %v1230, %v1318
      %1320 = vmatmul.bf16.gmra.mxu0 %v454
      %v1321 = vpop.f32.mrf.mxu0
      %v1322 = vadd.f32 %v1233, %v1321
      %v1323 = vpop.f32.mrf.mxu0
      %v1324 = vadd.f32 %v1235, %v1323
      %1325 = vmatmul.bf16.gmra.mxu0 %v456
      %v1326 = vpop.f32.mrf.mxu0
      %v1327 = vadd.f32 %v1238, %v1326
      %v1328 = vpop.f32.mrf.mxu0
      %v1329 = vadd.f32 %v1240, %v1328
      %1330 = vmatmul.bf16.gmra.mxu0 %v458
      %v1331 = vpop.f32.mrf.mxu0
      %v1332 = vadd.f32 %v1243, %v1331
      %v1333 = vpop.f32.mrf.mxu0
      %v1334 = vadd.f32 %v1245, %v1333
      %1335 = vmatmul.bf16.gmra.mxu0 %v460
      %v1336 = vpop.f32.mrf.mxu0
      %v1337 = vadd.f32 %v1248, %v1336
      %v1338 = vpop.f32.mrf.mxu0
      %v1339 = vadd.f32 %v1250, %v1338
      %1340 = vmatmul.bf16.gmra.mxu0 %v462
      %v1341 = vpop.f32.mrf.mxu0
      %v1342 = vadd.f32 %v1253, %v1341
      %v1343 = vpop.f32.mrf.mxu0
      %v1344 = vadd.f32 %v1255, %v1343
      %1345 = vmatmul.bf16.gmra.mxu0 %v464
      %v1346 = vpop.f32.mrf.mxu0
      %v1347 = vadd.f32 %v1258, %v1346
      %v1348 = vpop.f32.mrf.mxu0
      %v1349 = vadd.f32 %v1260, %v1348
      %1350 = vdwg.mxu0
      %1351 = vmatpush.bf16.msra.mxu0 %v720
      %1352 = vmatpush.bf16.msra.mxu0 %v716
      %1353 = vmatpush.bf16.msra.mxu0 %v712
      %1354 = vmatpush.bf16.msra.mxu0 %v708
      %1355 = vmatpush.bf16.msra.mxu0 %v704
      %1356 = vmatpush.bf16.msra.mxu0 %v700
      %1357 = vmatpush.bf16.msra.mxu0 %v696
      %1358 = vmatpush.bf16.msra.mxu0 %v692
      %1359 = vmatmul.bf16.gmra.mxu0 %v433
      %v1360 = vpop.f32.mrf.mxu0
      %v1361 = vadd.f32 %v332, %v1360
      %v1362 = vpop.f32.mrf.mxu0
      %v1363 = vadd.f32 %v332, %v1362
      %1364 = vmatmul.bf16.gmra.mxu0 %v435
      %v1365 = vpop.f32.mrf.mxu0
      %v1366 = vadd.f32 %v332, %v1365
      %v1367 = vpop.f32.mrf.mxu0
      %v1368 = vadd.f32 %v332, %v1367
      %1369 = vmatmul.bf16.gmra.mxu0 %v437
      %v1370 = vpop.f32.mrf.mxu0
      %v1371 = vadd.f32 %v332, %v1370
      %v1372 = vpop.f32.mrf.mxu0
      %v1373 = vadd.f32 %v332, %v1372
      %1374 = vmatmul.bf16.gmra.mxu0 %v439
      %v1375 = vpop.f32.mrf.mxu0
      %v1376 = vadd.f32 %v332, %v1375
      %v1377 = vpop.f32.mrf.mxu0
      %v1378 = vadd.f32 %v332, %v1377
      %1379 = vmatmul.bf16.gmra.mxu0 %v441
      %v1380 = vpop.f32.mrf.mxu0
      %v1381 = vadd.f32 %v332, %v1380
      %v1382 = vpop.f32.mrf.mxu0
      %v1383 = vadd.f32 %v332, %v1382
      %1384 = vmatmul.bf16.gmra.mxu0 %v443
      %v1385 = vpop.f32.mrf.mxu0
      %v1386 = vadd.f32 %v332, %v1385
      %v1387 = vpop.f32.mrf.mxu0
      %v1388 = vadd.f32 %v332, %v1387
      %1389 = vmatmul.bf16.gmra.mxu0 %v445
      %v1390 = vpop.f32.mrf.mxu0
      %v1391 = vadd.f32 %v332, %v1390
      %v1392 = vpop.f32.mrf.mxu0
      %v1393 = vadd.f32 %v332, %v1392
      %1394 = vmatmul.bf16.gmra.mxu0 %v447
      %v1395 = vpop.f32.mrf.mxu0
      %v1396 = vadd.f32 %v332, %v1395
      %v1397 = vpop.f32.mrf.mxu0
      %v1398 = vadd.f32 %v332, %v1397
      %1399 = vmatmul.bf16.gmra.mxu0 %v449
      %v1400 = vpop.f32.mrf.mxu0
      %v1401 = vadd.f32 %v332, %v1400
      %v1402 = vpop.f32.mrf.mxu0
      %v1403 = vadd.f32 %v332, %v1402
      %1404 = vmatmul.bf16.gmra.mxu0 %v451
      %v1405 = vpop.f32.mrf.mxu0
      %v1406 = vadd.f32 %v332, %v1405
      %v1407 = vpop.f32.mrf.mxu0
      %v1408 = vadd.f32 %v332, %v1407
      %1409 = vmatmul.bf16.gmra.mxu0 %v453
      %v1410 = vpop.f32.mrf.mxu0
      %v1411 = vadd.f32 %v332, %v1410
      %v1412 = vpop.f32.mrf.mxu0
      %v1413 = vadd.f32 %v332, %v1412
      %1414 = vmatmul.bf16.gmra.mxu0 %v455
      %v1415 = vpop.f32.mrf.mxu0
      %v1416 = vadd.f32 %v332, %v1415
      %v1417 = vpop.f32.mrf.mxu0
      %v1418 = vadd.f32 %v332, %v1417
      %1419 = vmatmul.bf16.gmra.mxu0 %v457
      %v1420 = vpop.f32.mrf.mxu0
      %v1421 = vadd.f32 %v332, %v1420
      %v1422 = vpop.f32.mrf.mxu0
      %v1423 = vadd.f32 %v332, %v1422
      %1424 = vmatmul.bf16.gmra.mxu0 %v459
      %v1425 = vpop.f32.mrf.mxu0
      %v1426 = vadd.f32 %v332, %v1425
      %v1427 = vpop.f32.mrf.mxu0
      %v1428 = vadd.f32 %v332, %v1427
      %1429 = vmatmul.bf16.gmra.mxu0 %v461
      %v1430 = vpop.f32.mrf.mxu0
      %v1431 = vadd.f32 %v332, %v1430
      %v1432 = vpop.f32.mrf.mxu0
      %v1433 = vadd.f32 %v332, %v1432
      %1434 = vmatmul.bf16.gmra.mxu0 %v463
      %v1435 = vpop.f32.mrf.mxu0
      %v1436 = vadd.f32 %v332, %v1435
      %v1437 = vpop.f32.mrf.mxu0
      %v1438 = vadd.f32 %v332, %v1437
      %1439 = vdwg.mxu0
      %1440 = vmatpush.bf16.msra.mxu0 %v752
      %1441 = vmatpush.bf16.msra.mxu0 %v748
      %1442 = vmatpush.bf16.msra.mxu0 %v744
      %1443 = vmatpush.bf16.msra.mxu0 %v740
      %1444 = vmatpush.bf16.msra.mxu0 %v736
      %1445 = vmatpush.bf16.msra.mxu0 %v732
      %1446 = vmatpush.bf16.msra.mxu0 %v728
      %1447 = vmatpush.bf16.msra.mxu0 %v724
      %1448 = vmatmul.bf16.gmra.mxu0 %v434
      %v1449 = vpop.f32.mrf.mxu0
      %v1450 = vadd.f32 %v1361, %v1449
      %v1451 = vpop.f32.mrf.mxu0
      %v1452 = vadd.f32 %v1363, %v1451
      %1453 = vmatmul.bf16.gmra.mxu0 %v436
      %v1454 = vpop.f32.mrf.mxu0
      %v1455 = vadd.f32 %v1366, %v1454
      %v1456 = vpop.f32.mrf.mxu0
      %v1457 = vadd.f32 %v1368, %v1456
      %1458 = vmatmul.bf16.gmra.mxu0 %v438
      %v1459 = vpop.f32.mrf.mxu0
      %v1460 = vadd.f32 %v1371, %v1459
      %v1461 = vpop.f32.mrf.mxu0
      %v1462 = vadd.f32 %v1373, %v1461
      %1463 = vmatmul.bf16.gmra.mxu0 %v440
      %v1464 = vpop.f32.mrf.mxu0
      %v1465 = vadd.f32 %v1376, %v1464
      %v1466 = vpop.f32.mrf.mxu0
      %v1467 = vadd.f32 %v1378, %v1466
      %1468 = vmatmul.bf16.gmra.mxu0 %v442
      %v1469 = vpop.f32.mrf.mxu0
      %v1470 = vadd.f32 %v1381, %v1469
      %v1471 = vpop.f32.mrf.mxu0
      %v1472 = vadd.f32 %v1383, %v1471
      %1473 = vmatmul.bf16.gmra.mxu0 %v444
      %v1474 = vpop.f32.mrf.mxu0
      %v1475 = vadd.f32 %v1386, %v1474
      %v1476 = vpop.f32.mrf.mxu0
      %v1477 = vadd.f32 %v1388, %v1476
      %1478 = vmatmul.bf16.gmra.mxu0 %v446
      %v1479 = vpop.f32.mrf.mxu0
      %v1480 = vadd.f32 %v1391, %v1479
      %v1481 = vpop.f32.mrf.mxu0
      %v1482 = vadd.f32 %v1393, %v1481
      %1483 = vmatmul.bf16.gmra.mxu0 %v448
      %v1484 = vpop.f32.mrf.mxu0
      %v1485 = vadd.f32 %v1396, %v1484
      %v1486 = vpop.f32.mrf.mxu0
      %v1487 = vadd.f32 %v1398, %v1486
      %1488 = vmatmul.bf16.gmra.mxu0 %v450
      %v1489 = vpop.f32.mrf.mxu0
      %v1490 = vadd.f32 %v1401, %v1489
      %v1491 = vpop.f32.mrf.mxu0
      %v1492 = vadd.f32 %v1403, %v1491
      %1493 = vmatmul.bf16.gmra.mxu0 %v452
      %v1494 = vpop.f32.mrf.mxu0
      %v1495 = vadd.f32 %v1406, %v1494
      %v1496 = vpop.f32.mrf.mxu0
      %v1497 = vadd.f32 %v1408, %v1496
      %1498 = vmatmul.bf16.gmra.mxu0 %v454
      %v1499 = vpop.f32.mrf.mxu0
      %v1500 = vadd.f32 %v1411, %v1499
      %v1501 = vpop.f32.mrf.mxu0
      %v1502 = vadd.f32 %v1413, %v1501
      %1503 = vmatmul.bf16.gmra.mxu0 %v456
      %v1504 = vpop.f32.mrf.mxu0
      %v1505 = vadd.f32 %v1416, %v1504
      %v1506 = vpop.f32.mrf.mxu0
      %v1507 = vadd.f32 %v1418, %v1506
      %1508 = vmatmul.bf16.gmra.mxu0 %v458
      %v1509 = vpop.f32.mrf.mxu0
      %v1510 = vadd.f32 %v1421, %v1509
      %v1511 = vpop.f32.mrf.mxu0
      %v1512 = vadd.f32 %v1423, %v1511
      %1513 = vmatmul.bf16.gmra.mxu0 %v460
      %v1514 = vpop.f32.mrf.mxu0
      %v1515 = vadd.f32 %v1426, %v1514
      %v1516 = vpop.f32.mrf.mxu0
      %v1517 = vadd.f32 %v1428, %v1516
      %1518 = vmatmul.bf16.gmra.mxu0 %v462
      %v1519 = vpop.f32.mrf.mxu0
      %v1520 = vadd.f32 %v1431, %v1519
      %v1521 = vpop.f32.mrf.mxu0
      %v1522 = vadd.f32 %v1433, %v1521
      %1523 = vmatmul.bf16.gmra.mxu0 %v464
      %v1524 = vpop.f32.mrf.mxu0
      %v1525 = vadd.f32 %v1436, %v1524
      %v1526 = vpop.f32.mrf.mxu0
      %v1527 = vadd.f32 %v1438, %v1526
      %1528 = vdwg.mxu0
      %v1529 = vmax.f32 %v916, 0.0
      %v1530 = vmax.f32 %v1094, 0.0
      %v1531 = vmax.f32 %v1272, 0.0
      %v1532 = vmax.f32 %v1450, 0.0
      %v1533 = vmax.f32 %v918, 0.0
      %v1534 = vmax.f32 %v1096, 0.0
      %v1535 = vmax.f32 %v1274, 0.0
      %v1536 = vmax.f32 %v1452, 0.0
      %v1537 = vmax.f32 %v921, 0.0
      %v1538 = vmax.f32 %v1099, 0.0
      %v1539 = vmax.f32 %v1277, 0.0
      %v1540 = vmax.f32 %v1455, 0.0
      %v1541 = vmax.f32 %v923, 0.0
      %v1542 = vmax.f32 %v1101, 0.0
      %v1543 = vmax.f32 %v1279, 0.0
      %v1544 = vmax.f32 %v1457, 0.0
      %v1545 = vmax.f32 %v926, 0.0
      %v1546 = vmax.f32 %v1104, 0.0
      %v1547 = vmax.f32 %v1282, 0.0
      %v1548 = vmax.f32 %v1460, 0.0
      %v1549 = vmax.f32 %v928, 0.0
      %v1550 = vmax.f32 %v1106, 0.0
      %v1551 = vmax.f32 %v1284, 0.0
      %v1552 = vmax.f32 %v1462, 0.0
      %v1553 = vmax.f32 %v931, 0.0
      %v1554 = vmax.f32 %v1109, 0.0
      %v1555 = vmax.f32 %v1287, 0.0
      %v1556 = vmax.f32 %v1465, 0.0
      %v1557 = vmax.f32 %v933, 0.0
      %v1558 = vmax.f32 %v1111, 0.0
      %v1559 = vmax.f32 %v1289, 0.0
      %v1560 = vmax.f32 %v1467, 0.0
      %v1561 = vmax.f32 %v936, 0.0
      %v1562 = vmax.f32 %v1114, 0.0
      %v1563 = vmax.f32 %v1292, 0.0
      %v1564 = vmax.f32 %v1470, 0.0
      %v1565 = vmax.f32 %v938, 0.0
      %v1566 = vmax.f32 %v1116, 0.0
      %v1567 = vmax.f32 %v1294, 0.0
      %v1568 = vmax.f32 %v1472, 0.0
      %v1569 = vmax.f32 %v941, 0.0
      %v1570 = vmax.f32 %v1119, 0.0
      %v1571 = vmax.f32 %v1297, 0.0
      %v1572 = vmax.f32 %v1475, 0.0
      %v1573 = vmax.f32 %v943, 0.0
      %v1574 = vmax.f32 %v1121, 0.0
      %v1575 = vmax.f32 %v1299, 0.0
      %v1576 = vmax.f32 %v1477, 0.0
      %v1577 = vmax.f32 %v946, 0.0
      %v1578 = vmax.f32 %v1124, 0.0
      %v1579 = vmax.f32 %v1302, 0.0
      %v1580 = vmax.f32 %v1480, 0.0
      %v1581 = vmax.f32 %v948, 0.0
      %v1582 = vmax.f32 %v1126, 0.0
      %v1583 = vmax.f32 %v1304, 0.0
      %v1584 = vmax.f32 %v1482, 0.0
      %v1585 = vmax.f32 %v951, 0.0
      %v1586 = vmax.f32 %v1129, 0.0
      %v1587 = vmax.f32 %v1307, 0.0
      %v1588 = vmax.f32 %v1485, 0.0
      %v1589 = vmax.f32 %v953, 0.0
      %v1590 = vmax.f32 %v1131, 0.0
      %v1591 = vmax.f32 %v1309, 0.0
      %v1592 = vmax.f32 %v1487, 0.0
      %v1593 = vmax.f32 %v956, 0.0
      %v1594 = vmax.f32 %v1134, 0.0
      %v1595 = vmax.f32 %v1312, 0.0
      %v1596 = vmax.f32 %v1490, 0.0
      %v1597 = vmax.f32 %v958, 0.0
      %v1598 = vmax.f32 %v1136, 0.0
      %v1599 = vmax.f32 %v1314, 0.0
      %v1600 = vmax.f32 %v1492, 0.0
      %v1601 = vmax.f32 %v961, 0.0
      %v1602 = vmax.f32 %v1139, 0.0
      %v1603 = vmax.f32 %v1317, 0.0
      %v1604 = vmax.f32 %v1495, 0.0
      %v1605 = vmax.f32 %v963, 0.0
      %v1606 = vmax.f32 %v1141, 0.0
      %v1607 = vmax.f32 %v1319, 0.0
      %v1608 = vmax.f32 %v1497, 0.0
      %v1609 = vmax.f32 %v966, 0.0
      %v1610 = vmax.f32 %v1144, 0.0
      %v1611 = vmax.f32 %v1322, 0.0
      %v1612 = vmax.f32 %v1500, 0.0
      %v1613 = vmax.f32 %v968, 0.0
      %v1614 = vmax.f32 %v1146, 0.0
      %v1615 = vmax.f32 %v1324, 0.0
      %v1616 = vmax.f32 %v1502, 0.0
      %v1617 = vmax.f32 %v971, 0.0
      %v1618 = vmax.f32 %v1149, 0.0
      %v1619 = vmax.f32 %v1327, 0.0
      %v1620 = vmax.f32 %v1505, 0.0
      %v1621 = vmax.f32 %v973, 0.0
      %v1622 = vmax.f32 %v1151, 0.0
      %v1623 = vmax.f32 %v1329, 0.0
      %v1624 = vmax.f32 %v1507, 0.0
      %v1625 = vmax.f32 %v976, 0.0
      %v1626 = vmax.f32 %v1154, 0.0
      %v1627 = vmax.f32 %v1332, 0.0
      %v1628 = vmax.f32 %v1510, 0.0
      %v1629 = vmax.f32 %v978, 0.0
      %v1630 = vmax.f32 %v1156, 0.0
      %v1631 = vmax.f32 %v1334, 0.0
      %v1632 = vmax.f32 %v1512, 0.0
      %v1633 = vmax.f32 %v981, 0.0
      %v1634 = vmax.f32 %v1159, 0.0
      %v1635 = vmax.f32 %v1337, 0.0
      %v1636 = vmax.f32 %v1515, 0.0
      %v1637 = vmax.f32 %v983, 0.0
      %v1638 = vmax.f32 %v1161, 0.0
      %v1639 = vmax.f32 %v1339, 0.0
      %v1640 = vmax.f32 %v1517, 0.0
      %v1641 = vmax.f32 %v986, 0.0
      %v1642 = vmax.f32 %v1164, 0.0
      %v1643 = vmax.f32 %v1342, 0.0
      %v1644 = vmax.f32 %v1520, 0.0
      %v1645 = vmax.f32 %v988, 0.0
      %v1646 = vmax.f32 %v1166, 0.0
      %v1647 = vmax.f32 %v1344, 0.0
      %v1648 = vmax.f32 %v1522, 0.0
      %v1649 = vmax.f32 %v991, 0.0
      %v1650 = vmax.f32 %v1169, 0.0
      %v1651 = vmax.f32 %v1347, 0.0
      %v1652 = vmax.f32 %v1525, 0.0
      %v1653 = vmax.f32 %v993, 0.0
      %v1654 = vmax.f32 %v1171, 0.0
      %v1655 = vmax.f32 %v1349, 0.0
      %v1656 = vmax.f32 %v1527, 0.0
      %v1657 = vpack.c.bf16 %v1533, %v1529
      %v1658 = vpack.c.bf16 %v1534, %v1530
      %v1659 = vpack.c.bf16 %v1535, %v1531
      %v1660 = vpack.c.bf16 %v1536, %v1532
      %v1661 = vpack.c.bf16 %v1541, %v1537
      %v1662 = vpack.c.bf16 %v1542, %v1538
      %v1663 = vpack.c.bf16 %v1543, %v1539
      %v1664 = vpack.c.bf16 %v1544, %v1540
      %v1665 = vpack.c.bf16 %v1549, %v1545
      %v1666 = vpack.c.bf16 %v1550, %v1546
      %v1667 = vpack.c.bf16 %v1551, %v1547
      %v1668 = vpack.c.bf16 %v1552, %v1548
      %v1669 = vpack.c.bf16 %v1557, %v1553
      %v1670 = vpack.c.bf16 %v1558, %v1554
      %v1671 = vpack.c.bf16 %v1559, %v1555
      %v1672 = vpack.c.bf16 %v1560, %v1556
      %v1673 = vpack.c.bf16 %v1565, %v1561
      %v1674 = vpack.c.bf16 %v1566, %v1562
      %v1675 = vpack.c.bf16 %v1567, %v1563
      %v1676 = vpack.c.bf16 %v1568, %v1564
      %v1677 = vpack.c.bf16 %v1573, %v1569
      %v1678 = vpack.c.bf16 %v1574, %v1570
      %v1679 = vpack.c.bf16 %v1575, %v1571
      %v1680 = vpack.c.bf16 %v1576, %v1572
      %v1681 = vpack.c.bf16 %v1581, %v1577
      %v1682 = vpack.c.bf16 %v1582, %v1578
      %v1683 = vpack.c.bf16 %v1583, %v1579
      %v1684 = vpack.c.bf16 %v1584, %v1580
      %v1685 = vpack.c.bf16 %v1589, %v1585
      %v1686 = vpack.c.bf16 %v1590, %v1586
      %v1687 = vpack.c.bf16 %v1591, %v1587
      %v1688 = vpack.c.bf16 %v1592, %v1588
      %v1689 = vpack.c.bf16 %v1597, %v1593
      %v1690 = vpack.c.bf16 %v1598, %v1594
      %v1691 = vpack.c.bf16 %v1599, %v1595
      %v1692 = vpack.c.bf16 %v1600, %v1596
      %v1693 = vpack.c.bf16 %v1605, %v1601
      %v1694 = vpack.c.bf16 %v1606, %v1602
      %v1695 = vpack.c.bf16 %v1607, %v1603
      %v1696 = vpack.c.bf16 %v1608, %v1604
      %v1697 = vpack.c.bf16 %v1613, %v1609
      %v1698 = vpack.c.bf16 %v1614, %v1610
      %v1699 = vpack.c.bf16 %v1615, %v1611
      %v1700 = vpack.c.bf16 %v1616, %v1612
      %v1701 = vpack.c.bf16 %v1621, %v1617
      %v1702 = vpack.c.bf16 %v1622, %v1618
      %v1703 = vpack.c.bf16 %v1623, %v1619
      %v1704 = vpack.c.bf16 %v1624, %v1620
      %v1705 = vpack.c.bf16 %v1629, %v1625
      %v1706 = vpack.c.bf16 %v1630, %v1626
      %v1707 = vpack.c.bf16 %v1631, %v1627
      %v1708 = vpack.c.bf16 %v1632, %v1628
      %v1709 = vpack.c.bf16 %v1637, %v1633
      %v1710 = vpack.c.bf16 %v1638, %v1634
      %v1711 = vpack.c.bf16 %v1639, %v1635
      %v1712 = vpack.c.bf16 %v1640, %v1636
      %v1713 = vpack.c.bf16 %v1645, %v1641
      %v1714 = vpack.c.bf16 %v1646, %v1642
      %v1715 = vpack.c.bf16 %v1647, %v1643
      %v1716 = vpack.c.bf16 %v1648, %v1644
      %v1717 = vpack.c.bf16 %v1653, %v1649
      %v1718 = vpack.c.bf16 %v1654, %v1650
      %v1719 = vpack.c.bf16 %v1655, %v1651
      %v1720 = vpack.c.bf16 %v1656, %v1652
      %v1721 = vld [vmem:[%s3] sm:$0xf]
      %v1722 = vld [vmem:[%s3 + $0x4] sm:$0xf]
      %v1723 = vld [vmem:[%s3 + $0x8] sm:$0xf]
      %v1724 = vld [vmem:[%s3 + $0xc] sm:$0xf]
      %v1725 = vld [vmem:[%s3 + $0x10] sm:$0xf]
      %v1726 = vld [vmem:[%s3 + $0x14] sm:$0xf]
      %v1727 = vld [vmem:[%s3 + $0x18] sm:$0xf]
      %v1728 = vld [vmem:[%s3 + $0x1c] sm:$0xf]
      %v1729 = vld [vmem:[%s3 + $0x20] sm:$0xf]
      %v1730 = vld [vmem:[%s3 + $0x24] sm:$0xf]
      %v1731 = vld [vmem:[%s3 + $0x28] sm:$0xf]
      %v1732 = vld [vmem:[%s3 + $0x2c] sm:$0xf]
      %v1733 = vld [vmem:[%s3 + $0x30] sm:$0xf]
      %v1734 = vld [vmem:[%s3 + $0x34] sm:$0xf]
      %v1735 = vld [vmem:[%s3 + $0x38] sm:$0xf]
      %v1736 = vld [vmem:[%s3 + $0x3c] sm:$0xf]
      %v1737 = vld [vmem:[%s3 + $0x40] sm:$0xf]
      %v1738 = vld [vmem:[%s3 + $0x44] sm:$0xf]
      %v1739 = vld [vmem:[%s3 + $0x48] sm:$0xf]
      %v1740 = vld [vmem:[%s3 + $0x4c] sm:$0xf]
      %v1741 = vld [vmem:[%s3 + $0x50] sm:$0xf]
      %v1742 = vld [vmem:[%s3 + $0x54] sm:$0xf]
      %v1743 = vld [vmem:[%s3 + $0x58] sm:$0xf]
      %v1744 = vld [vmem:[%s3 + $0x5c] sm:$0xf]
      %v1745 = vld [vmem:[%s3 + $0x60] sm:$0xf]
      %v1746 = vld [vmem:[%s3 + $0x64] sm:$0xf]
      %v1747 = vld [vmem:[%s3 + $0x68] sm:$0xf]
      %v1748 = vld [vmem:[%s3 + $0x6c] sm:$0xf]
      %v1749 = vld [vmem:[%s3 + $0x70] sm:$0xf]
      %v1750 = vld [vmem:[%s3 + $0x74] sm:$0xf]
      %v1751 = vld [vmem:[%s3 + $0x78] sm:$0xf]
      %v1752 = vld [vmem:[%s3 + $0x7c] sm:$0xf]
      %v1753 = vld [vmem:[%s3 + $0x80] sm:$0xf]
      %v1754 = vld [vmem:[%s3 + $0x84] sm:$0xf]
      %v1755 = vld [vmem:[%s3 + $0x88] sm:$0xf]
      %v1756 = vld [vmem:[%s3 + $0x8c] sm:$0xf]
      %v1757 = vld [vmem:[%s3 + $0x90] sm:$0xf]
      %v1758 = vld [vmem:[%s3 + $0x94] sm:$0xf]
      %v1759 = vld [vmem:[%s3 + $0x98] sm:$0xf]
      %v1760 = vld [vmem:[%s3 + $0x9c] sm:$0xf]
      %v1761 = vld [vmem:[%s3 + $0xa0] sm:$0xf]
      %v1762 = vld [vmem:[%s3 + $0xa4] sm:$0xf]
      %v1763 = vld [vmem:[%s3 + $0xa8] sm:$0xf]
      %v1764 = vld [vmem:[%s3 + $0xac] sm:$0xf]
      %v1765 = vld [vmem:[%s3 + $0xb0] sm:$0xf]
      %v1766 = vld [vmem:[%s3 + $0xb4] sm:$0xf]
      %v1767 = vld [vmem:[%s3 + $0xb8] sm:$0xf]
      %v1768 = vld [vmem:[%s3 + $0xbc] sm:$0xf]
      %v1769 = vld [vmem:[%s3 + $0xc0] sm:$0xf]
      %v1770 = vld [vmem:[%s3 + $0xc4] sm:$0xf]
      %v1771 = vld [vmem:[%s3 + $0xc8] sm:$0xf]
      %v1772 = vld [vmem:[%s3 + $0xcc] sm:$0xf]
      %v1773 = vld [vmem:[%s3 + $0xd0] sm:$0xf]
      %v1774 = vld [vmem:[%s3 + $0xd4] sm:$0xf]
      %v1775 = vld [vmem:[%s3 + $0xd8] sm:$0xf]
      %v1776 = vld [vmem:[%s3 + $0xdc] sm:$0xf]
      %v1777 = vld [vmem:[%s3 + $0xe0] sm:$0xf]
      %v1778 = vld [vmem:[%s3 + $0xe4] sm:$0xf]
      %v1779 = vld [vmem:[%s3 + $0xe8] sm:$0xf]
      %v1780 = vld [vmem:[%s3 + $0xec] sm:$0xf]
      %v1781 = vld [vmem:[%s3 + $0xf0] sm:$0xf]
      %v1782 = vld [vmem:[%s3 + $0xf4] sm:$0xf]
      %v1783 = vld [vmem:[%s3 + $0xf8] sm:$0xf]
      %v1784 = vld [vmem:[%s3 + $0xfc] sm:$0xf]
      %v1785 = vld [vmem:[%s4] sm:$0x1]
      %v1787 = vperm.slane %v1785, 0
      %v1853 = vunpack.c.l.b16 %v1721
      %v1854 = vunpack.c.l.b16 %v1722
      %v1855 = vunpack.c.l.b16 %v1723
      %v1856 = vunpack.c.l.b16 %v1724
      %v1857 = vunpack.c.l.b16 %v1725
      %v1858 = vunpack.c.l.b16 %v1726
      %v1859 = vunpack.c.l.b16 %v1727
      %v1860 = vunpack.c.l.b16 %v1728
      %v1861 = vunpack.c.l.b16 %v1729
      %v1862 = vunpack.c.l.b16 %v1730
      %v1863 = vunpack.c.l.b16 %v1731
      %v1864 = vunpack.c.l.b16 %v1732
      %v1865 = vunpack.c.l.b16 %v1733
      %v1866 = vunpack.c.l.b16 %v1734
      %v1867 = vunpack.c.l.b16 %v1735
      %v1868 = vunpack.c.l.b16 %v1736
      %v1869 = vunpack.c.l.b16 %v1737
      %v1870 = vunpack.c.l.b16 %v1738
      %v1871 = vunpack.c.l.b16 %v1739
      %v1872 = vunpack.c.l.b16 %v1740
      %v1873 = vunpack.c.l.b16 %v1741
      %v1874 = vunpack.c.l.b16 %v1742
      %v1875 = vunpack.c.l.b16 %v1743
      %v1876 = vunpack.c.l.b16 %v1744
      %v1877 = vunpack.c.l.b16 %v1745
      %v1878 = vunpack.c.l.b16 %v1746
      %v1879 = vunpack.c.l.b16 %v1747
      %v1880 = vunpack.c.l.b16 %v1748
      %v1881 = vunpack.c.l.b16 %v1749
      %v1882 = vunpack.c.l.b16 %v1750
      %v1883 = vunpack.c.l.b16 %v1751
      %v1884 = vunpack.c.l.b16 %v1752
      %v1885 = vunpack.c.l.b16 %v1753
      %v1886 = vunpack.c.l.b16 %v1754
      %v1887 = vunpack.c.l.b16 %v1755
      %v1888 = vunpack.c.l.b16 %v1756
      %v1889 = vunpack.c.l.b16 %v1757
      %v1890 = vunpack.c.l.b16 %v1758
      %v1891 = vunpack.c.l.b16 %v1759
      %v1892 = vunpack.c.l.b16 %v1760
      %v1893 = vunpack.c.l.b16 %v1761
      %v1894 = vunpack.c.l.b16 %v1762
      %v1895 = vunpack.c.l.b16 %v1763
      %v1896 = vunpack.c.l.b16 %v1764
      %v1897 = vunpack.c.l.b16 %v1765
      %v1898 = vunpack.c.l.b16 %v1766
      %v1899 = vunpack.c.l.b16 %v1767
      %v1900 = vunpack.c.l.b16 %v1768
      %v1901 = vunpack.c.l.b16 %v1769
      %v1902 = vunpack.c.l.b16 %v1770
      %v1903 = vunpack.c.l.b16 %v1771
      %v1904 = vunpack.c.l.b16 %v1772
      %v1905 = vunpack.c.l.b16 %v1773
      %v1906 = vunpack.c.l.b16 %v1774
      %v1907 = vunpack.c.l.b16 %v1775
      %v1908 = vunpack.c.l.b16 %v1776
      %v1909 = vunpack.c.l.b16 %v1777
      %v1910 = vunpack.c.l.b16 %v1778
      %v1911 = vunpack.c.l.b16 %v1779
      %v1912 = vunpack.c.l.b16 %v1780
      %v1913 = vunpack.c.l.b16 %v1781
      %v1914 = vunpack.c.l.b16 %v1782
      %v1915 = vunpack.c.l.b16 %v1783
      %v1916 = vunpack.c.l.b16 %v1784
      %v1917 = vpack.c.b16 %v1854, %v1853
      %v1918 = vpack.c.b16 %v1856, %v1855
      %v1919 = vpack.c.b16 %v1858, %v1857
      %v1920 = vpack.c.b16 %v1860, %v1859
      %v1921 = vpack.c.b16 %v1862, %v1861
      %v1922 = vpack.c.b16 %v1864, %v1863
      %v1923 = vpack.c.b16 %v1866, %v1865
      %v1924 = vpack.c.b16 %v1868, %v1867
      %v1925 = vpack.c.b16 %v1870, %v1869
      %v1926 = vpack.c.b16 %v1872, %v1871
      %v1927 = vpack.c.b16 %v1874, %v1873
      %v1928 = vpack.c.b16 %v1876, %v1875
      %v1929 = vpack.c.b16 %v1878, %v1877
      %v1930 = vpack.c.b16 %v1880, %v1879
      %v1931 = vpack.c.b16 %v1882, %v1881
      %v1932 = vpack.c.b16 %v1884, %v1883
      %v1933 = vpack.c.b16 %v1886, %v1885
      %v1934 = vpack.c.b16 %v1888, %v1887
      %v1935 = vpack.c.b16 %v1890, %v1889
      %v1936 = vpack.c.b16 %v1892, %v1891
      %v1937 = vpack.c.b16 %v1894, %v1893
      %v1938 = vpack.c.b16 %v1896, %v1895
      %v1939 = vpack.c.b16 %v1898, %v1897
      %v1940 = vpack.c.b16 %v1900, %v1899
      %v1941 = vpack.c.b16 %v1902, %v1901
      %v1942 = vpack.c.b16 %v1904, %v1903
      %v1943 = vpack.c.b16 %v1906, %v1905
      %v1944 = vpack.c.b16 %v1908, %v1907
      %v1945 = vpack.c.b16 %v1910, %v1909
      %v1946 = vpack.c.b16 %v1912, %v1911
      %v1947 = vpack.c.b16 %v1914, %v1913
      %v1948 = vpack.c.b16 %v1916, %v1915
      %1981 = vmatpush.bf16.msra.mxu0 %v1924
      %1982 = vmatpush.bf16.msra.mxu0 %v1923
      %1983 = vmatpush.bf16.msra.mxu0 %v1922
      %1984 = vmatpush.bf16.msra.mxu0 %v1921
      %1985 = vmatpush.bf16.msra.mxu0 %v1920
      %1986 = vmatpush.bf16.msra.mxu0 %v1919
      %1987 = vmatpush.bf16.msra.mxu0 %v1918
      %1988 = vmatpush.bf16.msra.mxu0 %v1917
      %1989 = vmatmul.bf16.gmra.mxu0 %v1657
      %v1990 = vpop.f32.mrf.mxu0
      %v1991 = vadd.f32 %v1787, %v1990
      %v1992 = vpop.f32.mrf.mxu0
      %v1993 = vadd.f32 %v1787, %v1992
      %1994 = vmatmul.bf16.gmra.mxu0 %v1661
      %v1995 = vpop.f32.mrf.mxu0
      %v1996 = vadd.f32 %v1787, %v1995
      %v1997 = vpop.f32.mrf.mxu0
      %v1998 = vadd.f32 %v1787, %v1997
      %1999 = vmatmul.bf16.gmra.mxu0 %v1665
      %v2000 = vpop.f32.mrf.mxu0
      %v2001 = vadd.f32 %v1787, %v2000
      %v2002 = vpop.f32.mrf.mxu0
      %v2003 = vadd.f32 %v1787, %v2002
      %2004 = vmatmul.bf16.gmra.mxu0 %v1669
      %v2005 = vpop.f32.mrf.mxu0
      %v2006 = vadd.f32 %v1787, %v2005
      %v2007 = vpop.f32.mrf.mxu0
      %v2008 = vadd.f32 %v1787, %v2007
      %2009 = vmatmul.bf16.gmra.mxu0 %v1673
      %v2010 = vpop.f32.mrf.mxu0
      %v2011 = vadd.f32 %v1787, %v2010
      %v2012 = vpop.f32.mrf.mxu0
      %v2013 = vadd.f32 %v1787, %v2012
      %2014 = vmatmul.bf16.gmra.mxu0 %v1677
      %v2015 = vpop.f32.mrf.mxu0
      %v2016 = vadd.f32 %v1787, %v2015
      %v2017 = vpop.f32.mrf.mxu0
      %v2018 = vadd.f32 %v1787, %v2017
      %2019 = vmatmul.bf16.gmra.mxu0 %v1681
      %v2020 = vpop.f32.mrf.mxu0
      %v2021 = vadd.f32 %v1787, %v2020
      %v2022 = vpop.f32.mrf.mxu0
      %v2023 = vadd.f32 %v1787, %v2022
      %2024 = vmatmul.bf16.gmra.mxu0 %v1685
      %v2025 = vpop.f32.mrf.mxu0
      %v2026 = vadd.f32 %v1787, %v2025
      %v2027 = vpop.f32.mrf.mxu0
      %v2028 = vadd.f32 %v1787, %v2027
      %2029 = vmatmul.bf16.gmra.mxu0 %v1689
      %v2030 = vpop.f32.mrf.mxu0
      %v2031 = vadd.f32 %v1787, %v2030
      %v2032 = vpop.f32.mrf.mxu0
      %v2033 = vadd.f32 %v1787, %v2032
      %2034 = vmatmul.bf16.gmra.mxu0 %v1693
      %v2035 = vpop.f32.mrf.mxu0
      %v2036 = vadd.f32 %v1787, %v2035
      %v2037 = vpop.f32.mrf.mxu0
      %v2038 = vadd.f32 %v1787, %v2037
      %2039 = vmatmul.bf16.gmra.mxu0 %v1697
      %v2040 = vpop.f32.mrf.mxu0
      %v2041 = vadd.f32 %v1787, %v2040
      %v2042 = vpop.f32.mrf.mxu0
      %v2043 = vadd.f32 %v1787, %v2042
      %2044 = vmatmul.bf16.gmra.mxu0 %v1701
      %v2045 = vpop.f32.mrf.mxu0
      %v2046 = vadd.f32 %v1787, %v2045
      %v2047 = vpop.f32.mrf.mxu0
      %v2048 = vadd.f32 %v1787, %v2047
      %2049 = vmatmul.bf16.gmra.mxu0 %v1705
      %v2050 = vpop.f32.mrf.mxu0
      %v2051 = vadd.f32 %v1787, %v2050
      %v2052 = vpop.f32.mrf.mxu0
      %v2053 = vadd.f32 %v1787, %v2052
      %2054 = vmatmul.bf16.gmra.mxu0 %v1709
      %v2055 = vpop.f32.mrf.mxu0
      %v2056 = vadd.f32 %v1787, %v2055
      %v2057 = vpop.f32.mrf.mxu0
      %v2058 = vadd.f32 %v1787, %v2057
      %2059 = vmatmul.bf16.gmra.mxu0 %v1713
      %v2060 = vpop.f32.mrf.mxu0
      %v2061 = vadd.f32 %v1787, %v2060
      %v2062 = vpop.f32.mrf.mxu0
      %v2063 = vadd.f32 %v1787, %v2062
      %2064 = vmatmul.bf16.gmra.mxu0 %v1717
      %v2065 = vpop.f32.mrf.mxu0
      %v2066 = vadd.f32 %v1787, %v2065
      %v2067 = vpop.f32.mrf.mxu0
      %v2068 = vadd.f32 %v1787, %v2067
      %2069 = vdwg.mxu0
      %2070 = vmatpush.bf16.msra.mxu0 %v1932
      %2071 = vmatpush.bf16.msra.mxu0 %v1931
      %2072 = vmatpush.bf16.msra.mxu0 %v1930
      %2073 = vmatpush.bf16.msra.mxu0 %v1929
      %2074 = vmatpush.bf16.msra.mxu0 %v1928
      %2075 = vmatpush.bf16.msra.mxu0 %v1927
      %2076 = vmatpush.bf16.msra.mxu0 %v1926
      %2077 = vmatpush.bf16.msra.mxu0 %v1925
      %2078 = vmatmul.bf16.gmra.mxu0 %v1658
      %v2079 = vpop.f32.mrf.mxu0
      %v2080 = vadd.f32 %v1991, %v2079
      %v2081 = vpop.f32.mrf.mxu0
      %v2082 = vadd.f32 %v1993, %v2081
      %2083 = vmatmul.bf16.gmra.mxu0 %v1662
      %v2084 = vpop.f32.mrf.mxu0
      %v2085 = vadd.f32 %v1996, %v2084
      %v2086 = vpop.f32.mrf.mxu0
      %v2087 = vadd.f32 %v1998, %v2086
      %2088 = vmatmul.bf16.gmra.mxu0 %v1666
      %v2089 = vpop.f32.mrf.mxu0
      %v2090 = vadd.f32 %v2001, %v2089
      %v2091 = vpop.f32.mrf.mxu0
      %v2092 = vadd.f32 %v2003, %v2091
      %2093 = vmatmul.bf16.gmra.mxu0 %v1670
      %v2094 = vpop.f32.mrf.mxu0
      %v2095 = vadd.f32 %v2006, %v2094
      %v2096 = vpop.f32.mrf.mxu0
      %v2097 = vadd.f32 %v2008, %v2096
      %2098 = vmatmul.bf16.gmra.mxu0 %v1674
      %v2099 = vpop.f32.mrf.mxu0
      %v2100 = vadd.f32 %v2011, %v2099
      %v2101 = vpop.f32.mrf.mxu0
      %v2102 = vadd.f32 %v2013, %v2101
      %2103 = vmatmul.bf16.gmra.mxu0 %v1678
      %v2104 = vpop.f32.mrf.mxu0
      %v2105 = vadd.f32 %v2016, %v2104
      %v2106 = vpop.f32.mrf.mxu0
      %v2107 = vadd.f32 %v2018, %v2106
      %2108 = vmatmul.bf16.gmra.mxu0 %v1682
      %v2109 = vpop.f32.mrf.mxu0
      %v2110 = vadd.f32 %v2021, %v2109
      %v2111 = vpop.f32.mrf.mxu0
      %v2112 = vadd.f32 %v2023, %v2111
      %2113 = vmatmul.bf16.gmra.mxu0 %v1686
      %v2114 = vpop.f32.mrf.mxu0
      %v2115 = vadd.f32 %v2026, %v2114
      %v2116 = vpop.f32.mrf.mxu0
      %v2117 = vadd.f32 %v2028, %v2116
      %2118 = vmatmul.bf16.gmra.mxu0 %v1690
      %v2119 = vpop.f32.mrf.mxu0
      %v2120 = vadd.f32 %v2031, %v2119
      %v2121 = vpop.f32.mrf.mxu0
      %v2122 = vadd.f32 %v2033, %v2121
      %2123 = vmatmul.bf16.gmra.mxu0 %v1694
      %v2124 = vpop.f32.mrf.mxu0
      %v2125 = vadd.f32 %v2036, %v2124
      %v2126 = vpop.f32.mrf.mxu0
      %v2127 = vadd.f32 %v2038, %v2126
      %2128 = vmatmul.bf16.gmra.mxu0 %v1698
      %v2129 = vpop.f32.mrf.mxu0
      %v2130 = vadd.f32 %v2041, %v2129
      %v2131 = vpop.f32.mrf.mxu0
      %v2132 = vadd.f32 %v2043, %v2131
      %2133 = vmatmul.bf16.gmra.mxu0 %v1702
      %v2134 = vpop.f32.mrf.mxu0
      %v2135 = vadd.f32 %v2046, %v2134
      %v2136 = vpop.f32.mrf.mxu0
      %v2137 = vadd.f32 %v2048, %v2136
      %2138 = vmatmul.bf16.gmra.mxu0 %v1706
      %v2139 = vpop.f32.mrf.mxu0
      %v2140 = vadd.f32 %v2051, %v2139
      %v2141 = vpop.f32.mrf.mxu0
      %v2142 = vadd.f32 %v2053, %v2141
      %2143 = vmatmul.bf16.gmra.mxu0 %v1710
      %v2144 = vpop.f32.mrf.mxu0
      %v2145 = vadd.f32 %v2056, %v2144
      %v2146 = vpop.f32.mrf.mxu0
      %v2147 = vadd.f32 %v2058, %v2146
      %2148 = vmatmul.bf16.gmra.mxu0 %v1714
      %v2149 = vpop.f32.mrf.mxu0
      %v2150 = vadd.f32 %v2061, %v2149
      %v2151 = vpop.f32.mrf.mxu0
      %v2152 = vadd.f32 %v2063, %v2151
      %2153 = vmatmul.bf16.gmra.mxu0 %v1718
      %v2154 = vpop.f32.mrf.mxu0
      %v2155 = vadd.f32 %v2066, %v2154
      %v2156 = vpop.f32.mrf.mxu0
      %v2157 = vadd.f32 %v2068, %v2156
      %2158 = vdwg.mxu0
      %2159 = vmatpush.bf16.msra.mxu0 %v1940
      %2160 = vmatpush.bf16.msra.mxu0 %v1939
      %2161 = vmatpush.bf16.msra.mxu0 %v1938
      %2162 = vmatpush.bf16.msra.mxu0 %v1937
      %2163 = vmatpush.bf16.msra.mxu0 %v1936
      %2164 = vmatpush.bf16.msra.mxu0 %v1935
      %2165 = vmatpush.bf16.msra.mxu0 %v1934
      %2166 = vmatpush.bf16.msra.mxu0 %v1933
      %2167 = vmatmul.bf16.gmra.mxu0 %v1659
      %v2168 = vpop.f32.mrf.mxu0
      %v2169 = vadd.f32 %v2080, %v2168
      %v2170 = vpop.f32.mrf.mxu0
      %v2171 = vadd.f32 %v2082, %v2170
      %2172 = vmatmul.bf16.gmra.mxu0 %v1663
      %v2173 = vpop.f32.mrf.mxu0
      %v2174 = vadd.f32 %v2085, %v2173
      %v2175 = vpop.f32.mrf.mxu0
      %v2176 = vadd.f32 %v2087, %v2175
      %2177 = vmatmul.bf16.gmra.mxu0 %v1667
      %v2178 = vpop.f32.mrf.mxu0
      %v2179 = vadd.f32 %v2090, %v2178
      %v2180 = vpop.f32.mrf.mxu0
      %v2181 = vadd.f32 %v2092, %v2180
      %2182 = vmatmul.bf16.gmra.mxu0 %v1671
      %v2183 = vpop.f32.mrf.mxu0
      %v2184 = vadd.f32 %v2095, %v2183
      %v2185 = vpop.f32.mrf.mxu0
      %v2186 = vadd.f32 %v2097, %v2185
      %2187 = vmatmul.bf16.gmra.mxu0 %v1675
      %v2188 = vpop.f32.mrf.mxu0
      %v2189 = vadd.f32 %v2100, %v2188
      %v2190 = vpop.f32.mrf.mxu0
      %v2191 = vadd.f32 %v2102, %v2190
      %2192 = vmatmul.bf16.gmra.mxu0 %v1679
      %v2193 = vpop.f32.mrf.mxu0
      %v2194 = vadd.f32 %v2105, %v2193
      %v2195 = vpop.f32.mrf.mxu0
      %v2196 = vadd.f32 %v2107, %v2195
      %2197 = vmatmul.bf16.gmra.mxu0 %v1683
      %v2198 = vpop.f32.mrf.mxu0
      %v2199 = vadd.f32 %v2110, %v2198
      %v2200 = vpop.f32.mrf.mxu0
      %v2201 = vadd.f32 %v2112, %v2200
      %2202 = vmatmul.bf16.gmra.mxu0 %v1687
      %v2203 = vpop.f32.mrf.mxu0
      %v2204 = vadd.f32 %v2115, %v2203
      %v2205 = vpop.f32.mrf.mxu0
      %v2206 = vadd.f32 %v2117, %v2205
      %2207 = vmatmul.bf16.gmra.mxu0 %v1691
      %v2208 = vpop.f32.mrf.mxu0
      %v2209 = vadd.f32 %v2120, %v2208
      %v2210 = vpop.f32.mrf.mxu0
      %v2211 = vadd.f32 %v2122, %v2210
      %2212 = vmatmul.bf16.gmra.mxu0 %v1695
      %v2213 = vpop.f32.mrf.mxu0
      %v2214 = vadd.f32 %v2125, %v2213
      %v2215 = vpop.f32.mrf.mxu0
      %v2216 = vadd.f32 %v2127, %v2215
      %2217 = vmatmul.bf16.gmra.mxu0 %v1699
      %v2218 = vpop.f32.mrf.mxu0
      %v2219 = vadd.f32 %v2130, %v2218
      %v2220 = vpop.f32.mrf.mxu0
      %v2221 = vadd.f32 %v2132, %v2220
      %2222 = vmatmul.bf16.gmra.mxu0 %v1703
      %v2223 = vpop.f32.mrf.mxu0
      %v2224 = vadd.f32 %v2135, %v2223
      %v2225 = vpop.f32.mrf.mxu0
      %v2226 = vadd.f32 %v2137, %v2225
      %2227 = vmatmul.bf16.gmra.mxu0 %v1707
      %v2228 = vpop.f32.mrf.mxu0
      %v2229 = vadd.f32 %v2140, %v2228
      %v2230 = vpop.f32.mrf.mxu0
      %v2231 = vadd.f32 %v2142, %v2230
      %2232 = vmatmul.bf16.gmra.mxu0 %v1711
      %v2233 = vpop.f32.mrf.mxu0
      %v2234 = vadd.f32 %v2145, %v2233
      %v2235 = vpop.f32.mrf.mxu0
      %v2236 = vadd.f32 %v2147, %v2235
      %2237 = vmatmul.bf16.gmra.mxu0 %v1715
      %v2238 = vpop.f32.mrf.mxu0
      %v2239 = vadd.f32 %v2150, %v2238
      %v2240 = vpop.f32.mrf.mxu0
      %v2241 = vadd.f32 %v2152, %v2240
      %2242 = vmatmul.bf16.gmra.mxu0 %v1719
      %v2243 = vpop.f32.mrf.mxu0
      %v2244 = vadd.f32 %v2155, %v2243
      %v2245 = vpop.f32.mrf.mxu0
      %v2246 = vadd.f32 %v2157, %v2245
      %2247 = vdwg.mxu0
      %2248 = vmatpush.bf16.msra.mxu0 %v1948
      %2249 = vmatpush.bf16.msra.mxu0 %v1947
      %2250 = vmatpush.bf16.msra.mxu0 %v1946
      %2251 = vmatpush.bf16.msra.mxu0 %v1945
      %2252 = vmatpush.bf16.msra.mxu0 %v1944
      %2253 = vmatpush.bf16.msra.mxu0 %v1943
      %2254 = vmatpush.bf16.msra.mxu0 %v1942
      %2255 = vmatpush.bf16.msra.mxu0 %v1941
      %2256 = vmatmul.bf16.gmra.mxu0 %v1660
      %v2257 = vpop.f32.mrf.mxu0
      %v2258 = vadd.f32 %v2169, %v2257
      %v2259 = vpop.f32.mrf.mxu0
      %v2260 = vadd.f32 %v2171, %v2259
      %2261 = vmatmul.bf16.gmra.mxu0 %v1664
      %v2262 = vpop.f32.mrf.mxu0
      %v2263 = vadd.f32 %v2174, %v2262
      %v2264 = vpop.f32.mrf.mxu0
      %v2265 = vadd.f32 %v2176, %v2264
      %2266 = vmatmul.bf16.gmra.mxu0 %v1668
      %v2267 = vpop.f32.mrf.mxu0
      %v2268 = vadd.f32 %v2179, %v2267
      %v2269 = vpop.f32.mrf.mxu0
      %v2270 = vadd.f32 %v2181, %v2269
      %2271 = vmatmul.bf16.gmra.mxu0 %v1672
      %v2272 = vpop.f32.mrf.mxu0
      %v2273 = vadd.f32 %v2184, %v2272
      %v2274 = vpop.f32.mrf.mxu0
      %v2275 = vadd.f32 %v2186, %v2274
      %2276 = vmatmul.bf16.gmra.mxu0 %v1676
      %v2277 = vpop.f32.mrf.mxu0
      %v2278 = vadd.f32 %v2189, %v2277
      %v2279 = vpop.f32.mrf.mxu0
      %v2280 = vadd.f32 %v2191, %v2279
      %2281 = vmatmul.bf16.gmra.mxu0 %v1680
      %v2282 = vpop.f32.mrf.mxu0
      %v2283 = vadd.f32 %v2194, %v2282
      %v2284 = vpop.f32.mrf.mxu0
      %v2285 = vadd.f32 %v2196, %v2284
      %2286 = vmatmul.bf16.gmra.mxu0 %v1684
      %v2287 = vpop.f32.mrf.mxu0
      %v2288 = vadd.f32 %v2199, %v2287
      %v2289 = vpop.f32.mrf.mxu0
      %v2290 = vadd.f32 %v2201, %v2289
      %2291 = vmatmul.bf16.gmra.mxu0 %v1688
      %v2292 = vpop.f32.mrf.mxu0
      %v2293 = vadd.f32 %v2204, %v2292
      %v2294 = vpop.f32.mrf.mxu0
      %v2295 = vadd.f32 %v2206, %v2294
      %2296 = vmatmul.bf16.gmra.mxu0 %v1692
      %v2297 = vpop.f32.mrf.mxu0
      %v2298 = vadd.f32 %v2209, %v2297
      %v2299 = vpop.f32.mrf.mxu0
      %v2300 = vadd.f32 %v2211, %v2299
      %2301 = vmatmul.bf16.gmra.mxu0 %v1696
      %v2302 = vpop.f32.mrf.mxu0
      %v2303 = vadd.f32 %v2214, %v2302
      %v2304 = vpop.f32.mrf.mxu0
      %v2305 = vadd.f32 %v2216, %v2304
      %2306 = vmatmul.bf16.gmra.mxu0 %v1700
      %v2307 = vpop.f32.mrf.mxu0
      %v2308 = vadd.f32 %v2219, %v2307
      %v2309 = vpop.f32.mrf.mxu0
      %v2310 = vadd.f32 %v2221, %v2309
      %2311 = vmatmul.bf16.gmra.mxu0 %v1704
      %v2312 = vpop.f32.mrf.mxu0
      %v2313 = vadd.f32 %v2224, %v2312
      %v2314 = vpop.f32.mrf.mxu0
      %v2315 = vadd.f32 %v2226, %v2314
      %2316 = vmatmul.bf16.gmra.mxu0 %v1708
      %v2317 = vpop.f32.mrf.mxu0
      %v2318 = vadd.f32 %v2229, %v2317
      %v2319 = vpop.f32.mrf.mxu0
      %v2320 = vadd.f32 %v2231, %v2319
      %2321 = vmatmul.bf16.gmra.mxu0 %v1712
      %v2322 = vpop.f32.mrf.mxu0
      %v2323 = vadd.f32 %v2234, %v2322
      %v2324 = vpop.f32.mrf.mxu0
      %v2325 = vadd.f32 %v2236, %v2324
      %2326 = vmatmul.bf16.gmra.mxu0 %v1716
      %v2327 = vpop.f32.mrf.mxu0
      %v2328 = vadd.f32 %v2239, %v2327
      %v2329 = vpop.f32.mrf.mxu0
      %v2330 = vadd.f32 %v2241, %v2329
      %2331 = vmatmul.bf16.gmra.mxu0 %v1720
      %v2332 = vpop.f32.mrf.mxu0
      %v2333 = vadd.f32 %v2244, %v2332
      %v2334 = vpop.f32.mrf.mxu0
      %v2335 = vadd.f32 %v2246, %v2334
      %2336 = vdwg.mxu0
      %v2337 = vxor.u32 %v2258, 2147483648
      %v2338 = vxor.u32 %v2260, 2147483648
      %v2339 = vxor.u32 %v2263, 2147483648
      %v2340 = vxor.u32 %v2265, 2147483648
      %v2341 = vxor.u32 %v2268, 2147483648
      %v2342 = vxor.u32 %v2270, 2147483648
      %v2343 = vxor.u32 %v2273, 2147483648
      %v2344 = vxor.u32 %v2275, 2147483648
      %v2345 = vxor.u32 %v2278, 2147483648
      %v2346 = vxor.u32 %v2280, 2147483648
      %v2347 = vxor.u32 %v2283, 2147483648
      %v2348 = vxor.u32 %v2285, 2147483648
      %v2349 = vxor.u32 %v2288, 2147483648
      %v2350 = vxor.u32 %v2290, 2147483648
      %v2351 = vxor.u32 %v2293, 2147483648
      %v2352 = vxor.u32 %v2295, 2147483648
      %v2353 = vxor.u32 %v2298, 2147483648
      %v2354 = vxor.u32 %v2300, 2147483648
      %v2355 = vxor.u32 %v2303, 2147483648
      %v2356 = vxor.u32 %v2305, 2147483648
      %v2357 = vxor.u32 %v2308, 2147483648
      %v2358 = vxor.u32 %v2310, 2147483648
      %v2359 = vxor.u32 %v2313, 2147483648
      %v2360 = vxor.u32 %v2315, 2147483648
      %v2361 = vxor.u32 %v2318, 2147483648
      %v2362 = vxor.u32 %v2320, 2147483648
      %v2363 = vxor.u32 %v2323, 2147483648
      %v2364 = vxor.u32 %v2325, 2147483648
      %v2365 = vxor.u32 %v2328, 2147483648
      %v2366 = vxor.u32 %v2330, 2147483648
      %v2367 = vxor.u32 %v2333, 2147483648
      %v2368 = vxor.u32 %v2335, 2147483648
      %v2369 = vmul.f32 %v2337, 1.442695
      %v2370 = vpow.pop %v2369
      %v2371 = vmul.f32 %v2338, 1.442695
      %v2372 = vpow.pop %v2371
      %v2373 = vmul.f32 %v2339, 1.442695
      %v2374 = vpow.pop %v2373
      %v2375 = vmul.f32 %v2340, 1.442695
      %v2376 = vpow.pop %v2375
      %v2377 = vmul.f32 %v2341, 1.442695
      %v2378 = vpow.pop %v2377
      %v2379 = vmul.f32 %v2342, 1.442695
      %v2380 = vpow.pop %v2379
      %v2381 = vmul.f32 %v2343, 1.442695
      %v2382 = vpow.pop %v2381
      %v2383 = vmul.f32 %v2344, 1.442695
      %v2384 = vpow.pop %v2383
      %v2385 = vmul.f32 %v2345, 1.442695
      %v2386 = vpow.pop %v2385
      %v2387 = vmul.f32 %v2346, 1.442695
      %v2388 = vpow.pop %v2387
      %v2389 = vmul.f32 %v2347, 1.442695
      %v2390 = vpow.pop %v2389
      %v2391 = vmul.f32 %v2348, 1.442695
      %v2392 = vpow.pop %v2391
      %v2393 = vmul.f32 %v2349, 1.442695
      %v2394 = vpow.pop %v2393
      %v2395 = vmul.f32 %v2350, 1.442695
      %v2396 = vpow.pop %v2395
      %v2397 = vmul.f32 %v2351, 1.442695
      %v2398 = vpow.pop %v2397
      %v2399 = vmul.f32 %v2352, 1.442695
      %v2400 = vpow.pop %v2399
      %v2401 = vmul.f32 %v2353, 1.442695
      %v2402 = vpow.pop %v2401
      %v2403 = vmul.f32 %v2354, 1.442695
      %v2404 = vpow.pop %v2403
      %v2405 = vmul.f32 %v2355, 1.442695
      %v2406 = vpow.pop %v2405
      %v2407 = vmul.f32 %v2356, 1.442695
      %v2408 = vpow.pop %v2407
      %v2409 = vmul.f32 %v2357, 1.442695
      %v2410 = vpow.pop %v2409
      %v2411 = vmul.f32 %v2358, 1.442695
      %v2412 = vpow.pop %v2411
      %v2413 = vmul.f32 %v2359, 1.442695
      %v2414 = vpow.pop %v2413
      %v2415 = vmul.f32 %v2360, 1.442695
      %v2416 = vpow.pop %v2415
      %v2417 = vmul.f32 %v2361, 1.442695
      %v2418 = vpow.pop %v2417
      %v2419 = vmul.f32 %v2362, 1.442695
      %v2420 = vpow.pop %v2419
      %v2421 = vmul.f32 %v2363, 1.442695
      %v2422 = vpow.pop %v2421
      %v2423 = vmul.f32 %v2364, 1.442695
      %v2424 = vpow.pop %v2423
      %v2425 = vmul.f32 %v2365, 1.442695
      %v2426 = vpow.pop %v2425
      %v2427 = vmul.f32 %v2366, 1.442695
      %v2428 = vpow.pop %v2427
      %v2429 = vmul.f32 %v2367, 1.442695
      %v2430 = vpow.pop %v2429
      %v2431 = vmul.f32 %v2368, 1.442695
      %v2432 = vpow.pop %v2431
      %v2433 = vadd.f32 %v2370, 1.0
      %v2434 = vadd.f32 %v2372, 1.0
      %v2435 = vadd.f32 %v2374, 1.0
      %v2436 = vadd.f32 %v2376, 1.0
      %v2437 = vadd.f32 %v2378, 1.0
      %v2438 = vadd.f32 %v2380, 1.0
      %v2439 = vadd.f32 %v2382, 1.0
      %v2440 = vadd.f32 %v2384, 1.0
      %v2441 = vadd.f32 %v2386, 1.0
      %v2442 = vadd.f32 %v2388, 1.0
      %v2443 = vadd.f32 %v2390, 1.0
      %v2444 = vadd.f32 %v2392, 1.0
      %v2445 = vadd.f32 %v2394, 1.0
      %v2446 = vadd.f32 %v2396, 1.0
      %v2447 = vadd.f32 %v2398, 1.0
      %v2448 = vadd.f32 %v2400, 1.0
      %v2449 = vadd.f32 %v2402, 1.0
      %v2450 = vadd.f32 %v2404, 1.0
      %v2451 = vadd.f32 %v2406, 1.0
      %v2452 = vadd.f32 %v2408, 1.0
      %v2453 = vadd.f32 %v2410, 1.0
      %v2454 = vadd.f32 %v2412, 1.0
      %v2455 = vadd.f32 %v2414, 1.0
      %v2456 = vadd.f32 %v2416, 1.0
      %v2457 = vadd.f32 %v2418, 1.0
      %v2458 = vadd.f32 %v2420, 1.0
      %v2459 = vadd.f32 %v2422, 1.0
      %v2460 = vadd.f32 %v2424, 1.0
      %v2461 = vadd.f32 %v2426, 1.0
      %v2462 = vadd.f32 %v2428, 1.0
      %v2463 = vadd.f32 %v2430, 1.0
      %v2464 = vadd.f32 %v2432, 1.0
      %v2465 = vrcp.pop %v2433
      %v2466 = vmul.f32 %v2433, %v2465
      %v2467 = vsub.f32 1.0, %v2466
      %v2468 = vmul.f32 %v2465, %v2467
      %v2469 = vadd.f32 %v2465, %v2468
      %vm2470 = vweird.f32 %v2433
      %vm2471 = vweird.f32 %v2465
      %vm2472 = vmor %vm2470, %vm2471
      %v2473 = vsel %vm2472, %v2465, %v2469
      %v2474 = vand.u32 2147483647, %v2433
      %vm2475 = vcmp.eq.f32.partialorder %v2474, 8.507059e+37
      %v2476 = vand.u32 %v2433, 2147483648
      %v2477 = vor.u32 1.1754944e-38, %v2476
      %v2478 = vsel %vm2475, %v2477, %v2473
      %v2479 = vmul.f32 1.0, %v2478
      %v2480 = vrcp.pop %v2434
      %v2481 = vmul.f32 %v2434, %v2480
      %v2482 = vsub.f32 1.0, %v2481
      %v2483 = vmul.f32 %v2480, %v2482
      %v2484 = vadd.f32 %v2480, %v2483
      %vm2485 = vweird.f32 %v2434
      %vm2486 = vweird.f32 %v2480
      %vm2487 = vmor %vm2485, %vm2486
      %v2488 = vsel %vm2487, %v2480, %v2484
      %v2489 = vand.u32 2147483647, %v2434
      %vm2490 = vcmp.eq.f32.partialorder %v2489, 8.507059e+37
      %v2491 = vand.u32 %v2434, 2147483648
      %v2492 = vor.u32 1.1754944e-38, %v2491
      %v2493 = vsel %vm2490, %v2492, %v2488
      %v2494 = vmul.f32 1.0, %v2493
      %v2495 = vrcp.pop %v2435
      %v2496 = vmul.f32 %v2435, %v2495
      %v2497 = vsub.f32 1.0, %v2496
      %v2498 = vmul.f32 %v2495, %v2497
      %v2499 = vadd.f32 %v2495, %v2498
      %vm2500 = vweird.f32 %v2435
      %vm2501 = vweird.f32 %v2495
      %vm2502 = vmor %vm2500, %vm2501
      %v2503 = vsel %vm2502, %v2495, %v2499
      %v2504 = vand.u32 2147483647, %v2435
      %vm2505 = vcmp.eq.f32.partialorder %v2504, 8.507059e+37
      %v2506 = vand.u32 %v2435, 2147483648
      %v2507 = vor.u32 1.1754944e-38, %v2506
      %v2508 = vsel %vm2505, %v2507, %v2503
      %v2509 = vmul.f32 1.0, %v2508
      %v2510 = vrcp.pop %v2436
      %v2511 = vmul.f32 %v2436, %v2510
      %v2512 = vsub.f32 1.0, %v2511
      %v2513 = vmul.f32 %v2510, %v2512
      %v2514 = vadd.f32 %v2510, %v2513
      %vm2515 = vweird.f32 %v2436
      %vm2516 = vweird.f32 %v2510
      %vm2517 = vmor %vm2515, %vm2516
      %v2518 = vsel %vm2517, %v2510, %v2514
      %v2519 = vand.u32 2147483647, %v2436
      %vm2520 = vcmp.eq.f32.partialorder %v2519, 8.507059e+37
      %v2521 = vand.u32 %v2436, 2147483648
      %v2522 = vor.u32 1.1754944e-38, %v2521
      %v2523 = vsel %vm2520, %v2522, %v2518
      %v2524 = vmul.f32 1.0, %v2523
      %v2525 = vrcp.pop %v2437
      %v2526 = vmul.f32 %v2437, %v2525
      %v2527 = vsub.f32 1.0, %v2526
      %v2528 = vmul.f32 %v2525, %v2527
      %v2529 = vadd.f32 %v2525, %v2528
      %vm2530 = vweird.f32 %v2437
      %vm2531 = vweird.f32 %v2525
      %vm2532 = vmor %vm2530, %vm2531
      %v2533 = vsel %vm2532, %v2525, %v2529
      %v2534 = vand.u32 2147483647, %v2437
      %vm2535 = vcmp.eq.f32.partialorder %v2534, 8.507059e+37
      %v2536 = vand.u32 %v2437, 2147483648
      %v2537 = vor.u32 1.1754944e-38, %v2536
      %v2538 = vsel %vm2535, %v2537, %v2533
      %v2539 = vmul.f32 1.0, %v2538
      %v2540 = vrcp.pop %v2438
      %v2541 = vmul.f32 %v2438, %v2540
      %v2542 = vsub.f32 1.0, %v2541
      %v2543 = vmul.f32 %v2540, %v2542
      %v2544 = vadd.f32 %v2540, %v2543
      %vm2545 = vweird.f32 %v2438
      %vm2546 = vweird.f32 %v2540
      %vm2547 = vmor %vm2545, %vm2546
      %v2548 = vsel %vm2547, %v2540, %v2544
      %v2549 = vand.u32 2147483647, %v2438
      %vm2550 = vcmp.eq.f32.partialorder %v2549, 8.507059e+37
      %v2551 = vand.u32 %v2438, 2147483648
      %v2552 = vor.u32 1.1754944e-38, %v2551
      %v2553 = vsel %vm2550, %v2552, %v2548
      %v2554 = vmul.f32 1.0, %v2553
      %v2555 = vrcp.pop %v2439
      %v2556 = vmul.f32 %v2439, %v2555
      %v2557 = vsub.f32 1.0, %v2556
      %v2558 = vmul.f32 %v2555, %v2557
      %v2559 = vadd.f32 %v2555, %v2558
      %vm2560 = vweird.f32 %v2439
      %vm2561 = vweird.f32 %v2555
      %vm2562 = vmor %vm2560, %vm2561
      %v2563 = vsel %vm2562, %v2555, %v2559
      %v2564 = vand.u32 2147483647, %v2439
      %vm2565 = vcmp.eq.f32.partialorder %v2564, 8.507059e+37
      %v2566 = vand.u32 %v2439, 2147483648
      %v2567 = vor.u32 1.1754944e-38, %v2566
      %v2568 = vsel %vm2565, %v2567, %v2563
      %v2569 = vmul.f32 1.0, %v2568
      %v2570 = vrcp.pop %v2440
      %v2571 = vmul.f32 %v2440, %v2570
      %v2572 = vsub.f32 1.0, %v2571
      %v2573 = vmul.f32 %v2570, %v2572
      %v2574 = vadd.f32 %v2570, %v2573
      %vm2575 = vweird.f32 %v2440
      %vm2576 = vweird.f32 %v2570
      %vm2577 = vmor %vm2575, %vm2576
      %v2578 = vsel %vm2577, %v2570, %v2574
      %v2579 = vand.u32 2147483647, %v2440
      %vm2580 = vcmp.eq.f32.partialorder %v2579, 8.507059e+37
      %v2581 = vand.u32 %v2440, 2147483648
      %v2582 = vor.u32 1.1754944e-38, %v2581
      %v2583 = vsel %vm2580, %v2582, %v2578
      %v2584 = vmul.f32 1.0, %v2583
      %v2585 = vrcp.pop %v2441
      %v2586 = vmul.f32 %v2441, %v2585
      %v2587 = vsub.f32 1.0, %v2586
      %v2588 = vmul.f32 %v2585, %v2587
      %v2589 = vadd.f32 %v2585, %v2588
      %vm2590 = vweird.f32 %v2441
      %vm2591 = vweird.f32 %v2585
      %vm2592 = vmor %vm2590, %vm2591
      %v2593 = vsel %vm2592, %v2585, %v2589
      %v2594 = vand.u32 2147483647, %v2441
      %vm2595 = vcmp.eq.f32.partialorder %v2594, 8.507059e+37
      %v2596 = vand.u32 %v2441, 2147483648
      %v2597 = vor.u32 1.1754944e-38, %v2596
      %v2598 = vsel %vm2595, %v2597, %v2593
      %v2599 = vmul.f32 1.0, %v2598
      %v2600 = vrcp.pop %v2442
      %v2601 = vmul.f32 %v2442, %v2600
      %v2602 = vsub.f32 1.0, %v2601
      %v2603 = vmul.f32 %v2600, %v2602
      %v2604 = vadd.f32 %v2600, %v2603
      %vm2605 = vweird.f32 %v2442
      %vm2606 = vweird.f32 %v2600
      %vm2607 = vmor %vm2605, %vm2606
      %v2608 = vsel %vm2607, %v2600, %v2604
      %v2609 = vand.u32 2147483647, %v2442
      %vm2610 = vcmp.eq.f32.partialorder %v2609, 8.507059e+37
      %v2611 = vand.u32 %v2442, 2147483648
      %v2612 = vor.u32 1.1754944e-38, %v2611
      %v2613 = vsel %vm2610, %v2612, %v2608
      %v2614 = vmul.f32 1.0, %v2613
      %v2615 = vrcp.pop %v2443
      %v2616 = vmul.f32 %v2443, %v2615
      %v2617 = vsub.f32 1.0, %v2616
      %v2618 = vmul.f32 %v2615, %v2617
      %v2619 = vadd.f32 %v2615, %v2618
      %vm2620 = vweird.f32 %v2443
      %vm2621 = vweird.f32 %v2615
      %vm2622 = vmor %vm2620, %vm2621
      %v2623 = vsel %vm2622, %v2615, %v2619
      %v2624 = vand.u32 2147483647, %v2443
      %vm2625 = vcmp.eq.f32.partialorder %v2624, 8.507059e+37
      %v2626 = vand.u32 %v2443, 2147483648
      %v2627 = vor.u32 1.1754944e-38, %v2626
      %v2628 = vsel %vm2625, %v2627, %v2623
      %v2629 = vmul.f32 1.0, %v2628
      %v2630 = vrcp.pop %v2444
      %v2631 = vmul.f32 %v2444, %v2630
      %v2632 = vsub.f32 1.0, %v2631
      %v2633 = vmul.f32 %v2630, %v2632
      %v2634 = vadd.f32 %v2630, %v2633
      %vm2635 = vweird.f32 %v2444
      %vm2636 = vweird.f32 %v2630
      %vm2637 = vmor %vm2635, %vm2636
      %v2638 = vsel %vm2637, %v2630, %v2634
      %v2639 = vand.u32 2147483647, %v2444
      %vm2640 = vcmp.eq.f32.partialorder %v2639, 8.507059e+37
      %v2641 = vand.u32 %v2444, 2147483648
      %v2642 = vor.u32 1.1754944e-38, %v2641
      %v2643 = vsel %vm2640, %v2642, %v2638
      %v2644 = vmul.f32 1.0, %v2643
      %v2645 = vrcp.pop %v2445
      %v2646 = vmul.f32 %v2445, %v2645
      %v2647 = vsub.f32 1.0, %v2646
      %v2648 = vmul.f32 %v2645, %v2647
      %v2649 = vadd.f32 %v2645, %v2648
      %vm2650 = vweird.f32 %v2445
      %vm2651 = vweird.f32 %v2645
      %vm2652 = vmor %vm2650, %vm2651
      %v2653 = vsel %vm2652, %v2645, %v2649
      %v2654 = vand.u32 2147483647, %v2445
      %vm2655 = vcmp.eq.f32.partialorder %v2654, 8.507059e+37
      %v2656 = vand.u32 %v2445, 2147483648
      %v2657 = vor.u32 1.1754944e-38, %v2656
      %v2658 = vsel %vm2655, %v2657, %v2653
      %v2659 = vmul.f32 1.0, %v2658
      %v2660 = vrcp.pop %v2446
      %v2661 = vmul.f32 %v2446, %v2660
      %v2662 = vsub.f32 1.0, %v2661
      %v2663 = vmul.f32 %v2660, %v2662
      %v2664 = vadd.f32 %v2660, %v2663
      %vm2665 = vweird.f32 %v2446
      %vm2666 = vweird.f32 %v2660
      %vm2667 = vmor %vm2665, %vm2666
      %v2668 = vsel %vm2667, %v2660, %v2664
      %v2669 = vand.u32 2147483647, %v2446
      %vm2670 = vcmp.eq.f32.partialorder %v2669, 8.507059e+37
      %v2671 = vand.u32 %v2446, 2147483648
      %v2672 = vor.u32 1.1754944e-38, %v2671
      %v2673 = vsel %vm2670, %v2672, %v2668
      %v2674 = vmul.f32 1.0, %v2673
      %v2675 = vrcp.pop %v2447
      %v2676 = vmul.f32 %v2447, %v2675
      %v2677 = vsub.f32 1.0, %v2676
      %v2678 = vmul.f32 %v2675, %v2677
      %v2679 = vadd.f32 %v2675, %v2678
      %vm2680 = vweird.f32 %v2447
      %vm2681 = vweird.f32 %v2675
      %vm2682 = vmor %vm2680, %vm2681
      %v2683 = vsel %vm2682, %v2675, %v2679
      %v2684 = vand.u32 2147483647, %v2447
      %vm2685 = vcmp.eq.f32.partialorder %v2684, 8.507059e+37
      %v2686 = vand.u32 %v2447, 2147483648
      %v2687 = vor.u32 1.1754944e-38, %v2686
      %v2688 = vsel %vm2685, %v2687, %v2683
      %v2689 = vmul.f32 1.0, %v2688
      %v2690 = vrcp.pop %v2448
      %v2691 = vmul.f32 %v2448, %v2690
      %v2692 = vsub.f32 1.0, %v2691
      %v2693 = vmul.f32 %v2690, %v2692
      %v2694 = vadd.f32 %v2690, %v2693
      %vm2695 = vweird.f32 %v2448
      %vm2696 = vweird.f32 %v2690
      %vm2697 = vmor %vm2695, %vm2696
      %v2698 = vsel %vm2697, %v2690, %v2694
      %v2699 = vand.u32 2147483647, %v2448
      %vm2700 = vcmp.eq.f32.partialorder %v2699, 8.507059e+37
      %v2701 = vand.u32 %v2448, 2147483648
      %v2702 = vor.u32 1.1754944e-38, %v2701
      %v2703 = vsel %vm2700, %v2702, %v2698
      %v2704 = vmul.f32 1.0, %v2703
      %v2705 = vrcp.pop %v2449
      %v2706 = vmul.f32 %v2449, %v2705
      %v2707 = vsub.f32 1.0, %v2706
      %v2708 = vmul.f32 %v2705, %v2707
      %v2709 = vadd.f32 %v2705, %v2708
      %vm2710 = vweird.f32 %v2449
      %vm2711 = vweird.f32 %v2705
      %vm2712 = vmor %vm2710, %vm2711
      %v2713 = vsel %vm2712, %v2705, %v2709
      %v2714 = vand.u32 2147483647, %v2449
      %vm2715 = vcmp.eq.f32.partialorder %v2714, 8.507059e+37
      %v2716 = vand.u32 %v2449, 2147483648
      %v2717 = vor.u32 1.1754944e-38, %v2716
      %v2718 = vsel %vm2715, %v2717, %v2713
      %v2719 = vmul.f32 1.0, %v2718
      %v2720 = vrcp.pop %v2450
      %v2721 = vmul.f32 %v2450, %v2720
      %v2722 = vsub.f32 1.0, %v2721
      %v2723 = vmul.f32 %v2720, %v2722
      %v2724 = vadd.f32 %v2720, %v2723
      %vm2725 = vweird.f32 %v2450
      %vm2726 = vweird.f32 %v2720
      %vm2727 = vmor %vm2725, %vm2726
      %v2728 = vsel %vm2727, %v2720, %v2724
      %v2729 = vand.u32 2147483647, %v2450
      %vm2730 = vcmp.eq.f32.partialorder %v2729, 8.507059e+37
      %v2731 = vand.u32 %v2450, 2147483648
      %v2732 = vor.u32 1.1754944e-38, %v2731
      %v2733 = vsel %vm2730, %v2732, %v2728
      %v2734 = vmul.f32 1.0, %v2733
      %v2735 = vrcp.pop %v2451
      %v2736 = vmul.f32 %v2451, %v2735
      %v2737 = vsub.f32 1.0, %v2736
      %v2738 = vmul.f32 %v2735, %v2737
      %v2739 = vadd.f32 %v2735, %v2738
      %vm2740 = vweird.f32 %v2451
      %vm2741 = vweird.f32 %v2735
      %vm2742 = vmor %vm2740, %vm2741
      %v2743 = vsel %vm2742, %v2735, %v2739
      %v2744 = vand.u32 2147483647, %v2451
      %vm2745 = vcmp.eq.f32.partialorder %v2744, 8.507059e+37
      %v2746 = vand.u32 %v2451, 2147483648
      %v2747 = vor.u32 1.1754944e-38, %v2746
      %v2748 = vsel %vm2745, %v2747, %v2743
      %v2749 = vmul.f32 1.0, %v2748
      %v2750 = vrcp.pop %v2452
      %v2751 = vmul.f32 %v2452, %v2750
      %v2752 = vsub.f32 1.0, %v2751
      %v2753 = vmul.f32 %v2750, %v2752
      %v2754 = vadd.f32 %v2750, %v2753
      %vm2755 = vweird.f32 %v2452
      %vm2756 = vweird.f32 %v2750
      %vm2757 = vmor %vm2755, %vm2756
      %v2758 = vsel %vm2757, %v2750, %v2754
      %v2759 = vand.u32 2147483647, %v2452
      %vm2760 = vcmp.eq.f32.partialorder %v2759, 8.507059e+37
      %v2761 = vand.u32 %v2452, 2147483648
      %v2762 = vor.u32 1.1754944e-38, %v2761
      %v2763 = vsel %vm2760, %v2762, %v2758
      %v2764 = vmul.f32 1.0, %v2763
      %v2765 = vrcp.pop %v2453
      %v2766 = vmul.f32 %v2453, %v2765
      %v2767 = vsub.f32 1.0, %v2766
      %v2768 = vmul.f32 %v2765, %v2767
      %v2769 = vadd.f32 %v2765, %v2768
      %vm2770 = vweird.f32 %v2453
      %vm2771 = vweird.f32 %v2765
      %vm2772 = vmor %vm2770, %vm2771
      %v2773 = vsel %vm2772, %v2765, %v2769
      %v2774 = vand.u32 2147483647, %v2453
      %vm2775 = vcmp.eq.f32.partialorder %v2774, 8.507059e+37
      %v2776 = vand.u32 %v2453, 2147483648
      %v2777 = vor.u32 1.1754944e-38, %v2776
      %v2778 = vsel %vm2775, %v2777, %v2773
      %v2779 = vmul.f32 1.0, %v2778
      %v2780 = vrcp.pop %v2454
      %v2781 = vmul.f32 %v2454, %v2780
      %v2782 = vsub.f32 1.0, %v2781
      %v2783 = vmul.f32 %v2780, %v2782
      %v2784 = vadd.f32 %v2780, %v2783
      %vm2785 = vweird.f32 %v2454
      %vm2786 = vweird.f32 %v2780
      %vm2787 = vmor %vm2785, %vm2786
      %v2788 = vsel %vm2787, %v2780, %v2784
      %v2789 = vand.u32 2147483647, %v2454
      %vm2790 = vcmp.eq.f32.partialorder %v2789, 8.507059e+37
      %v2791 = vand.u32 %v2454, 2147483648
      %v2792 = vor.u32 1.1754944e-38, %v2791
      %v2793 = vsel %vm2790, %v2792, %v2788
      %v2794 = vmul.f32 1.0, %v2793
      %v2795 = vrcp.pop %v2455
      %v2796 = vmul.f32 %v2455, %v2795
      %v2797 = vsub.f32 1.0, %v2796
      %v2798 = vmul.f32 %v2795, %v2797
      %v2799 = vadd.f32 %v2795, %v2798
      %vm2800 = vweird.f32 %v2455
      %vm2801 = vweird.f32 %v2795
      %vm2802 = vmor %vm2800, %vm2801
      %v2803 = vsel %vm2802, %v2795, %v2799
      %v2804 = vand.u32 2147483647, %v2455
      %vm2805 = vcmp.eq.f32.partialorder %v2804, 8.507059e+37
      %v2806 = vand.u32 %v2455, 2147483648
      %v2807 = vor.u32 1.1754944e-38, %v2806
      %v2808 = vsel %vm2805, %v2807, %v2803
      %v2809 = vmul.f32 1.0, %v2808
      %v2810 = vrcp.pop %v2456
      %v2811 = vmul.f32 %v2456, %v2810
      %v2812 = vsub.f32 1.0, %v2811
      %v2813 = vmul.f32 %v2810, %v2812
      %v2814 = vadd.f32 %v2810, %v2813
      %vm2815 = vweird.f32 %v2456
      %vm2816 = vweird.f32 %v2810
      %vm2817 = vmor %vm2815, %vm2816
      %v2818 = vsel %vm2817, %v2810, %v2814
      %v2819 = vand.u32 2147483647, %v2456
      %vm2820 = vcmp.eq.f32.partialorder %v2819, 8.507059e+37
      %v2821 = vand.u32 %v2456, 2147483648
      %v2822 = vor.u32 1.1754944e-38, %v2821
      %v2823 = vsel %vm2820, %v2822, %v2818
      %v2824 = vmul.f32 1.0, %v2823
      %v2825 = vrcp.pop %v2457
      %v2826 = vmul.f32 %v2457, %v2825
      %v2827 = vsub.f32 1.0, %v2826
      %v2828 = vmul.f32 %v2825, %v2827
      %v2829 = vadd.f32 %v2825, %v2828
      %vm2830 = vweird.f32 %v2457
      %vm2831 = vweird.f32 %v2825
      %vm2832 = vmor %vm2830, %vm2831
      %v2833 = vsel %vm2832, %v2825, %v2829
      %v2834 = vand.u32 2147483647, %v2457
      %vm2835 = vcmp.eq.f32.partialorder %v2834, 8.507059e+37
      %v2836 = vand.u32 %v2457, 2147483648
      %v2837 = vor.u32 1.1754944e-38, %v2836
      %v2838 = vsel %vm2835, %v2837, %v2833
      %v2839 = vmul.f32 1.0, %v2838
      %v2840 = vrcp.pop %v2458
      %v2841 = vmul.f32 %v2458, %v2840
      %v2842 = vsub.f32 1.0, %v2841
      %v2843 = vmul.f32 %v2840, %v2842
      %v2844 = vadd.f32 %v2840, %v2843
      %vm2845 = vweird.f32 %v2458
      %vm2846 = vweird.f32 %v2840
      %vm2847 = vmor %vm2845, %vm2846
      %v2848 = vsel %vm2847, %v2840, %v2844
      %v2849 = vand.u32 2147483647, %v2458
      %vm2850 = vcmp.eq.f32.partialorder %v2849, 8.507059e+37
      %v2851 = vand.u32 %v2458, 2147483648
      %v2852 = vor.u32 1.1754944e-38, %v2851
      %v2853 = vsel %vm2850, %v2852, %v2848
      %v2854 = vmul.f32 1.0, %v2853
      %v2855 = vrcp.pop %v2459
      %v2856 = vmul.f32 %v2459, %v2855
      %v2857 = vsub.f32 1.0, %v2856
      %v2858 = vmul.f32 %v2855, %v2857
      %v2859 = vadd.f32 %v2855, %v2858
      %vm2860 = vweird.f32 %v2459
      %vm2861 = vweird.f32 %v2855
      %vm2862 = vmor %vm2860, %vm2861
      %v2863 = vsel %vm2862, %v2855, %v2859
      %v2864 = vand.u32 2147483647, %v2459
      %vm2865 = vcmp.eq.f32.partialorder %v2864, 8.507059e+37
      %v2866 = vand.u32 %v2459, 2147483648
      %v2867 = vor.u32 1.1754944e-38, %v2866
      %v2868 = vsel %vm2865, %v2867, %v2863
      %v2869 = vmul.f32 1.0, %v2868
      %v2870 = vrcp.pop %v2460
      %v2871 = vmul.f32 %v2460, %v2870
      %v2872 = vsub.f32 1.0, %v2871
      %v2873 = vmul.f32 %v2870, %v2872
      %v2874 = vadd.f32 %v2870, %v2873
      %vm2875 = vweird.f32 %v2460
      %vm2876 = vweird.f32 %v2870
      %vm2877 = vmor %vm2875, %vm2876
      %v2878 = vsel %vm2877, %v2870, %v2874
      %v2879 = vand.u32 2147483647, %v2460
      %vm2880 = vcmp.eq.f32.partialorder %v2879, 8.507059e+37
      %v2881 = vand.u32 %v2460, 2147483648
      %v2882 = vor.u32 1.1754944e-38, %v2881
      %v2883 = vsel %vm2880, %v2882, %v2878
      %v2884 = vmul.f32 1.0, %v2883
      %v2885 = vrcp.pop %v2461
      %v2886 = vmul.f32 %v2461, %v2885
      %v2887 = vsub.f32 1.0, %v2886
      %v2888 = vmul.f32 %v2885, %v2887
      %v2889 = vadd.f32 %v2885, %v2888
      %vm2890 = vweird.f32 %v2461
      %vm2891 = vweird.f32 %v2885
      %vm2892 = vmor %vm2890, %vm2891
      %v2893 = vsel %vm2892, %v2885, %v2889
      %v2894 = vand.u32 2147483647, %v2461
      %vm2895 = vcmp.eq.f32.partialorder %v2894, 8.507059e+37
      %v2896 = vand.u32 %v2461, 2147483648
      %v2897 = vor.u32 1.1754944e-38, %v2896
      %v2898 = vsel %vm2895, %v2897, %v2893
      %v2899 = vmul.f32 1.0, %v2898
      %v2900 = vrcp.pop %v2462
      %v2901 = vmul.f32 %v2462, %v2900
      %v2902 = vsub.f32 1.0, %v2901
      %v2903 = vmul.f32 %v2900, %v2902
      %v2904 = vadd.f32 %v2900, %v2903
      %vm2905 = vweird.f32 %v2462
      %vm2906 = vweird.f32 %v2900
      %vm2907 = vmor %vm2905, %vm2906
      %v2908 = vsel %vm2907, %v2900, %v2904
      %v2909 = vand.u32 2147483647, %v2462
      %vm2910 = vcmp.eq.f32.partialorder %v2909, 8.507059e+37
      %v2911 = vand.u32 %v2462, 2147483648
      %v2912 = vor.u32 1.1754944e-38, %v2911
      %v2913 = vsel %vm2910, %v2912, %v2908
      %v2914 = vmul.f32 1.0, %v2913
      %v2915 = vrcp.pop %v2463
      %v2916 = vmul.f32 %v2463, %v2915
      %v2917 = vsub.f32 1.0, %v2916
      %v2918 = vmul.f32 %v2915, %v2917
      %v2919 = vadd.f32 %v2915, %v2918
      %vm2920 = vweird.f32 %v2463
      %vm2921 = vweird.f32 %v2915
      %vm2922 = vmor %vm2920, %vm2921
      %v2923 = vsel %vm2922, %v2915, %v2919
      %v2924 = vand.u32 2147483647, %v2463
      %vm2925 = vcmp.eq.f32.partialorder %v2924, 8.507059e+37
      %v2926 = vand.u32 %v2463, 2147483648
      %v2927 = vor.u32 1.1754944e-38, %v2926
      %v2928 = vsel %vm2925, %v2927, %v2923
      %v2929 = vmul.f32 1.0, %v2928
      %v2930 = vrcp.pop %v2464
      %v2931 = vmul.f32 %v2464, %v2930
      %v2932 = vsub.f32 1.0, %v2931
      %v2933 = vmul.f32 %v2930, %v2932
      %v2934 = vadd.f32 %v2930, %v2933
      %vm2935 = vweird.f32 %v2464
      %vm2936 = vweird.f32 %v2930
      %vm2937 = vmor %vm2935, %vm2936
      %v2938 = vsel %vm2937, %v2930, %v2934
      %v2939 = vand.u32 2147483647, %v2464
      %vm2940 = vcmp.eq.f32.partialorder %v2939, 8.507059e+37
      %v2941 = vand.u32 %v2464, 2147483648
      %v2942 = vor.u32 1.1754944e-38, %v2941
      %v2943 = vsel %vm2940, %v2942, %v2938
      %v2944 = vmul.f32 1.0, %v2943
      %2945 = vst [vmem:[%s229] sm:$0xff] %v2479
      %2946 = vst [vmem:[%s229 + $0x8] sm:$0xff] %v2494
      %2947 = vst [vmem:[%s229 + $0x10] sm:$0xff] %v2509
      %2948 = vst [vmem:[%s229 + $0x18] sm:$0xff] %v2524
      %2949 = vst [vmem:[%s229 + $0x20] sm:$0xff] %v2539
      %2950 = vst [vmem:[%s229 + $0x28] sm:$0xff] %v2554
      %2951 = vst [vmem:[%s229 + $0x30] sm:$0xff] %v2569
      %2952 = vst [vmem:[%s229 + $0x38] sm:$0xff] %v2584
      %2953 = vst [vmem:[%s229 + $0x40] sm:$0xff] %v2599
      %2954 = vst [vmem:[%s229 + $0x48] sm:$0xff] %v2614
      %2955 = vst [vmem:[%s229 + $0x50] sm:$0xff] %v2629
      %2956 = vst [vmem:[%s229 + $0x58] sm:$0xff] %v2644
      %2957 = vst [vmem:[%s229 + $0x60] sm:$0xff] %v2659
      %2958 = vst [vmem:[%s229 + $0x68] sm:$0xff] %v2674
      %2959 = vst [vmem:[%s229 + $0x70] sm:$0xff] %v2689
      %2960 = vst [vmem:[%s229 + $0x78] sm:$0xff] %v2704
      %2961 = vst [vmem:[%s229 + $0x80] sm:$0xff] %v2719
      %2962 = vst [vmem:[%s229 + $0x88] sm:$0xff] %v2734
      %2963 = vst [vmem:[%s229 + $0x90] sm:$0xff] %v2749
      %2964 = vst [vmem:[%s229 + $0x98] sm:$0xff] %v2764
      %2965 = vst [vmem:[%s229 + $0xa0] sm:$0xff] %v2779
      %2966 = vst [vmem:[%s229 + $0xa8] sm:$0xff] %v2794
      %2967 = vst [vmem:[%s229 + $0xb0] sm:$0xff] %v2809
      %2968 = vst [vmem:[%s229 + $0xb8] sm:$0xff] %v2824
      %2969 = vst [vmem:[%s229 + $0xc0] sm:$0xff] %v2839
      %2970 = vst [vmem:[%s229 + $0xc8] sm:$0xff] %v2854
      %2971 = vst [vmem:[%s229 + $0xd0] sm:$0xff] %v2869
      %2972 = vst [vmem:[%s229 + $0xd8] sm:$0xff] %v2884
      %2973 = vst [vmem:[%s229 + $0xe0] sm:$0xff] %v2899
      %2974 = vst [vmem:[%s229 + $0xe8] sm:$0xff] %v2914
      %2975 = vst [vmem:[%s229 + $0xf0] sm:$0xff] %v2929
      %2976 = vst [vmem:[%s229 + $0xf8] sm:$0xff] %v2944
      %s2977 = smul.u32 32, %s16
      %p2978 = scmp.lt.s32.totalorder %s2977, 159
      %s2979 = scalar_select %p2978, %s2977, 159
      %s2980 = smul.addr %s2979, 8
      %s2981 = scalar_lea.vmem %s5, %s2980
      // Predicated region
      $region41: #{_lambda_.19} parent=39 // pred_check
        %p2982 = pneg %p144
      $region42: #{_lambda_.19} parent=39 // pred_check_branch
        %2984 = sbr.rel (%p2982) target = $region44
      $region43: #{_lambda_.19} parent=39 // pred_region
        %s2985 = smul.u32 32, %s16
      $region44: #{_lambda_.19} parent=39 // pred_fallthru
        _
    $region40: #{_lambda_.19} parent=5 // pred_fallthru
      _
    %p2986 = scmp.le.s32.totalorder 2, %s11
    // Predicated region
    $region45: #{_lambda_.19} parent=5 // pred_check
      %p2987 = pneg %p2986
    $region46: #{_lambda_.19} parent=5 // pred_check_branch
      %2989 = sbr.rel (%p2987) target = $region48
    $region47: #{_lambda_.19} parent=5 // pred_region
      %s2990 = ssub.s32 %s11, 2
      // Predicated region
      $region49: #{_lambda_.19} parent=47 // pred_check
        %p2991 = pneg %p150
      $region50: #{_lambda_.19} parent=47 // pred_check_branch
        %2993 = sbr.rel (%p2991) target = $region52
      $region51: #{_lambda_.19} parent=47 // pred_region
        %s2994 = smul.u32 32, %s17
        %p2995 = scmp.lt.s32.totalorder %s2994, 159
        %s2996 = scalar_select %p2995, %s2994, 159
        %s2997 = smul.addr %s2996, 8
        %s2998 = scalar_lea.vmem %s5, %s2997
      $region52: #{_lambda_.19} parent=47 // pred_fallthru
        _
    $region48: #{_lambda_.19} parent=5 // pred_fallthru
      _
  $region6: #{_lambda_.19} parent=0 // loop_footer
    %s15 = sadd.s32 1, %s11
  $region7: #{_lambda_.19} parent=0 // loop_footer_branch
    %10 = sbr.rel target = $region3
  $region8: #{_lambda_.19} parent=0 // loop_exit
    _

</llo_original>
